<compile_context>
chip_gen: v6e
topology: v6e:2x2x1
jax: 0.10.0
libtpu: 0.0.40
codegen_flags: <defaults>
</compile_context>

<pallas_src>
import jax
import jax.numpy as jnp
from jax.experimental import pallas as pl
from jax.experimental.pallas import tpu as pltpu

D = 32     # embedding dim (args.d); 4*D = 128 = one full lane group
NCH = 5    # ent + 4 attribute channels (music dataset)
A = 4      # attributes per item


def _max_norm_rows(x, max_norm=0.5, eps=1e-7):
    # torch.nn.Embedding(max_norm=0.5, norm_type=2) applied to looked-up rows.
    # TODO(synk): torch's renorm is stateful/in-place on the table; here it is
    # functional per call on the gathered rows (forward values identical).
    n = jnp.linalg.norm(x, axis=-1, keepdims=True)
    scale = jnp.where(n > max_norm, max_norm / (n + eps), 1.0)
    return x * scale


# -----------------------------------------------------------------------------
# One fused kernel, grid=(2,):
#   step 0: history attention + fused key projection + attention map + pooled
#           features + predict MLP (writes y and attn_matrix)
#   step 1: lane-packed KG (TransH-style) scores (writes kg scalar)
# -----------------------------------------------------------------------------
def _kaam_kernel(hist_ref, cand_ref, wcat_ref, bcat_ref,
                 pw1_ref, pb1_ref, g_ref, be_ref, pw2_ref, pb2_ref,
                 pw3_ref, pb3_ref,
                 ent_ref, attr_ref, wattr_ref, rel_ref, wr_ref,
                 seg_ref, segt_ref,
                 out_ref):
    step = pl.program_id(0)

    # ------------------- step 0: attention + MLP branch ---------------------
    @pl.when(step == 0)
    def _attention_and_mlp():
        bn, d = cand_ref.shape                 # (B*NCH, d)
        b = bn // NCH

        hist = hist_ref[...]                   # (B*5, L-1, d)
        cand = cand_ref[...]                   # (B*5, d)

        # w[m, t] = tanh(<hist[m, t], cand[m]>); user[m] = sum_t w[m,t]*hist[m,t]
        w = jnp.tanh(jnp.sum(hist * cand[:, None, :], axis=-1))     # (B*5, L-1)
        user = jnp.sum(w[:, :, None] * hist, axis=1)                 # (B*5, d)

        # Fused key projections: blockdiag(W1, W2), one MXU matmul.
        uc = jnp.concatenate([user, cand], axis=-1)                  # (B*5, 2d)
        keys = jnp.dot(uc, wcat_ref[...], preferred_element_type=jnp.float32)
        keys = jnp.tanh(keys.reshape(b, NCH, 2 * d) + bcat_ref[...][None])
        uk3 = keys[:, :, :d]                   # user_key  (B, 5, d)
        ik3 = keys[:, :, d:]                   # item_key  (B, 5, d)

        # attn_map[b, u, i] = <user_key[b, u], item_key[b, i]>
        amap = jnp.einsum('bud,bid->bui', uk3, ik3,
                          preferred_element_type=jnp.float32)        # (B, 5, 5)
        am_sum = jnp.sum(amap, axis=0)         # torch: self.attn_matrix

        def softmax(x, axis):
            x = x - jnp.max(x, axis=axis, keepdims=True)
            e = jnp.exp(x)
            return e * pl.reciprocal(jnp.sum(e, axis=axis, keepdims=True),
                                     approx=True)

        su = softmax(amap, 1)                  # softmax over user axis (dim=1)
        si = softmax(amap, 2)                  # softmax over item axis (dim=2)

        user_set = jnp.einsum('bui,bud->bid', su, uk3,
                              preferred_element_type=jnp.float32)    # (B, 5, d)
        item_set = jnp.einsum('bui,bid->bud', si, ik3,
                              preferred_element_type=jnp.float32)    # (B, 5, d)

        # Lane-dense pooled feature (B, 4*d) = (B, 128); never leaves VMEM.
        y = jnp.concatenate(
            [jnp.sum(user_set, axis=1), jnp.sum(item_set, axis=1),
             jnp.sum(uk3, axis=1), jnp.sum(ik3, axis=1)], axis=-1)

        # predict MLP: Linear -> BatchNorm1d(batch stats) -> ReLU -> Linear ->
        # ReLU -> Linear
        h = jnp.dot(y, pw1_ref[...], preferred_element_type=jnp.float32) \
            + pb1_ref[...]
        mu = jnp.mean(h, axis=0, keepdims=True)
        var = jnp.mean((h - mu) ** 2, axis=0, keepdims=True)   # biased variance
        h = (h - mu) * jax.lax.rsqrt(var + 1e-5) * g_ref[...] + be_ref[...]
        h = jnp.maximum(h, 0.0)
        h = jnp.maximum(
            jnp.dot(h, pw2_ref[...], preferred_element_type=jnp.float32)
            + pb2_ref[...], 0.0)
        y_final = (jnp.dot(h, pw3_ref[...], preferred_element_type=jnp.float32)
                   + pb3_ref[...])                                   # (B, 2)

        out_ref[...] = jnp.zeros(out_ref.shape, jnp.float32)
        out_ref[0, 0:b, 0:2] = y_final
        out_ref[0, 0:NCH, 8:8 + NCH] = am_sum

    # ------------------- step 1: KG (TransH) branch, lane-packed ------------
    @pl.when(step == 1)
    def _kg():
        bl, d = ent_ref.shape                  # (B*L, d)
        ad = attr_ref.shape[1]                 # A*d (= 128)
        a = ad // d

        ent = ent_ref[...]                     # (B*L, d)
        ent_pk = jnp.concatenate([ent] * a, axis=-1)      # (B*L, A*d)
        attr = attr_ref[...]                   # (B*L, A*d)
        watt = wattr_ref[...]                  # (B*L, A*d)
        rel = rel_ref[...]                     # (1, A*d), broadcast over rows
        wr = wr_ref[...]                       # (1, A*d)
        seg = seg_ref[...]                     # (A*d, A) channel indicator
        segt = segt_ref[...]                   # (A, A*d)

        def hplane_proj(x):
            # per-channel <w_r, x>, broadcast back across the channel's lanes,
            # times w_r  (two tiny MXU matmuls instead of lane reductions).
            s = jnp.dot(wr * x, seg, preferred_element_type=jnp.float32)
            return wr * jnp.dot(s, segt, preferred_element_type=jnp.float32)

        ent_p = hplane_proj(ent_pk)
        attr_p = hplane_proj(attr)
        watt_p = hplane_proj(watt)
        d_right = ent_p + rel - attr_p
        d_wrong = ent_p + rel - watt_p

        inv_d = 1.0 / d
        ms_r = jnp.dot(d_right * d_right, seg,
                       preferred_element_type=jnp.float32) * inv_d   # (B*L, A)
        ms_w = jnp.dot(d_wrong * d_wrong, seg,
                       preferred_element_type=jnp.float32) * inv_d
        # No eps under sqrt, matching the torch reference (forward only).
        score = jnp.sqrt(ms_r) - jnp.sqrt(ms_w)                      # (B*L, A)
        kg = jnp.mean(score, keepdims=True)                          # (1, 1)

        out_ref[...] = jnp.zeros(out_ref.shape, jnp.float32)
        out_ref[0, 0:1, 0:1] = kg


# -----------------------------------------------------------------------------
# Wrapper (glue: gathers, row renorm, channel selection, permutations, packing)
# -----------------------------------------------------------------------------
@jax.jit
def kaam_forward(seq, params, perm_key):
    d = D
    B, L = seq.shape
    Lm1 = L - 1

    # Gather first, renormalize only the used rows (cheap vs. full tables).
    ent = _max_norm_rows(params['embed_ent'][seq])                 # (B, L, d)
    attr_idx = params['embed_attr_set'][seq]                       # (B, L, A)
    attr = _max_norm_rows(params['embed_attr'][attr_idx])          # (B, L, A, d)

    # music dataset: relation_type = [0, 1, 2, 3]
    # TODO(synk): only the 'music' dataset branch is implemented.
    relation_type = jnp.array([0, 1, 2, 3])
    rel_emb = _max_norm_rows(params['relation'][relation_type])    # (A, d)
    wr_emb = _max_norm_rows(params['w_r'][relation_type])          # (A, d)

    ent_hist, ent_cand = ent[:, :-1, :], ent[:, -1, :]
    attr_hist, attr_cand = attr[:, :-1, :, :], attr[:, -1, :, :]

    # music channels: ent, singer (0), attr[-3], attr[-2], attr[-1]
    chan_idx = jnp.array([0, A - 3, A - 2, A - 1])
    hist = jnp.concatenate(
        [ent_hist[:, None], jnp.moveaxis(attr_hist[:, :, chan_idx, :], 2, 1)],
        axis=1)                                                    # (B, 5, L-1, d)
    cand = jnp.concatenate(
        [ent_cand[:, None], attr_cand[:, chan_idx, :]], axis=1)    # (B, 5, d)

    hist_flat = hist.reshape(B * NCH, Lm1, d)
    cand_flat = cand.reshape(B * NCH, d)

    # Fused key-projection weights (tiny, batch-independent).
    zdd = jnp.zeros((d, d), jnp.float32)
    wcat = jnp.concatenate(
        [jnp.concatenate([params['W1'], zdd], axis=1),
         jnp.concatenate([zdd, params['W2']], axis=1)], axis=0)    # (2d, 2d)
    bcat = jnp.concatenate([params['b1'], params['b2']], axis=1)   # (NCH, 2d)

    # "wrong attribute" negatives.
    # TODO(synk): jax.random.permutation stream differs from torch.randperm
    # (deterministic, but not bit-matching the reference draws).
    k1, k2, k3 = jax.random.split(perm_key, 3)
    wrong_attr = attr[jax.random.permutation(k1, B)]
    wrong_attr = wrong_attr[:, jax.random.permutation(k2, L)]
    wrong_attr = wrong_attr[:, :, jax.random.permutation(k3, A)]

    # Lane-packed KG operands: (B*L, A*d) = lane-dense; ent stays (B*L, d) and
    # rel/w_r stay a single (1, A*d) row each (broadcast inside the kernel).
    BL = B * L
    ent_flat = ent.reshape(BL, d)
    attr_pk = attr.reshape(BL, A * d)
    wattr_pk = wrong_attr.reshape(BL, A * d)
    rel_pk = rel_emb.reshape(1, A * d)
    wr_pk = wr_emb.reshape(1, A * d)

    # Static channel-indicator matrices for per-channel reductions/broadcasts.
    seg = jnp.repeat(jnp.eye(A, dtype=jnp.float32), d, axis=0)     # (A*d, A)
    segt = seg.T                                                   # (A, A*d)

    out_rows = max(B, 8)

    def full_block(shape):
        return pl.BlockSpec(shape, lambda i, _n=len(shape): (0,) * _n)

    merged = pl.pallas_call(
        _kaam_kernel,
        out_shape=jax.ShapeDtypeStruct((2, out_rows, 4 * d), jnp.float32),
        grid_spec=pltpu.PrefetchScalarGridSpec(
            num_scalar_prefetch=0, grid=(2,),
            in_specs=[
                full_block((B * NCH, Lm1, d)),   # hist
                full_block((B * NCH, d)),        # cand
                full_block((2 * d, 2 * d)),      # blockdiag(W1, W2)
                full_block((NCH, 2 * d)),        # concat(b1, b2)
                full_block((4 * d, 96)),         # MLP / BN params
                full_block((1, 96)),
                full_block((1, 96)),
                full_block((1, 96)),
                full_block((96, 20)),
                full_block((1, 20)),
                full_block((20, 2)),
                full_block((1, 2)),
                full_block((BL, d)),             # ent (compact)
                full_block((BL, A * d)),         # attr (lane-packed)
                full_block((BL, A * d)),         # wrong attr (lane-packed)
                full_block((1, A * d)),          # relation row
                full_block((1, A * d)),          # w_r row
                full_block((A * d, A)),          # channel indicator
                full_block((A, A * d)),          # its transpose
            ],
            out_specs=pl.BlockSpec((1, out_rows, 4 * d),
                                   lambda i: (i, 0, 0)),
        ),
        compiler_params=pltpu.CompilerParams(
            dimension_semantics=("parallel",)),
    )(hist_flat, cand_flat, wcat, bcat,
      params['pw1'], params['pb1'], params['bn_gamma'], params['bn_beta'],
      params['pw2'], params['pb2'], params['pw3'], params['pb3'],
      ent_flat, attr_pk, wattr_pk, rel_pk, wr_pk, seg, segt)

    y_out = merged[0, :B, :2]
    attn_matrix = merged[0, :NCH, 8:8 + NCH]
    kg_loss = merged[1, 0, 0]
    return y_out, kg_loss, attn_matrix


# -----------------------------------------------------------------------------
# Deterministic parameter construction + smoke test
# -----------------------------------------------------------------------------
if __name__ == "__main__":
    B, L = 8, 8
    num_items, num_attrs = 10, 12
    d = D

    key = jax.random.PRNGKey(0)
    ks = jax.random.split(key, 16)

    def xavier(k, shape):
        fan_in, fan_out = shape[-2], shape[-1]
        std = (2.0 / (fan_in + fan_out)) ** 0.5
        return std * jax.random.normal(k, shape, jnp.float32)

    params = {
        # embedding tables (gathered rows renormalised to max_norm=0.5)
        'embed_ent': 0.1 * jax.random.normal(ks[0], (num_items, d), jnp.float32),
        'embed_attr': 0.1 * jax.random.normal(ks[1], (num_attrs, d), jnp.float32),
        'embed_attr_set': jax.random.randint(ks[2], (num_items, A), 0, num_attrs),
        'relation': 0.1 * jax.random.normal(ks[3], (7, d), jnp.float32),
        'w_r': 0.1 * jax.random.normal(ks[4], (7, d), jnp.float32),
        # bilinear key parameters
        'W1': xavier(ks[5], (d, d)),
        'W2': xavier(ks[6], (d, d)),
        'b1': xavier(ks[7], (NCH, d)),
        'b2': xavier(ks[8], (NCH, d)),
        # predict MLP
        'pw1': xavier(ks[9], (4 * d, 96)),
        'pb1': jnp.zeros((1, 96), jnp.float32),
        'bn_gamma': jnp.ones((1, 96), jnp.float32),
        'bn_beta': jnp.zeros((1, 96), jnp.float32),
        'pw2': xavier(ks[10], (96, 20)),
        'pb2': jnp.zeros((1, 20), jnp.float32),
        'pw3': xavier(ks[11], (20, 2)),
        'pb3': jnp.zeros((1, 2), jnp.float32),
    }

    seq = jax.random.randint(ks[12], (B, L), 0, num_items)
    perm_key = ks[13]

    y, kg_loss, attn_matrix = kaam_forward(seq, params, perm_key)
    jax.block_until_ready((y, kg_loss, attn_matrix))
    assert y.shape == (B, 2) and attn_matrix.shape == (NCH, NCH)
    assert bool(jnp.isfinite(kg_loss))
    print("KERNEL_OK")
</pallas_src>

<mosaic_0001>
module attributes {stable_mosaic.version = 11 : i64} {
  func.func @_kaam_kernel(%arg0: i32, %arg1: memref<40x7x32xf32, #tpu.memory_space<vmem>>, %arg2: memref<40x32xf32, #tpu.memory_space<vmem>>, %arg3: memref<64x64xf32, #tpu.memory_space<vmem>>, %arg4: memref<5x64xf32, #tpu.memory_space<vmem>>, %arg5: memref<128x96xf32, #tpu.memory_space<vmem>>, %arg6: memref<1x96xf32, #tpu.memory_space<vmem>>, %arg7: memref<1x96xf32, #tpu.memory_space<vmem>>, %arg8: memref<1x96xf32, #tpu.memory_space<vmem>>, %arg9: memref<96x20xf32, #tpu.memory_space<vmem>>, %arg10: memref<1x20xf32, #tpu.memory_space<vmem>>, %arg11: memref<20x2xf32, #tpu.memory_space<vmem>>, %arg12: memref<1x2xf32, #tpu.memory_space<vmem>>, %arg13: memref<64x32xf32, #tpu.memory_space<vmem>>, %arg14: memref<64x128xf32, #tpu.memory_space<vmem>>, %arg15: memref<64x128xf32, #tpu.memory_space<vmem>>, %arg16: memref<1x128xf32, #tpu.memory_space<vmem>>, %arg17: memref<1x128xf32, #tpu.memory_space<vmem>>, %arg18: memref<128x4xf32, #tpu.memory_space<vmem>>, %arg19: memref<4x128xf32, #tpu.memory_space<vmem>>, %arg20: memref<1x8x128xf32, #tpu.memory_space<vmem>>) attributes {dimension_semantics = [#tpu.dimension_semantics<parallel>], iteration_bounds = array<i64: 2>, scalar_prefetch = 0 : i64, scratch_operands = 0 : i64, tpu.core_type = #tpu.core_type<tc>, window_params = [{pipeline_mode = #tpu.pipeline_mode<synchronous>, transform_indices = @transform_0, window_bounds = array<i64: 40, 7, 32>}, {pipeline_mode = #tpu.pipeline_mode<synchronous>, transform_indices = @transform_1, window_bounds = array<i64: 40, 32>}, {pipeline_mode = #tpu.pipeline_mode<synchronous>, transform_indices = @transform_2, window_bounds = array<i64: 64, 64>}, {pipeline_mode = #tpu.pipeline_mode<synchronous>, transform_indices = @transform_3, window_bounds = array<i64: 5, 64>}, {pipeline_mode = #tpu.pipeline_mode<synchronous>, transform_indices = @transform_4, window_bounds = array<i64: 128, 96>}, {pipeline_mode = #tpu.pipeline_mode<synchronous>, transform_indices = @transform_5, window_bounds = array<i64: 1, 96>}, {pipeline_mode = #tpu.pipeline_mode<synchronous>, transform_indices = @transform_6, window_bounds = array<i64: 1, 96>}, {pipeline_mode = #tpu.pipeline_mode<synchronous>, transform_indices = @transform_7, window_bounds = array<i64: 1, 96>}, {pipeline_mode = #tpu.pipeline_mode<synchronous>, transform_indices = @transform_8, window_bounds = array<i64: 96, 20>}, {pipeline_mode = #tpu.pipeline_mode<synchronous>, transform_indices = @transform_9, window_bounds = array<i64: 1, 20>}, {pipeline_mode = #tpu.pipeline_mode<synchronous>, transform_indices = @transform_10, window_bounds = array<i64: 20, 2>}, {pipeline_mode = #tpu.pipeline_mode<synchronous>, transform_indices = @transform_11, window_bounds = array<i64: 1, 2>}, {pipeline_mode = #tpu.pipeline_mode<synchronous>, transform_indices = @transform_12, window_bounds = array<i64: 64, 32>}, {pipeline_mode = #tpu.pipeline_mode<synchronous>, transform_indices = @transform_13, window_bounds = array<i64: 64, 128>}, {pipeline_mode = #tpu.pipeline_mode<synchronous>, transform_indices = @transform_14, window_bounds = array<i64: 64, 128>}, {pipeline_mode = #tpu.pipeline_mode<synchronous>, transform_indices = @transform_15, window_bounds = array<i64: 1, 128>}, {pipeline_mode = #tpu.pipeline_mode<synchronous>, transform_indices = @transform_16, window_bounds = array<i64: 1, 128>}, {pipeline_mode = #tpu.pipeline_mode<synchronous>, transform_indices = @transform_17, window_bounds = array<i64: 128, 4>}, {pipeline_mode = #tpu.pipeline_mode<synchronous>, transform_indices = @transform_18, window_bounds = array<i64: 4, 128>}, {transform_indices = @transform_19, window_bounds = array<i64: 1, 8, 128>}]} {
    %c0_i32 = arith.constant 0 : i32
    %0 = arith.cmpi eq, %arg0, %c0_i32 : i32
    %1 = arith.extui %0 : i1 to i32
    %c0_i32_0 = arith.constant 0 : i32
    %2 = arith.cmpi ne, %1, %c0_i32_0 : i32
    scf.if %2 {
      %c0 = arith.constant 0 : index
      %c0_2 = arith.constant 0 : index
      %c0_3 = arith.constant 0 : index
      %6 = vector.load %arg1[%c0, %c0_2, %c0_3] : memref<40x7x32xf32, #tpu.memory_space<vmem>>, vector<40x7x32xf32>
      %c0_4 = arith.constant 0 : index
      %c0_5 = arith.constant 0 : index
      %7 = vector.load %arg2[%c0_4, %c0_5] : memref<40x32xf32, #tpu.memory_space<vmem>>, vector<40x32xf32>
      %8 = vector.shape_cast %7 : vector<40x32xf32> to vector<40x1x32xf32>
      %9 = vector.broadcast %8 : vector<40x1x32xf32> to vector<40x7x32xf32>
      %10 = arith.mulf %6, %9 : vector<40x7x32xf32>
      %cst = arith.constant dense<0.000000e+00> : vector<40x7xf32>
      %11 = vector.multi_reduction <add>, %10, %cst [2] : vector<40x7x32xf32> to vector<40x7xf32>
      %12 = math.tanh %11 : vector<40x7xf32>
      %13 = vector.shape_cast %12 : vector<40x7xf32> to vector<40x7x1xf32>
      %14 = vector.broadcast %13 : vector<40x7x1xf32> to vector<40x7x32xf32>
      %15 = arith.mulf %14, %6 : vector<40x7x32xf32>
      %cst_6 = arith.constant dense<0.000000e+00> : vector<40x32xf32>
      %16 = vector.multi_reduction <add>, %15, %cst_6 [1] : vector<40x7x32xf32> to vector<40x32xf32>
      %17 = tpu.concatenate %16, %7 in 1 : vector<40x32xf32>, vector<40x32xf32> -> vector<40x64xf32>
      %c0_7 = arith.constant 0 : index
      %c0_8 = arith.constant 0 : index
      %18 = vector.load %arg3[%c0_7, %c0_8] : memref<64x64xf32, #tpu.memory_space<vmem>>, vector<64x64xf32>
      %cst_9 = arith.constant dense<0.000000e+00> : vector<40x64xf32>
      %19 = tpu.matmul %17, %18, %cst_9 {dimension_numbers = #tpu.dot_dimension_numbers<[1], [0], [0], [1], [0, 0, 1, 1], [], []>} : vector<40x64xf32>, vector<64x64xf32>, vector<40x64xf32> -> vector<40x64xf32>
      %20 = vector.shape_cast %19 : vector<40x64xf32> to vector<8x5x64xf32>
      %c0_10 = arith.constant 0 : index
      %c0_11 = arith.constant 0 : index
      %21 = vector.load %arg4[%c0_10, %c0_11] : memref<5x64xf32, #tpu.memory_space<vmem>>, vector<5x64xf32>
      %22 = vector.shape_cast %21 : vector<5x64xf32> to vector<1x5x64xf32>
      %23 = vector.broadcast %22 : vector<1x5x64xf32> to vector<8x5x64xf32>
      %24 = arith.addf %20, %23 : vector<8x5x64xf32>
      %25 = math.tanh %24 : vector<8x5x64xf32>
      %26 = vector.extract_strided_slice %25 {offsets = [0, 0, 0], sizes = [8, 5, 32], strides = [1, 1, 1]} : vector<8x5x64xf32> to vector<8x5x32xf32>
      %27 = vector.extract_strided_slice %25 {offsets = [0, 0, 32], sizes = [8, 5, 32], strides = [1, 1, 1]} : vector<8x5x64xf32> to vector<8x5x32xf32>
      "tpu.trace_start"() <{level = 10 : i32, message = "bud,bid->bui"}> : () -> ()
      %cst_12 = arith.constant dense<0.000000e+00> : vector<8x5x5xf32>
      %28 = tpu.matmul %26, %27, %cst_12 {dimension_numbers = #tpu.dot_dimension_numbers<[2], [2], [1], [1], [0, 0, 0, 1, 1, 1], [0], [0]>} : vector<8x5x32xf32>, vector<8x5x32xf32>, vector<8x5x5xf32> -> vector<8x5x5xf32>
      "tpu.trace_stop"() : () -> ()
      %cst_13 = arith.constant dense<0.000000e+00> : vector<5x5xf32>
      %29 = vector.multi_reduction <add>, %28, %cst_13 [0] : vector<8x5x5xf32> to vector<5x5xf32>
      %cst_14 = arith.constant dense<0xFF800000> : vector<8x5xf32>
      %30 = vector.multi_reduction <maximumf>, %28, %cst_14 [1] : vector<8x5x5xf32> to vector<8x5xf32>
      %31 = vector.shape_cast %30 : vector<8x5xf32> to vector<8x1x5xf32>
      %32 = vector.broadcast %31 : vector<8x1x5xf32> to vector<8x5x5xf32>
      %33 = arith.subf %28, %32 : vector<8x5x5xf32>
      %34 = math.exp %33 : vector<8x5x5xf32>
      %cst_15 = arith.constant dense<0.000000e+00> : vector<8x5xf32>
      %35 = vector.multi_reduction <add>, %34, %cst_15 [1] : vector<8x5x5xf32> to vector<8x5xf32>
      %36 = vector.shape_cast %35 : vector<8x5xf32> to vector<8x1x5xf32>
      %37 = tpu.reciprocal %36 {approx = true} : vector<8x1x5xf32> -> vector<8x1x5xf32>
      %38 = vector.broadcast %37 : vector<8x1x5xf32> to vector<8x5x5xf32>
      %39 = arith.mulf %34, %38 : vector<8x5x5xf32>
      %cst_16 = arith.constant dense<0xFF800000> : vector<8x5xf32>
      %40 = vector.multi_reduction <maximumf>, %28, %cst_16 [2] : vector<8x5x5xf32> to vector<8x5xf32>
      %41 = vector.shape_cast %40 : vector<8x5xf32> to vector<8x5x1xf32>
      %42 = vector.broadcast %41 : vector<8x5x1xf32> to vector<8x5x5xf32>
      %43 = arith.subf %28, %42 : vector<8x5x5xf32>
      %44 = math.exp %43 : vector<8x5x5xf32>
      %cst_17 = arith.constant dense<0.000000e+00> : vector<8x5xf32>
      %45 = vector.multi_reduction <add>, %44, %cst_17 [2] : vector<8x5x5xf32> to vector<8x5xf32>
      %46 = vector.shape_cast %45 : vector<8x5xf32> to vector<8x5x1xf32>
      %47 = tpu.reciprocal %46 {approx = true} : vector<8x5x1xf32> -> vector<8x5x1xf32>
      %48 = vector.broadcast %47 : vector<8x5x1xf32> to vector<8x5x5xf32>
      %49 = arith.mulf %44, %48 : vector<8x5x5xf32>
      "tpu.trace_start"() <{level = 10 : i32, message = "bui,bud->bid"}> : () -> ()
      %cst_18 = arith.constant dense<0.000000e+00> : vector<8x5x32xf32>
      %50 = tpu.matmul %39, %26, %cst_18 {dimension_numbers = #tpu.dot_dimension_numbers<[1], [1], [2], [2], [0, 0, 0, 2, 1, 2], [0], [0]>} : vector<8x5x5xf32>, vector<8x5x32xf32>, vector<8x5x32xf32> -> vector<8x5x32xf32>
      "tpu.trace_stop"() : () -> ()
      "tpu.trace_start"() <{level = 10 : i32, message = "bui,bid->bud"}> : () -> ()
      %cst_19 = arith.constant dense<0.000000e+00> : vector<8x5x32xf32>
      %51 = tpu.matmul %49, %27, %cst_19 {dimension_numbers = #tpu.dot_dimension_numbers<[2], [1], [1], [2], [0, 0, 0, 1, 1, 2], [0], [0]>} : vector<8x5x5xf32>, vector<8x5x32xf32>, vector<8x5x32xf32> -> vector<8x5x32xf32>
      "tpu.trace_stop"() : () -> ()
      %cst_20 = arith.constant dense<0.000000e+00> : vector<8x32xf32>
      %52 = vector.multi_reduction <add>, %50, %cst_20 [1] : vector<8x5x32xf32> to vector<8x32xf32>
      %cst_21 = arith.constant dense<0.000000e+00> : vector<8x32xf32>
      %53 = vector.multi_reduction <add>, %51, %cst_21 [1] : vector<8x5x32xf32> to vector<8x32xf32>
      %cst_22 = arith.constant dense<0.000000e+00> : vector<8x32xf32>
      %54 = vector.multi_reduction <add>, %26, %cst_22 [1] : vector<8x5x32xf32> to vector<8x32xf32>
      %cst_23 = arith.constant dense<0.000000e+00> : vector<8x32xf32>
      %55 = vector.multi_reduction <add>, %27, %cst_23 [1] : vector<8x5x32xf32> to vector<8x32xf32>
      %56 = tpu.concatenate %52, %53, %54, %55 in 1 : vector<8x32xf32>, vector<8x32xf32>, vector<8x32xf32>, vector<8x32xf32> -> vector<8x128xf32>
      %c0_24 = arith.constant 0 : index
      %c0_25 = arith.constant 0 : index
      %57 = vector.load %arg5[%c0_24, %c0_25] : memref<128x96xf32, #tpu.memory_space<vmem>>, vector<128x96xf32>
      %cst_26 = arith.constant dense<0.000000e+00> : vector<8x96xf32>
      %58 = tpu.matmul %56, %57, %cst_26 {dimension_numbers = #tpu.dot_dimension_numbers<[1], [0], [0], [1], [0, 0, 1, 1], [], []>} : vector<8x128xf32>, vector<128x96xf32>, vector<8x96xf32> -> vector<8x96xf32>
      %c0_27 = arith.constant 0 : index
      %c0_28 = arith.constant 0 : index
      %59 = vector.load %arg6[%c0_27, %c0_28] : memref<1x96xf32, #tpu.memory_space<vmem>>, vector<1x96xf32>
      %60 = vector.broadcast %59 : vector<1x96xf32> to vector<8x96xf32>
      %61 = arith.addf %58, %60 : vector<8x96xf32>
      %cst_29 = arith.constant dense<0.000000e+00> : vector<96xf32>
      %62 = vector.multi_reduction <add>, %61, %cst_29 [0] : vector<8x96xf32> to vector<96xf32>
      %63 = vector.shape_cast %62 : vector<96xf32> to vector<1x96xf32>
      %cst_30 = arith.constant 8.000000e+00 : f32
      %64 = vector.broadcast %cst_30 : f32 to vector<1x96xf32>
      %65 = arith.divf %63, %64 : vector<1x96xf32>
      %66 = vector.broadcast %65 : vector<1x96xf32> to vector<8x96xf32>
      %67 = arith.subf %61, %66 : vector<8x96xf32>
      %68 = arith.mulf %67, %67 : vector<8x96xf32>
      %cst_31 = arith.constant dense<0.000000e+00> : vector<96xf32>
      %69 = vector.multi_reduction <add>, %68, %cst_31 [0] : vector<8x96xf32> to vector<96xf32>
      %70 = vector.shape_cast %69 : vector<96xf32> to vector<1x96xf32>
      %cst_32 = arith.constant 8.000000e+00 : f32
      %71 = vector.broadcast %cst_32 : f32 to vector<1x96xf32>
      %72 = arith.divf %70, %71 : vector<1x96xf32>
      %73 = vector.broadcast %65 : vector<1x96xf32> to vector<8x96xf32>
      %74 = arith.subf %61, %73 : vector<8x96xf32>
      %cst_33 = arith.constant 9.99999974E-6 : f32
      %75 = vector.broadcast %cst_33 : f32 to vector<1x96xf32>
      %76 = arith.addf %72, %75 : vector<1x96xf32>
      %77 = math.rsqrt %76 : vector<1x96xf32>
      %78 = vector.broadcast %77 : vector<1x96xf32> to vector<8x96xf32>
      %79 = arith.mulf %74, %78 : vector<8x96xf32>
      %c0_34 = arith.constant 0 : index
      %c0_35 = arith.constant 0 : index
      %80 = vector.load %arg7[%c0_34, %c0_35] : memref<1x96xf32, #tpu.memory_space<vmem>>, vector<1x96xf32>
      %81 = vector.broadcast %80 : vector<1x96xf32> to vector<8x96xf32>
      %82 = arith.mulf %79, %81 : vector<8x96xf32>
      %c0_36 = arith.constant 0 : index
      %c0_37 = arith.constant 0 : index
      %83 = vector.load %arg8[%c0_36, %c0_37] : memref<1x96xf32, #tpu.memory_space<vmem>>, vector<1x96xf32>
      %84 = vector.broadcast %83 : vector<1x96xf32> to vector<8x96xf32>
      %85 = arith.addf %82, %84 : vector<8x96xf32>
      %cst_38 = arith.constant 0.000000e+00 : f32
      %86 = vector.broadcast %cst_38 : f32 to vector<8x96xf32>
      %87 = arith.maximumf %85, %86 : vector<8x96xf32>
      %c0_39 = arith.constant 0 : index
      %c0_40 = arith.constant 0 : index
      %88 = vector.load %arg9[%c0_39, %c0_40] : memref<96x20xf32, #tpu.memory_space<vmem>>, vector<96x20xf32>
      %cst_41 = arith.constant dense<0.000000e+00> : vector<8x20xf32>
      %89 = tpu.matmul %87, %88, %cst_41 {dimension_numbers = #tpu.dot_dimension_numbers<[1], [0], [0], [1], [0, 0, 1, 1], [], []>} : vector<8x96xf32>, vector<96x20xf32>, vector<8x20xf32> -> vector<8x20xf32>
      %c0_42 = arith.constant 0 : index
      %c0_43 = arith.constant 0 : index
      %90 = vector.load %arg10[%c0_42, %c0_43] : memref<1x20xf32, #tpu.memory_space<vmem>>, vector<1x20xf32>
      %91 = vector.broadcast %90 : vector<1x20xf32> to vector<8x20xf32>
      %92 = arith.addf %89, %91 : vector<8x20xf32>
      %cst_44 = arith.constant 0.000000e+00 : f32
      %93 = vector.broadcast %cst_44 : f32 to vector<8x20xf32>
      %94 = arith.maximumf %92, %93 : vector<8x20xf32>
      %c0_45 = arith.constant 0 : index
      %c0_46 = arith.constant 0 : index
      %95 = vector.load %arg11[%c0_45, %c0_46] : memref<20x2xf32, #tpu.memory_space<vmem>>, vector<20x2xf32>
      %cst_47 = arith.constant dense<0.000000e+00> : vector<8x2xf32>
      %96 = tpu.matmul %94, %95, %cst_47 {dimension_numbers = #tpu.dot_dimension_numbers<[1], [0], [0], [1], [0, 0, 1, 1], [], []>} : vector<8x20xf32>, vector<20x2xf32>, vector<8x2xf32> -> vector<8x2xf32>
      %c0_48 = arith.constant 0 : index
      %c0_49 = arith.constant 0 : index
      %97 = vector.load %arg12[%c0_48, %c0_49] : memref<1x2xf32, #tpu.memory_space<vmem>>, vector<1x2xf32>
      %98 = vector.broadcast %97 : vector<1x2xf32> to vector<8x2xf32>
      %99 = arith.addf %96, %98 : vector<8x2xf32>
      %cst_50 = arith.constant 0.000000e+00 : f32
      %100 = vector.broadcast %cst_50 : f32 to vector<1x8x128xf32>
      %c0_51 = arith.constant 0 : index
      %c0_52 = arith.constant 0 : index
      %c0_53 = arith.constant 0 : index
      %101 = vector.load %arg20[%c0_51, %c0_52, %c0_53] : memref<1x8x128xf32, #tpu.memory_space<vmem>>, vector<1x8x128xf32>
      tpu.vector_store %arg20[%c0_51, %c0_52, %c0_53], %100 {strides = array<i32>} : memref<1x8x128xf32, #tpu.memory_space<vmem>>, vector<1x8x128xf32>,
      %c0_54 = arith.constant 0 : index
      %c0_55 = arith.constant 0 : index
      %c0_56 = arith.constant 0 : index
      %102 = vector.load %arg20[%c0_54, %c0_55, %c0_56] : memref<1x8x128xf32, #tpu.memory_space<vmem>>, vector<1x8x2xf32>
      %103 = vector.shape_cast %102 : vector<1x8x2xf32> to vector<8x2xf32>
      %104 = vector.shape_cast %99 : vector<8x2xf32> to vector<1x8x2xf32>
      tpu.vector_store %arg20[%c0_54, %c0_55, %c0_56], %104 {strides = array<i32>} : memref<1x8x128xf32, #tpu.memory_space<vmem>>, vector<1x8x2xf32>,
      %c0_57 = arith.constant 0 : index
      %c0_58 = arith.constant 0 : index
      %c8 = arith.constant 8 : index
      %105 = vector.load %arg20[%c0_57, %c0_58, %c8] : memref<1x8x128xf32, #tpu.memory_space<vmem>>, vector<1x5x5xf32>
      %106 = vector.shape_cast %105 : vector<1x5x5xf32> to vector<5x5xf32>
      %107 = vector.shape_cast %29 : vector<5x5xf32> to vector<1x5x5xf32>
      tpu.vector_store %arg20[%c0_57, %c0_58, %c8], %107 {strides = array<i32>} : memref<1x8x128xf32, #tpu.memory_space<vmem>>, vector<1x5x5xf32>,
    } else {
    }
    %c1_i32 = arith.constant 1 : i32
    %3 = arith.cmpi eq, %arg0, %c1_i32 : i32
    %4 = arith.extui %3 : i1 to i32
    %c0_i32_1 = arith.constant 0 : i32
    %5 = arith.cmpi ne, %4, %c0_i32_1 : i32
    scf.if %5 {
      %c0 = arith.constant 0 : index
      %c0_2 = arith.constant 0 : index
      %6 = vector.load %arg13[%c0, %c0_2] : memref<64x32xf32, #tpu.memory_space<vmem>>, vector<64x32xf32>
      %7 = tpu.concatenate %6, %6, %6, %6 in 1 : vector<64x32xf32>, vector<64x32xf32>, vector<64x32xf32>, vector<64x32xf32> -> vector<64x128xf32>
      %c0_3 = arith.constant 0 : index
      %c0_4 = arith.constant 0 : index
      %8 = vector.load %arg14[%c0_3, %c0_4] : memref<64x128xf32, #tpu.memory_space<vmem>>, vector<64x128xf32>
      %c0_5 = arith.constant 0 : index
      %c0_6 = arith.constant 0 : index
      %9 = vector.load %arg15[%c0_5, %c0_6] : memref<64x128xf32, #tpu.memory_space<vmem>>, vector<64x128xf32>
      %c0_7 = arith.constant 0 : index
      %c0_8 = arith.constant 0 : index
      %10 = vector.load %arg16[%c0_7, %c0_8] : memref<1x128xf32, #tpu.memory_space<vmem>>, vector<1x128xf32>
      %c0_9 = arith.constant 0 : index
      %c0_10 = arith.constant 0 : index
      %11 = vector.load %arg17[%c0_9, %c0_10] : memref<1x128xf32, #tpu.memory_space<vmem>>, vector<1x128xf32>
      %c0_11 = arith.constant 0 : index
      %c0_12 = arith.constant 0 : index
      %12 = vector.load %arg18[%c0_11, %c0_12] : memref<128x4xf32, #tpu.memory_space<vmem>>, vector<128x4xf32>
      %c0_13 = arith.constant 0 : index
      %c0_14 = arith.constant 0 : index
      %13 = vector.load %arg19[%c0_13, %c0_14] : memref<4x128xf32, #tpu.memory_space<vmem>>, vector<4x128xf32>
      %14 = vector.broadcast %11 : vector<1x128xf32> to vector<64x128xf32>
      %15 = arith.mulf %14, %7 : vector<64x128xf32>
      %cst = arith.constant dense<0.000000e+00> : vector<64x4xf32>
      %16 = tpu.matmul %15, %12, %cst {dimension_numbers = #tpu.dot_dimension_numbers<[1], [0], [0], [1], [0, 0, 1, 1], [], []>} : vector<64x128xf32>, vector<128x4xf32>, vector<64x4xf32> -> vector<64x4xf32>
      %cst_15 = arith.constant dense<0.000000e+00> : vector<64x128xf32>
      %17 = tpu.matmul %16, %13, %cst_15 {dimension_numbers = #tpu.dot_dimension_numbers<[1], [0], [0], [1], [0, 0, 1, 1], [], []>} : vector<64x4xf32>, vector<4x128xf32>, vector<64x128xf32> -> vector<64x128xf32>
      %18 = vector.broadcast %11 : vector<1x128xf32> to vector<64x128xf32>
      %19 = arith.mulf %18, %17 : vector<64x128xf32>
      %20 = vector.broadcast %11 : vector<1x128xf32> to vector<64x128xf32>
      %21 = arith.mulf %20, %8 : vector<64x128xf32>
      %cst_16 = arith.constant dense<0.000000e+00> : vector<64x4xf32>
      %22 = tpu.matmul %21, %12, %cst_16 {dimension_numbers = #tpu.dot_dimension_numbers<[1], [0], [0], [1], [0, 0, 1, 1], [], []>} : vector<64x128xf32>, vector<128x4xf32>, vector<64x4xf32> -> vector<64x4xf32>
      %cst_17 = arith.constant dense<0.000000e+00> : vector<64x128xf32>
      %23 = tpu.matmul %22, %13, %cst_17 {dimension_numbers = #tpu.dot_dimension_numbers<[1], [0], [0], [1], [0, 0, 1, 1], [], []>} : vector<64x4xf32>, vector<4x128xf32>, vector<64x128xf32> -> vector<64x128xf32>
      %24 = vector.broadcast %11 : vector<1x128xf32> to vector<64x128xf32>
      %25 = arith.mulf %24, %23 : vector<64x128xf32>
      %26 = vector.broadcast %11 : vector<1x128xf32> to vector<64x128xf32>
      %27 = arith.mulf %26, %9 : vector<64x128xf32>
      %cst_18 = arith.constant dense<0.000000e+00> : vector<64x4xf32>
      %28 = tpu.matmul %27, %12, %cst_18 {dimension_numbers = #tpu.dot_dimension_numbers<[1], [0], [0], [1], [0, 0, 1, 1], [], []>} : vector<64x128xf32>, vector<128x4xf32>, vector<64x4xf32> -> vector<64x4xf32>
      %cst_19 = arith.constant dense<0.000000e+00> : vector<64x128xf32>
      %29 = tpu.matmul %28, %13, %cst_19 {dimension_numbers = #tpu.dot_dimension_numbers<[1], [0], [0], [1], [0, 0, 1, 1], [], []>} : vector<64x4xf32>, vector<4x128xf32>, vector<64x128xf32> -> vector<64x128xf32>
      %30 = vector.broadcast %11 : vector<1x128xf32> to vector<64x128xf32>
      %31 = arith.mulf %30, %29 : vector<64x128xf32>
      %32 = vector.broadcast %10 : vector<1x128xf32> to vector<64x128xf32>
      %33 = arith.addf %19, %32 : vector<64x128xf32>
      %34 = arith.subf %33, %25 : vector<64x128xf32>
      %35 = vector.broadcast %10 : vector<1x128xf32> to vector<64x128xf32>
      %36 = arith.addf %19, %35 : vector<64x128xf32>
      %37 = arith.subf %36, %31 : vector<64x128xf32>
      %38 = arith.mulf %34, %34 : vector<64x128xf32>
      %cst_20 = arith.constant dense<0.000000e+00> : vector<64x4xf32>
      %39 = tpu.matmul %38, %12, %cst_20 {dimension_numbers = #tpu.dot_dimension_numbers<[1], [0], [0], [1], [0, 0, 1, 1], [], []>} : vector<64x128xf32>, vector<128x4xf32>, vector<64x4xf32> -> vector<64x4xf32>
      %cst_21 = arith.constant 3.125000e-02 : f32
      %40 = vector.broadcast %cst_21 : f32 to vector<64x4xf32>
      %41 = arith.mulf %39, %40 : vector<64x4xf32>
      %42 = arith.mulf %37, %37 : vector<64x128xf32>
      %cst_22 = arith.constant dense<0.000000e+00> : vector<64x4xf32>
      %43 = tpu.matmul %42, %12, %cst_22 {dimension_numbers = #tpu.dot_dimension_numbers<[1], [0], [0], [1], [0, 0, 1, 1], [], []>} : vector<64x128xf32>, vector<128x4xf32>, vector<64x4xf32> -> vector<64x4xf32>
      %cst_23 = arith.constant 3.125000e-02 : f32
      %44 = vector.broadcast %cst_23 : f32 to vector<64x4xf32>
      %45 = arith.mulf %43, %44 : vector<64x4xf32>
      %46 = math.sqrt %41 : vector<64x4xf32>
      %47 = math.sqrt %45 : vector<64x4xf32>
      %48 = arith.subf %46, %47 : vector<64x4xf32>
      %49 = vector.shape_cast %48 : vector<64x4xf32> to vector<1x64x4xf32>
      %cst_24 = arith.constant dense<0.000000e+00> : vector<1xf32>
      %50 = vector.multi_reduction <add>, %49, %cst_24 [1, 2] : vector<1x64x4xf32> to vector<1xf32>
      %51 = vector.shape_cast %50 : vector<1xf32> to vector<1x1x1xf32>
      %52 = vector.extract %51[0, 0, 0] : f32 from vector<1x1x1xf32>
      %53 = vector.broadcast %52 : f32 to vector<1x1xf32>
      %cst_25 = arith.constant 2.560000e+02 : f32
      %54 = vector.broadcast %cst_25 : f32 to vector<1x1xf32>
      %55 = arith.divf %53, %54 : vector<1x1xf32>
      %cst_26 = arith.constant 0.000000e+00 : f32
      %56 = vector.broadcast %cst_26 : f32 to vector<1x8x128xf32>
      %c0_27 = arith.constant 0 : index
      %c0_28 = arith.constant 0 : index
      %c0_29 = arith.constant 0 : index
      %57 = vector.load %arg20[%c0_27, %c0_28, %c0_29] : memref<1x8x128xf32, #tpu.memory_space<vmem>>, vector<1x8x128xf32>
      tpu.vector_store %arg20[%c0_27, %c0_28, %c0_29], %56 {strides = array<i32>} : memref<1x8x128xf32, #tpu.memory_space<vmem>>, vector<1x8x128xf32>,
      %c0_30 = arith.constant 0 : index
      %c0_31 = arith.constant 0 : index
      %c0_32 = arith.constant 0 : index
      %58 = vector.load %arg20[%c0_30, %c0_31, %c0_32] : memref<1x8x128xf32, #tpu.memory_space<vmem>>, vector<1x1x1xf32>
      %59 = vector.shape_cast %58 : vector<1x1x1xf32> to vector<1x1xf32>
      %60 = vector.shape_cast %55 : vector<1x1xf32> to vector<1x1x1xf32>
      tpu.vector_store %arg20[%c0_30, %c0_31, %c0_32], %60 {strides = array<i32>} : memref<1x8x128xf32, #tpu.memory_space<vmem>>, vector<1x1x1xf32>,
    } else {
    }
    return
  }
  func.func @transform_0(%arg0: i32) -> (i32, i32, i32) {
    %c0_i32 = arith.constant 0 : i32
    %c0_i32_0 = arith.constant 0 : i32
    %c0_i32_1 = arith.constant 0 : i32
    %c0_i32_2 = arith.constant 0 : i32
    return %c0_i32, %c0_i32_0, %c0_i32_1 : i32, i32, i32
  }
  func.func @transform_1(%arg0: i32) -> (i32, i32) {
    %c0_i32 = arith.constant 0 : i32
    %c0_i32_0 = arith.constant 0 : i32
    %c0_i32_1 = arith.constant 0 : i32
    return %c0_i32, %c0_i32_0 : i32, i32
  }
  func.func @transform_2(%arg0: i32) -> (i32, i32) {
    %c0_i32 = arith.constant 0 : i32
    %c0_i32_0 = arith.constant 0 : i32
    %c0_i32_1 = arith.constant 0 : i32
    return %c0_i32, %c0_i32_0 : i32, i32
  }
  func.func @transform_3(%arg0: i32) -> (i32, i32) {
    %c0_i32 = arith.constant 0 : i32
    %c0_i32_0 = arith.constant 0 : i32
    %c0_i32_1 = arith.constant 0 : i32
    return %c0_i32, %c0_i32_0 : i32, i32
  }
  func.func @transform_4(%arg0: i32) -> (i32, i32) {
    %c0_i32 = arith.constant 0 : i32
    %c0_i32_0 = arith.constant 0 : i32
    %c0_i32_1 = arith.constant 0 : i32
    return %c0_i32, %c0_i32_0 : i32, i32
  }
  func.func @transform_5(%arg0: i32) -> (i32, i32) {
    %c0_i32 = arith.constant 0 : i32
    %c0_i32_0 = arith.constant 0 : i32
    %c0_i32_1 = arith.constant 0 : i32
    return %c0_i32, %c0_i32_0 : i32, i32
  }
  func.func @transform_6(%arg0: i32) -> (i32, i32) {
    %c0_i32 = arith.constant 0 : i32
    %c0_i32_0 = arith.constant 0 : i32
    %c0_i32_1 = arith.constant 0 : i32
    return %c0_i32, %c0_i32_0 : i32, i32
  }
  func.func @transform_7(%arg0: i32) -> (i32, i32) {
    %c0_i32 = arith.constant 0 : i32
    %c0_i32_0 = arith.constant 0 : i32
    %c0_i32_1 = arith.constant 0 : i32
    return %c0_i32, %c0_i32_0 : i32, i32
  }
  func.func @transform_8(%arg0: i32) -> (i32, i32) {
    %c0_i32 = arith.constant 0 : i32
    %c0_i32_0 = arith.constant 0 : i32
    %c0_i32_1 = arith.constant 0 : i32
    return %c0_i32, %c0_i32_0 : i32, i32
  }
  func.func @transform_9(%arg0: i32) -> (i32, i32) {
    %c0_i32 = arith.constant 0 : i32
    %c0_i32_0 = arith.constant 0 : i32
    %c0_i32_1 = arith.constant 0 : i32
    return %c0_i32, %c0_i32_0 : i32, i32
  }
  func.func @transform_10(%arg0: i32) -> (i32, i32) {
    %c0_i32 = arith.constant 0 : i32
    %c0_i32_0 = arith.constant 0 : i32
    %c0_i32_1 = arith.constant 0 : i32
    return %c0_i32, %c0_i32_0 : i32, i32
  }
  func.func @transform_11(%arg0: i32) -> (i32, i32) {
    %c0_i32 = arith.constant 0 : i32
    %c0_i32_0 = arith.constant 0 : i32
    %c0_i32_1 = arith.constant 0 : i32
    return %c0_i32, %c0_i32_0 : i32, i32
  }
  func.func @transform_12(%arg0: i32) -> (i32, i32) {
    %c0_i32 = arith.constant 0 : i32
    %c0_i32_0 = arith.constant 0 : i32
    %c0_i32_1 = arith.constant 0 : i32
    return %c0_i32, %c0_i32_0 : i32, i32
  }
  func.func @transform_13(%arg0: i32) -> (i32, i32) {
    %c0_i32 = arith.constant 0 : i32
    %c0_i32_0 = arith.constant 0 : i32
    %c0_i32_1 = arith.constant 0 : i32
    return %c0_i32, %c0_i32_0 : i32, i32
  }
  func.func @transform_14(%arg0: i32) -> (i32, i32) {
    %c0_i32 = arith.constant 0 : i32
    %c0_i32_0 = arith.constant 0 : i32
    %c0_i32_1 = arith.constant 0 : i32
    return %c0_i32, %c0_i32_0 : i32, i32
  }
  func.func @transform_15(%arg0: i32) -> (i32, i32) {
    %c0_i32 = arith.constant 0 : i32
    %c0_i32_0 = arith.constant 0 : i32
    %c0_i32_1 = arith.constant 0 : i32
    return %c0_i32, %c0_i32_0 : i32, i32
  }
  func.func @transform_16(%arg0: i32) -> (i32, i32) {
    %c0_i32 = arith.constant 0 : i32
    %c0_i32_0 = arith.constant 0 : i32
    %c0_i32_1 = arith.constant 0 : i32
    return %c0_i32, %c0_i32_0 : i32, i32
  }
  func.func @transform_17(%arg0: i32) -> (i32, i32) {
    %c0_i32 = arith.constant 0 : i32
    %c0_i32_0 = arith.constant 0 : i32
    %c0_i32_1 = arith.constant 0 : i32
    return %c0_i32, %c0_i32_0 : i32, i32
  }
  func.func @transform_18(%arg0: i32) -> (i32, i32) {
    %c0_i32 = arith.constant 0 : i32
    %c0_i32_0 = arith.constant 0 : i32
    %c0_i32_1 = arith.constant 0 : i32
    return %c0_i32, %c0_i32_0 : i32, i32
  }
  func.func @transform_19(%arg0: i32) -> (i32, i32, i32) {
    %c0_i32 = arith.constant 0 : i32
    %c0_i32_0 = arith.constant 0 : i32
    %c0_i32_1 = arith.constant 0 : i32
    return %arg0, %c0_i32, %c0_i32_0 : i32, i32, i32
  }
}

</mosaic_0001>

<llo_original>
// kernel: kaam_forward.3
$region0: #{kaam_forward.3}
  #allocation0 [shape = 'u32[]', space=smem, size = 0x4, offset = 0x4, fixed_abs, tag = 'smem constant byte address 0x4 - core index']
  #allocation1 [shape = 'u32[144,128]{1,0:T(1,128)}', space=vmem, size = 0x12000, scoped, tag = 'internal scratch']
  %s0 = inlined_call_operand.vmem [shape: f32[40,7,32], index: 0, kind: input, shape index: {}]
  %s1 = inlined_call_operand.vmem [shape: f32[40,32], index: 1, kind: input, shape index: {}]
  %s2 = inlined_call_operand.vmem [shape: f32[64,64], index: 2, kind: input, shape index: {}]
  %s3 = inlined_call_operand.vmem [shape: f32[5,64], index: 3, kind: input, shape index: {}]
  %s4 = inlined_call_operand.vmem [shape: f32[128,96], index: 4, kind: input, shape index: {}]
  %s5 = inlined_call_operand.vmem [shape: f32[1,96], index: 5, kind: input, shape index: {}]
  %s6 = inlined_call_operand.vmem [shape: f32[1,96], index: 6, kind: input, shape index: {}]
  %s7 = inlined_call_operand.vmem [shape: f32[1,96], index: 7, kind: input, shape index: {}]
  %s8 = inlined_call_operand.vmem [shape: f32[96,20], index: 8, kind: input, shape index: {}]
  %s9 = inlined_call_operand.vmem [shape: f32[1,20], index: 9, kind: input, shape index: {}]
  %s10 = inlined_call_operand.vmem [shape: f32[20,2], index: 10, kind: input, shape index: {}]
  %s11 = inlined_call_operand.vmem [shape: f32[1,2], index: 11, kind: input, shape index: {}]
  %s12 = inlined_call_operand.vmem [shape: f32[64,32], index: 12, kind: input, shape index: {}]
  %s13 = inlined_call_operand.vmem [shape: f32[64,128], index: 13, kind: input, shape index: {}]
  %s14 = inlined_call_operand.vmem [shape: f32[64,128], index: 14, kind: input, shape index: {}]
  %s15 = inlined_call_operand.vmem [shape: f32[1,128], index: 15, kind: input, shape index: {}]
  %s16 = inlined_call_operand.vmem [shape: f32[1,128], index: 16, kind: input, shape index: {}]
  %s17 = inlined_call_operand.vmem [shape: f32[128,4], index: 17, kind: input, shape index: {}]
  %s18 = inlined_call_operand.vmem [shape: f32[4,128], index: 18, kind: input, shape index: {}]
  %s19 = inlined_call_operand.vmem [shape: f32[2,8,128], index: 19, kind: output, shape index: {}]
  %s20 = sld [smem:[#allocation0]]
  $region117: #{kaam_forward.3} parent=0
    _
  %s22 = ssub.s32 1, %s20
  %s23 = scalar_select 0, %s22, %s20
  loop: start=0, step=1, limit=4
  $region2: #{kaam_forward.3} parent=0 // loop_pre_header
    _
  $region3: #{kaam_forward.3} parent=0 // loop_header
    %s25 = sphi 0, %s29
    %p26 = scmp.ge.s32.totalorder %s25, 4
    %s33 = sphi 0, %s33
    %s35 = sphi 0, %s33
    %s36 = sphi 0, %s35
    %s50 = sphi 0, %s36
    %s54 = sphi 0, %s54
    %s56 = sphi 0, %s54
    %s57 = sphi 0, %s56
    %s71 = sphi 0, %s57
    %s75 = sphi 0, %s75
    %s77 = sphi 0, %s75
    %s78 = sphi 0, %s77
    %s92 = sphi 0, %s78
    %s96 = sphi 0, %s96
    %s98 = sphi 0, %s96
    %s99 = sphi 0, %s98
    %s113 = sphi 0, %s99
    %s117 = sphi 0, %s117
    %s119 = sphi 0, %s117
    %s120 = sphi 0, %s119
    %s134 = sphi 0, %s120
    %s138 = sphi 0, %s138
    %s140 = sphi 0, %s138
    %s141 = sphi 0, %s140
    %s155 = sphi 0, %s141
    %s159 = sphi 0, %s159
    %s161 = sphi 0, %s159
    %s162 = sphi 0, %s161
    %s176 = sphi 0, %s162
    %s180 = sphi 0, %s180
    %s182 = sphi 0, %s180
    %s183 = sphi 0, %s182
    %s197 = sphi 0, %s183
    %s201 = sphi 0, %s201
    %s203 = sphi 0, %s201
    %s204 = sphi 0, %s203
    %s218 = sphi 0, %s204
    %s222 = sphi 0, %s222
    %s224 = sphi 0, %s222
    %s225 = sphi 0, %s224
    %s239 = sphi 0, %s225
    %s243 = sphi 0, %s243
    %s245 = sphi 0, %s243
    %s246 = sphi 0, %s245
    %s260 = sphi 0, %s246
    %s264 = sphi 0, %s264
    %s266 = sphi 0, %s264
    %s267 = sphi 0, %s266
    %s281 = sphi 0, %s267
    %s285 = sphi 0, %s285
    %s287 = sphi 0, %s285
    %s288 = sphi 0, %s287
    %s302 = sphi 0, %s288
    %s306 = sphi 0, %s306
    %s308 = sphi 0, %s306
    %s309 = sphi 0, %s308
    %s323 = sphi 0, %s309
    %s327 = sphi 0, %s327
    %s329 = sphi 0, %s327
    %s330 = sphi 0, %s329
    %s344 = sphi 0, %s330
    %s348 = sphi 0, %s348
    %s350 = sphi 0, %s348
    %s351 = sphi 0, %s350
    %s365 = sphi 0, %s351
    %s369 = sphi 0, %s369
    %s371 = sphi 0, %s369
    %s372 = sphi 0, %s371
    %s386 = sphi 0, %s372
    %s390 = sphi 0, %s390
    %s392 = sphi 0, %s390
    %s393 = sphi 0, %s392
    %s407 = sphi 0, %s393
    %s411 = sphi 0, %s411
    %s413 = sphi 0, %s411
    %s414 = sphi 0, %s413
    %s428 = sphi 0, %s414
    %s434 = sphi 0, %s436
    %s437 = sphi 0, %s434
    %s438 = sphi 0, %s437
    %s454 = sphi 0, %s438
  $region4: #{kaam_forward.3} parent=0 // loop_header_branch
    %28 = sbr.rel (%p26) target = $region8
  $region5: #{kaam_forward.3} parent=0 // loop_body
    %s30 = ssub.s32 %s25, 1
    %s31 = ssub.s32 %s25, 2
    %s32 = sadd.s32 %s25, 1
    %s34 = sadd.s32 %s33, 1
    %p37 = scmp.eq.s32.totalorder %s25, 1
    %p38 = scmp.ne.s32.totalorder %s33, %s35
    %p39 = scmp.eq.s32.totalorder %s25, 0
    %p40 = por %p38, %p39
    %p41 = scmp.ne.s32.totalorder %s33, %s35
    %p42 = scmp.eq.s32.totalorder %s30, 1
    %p43 = por %p41, %p42
    %p44 = scmp.ne.s32.totalorder %s35, %s36
    %p45 = scmp.eq.s32.totalorder %s30, 0
    %p46 = por %p44, %p45
    %p47 = scmp.ne.s32.totalorder %s35, %s36
    %p48 = scmp.eq.s32.totalorder %s31, 1
    %p49 = por %p47, %p48
    %p51 = scmp.ne.s32.totalorder %s36, %s50
    %p52 = scmp.eq.s32.totalorder %s31, 0
    %p53 = por %p51, %p52
    %s55 = sadd.s32 %s54, 1
    %p58 = scmp.eq.s32.totalorder %s25, 1
    %p59 = scmp.ne.s32.totalorder %s54, %s56
    %p60 = scmp.eq.s32.totalorder %s25, 0
    %p61 = por %p59, %p60
    %p62 = scmp.ne.s32.totalorder %s54, %s56
    %p63 = scmp.eq.s32.totalorder %s30, 1
    %p64 = por %p62, %p63
    %p65 = scmp.ne.s32.totalorder %s56, %s57
    %p66 = scmp.eq.s32.totalorder %s30, 0
    %p67 = por %p65, %p66
    %p68 = scmp.ne.s32.totalorder %s56, %s57
    %p69 = scmp.eq.s32.totalorder %s31, 1
    %p70 = por %p68, %p69
    %p72 = scmp.ne.s32.totalorder %s57, %s71
    %p73 = scmp.eq.s32.totalorder %s31, 0
    %p74 = por %p72, %p73
    %s76 = sadd.s32 %s75, 1
    %p79 = scmp.eq.s32.totalorder %s25, 1
    %p80 = scmp.ne.s32.totalorder %s75, %s77
    %p81 = scmp.eq.s32.totalorder %s25, 0
    %p82 = por %p80, %p81
    %p83 = scmp.ne.s32.totalorder %s75, %s77
    %p84 = scmp.eq.s32.totalorder %s30, 1
    %p85 = por %p83, %p84
    %p86 = scmp.ne.s32.totalorder %s77, %s78
    %p87 = scmp.eq.s32.totalorder %s30, 0
    %p88 = por %p86, %p87
    %p89 = scmp.ne.s32.totalorder %s77, %s78
    %p90 = scmp.eq.s32.totalorder %s31, 1
    %p91 = por %p89, %p90
    %p93 = scmp.ne.s32.totalorder %s78, %s92
    %p94 = scmp.eq.s32.totalorder %s31, 0
    %p95 = por %p93, %p94
    %s97 = sadd.s32 %s96, 1
    %p100 = scmp.eq.s32.totalorder %s25, 1
    %p101 = scmp.ne.s32.totalorder %s96, %s98
    %p102 = scmp.eq.s32.totalorder %s25, 0
    %p103 = por %p101, %p102
    %p104 = scmp.ne.s32.totalorder %s96, %s98
    %p105 = scmp.eq.s32.totalorder %s30, 1
    %p106 = por %p104, %p105
    %p107 = scmp.ne.s32.totalorder %s98, %s99
    %p108 = scmp.eq.s32.totalorder %s30, 0
    %p109 = por %p107, %p108
    %p110 = scmp.ne.s32.totalorder %s98, %s99
    %p111 = scmp.eq.s32.totalorder %s31, 1
    %p112 = por %p110, %p111
    %p114 = scmp.ne.s32.totalorder %s99, %s113
    %p115 = scmp.eq.s32.totalorder %s31, 0
    %p116 = por %p114, %p115
    %s118 = sadd.s32 %s117, 1
    %p121 = scmp.eq.s32.totalorder %s25, 1
    %p122 = scmp.ne.s32.totalorder %s117, %s119
    %p123 = scmp.eq.s32.totalorder %s25, 0
    %p124 = por %p122, %p123
    %p125 = scmp.ne.s32.totalorder %s117, %s119
    %p126 = scmp.eq.s32.totalorder %s30, 1
    %p127 = por %p125, %p126
    %p128 = scmp.ne.s32.totalorder %s119, %s120
    %p129 = scmp.eq.s32.totalorder %s30, 0
    %p130 = por %p128, %p129
    %p131 = scmp.ne.s32.totalorder %s119, %s120
    %p132 = scmp.eq.s32.totalorder %s31, 1
    %p133 = por %p131, %p132
    %p135 = scmp.ne.s32.totalorder %s120, %s134
    %p136 = scmp.eq.s32.totalorder %s31, 0
    %p137 = por %p135, %p136
    %s139 = sadd.s32 %s138, 1
    %p142 = scmp.eq.s32.totalorder %s25, 1
    %p143 = scmp.ne.s32.totalorder %s138, %s140
    %p144 = scmp.eq.s32.totalorder %s25, 0
    %p145 = por %p143, %p144
    %p146 = scmp.ne.s32.totalorder %s138, %s140
    %p147 = scmp.eq.s32.totalorder %s30, 1
    %p148 = por %p146, %p147
    %p149 = scmp.ne.s32.totalorder %s140, %s141
    %p150 = scmp.eq.s32.totalorder %s30, 0
    %p151 = por %p149, %p150
    %p152 = scmp.ne.s32.totalorder %s140, %s141
    %p153 = scmp.eq.s32.totalorder %s31, 1
    %p154 = por %p152, %p153
    %p156 = scmp.ne.s32.totalorder %s141, %s155
    %p157 = scmp.eq.s32.totalorder %s31, 0
    %p158 = por %p156, %p157
    %s160 = sadd.s32 %s159, 1
    %p163 = scmp.eq.s32.totalorder %s25, 1
    %p164 = scmp.ne.s32.totalorder %s159, %s161
    %p165 = scmp.eq.s32.totalorder %s25, 0
    %p166 = por %p164, %p165
    %p167 = scmp.ne.s32.totalorder %s159, %s161
    %p168 = scmp.eq.s32.totalorder %s30, 1
    %p169 = por %p167, %p168
    %p170 = scmp.ne.s32.totalorder %s161, %s162
    %p171 = scmp.eq.s32.totalorder %s30, 0
    %p172 = por %p170, %p171
    %p173 = scmp.ne.s32.totalorder %s161, %s162
    %p174 = scmp.eq.s32.totalorder %s31, 1
    %p175 = por %p173, %p174
    %p177 = scmp.ne.s32.totalorder %s162, %s176
    %p178 = scmp.eq.s32.totalorder %s31, 0
    %p179 = por %p177, %p178
    %s181 = sadd.s32 %s180, 1
    %p184 = scmp.eq.s32.totalorder %s25, 1
    %p185 = scmp.ne.s32.totalorder %s180, %s182
    %p186 = scmp.eq.s32.totalorder %s25, 0
    %p187 = por %p185, %p186
    %p188 = scmp.ne.s32.totalorder %s180, %s182
    %p189 = scmp.eq.s32.totalorder %s30, 1
    %p190 = por %p188, %p189
    %p191 = scmp.ne.s32.totalorder %s182, %s183
    %p192 = scmp.eq.s32.totalorder %s30, 0
    %p193 = por %p191, %p192
    %p194 = scmp.ne.s32.totalorder %s182, %s183
    %p195 = scmp.eq.s32.totalorder %s31, 1
    %p196 = por %p194, %p195
    %p198 = scmp.ne.s32.totalorder %s183, %s197
    %p199 = scmp.eq.s32.totalorder %s31, 0
    %p200 = por %p198, %p199
    %s202 = sadd.s32 %s201, 1
    %p205 = scmp.eq.s32.totalorder %s25, 1
    %p206 = scmp.ne.s32.totalorder %s201, %s203
    %p207 = scmp.eq.s32.totalorder %s25, 0
    %p208 = por %p206, %p207
    %p209 = scmp.ne.s32.totalorder %s201, %s203
    %p210 = scmp.eq.s32.totalorder %s30, 1
    %p211 = por %p209, %p210
    %p212 = scmp.ne.s32.totalorder %s203, %s204
    %p213 = scmp.eq.s32.totalorder %s30, 0
    %p214 = por %p212, %p213
    %p215 = scmp.ne.s32.totalorder %s203, %s204
    %p216 = scmp.eq.s32.totalorder %s31, 1
    %p217 = por %p215, %p216
    %p219 = scmp.ne.s32.totalorder %s204, %s218
    %p220 = scmp.eq.s32.totalorder %s31, 0
    %p221 = por %p219, %p220
    %s223 = sadd.s32 %s222, 1
    %p226 = scmp.eq.s32.totalorder %s25, 1
    %p227 = scmp.ne.s32.totalorder %s222, %s224
    %p228 = scmp.eq.s32.totalorder %s25, 0
    %p229 = por %p227, %p228
    %p230 = scmp.ne.s32.totalorder %s222, %s224
    %p231 = scmp.eq.s32.totalorder %s30, 1
    %p232 = por %p230, %p231
    %p233 = scmp.ne.s32.totalorder %s224, %s225
    %p234 = scmp.eq.s32.totalorder %s30, 0
    %p235 = por %p233, %p234
    %p236 = scmp.ne.s32.totalorder %s224, %s225
    %p237 = scmp.eq.s32.totalorder %s31, 1
    %p238 = por %p236, %p237
    %p240 = scmp.ne.s32.totalorder %s225, %s239
    %p241 = scmp.eq.s32.totalorder %s31, 0
    %p242 = por %p240, %p241
    %s244 = sadd.s32 %s243, 1
    %p247 = scmp.eq.s32.totalorder %s25, 1
    %p248 = scmp.ne.s32.totalorder %s243, %s245
    %p249 = scmp.eq.s32.totalorder %s25, 0
    %p250 = por %p248, %p249
    %p251 = scmp.ne.s32.totalorder %s243, %s245
    %p252 = scmp.eq.s32.totalorder %s30, 1
    %p253 = por %p251, %p252
    %p254 = scmp.ne.s32.totalorder %s245, %s246
    %p255 = scmp.eq.s32.totalorder %s30, 0
    %p256 = por %p254, %p255
    %p257 = scmp.ne.s32.totalorder %s245, %s246
    %p258 = scmp.eq.s32.totalorder %s31, 1
    %p259 = por %p257, %p258
    %p261 = scmp.ne.s32.totalorder %s246, %s260
    %p262 = scmp.eq.s32.totalorder %s31, 0
    %p263 = por %p261, %p262
    %s265 = sadd.s32 %s264, 1
    %p268 = scmp.eq.s32.totalorder %s25, 1
    %p269 = scmp.ne.s32.totalorder %s264, %s266
    %p270 = scmp.eq.s32.totalorder %s25, 0
    %p271 = por %p269, %p270
    %p272 = scmp.ne.s32.totalorder %s264, %s266
    %p273 = scmp.eq.s32.totalorder %s30, 1
    %p274 = por %p272, %p273
    %p275 = scmp.ne.s32.totalorder %s266, %s267
    %p276 = scmp.eq.s32.totalorder %s30, 0
    %p277 = por %p275, %p276
    %p278 = scmp.ne.s32.totalorder %s266, %s267
    %p279 = scmp.eq.s32.totalorder %s31, 1
    %p280 = por %p278, %p279
    %p282 = scmp.ne.s32.totalorder %s267, %s281
    %p283 = scmp.eq.s32.totalorder %s31, 0
    %p284 = por %p282, %p283
    %s286 = sadd.s32 %s285, 1
    %p289 = scmp.eq.s32.totalorder %s25, 1
    %p290 = scmp.ne.s32.totalorder %s285, %s287
    %p291 = scmp.eq.s32.totalorder %s25, 0
    %p292 = por %p290, %p291
    %p293 = scmp.ne.s32.totalorder %s285, %s287
    %p294 = scmp.eq.s32.totalorder %s30, 1
    %p295 = por %p293, %p294
    %p296 = scmp.ne.s32.totalorder %s287, %s288
    %p297 = scmp.eq.s32.totalorder %s30, 0
    %p298 = por %p296, %p297
    %p299 = scmp.ne.s32.totalorder %s287, %s288
    %p300 = scmp.eq.s32.totalorder %s31, 1
    %p301 = por %p299, %p300
    %p303 = scmp.ne.s32.totalorder %s288, %s302
    %p304 = scmp.eq.s32.totalorder %s31, 0
    %p305 = por %p303, %p304
    %s307 = sadd.s32 %s306, 1
    %p310 = scmp.eq.s32.totalorder %s25, 1
    %p311 = scmp.ne.s32.totalorder %s306, %s308
    %p312 = scmp.eq.s32.totalorder %s25, 0
    %p313 = por %p311, %p312
    %p314 = scmp.ne.s32.totalorder %s306, %s308
    %p315 = scmp.eq.s32.totalorder %s30, 1
    %p316 = por %p314, %p315
    %p317 = scmp.ne.s32.totalorder %s308, %s309
    %p318 = scmp.eq.s32.totalorder %s30, 0
    %p319 = por %p317, %p318
    %p320 = scmp.ne.s32.totalorder %s308, %s309
    %p321 = scmp.eq.s32.totalorder %s31, 1
    %p322 = por %p320, %p321
    %p324 = scmp.ne.s32.totalorder %s309, %s323
    %p325 = scmp.eq.s32.totalorder %s31, 0
    %p326 = por %p324, %p325
    %s328 = sadd.s32 %s327, 1
    %p331 = scmp.eq.s32.totalorder %s25, 1
    %p332 = scmp.ne.s32.totalorder %s327, %s329
    %p333 = scmp.eq.s32.totalorder %s25, 0
    %p334 = por %p332, %p333
    %p335 = scmp.ne.s32.totalorder %s327, %s329
    %p336 = scmp.eq.s32.totalorder %s30, 1
    %p337 = por %p335, %p336
    %p338 = scmp.ne.s32.totalorder %s329, %s330
    %p339 = scmp.eq.s32.totalorder %s30, 0
    %p340 = por %p338, %p339
    %p341 = scmp.ne.s32.totalorder %s329, %s330
    %p342 = scmp.eq.s32.totalorder %s31, 1
    %p343 = por %p341, %p342
    %p345 = scmp.ne.s32.totalorder %s330, %s344
    %p346 = scmp.eq.s32.totalorder %s31, 0
    %p347 = por %p345, %p346
    %s349 = sadd.s32 %s348, 1
    %p352 = scmp.eq.s32.totalorder %s25, 1
    %p353 = scmp.ne.s32.totalorder %s348, %s350
    %p354 = scmp.eq.s32.totalorder %s25, 0
    %p355 = por %p353, %p354
    %p356 = scmp.ne.s32.totalorder %s348, %s350
    %p357 = scmp.eq.s32.totalorder %s30, 1
    %p358 = por %p356, %p357
    %p359 = scmp.ne.s32.totalorder %s350, %s351
    %p360 = scmp.eq.s32.totalorder %s30, 0
    %p361 = por %p359, %p360
    %p362 = scmp.ne.s32.totalorder %s350, %s351
    %p363 = scmp.eq.s32.totalorder %s31, 1
    %p364 = por %p362, %p363
    %p366 = scmp.ne.s32.totalorder %s351, %s365
    %p367 = scmp.eq.s32.totalorder %s31, 0
    %p368 = por %p366, %p367
    %s370 = sadd.s32 %s369, 1
    %p373 = scmp.eq.s32.totalorder %s25, 1
    %p374 = scmp.ne.s32.totalorder %s369, %s371
    %p375 = scmp.eq.s32.totalorder %s25, 0
    %p376 = por %p374, %p375
    %p377 = scmp.ne.s32.totalorder %s369, %s371
    %p378 = scmp.eq.s32.totalorder %s30, 1
    %p379 = por %p377, %p378
    %p380 = scmp.ne.s32.totalorder %s371, %s372
    %p381 = scmp.eq.s32.totalorder %s30, 0
    %p382 = por %p380, %p381
    %p383 = scmp.ne.s32.totalorder %s371, %s372
    %p384 = scmp.eq.s32.totalorder %s31, 1
    %p385 = por %p383, %p384
    %p387 = scmp.ne.s32.totalorder %s372, %s386
    %p388 = scmp.eq.s32.totalorder %s31, 0
    %p389 = por %p387, %p388
    %s391 = sadd.s32 %s390, 1
    %p394 = scmp.eq.s32.totalorder %s25, 1
    %p395 = scmp.ne.s32.totalorder %s390, %s392
    %p396 = scmp.eq.s32.totalorder %s25, 0
    %p397 = por %p395, %p396
    %p398 = scmp.ne.s32.totalorder %s390, %s392
    %p399 = scmp.eq.s32.totalorder %s30, 1
    %p400 = por %p398, %p399
    %p401 = scmp.ne.s32.totalorder %s392, %s393
    %p402 = scmp.eq.s32.totalorder %s30, 0
    %p403 = por %p401, %p402
    %p404 = scmp.ne.s32.totalorder %s392, %s393
    %p405 = scmp.eq.s32.totalorder %s31, 1
    %p406 = por %p404, %p405
    %p408 = scmp.ne.s32.totalorder %s393, %s407
    %p409 = scmp.eq.s32.totalorder %s31, 0
    %p410 = por %p408, %p409
    %s412 = sadd.s32 %s411, 1
    %p415 = scmp.eq.s32.totalorder %s25, 1
    %p416 = scmp.ne.s32.totalorder %s411, %s413
    %p417 = scmp.eq.s32.totalorder %s25, 0
    %p418 = por %p416, %p417
    %p419 = scmp.ne.s32.totalorder %s411, %s413
    %p420 = scmp.eq.s32.totalorder %s30, 1
    %p421 = por %p419, %p420
    %p422 = scmp.ne.s32.totalorder %s413, %s414
    %p423 = scmp.eq.s32.totalorder %s30, 0
    %p424 = por %p422, %p423
    %p425 = scmp.ne.s32.totalorder %s413, %s414
    %p426 = scmp.eq.s32.totalorder %s31, 1
    %p427 = por %p425, %p426
    %p429 = scmp.ne.s32.totalorder %s414, %s428
    %p430 = scmp.eq.s32.totalorder %s31, 0
    %p431 = por %p429, %p430
    %s432 = ssub.s32 %s25, %s32
    %p433 = scmp.eq.s32.totalorder %s432, 0
    %s435 = sadd.s32 %s434, 1
    %s436 = scalar_select %p433, %s434, %s435
    %p439 = pneg %p433
    %p440 = scmp.eq.s32.totalorder %s25, 1
    %p441 = por %p439, %p440
    %p442 = scmp.ne.s32.totalorder %s434, %s437
    %p443 = scmp.eq.s32.totalorder %s25, 0
    %p444 = por %p442, %p443
    %p445 = scmp.ne.s32.totalorder %s434, %s437
    %p446 = scmp.eq.s32.totalorder %s30, 1
    %p447 = por %p445, %p446
    %p448 = scmp.ne.s32.totalorder %s437, %s438
    %p449 = scmp.eq.s32.totalorder %s30, 0
    %p450 = por %p448, %p449
    %p451 = scmp.ne.s32.totalorder %s437, %s438
    %p452 = scmp.eq.s32.totalorder %s31, 1
    %p453 = por %p451, %p452
    %p455 = scmp.ne.s32.totalorder %s438, %s454
    %p456 = scmp.eq.s32.totalorder %s31, 0
    %p457 = por %p455, %p456
    %p458 = scmp.le.s32.totalorder 1, %s25
    %p459 = scmp.lt.s32.totalorder %s25, 3
    %p460 = pnand %p458, %p459
    %p461 = pneg %p460
    // Predicated region
    $region9: #{kaam_forward.3} parent=5 // pred_check
      _
    $region10: #{kaam_forward.3} parent=5 // pred_check_branch
      %463 = sbr.rel (%p460) target = $region12
    $region11: #{kaam_forward.3} parent=5 // pred_region
      %s464 = ssub.s32 %s25, 1
      // Predicated region
      $region13: #{kaam_forward.3} parent=11 // pred_check
        %p465 = pneg %p46
      $region14: #{kaam_forward.3} parent=11 // pred_check_branch
        %467 = sbr.rel (%p465) target = $region16
      $region15: #{kaam_forward.3} parent=11 // pred_region
        _
      $region16: #{kaam_forward.3} parent=11 // pred_fallthru
        _
      // Predicated region
      $region17: #{kaam_forward.3} parent=11 // pred_check
        %p468 = pneg %p67
      $region18: #{kaam_forward.3} parent=11 // pred_check_branch
        %470 = sbr.rel (%p468) target = $region20
      $region19: #{kaam_forward.3} parent=11 // pred_region
        _
      $region20: #{kaam_forward.3} parent=11 // pred_fallthru
        _
      // Predicated region
      $region21: #{kaam_forward.3} parent=11 // pred_check
        %p471 = pneg %p88
      $region22: #{kaam_forward.3} parent=11 // pred_check_branch
        %473 = sbr.rel (%p471) target = $region24
      $region23: #{kaam_forward.3} parent=11 // pred_region
        _
      $region24: #{kaam_forward.3} parent=11 // pred_fallthru
        _
      // Predicated region
      $region25: #{kaam_forward.3} parent=11 // pred_check
        %p474 = pneg %p109
      $region26: #{kaam_forward.3} parent=11 // pred_check_branch
        %476 = sbr.rel (%p474) target = $region28
      $region27: #{kaam_forward.3} parent=11 // pred_region
        _
      $region28: #{kaam_forward.3} parent=11 // pred_fallthru
        _
      // Predicated region
      $region29: #{kaam_forward.3} parent=11 // pred_check
        %p477 = pneg %p130
      $region30: #{kaam_forward.3} parent=11 // pred_check_branch
        %479 = sbr.rel (%p477) target = $region32
      $region31: #{kaam_forward.3} parent=11 // pred_region
        _
      $region32: #{kaam_forward.3} parent=11 // pred_fallthru
        _
      // Predicated region
      $region33: #{kaam_forward.3} parent=11 // pred_check
        %p480 = pneg %p151
      $region34: #{kaam_forward.3} parent=11 // pred_check_branch
        %482 = sbr.rel (%p480) target = $region36
      $region35: #{kaam_forward.3} parent=11 // pred_region
        _
      $region36: #{kaam_forward.3} parent=11 // pred_fallthru
        _
      // Predicated region
      $region37: #{kaam_forward.3} parent=11 // pred_check
        %p483 = pneg %p172
      $region38: #{kaam_forward.3} parent=11 // pred_check_branch
        %485 = sbr.rel (%p483) target = $region40
      $region39: #{kaam_forward.3} parent=11 // pred_region
        _
      $region40: #{kaam_forward.3} parent=11 // pred_fallthru
        _
      // Predicated region
      $region41: #{kaam_forward.3} parent=11 // pred_check
        %p486 = pneg %p193
      $region42: #{kaam_forward.3} parent=11 // pred_check_branch
        %488 = sbr.rel (%p486) target = $region44
      $region43: #{kaam_forward.3} parent=11 // pred_region
        _
      $region44: #{kaam_forward.3} parent=11 // pred_fallthru
        _
      // Predicated region
      $region45: #{kaam_forward.3} parent=11 // pred_check
        %p489 = pneg %p214
      $region46: #{kaam_forward.3} parent=11 // pred_check_branch
        %491 = sbr.rel (%p489) target = $region48
      $region47: #{kaam_forward.3} parent=11 // pred_region
        _
      $region48: #{kaam_forward.3} parent=11 // pred_fallthru
        _
      // Predicated region
      $region49: #{kaam_forward.3} parent=11 // pred_check
        %p492 = pneg %p235
      $region50: #{kaam_forward.3} parent=11 // pred_check_branch
        %494 = sbr.rel (%p492) target = $region52
      $region51: #{kaam_forward.3} parent=11 // pred_region
        _
      $region52: #{kaam_forward.3} parent=11 // pred_fallthru
        _
      // Predicated region
      $region53: #{kaam_forward.3} parent=11 // pred_check
        %p495 = pneg %p256
      $region54: #{kaam_forward.3} parent=11 // pred_check_branch
        %497 = sbr.rel (%p495) target = $region56
      $region55: #{kaam_forward.3} parent=11 // pred_region
        _
      $region56: #{kaam_forward.3} parent=11 // pred_fallthru
        _
      // Predicated region
      $region57: #{kaam_forward.3} parent=11 // pred_check
        %p498 = pneg %p277
      $region58: #{kaam_forward.3} parent=11 // pred_check_branch
        %500 = sbr.rel (%p498) target = $region60
      $region59: #{kaam_forward.3} parent=11 // pred_region
        _
      $region60: #{kaam_forward.3} parent=11 // pred_fallthru
        _
      // Predicated region
      $region61: #{kaam_forward.3} parent=11 // pred_check
        %p501 = pneg %p298
      $region62: #{kaam_forward.3} parent=11 // pred_check_branch
        %503 = sbr.rel (%p501) target = $region64
      $region63: #{kaam_forward.3} parent=11 // pred_region
        _
      $region64: #{kaam_forward.3} parent=11 // pred_fallthru
        _
      // Predicated region
      $region65: #{kaam_forward.3} parent=11 // pred_check
        %p504 = pneg %p319
      $region66: #{kaam_forward.3} parent=11 // pred_check_branch
        %506 = sbr.rel (%p504) target = $region68
      $region67: #{kaam_forward.3} parent=11 // pred_region
        _
      $region68: #{kaam_forward.3} parent=11 // pred_fallthru
        _
      // Predicated region
      $region69: #{kaam_forward.3} parent=11 // pred_check
        %p507 = pneg %p340
      $region70: #{kaam_forward.3} parent=11 // pred_check_branch
        %509 = sbr.rel (%p507) target = $region72
      $region71: #{kaam_forward.3} parent=11 // pred_region
        _
      $region72: #{kaam_forward.3} parent=11 // pred_fallthru
        _
      // Predicated region
      $region73: #{kaam_forward.3} parent=11 // pred_check
        %p510 = pneg %p361
      $region74: #{kaam_forward.3} parent=11 // pred_check_branch
        %512 = sbr.rel (%p510) target = $region76
      $region75: #{kaam_forward.3} parent=11 // pred_region
        _
      $region76: #{kaam_forward.3} parent=11 // pred_fallthru
        _
      // Predicated region
      $region77: #{kaam_forward.3} parent=11 // pred_check
        %p513 = pneg %p382
      $region78: #{kaam_forward.3} parent=11 // pred_check_branch
        %515 = sbr.rel (%p513) target = $region80
      $region79: #{kaam_forward.3} parent=11 // pred_region
        _
      $region80: #{kaam_forward.3} parent=11 // pred_fallthru
        _
      // Predicated region
      $region81: #{kaam_forward.3} parent=11 // pred_check
        %p516 = pneg %p403
      $region82: #{kaam_forward.3} parent=11 // pred_check_branch
        %518 = sbr.rel (%p516) target = $region84
      $region83: #{kaam_forward.3} parent=11 // pred_region
        _
      $region84: #{kaam_forward.3} parent=11 // pred_fallthru
        _
      // Predicated region
      $region85: #{kaam_forward.3} parent=11 // pred_check
        %p519 = pneg %p424
      $region86: #{kaam_forward.3} parent=11 // pred_check_branch
        %521 = sbr.rel (%p519) target = $region88
      $region87: #{kaam_forward.3} parent=11 // pred_region
        _
      $region88: #{kaam_forward.3} parent=11 // pred_fallthru
        _
    $region12: #{kaam_forward.3} parent=5 // pred_fallthru
      _
    %p522 = scmp.lt.s32.totalorder %s25, 2
    // Predicated region
    $region89: #{kaam_forward.3} parent=5 // pred_check
      %p523 = pneg %p522
    $region90: #{kaam_forward.3} parent=5 // pred_check_branch
      %525 = sbr.rel (%p523) target = $region92
    $region91: #{kaam_forward.3} parent=5 // pred_region
      _
    $region92: #{kaam_forward.3} parent=5 // pred_fallthru
      _
    %p526 = scmp.le.s32.totalorder 1, %s25
    %p527 = scmp.lt.s32.totalorder %s25, 3
    %p528 = pnand %p526, %p527
    %p529 = pneg %p528
    // Predicated region
    $region93: #{kaam_forward.3} parent=5 // pred_check
      _
    $region94: #{kaam_forward.3} parent=5 // pred_check_branch
      %531 = sbr.rel (%p528) target = $region96
    $region95: #{kaam_forward.3} parent=5 // pred_region
      %s532 = ssub.s32 %s25, 1
      %p533 = pneg %p46
      %p534 = pneg %p43
      %p535 = pneg %p67
      %p536 = pneg %p64
      %p537 = pneg %p88
      %p538 = pneg %p85
      %p539 = pneg %p109
      %p540 = pneg %p106
      %p541 = pneg %p130
      %p542 = pneg %p127
      %p543 = pneg %p151
      %p544 = pneg %p148
      %p545 = pneg %p172
      %p546 = pneg %p169
      %p547 = pneg %p193
      %p548 = pneg %p190
      %p549 = pneg %p214
      %p550 = pneg %p211
      %p551 = pneg %p235
      %p552 = pneg %p232
      %p553 = pneg %p256
      %p554 = pneg %p253
      %p555 = pneg %p277
      %p556 = pneg %p274
      %p557 = pneg %p298
      %p558 = pneg %p295
      %p559 = pneg %p319
      %p560 = pneg %p316
      %p561 = pneg %p340
      %p562 = pneg %p337
      %p563 = pneg %p361
      %p564 = pneg %p358
      %p565 = pneg %p382
      %p566 = pneg %p379
      %p567 = pneg %p403
      %p568 = pneg %p400
      %p569 = pneg %p424
      %p570 = pneg %p421
      %p571 = pneg %p450
      %p572 = pneg %p447
      %p573 = scmp.lt.s32.totalorder %s30, 1
      %s574 = scalar_select %p573, %s30, 1
      %s575 = smul.addr %s574, 8
      %s576 = scalar_lea.vmem %s19, %s575
      %p577 = scmp.lt.s32.totalorder %s30, 1
      %s578 = scalar_select %p577, %s30, 1
      %s579 = smul.addr %s578, 8
      %s580 = scalar_lea.vmem %s19, %s579
      %p581 = scmp.eq.s32.totalorder %s30, 0
      // Predicated region
      $region97: #{kaam_forward.3} parent=95 // pred_check
        %p582 = pneg %p581
      $region98: #{kaam_forward.3} parent=95 // pred_check_branch
        %584 = sbr.rel (%p582) target = $region100
      $region99: #{kaam_forward.3} parent=95 // pred_region
        %v585 = vld [vmem:[%s0] sm:$0x7f]
        %v586 = vld [vmem:[%s0 + $0x8] sm:$0x7f]
        %v587 = vld [vmem:[%s0 + $0x10] sm:$0x7f]
        %v588 = vld [vmem:[%s0 + $0x18] sm:$0x7f]
        %v589 = vld [vmem:[%s0 + $0x20] sm:$0x7f]
        %v590 = vld [vmem:[%s0 + $0x28] sm:$0x7f]
        %v591 = vld [vmem:[%s0 + $0x30] sm:$0x7f]
        %v592 = vld [vmem:[%s0 + $0x38] sm:$0x7f]
        %v593 = vld [vmem:[%s0 + $0x40] sm:$0x7f]
        %v594 = vld [vmem:[%s0 + $0x48] sm:$0x7f]
        %v595 = vld [vmem:[%s0 + $0x50] sm:$0x7f]
        %v596 = vld [vmem:[%s0 + $0x58] sm:$0x7f]
        %v597 = vld [vmem:[%s0 + $0x60] sm:$0x7f]
        %v598 = vld [vmem:[%s0 + $0x68] sm:$0x7f]
        %v599 = vld [vmem:[%s0 + $0x70] sm:$0x7f]
        %v600 = vld [vmem:[%s0 + $0x78] sm:$0x7f]
        %v601 = vld [vmem:[%s0 + $0x80] sm:$0x7f]
        %v602 = vld [vmem:[%s0 + $0x88] sm:$0x7f]
        %v603 = vld [vmem:[%s0 + $0x90] sm:$0x7f]
        %v604 = vld [vmem:[%s0 + $0x98] sm:$0x7f]
        %v605 = vld [vmem:[%s0 + $0xa0] sm:$0x7f]
        %v606 = vld [vmem:[%s0 + $0xa8] sm:$0x7f]
        %v607 = vld [vmem:[%s0 + $0xb0] sm:$0x7f]
        %v608 = vld [vmem:[%s0 + $0xb8] sm:$0x7f]
        %v609 = vld [vmem:[%s0 + $0xc0] sm:$0x7f]
        %v610 = vld [vmem:[%s0 + $0xc8] sm:$0x7f]
        %v611 = vld [vmem:[%s0 + $0xd0] sm:$0x7f]
        %v612 = vld [vmem:[%s0 + $0xd8] sm:$0x7f]
        %v613 = vld [vmem:[%s0 + $0xe0] sm:$0x7f]
        %v614 = vld [vmem:[%s0 + $0xe8] sm:$0x7f]
        %v615 = vld [vmem:[%s0 + $0xf0] sm:$0x7f]
        %v616 = vld [vmem:[%s0 + $0xf8] sm:$0x7f]
        %v617 = vld [vmem:[%s0 + $0x100] sm:$0x7f]
        %v618 = vld [vmem:[%s0 + $0x108] sm:$0x7f]
        %v619 = vld [vmem:[%s0 + $0x110] sm:$0x7f]
        %v620 = vld [vmem:[%s0 + $0x118] sm:$0x7f]
        %v621 = vld [vmem:[%s0 + $0x120] sm:$0x7f]
        %v622 = vld [vmem:[%s0 + $0x128] sm:$0x7f]
        %v623 = vld [vmem:[%s0 + $0x130] sm:$0x7f]
        %v624 = vld [vmem:[%s0 + $0x138] sm:$0x7f]
        %v625 = vld [vmem:[%s1] sm:$0xff]
        %v626 = vld [vmem:[%s1 + $0x8] sm:$0xff]
        %v627 = vld [vmem:[%s1 + $0x10] sm:$0xff]
        %v628 = vld [vmem:[%s1 + $0x18] sm:$0xff]
        %v629 = vld [vmem:[%s1 + $0x20] sm:$0xff]
        %v635 = vcombine.high %v625, %v625
        %v637 = vunpack.c.l.s4 1966171168
        %v638 = vunpack.c.0.s8 %v637
        %v639 = vlaneseq
        %v640 = vshrl.u32 %v639, 7
        %v641 = vsub.s32 %v638, %v640
        %v642 = vrot.slane %v625, %v641
        %v644 = vunpack.c.l.s4 1966171168
        %v645 = vunpack.c.0.s8 %v644
        %v646 = vlaneseq
        %v647 = vshrl.u32 %v646, 7
        %v648 = vsub.s32 %v645, %v647
        %v649 = vrot.slane %v635, %v648
        %v650 = vcombine.high %v642, %v642
        %v651 = vcombine.high %v649, %v649
        %v653 = vunpack.c.l.s4 1966171168
        %v654 = vunpack.c.0.s8 %v653
        %v655 = vlaneseq
        %v656 = vshrl.u32 %v655, 7
        %v657 = vsub.s32 %v654, %v656
        %v658 = vrot.slane %v642, %v657
        %v660 = vunpack.c.l.s4 1966171168
        %v661 = vunpack.c.0.s8 %v660
        %v662 = vlaneseq
        %v663 = vshrl.u32 %v662, 7
        %v664 = vsub.s32 %v661, %v663
        %v665 = vrot.slane %v649, %v664
        %v667 = vunpack.c.l.s4 1966171168
        %v668 = vunpack.c.0.s8 %v667
        %v669 = vlaneseq
        %v670 = vshrl.u32 %v669, 7
        %v671 = vsub.s32 %v668, %v670
        %v672 = vrot.slane %v650, %v671
        %v674 = vunpack.c.l.s4 1966171168
        %v675 = vunpack.c.0.s8 %v674
        %v676 = vlaneseq
        %v677 = vshrl.u32 %v676, 7
        %v678 = vsub.s32 %v675, %v677
        %v679 = vrot.slane %v651, %v678
        %v680 = vcombine.high %v658, %v658
        %v681 = vcombine.high %v665, %v665
        %v682 = vcombine.high %v672, %v672
        %v683 = vcombine.high %v679, %v679
        %v684 = vcombine.high %v626, %v626
        %v686 = vunpack.c.l.s4 1966171168
        %v687 = vunpack.c.0.s8 %v686
        %v688 = vlaneseq
        %v689 = vshrl.u32 %v688, 7
        %v690 = vsub.s32 %v687, %v689
        %v691 = vrot.slane %v626, %v690
        %v693 = vunpack.c.l.s4 1966171168
        %v694 = vunpack.c.0.s8 %v693
        %v695 = vlaneseq
        %v696 = vshrl.u32 %v695, 7
        %v697 = vsub.s32 %v694, %v696
        %v698 = vrot.slane %v684, %v697
        %v699 = vcombine.high %v691, %v691
        %v700 = vcombine.high %v698, %v698
        %v702 = vunpack.c.l.s4 1966171168
        %v703 = vunpack.c.0.s8 %v702
        %v704 = vlaneseq
        %v705 = vshrl.u32 %v704, 7
        %v706 = vsub.s32 %v703, %v705
        %v707 = vrot.slane %v691, %v706
        %v709 = vunpack.c.l.s4 1966171168
        %v710 = vunpack.c.0.s8 %v709
        %v711 = vlaneseq
        %v712 = vshrl.u32 %v711, 7
        %v713 = vsub.s32 %v710, %v712
        %v714 = vrot.slane %v698, %v713
        %v716 = vunpack.c.l.s4 1966171168
        %v717 = vunpack.c.0.s8 %v716
        %v718 = vlaneseq
        %v719 = vshrl.u32 %v718, 7
        %v720 = vsub.s32 %v717, %v719
        %v721 = vrot.slane %v699, %v720
        %v723 = vunpack.c.l.s4 1966171168
        %v724 = vunpack.c.0.s8 %v723
        %v725 = vlaneseq
        %v726 = vshrl.u32 %v725, 7
        %v727 = vsub.s32 %v724, %v726
        %v728 = vrot.slane %v700, %v727
        %v729 = vcombine.high %v707, %v707
        %v730 = vcombine.high %v714, %v714
        %v731 = vcombine.high %v721, %v721
        %v732 = vcombine.high %v728, %v728
        %v733 = vcombine.high %v627, %v627
        %v735 = vunpack.c.l.s4 1966171168
        %v736 = vunpack.c.0.s8 %v735
        %v737 = vlaneseq
        %v738 = vshrl.u32 %v737, 7
        %v739 = vsub.s32 %v736, %v738
        %v740 = vrot.slane %v627, %v739
        %v742 = vunpack.c.l.s4 1966171168
        %v743 = vunpack.c.0.s8 %v742
        %v744 = vlaneseq
        %v745 = vshrl.u32 %v744, 7
        %v746 = vsub.s32 %v743, %v745
        %v747 = vrot.slane %v733, %v746
        %v748 = vcombine.high %v740, %v740
        %v749 = vcombine.high %v747, %v747
        %v751 = vunpack.c.l.s4 1966171168
        %v752 = vunpack.c.0.s8 %v751
        %v753 = vlaneseq
        %v754 = vshrl.u32 %v753, 7
        %v755 = vsub.s32 %v752, %v754
        %v756 = vrot.slane %v740, %v755
        %v758 = vunpack.c.l.s4 1966171168
        %v759 = vunpack.c.0.s8 %v758
        %v760 = vlaneseq
        %v761 = vshrl.u32 %v760, 7
        %v762 = vsub.s32 %v759, %v761
        %v763 = vrot.slane %v747, %v762
        %v765 = vunpack.c.l.s4 1966171168
        %v766 = vunpack.c.0.s8 %v765
        %v767 = vlaneseq
        %v768 = vshrl.u32 %v767, 7
        %v769 = vsub.s32 %v766, %v768
        %v770 = vrot.slane %v748, %v769
        %v772 = vunpack.c.l.s4 1966171168
        %v773 = vunpack.c.0.s8 %v772
        %v774 = vlaneseq
        %v775 = vshrl.u32 %v774, 7
        %v776 = vsub.s32 %v773, %v775
        %v777 = vrot.slane %v749, %v776
        %v778 = vcombine.high %v756, %v756
        %v779 = vcombine.high %v763, %v763
        %v780 = vcombine.high %v770, %v770
        %v781 = vcombine.high %v777, %v777
        %v782 = vcombine.high %v628, %v628
        %v784 = vunpack.c.l.s4 1966171168
        %v785 = vunpack.c.0.s8 %v784
        %v786 = vlaneseq
        %v787 = vshrl.u32 %v786, 7
        %v788 = vsub.s32 %v785, %v787
        %v789 = vrot.slane %v628, %v788
        %v791 = vunpack.c.l.s4 1966171168
        %v792 = vunpack.c.0.s8 %v791
        %v793 = vlaneseq
        %v794 = vshrl.u32 %v793, 7
        %v795 = vsub.s32 %v792, %v794
        %v796 = vrot.slane %v782, %v795
        %v797 = vcombine.high %v789, %v789
        %v798 = vcombine.high %v796, %v796
        %v800 = vunpack.c.l.s4 1966171168
        %v801 = vunpack.c.0.s8 %v800
        %v802 = vlaneseq
        %v803 = vshrl.u32 %v802, 7
        %v804 = vsub.s32 %v801, %v803
        %v805 = vrot.slane %v789, %v804
        %v807 = vunpack.c.l.s4 1966171168
        %v808 = vunpack.c.0.s8 %v807
        %v809 = vlaneseq
        %v810 = vshrl.u32 %v809, 7
        %v811 = vsub.s32 %v808, %v810
        %v812 = vrot.slane %v796, %v811
        %v814 = vunpack.c.l.s4 1966171168
        %v815 = vunpack.c.0.s8 %v814
        %v816 = vlaneseq
        %v817 = vshrl.u32 %v816, 7
        %v818 = vsub.s32 %v815, %v817
        %v819 = vrot.slane %v797, %v818
        %v821 = vunpack.c.l.s4 1966171168
        %v822 = vunpack.c.0.s8 %v821
        %v823 = vlaneseq
        %v824 = vshrl.u32 %v823, 7
        %v825 = vsub.s32 %v822, %v824
        %v826 = vrot.slane %v798, %v825
        %v827 = vcombine.high %v805, %v805
        %v828 = vcombine.high %v812, %v812
        %v829 = vcombine.high %v819, %v819
        %v830 = vcombine.high %v826, %v826
        %v831 = vcombine.high %v629, %v629
        %v833 = vunpack.c.l.s4 1966171168
        %v834 = vunpack.c.0.s8 %v833
        %v835 = vlaneseq
        %v836 = vshrl.u32 %v835, 7
        %v837 = vsub.s32 %v834, %v836
        %v838 = vrot.slane %v629, %v837
        %v840 = vunpack.c.l.s4 1966171168
        %v841 = vunpack.c.0.s8 %v840
        %v842 = vlaneseq
        %v843 = vshrl.u32 %v842, 7
        %v844 = vsub.s32 %v841, %v843
        %v845 = vrot.slane %v831, %v844
        %v846 = vcombine.high %v838, %v838
        %v847 = vcombine.high %v845, %v845
        %v849 = vunpack.c.l.s4 1966171168
        %v850 = vunpack.c.0.s8 %v849
        %v851 = vlaneseq
        %v852 = vshrl.u32 %v851, 7
        %v853 = vsub.s32 %v850, %v852
        %v854 = vrot.slane %v838, %v853
        %v856 = vunpack.c.l.s4 1966171168
        %v857 = vunpack.c.0.s8 %v856
        %v858 = vlaneseq
        %v859 = vshrl.u32 %v858, 7
        %v860 = vsub.s32 %v857, %v859
        %v861 = vrot.slane %v845, %v860
        %v863 = vunpack.c.l.s4 1966171168
        %v864 = vunpack.c.0.s8 %v863
        %v865 = vlaneseq
        %v866 = vshrl.u32 %v865, 7
        %v867 = vsub.s32 %v864, %v866
        %v868 = vrot.slane %v846, %v867
        %v870 = vunpack.c.l.s4 1966171168
        %v871 = vunpack.c.0.s8 %v870
        %v872 = vlaneseq
        %v873 = vshrl.u32 %v872, 7
        %v874 = vsub.s32 %v871, %v873
        %v875 = vrot.slane %v847, %v874
        %v876 = vcombine.high %v854, %v854
        %v877 = vcombine.high %v861, %v861
        %v878 = vcombine.high %v868, %v868
        %v879 = vcombine.high %v875, %v875
        %v880 = vlaneseq
        %v881 = vshrl.u32 %v880, 7
        %v882 = vsub.s32 0, %v881
        %v883 = vrot.slane %v658, %v882
        %v884 = vlaneseq
        %v885 = vshrl.u32 %v884, 7
        %v886 = vsub.s32 0, %v885
        %v887 = vrot.slane %v672, %v886
        %v888 = vlaneseq
        %v889 = vshrl.u32 %v888, 7
        %v890 = vsub.s32 0, %v889
        %v891 = vrot.slane %v680, %v890
        %v892 = vlaneseq
        %v893 = vshrl.u32 %v892, 7
        %v894 = vsub.s32 0, %v893
        %v895 = vrot.slane %v682, %v894
        %v896 = vlaneseq
        %v897 = vshrl.u32 %v896, 7
        %v898 = vsub.s32 0, %v897
        %v899 = vrot.slane %v665, %v898
        %v900 = vlaneseq
        %v901 = vshrl.u32 %v900, 7
        %v902 = vsub.s32 0, %v901
        %v903 = vrot.slane %v679, %v902
        %v904 = vlaneseq
        %v905 = vshrl.u32 %v904, 7
        %v906 = vsub.s32 0, %v905
        %v907 = vrot.slane %v681, %v906
        %v908 = vlaneseq
        %v909 = vshrl.u32 %v908, 7
        %v910 = vsub.s32 0, %v909
        %v911 = vrot.slane %v683, %v910
        %v912 = vlaneseq
        %v913 = vshrl.u32 %v912, 7
        %v914 = vsub.s32 0, %v913
        %v915 = vrot.slane %v707, %v914
        %v916 = vlaneseq
        %v917 = vshrl.u32 %v916, 7
        %v918 = vsub.s32 0, %v917
        %v919 = vrot.slane %v721, %v918
        %v920 = vlaneseq
        %v921 = vshrl.u32 %v920, 7
        %v922 = vsub.s32 0, %v921
        %v923 = vrot.slane %v729, %v922
        %v924 = vlaneseq
        %v925 = vshrl.u32 %v924, 7
        %v926 = vsub.s32 0, %v925
        %v927 = vrot.slane %v731, %v926
        %v928 = vlaneseq
        %v929 = vshrl.u32 %v928, 7
        %v930 = vsub.s32 0, %v929
        %v931 = vrot.slane %v714, %v930
        %v932 = vlaneseq
        %v933 = vshrl.u32 %v932, 7
        %v934 = vsub.s32 0, %v933
        %v935 = vrot.slane %v728, %v934
        %v936 = vlaneseq
        %v937 = vshrl.u32 %v936, 7
        %v938 = vsub.s32 0, %v937
        %v939 = vrot.slane %v730, %v938
        %v940 = vlaneseq
        %v941 = vshrl.u32 %v940, 7
        %v942 = vsub.s32 0, %v941
        %v943 = vrot.slane %v732, %v942
        %v944 = vlaneseq
        %v945 = vshrl.u32 %v944, 7
        %v946 = vsub.s32 0, %v945
        %v947 = vrot.slane %v756, %v946
        %v948 = vlaneseq
        %v949 = vshrl.u32 %v948, 7
        %v950 = vsub.s32 0, %v949
        %v951 = vrot.slane %v770, %v950
        %v952 = vlaneseq
        %v953 = vshrl.u32 %v952, 7
        %v954 = vsub.s32 0, %v953
        %v955 = vrot.slane %v778, %v954
        %v956 = vlaneseq
        %v957 = vshrl.u32 %v956, 7
        %v958 = vsub.s32 0, %v957
        %v959 = vrot.slane %v780, %v958
        %v960 = vlaneseq
        %v961 = vshrl.u32 %v960, 7
        %v962 = vsub.s32 0, %v961
        %v963 = vrot.slane %v763, %v962
        %v964 = vlaneseq
        %v965 = vshrl.u32 %v964, 7
        %v966 = vsub.s32 0, %v965
        %v967 = vrot.slane %v777, %v966
        %v968 = vlaneseq
        %v969 = vshrl.u32 %v968, 7
        %v970 = vsub.s32 0, %v969
        %v971 = vrot.slane %v779, %v970
        %v972 = vlaneseq
        %v973 = vshrl.u32 %v972, 7
        %v974 = vsub.s32 0, %v973
        %v975 = vrot.slane %v781, %v974
        %v976 = vlaneseq
        %v977 = vshrl.u32 %v976, 7
        %v978 = vsub.s32 0, %v977
        %v979 = vrot.slane %v805, %v978
        %v980 = vlaneseq
        %v981 = vshrl.u32 %v980, 7
        %v982 = vsub.s32 0, %v981
        %v983 = vrot.slane %v819, %v982
        %v984 = vlaneseq
        %v985 = vshrl.u32 %v984, 7
        %v986 = vsub.s32 0, %v985
        %v987 = vrot.slane %v827, %v986
        %v988 = vlaneseq
        %v989 = vshrl.u32 %v988, 7
        %v990 = vsub.s32 0, %v989
        %v991 = vrot.slane %v829, %v990
        %v992 = vlaneseq
        %v993 = vshrl.u32 %v992, 7
        %v994 = vsub.s32 0, %v993
        %v995 = vrot.slane %v812, %v994
        %v996 = vlaneseq
        %v997 = vshrl.u32 %v996, 7
        %v998 = vsub.s32 0, %v997
        %v999 = vrot.slane %v826, %v998
        %v1000 = vlaneseq
        %v1001 = vshrl.u32 %v1000, 7
        %v1002 = vsub.s32 0, %v1001
        %v1003 = vrot.slane %v828, %v1002
        %v1004 = vlaneseq
        %v1005 = vshrl.u32 %v1004, 7
        %v1006 = vsub.s32 0, %v1005
        %v1007 = vrot.slane %v830, %v1006
        %v1008 = vlaneseq
        %v1009 = vshrl.u32 %v1008, 7
        %v1010 = vsub.s32 0, %v1009
        %v1011 = vrot.slane %v854, %v1010
        %v1012 = vlaneseq
        %v1013 = vshrl.u32 %v1012, 7
        %v1014 = vsub.s32 0, %v1013
        %v1015 = vrot.slane %v868, %v1014
        %v1016 = vlaneseq
        %v1017 = vshrl.u32 %v1016, 7
        %v1018 = vsub.s32 0, %v1017
        %v1019 = vrot.slane %v876, %v1018
        %v1020 = vlaneseq
        %v1021 = vshrl.u32 %v1020, 7
        %v1022 = vsub.s32 0, %v1021
        %v1023 = vrot.slane %v878, %v1022
        %v1024 = vlaneseq
        %v1025 = vshrl.u32 %v1024, 7
        %v1026 = vsub.s32 0, %v1025
        %v1027 = vrot.slane %v861, %v1026
        %v1028 = vlaneseq
        %v1029 = vshrl.u32 %v1028, 7
        %v1030 = vsub.s32 0, %v1029
        %v1031 = vrot.slane %v875, %v1030
        %v1032 = vlaneseq
        %v1033 = vshrl.u32 %v1032, 7
        %v1034 = vsub.s32 0, %v1033
        %v1035 = vrot.slane %v877, %v1034
        %v1036 = vlaneseq
        %v1037 = vshrl.u32 %v1036, 7
        %v1038 = vsub.s32 0, %v1037
        %v1039 = vrot.slane %v879, %v1038
        %v1080 = vmul.f32 %v585, %v883
        %v1081 = vmul.f32 %v586, %v887
        %v1082 = vmul.f32 %v587, %v891
        %v1083 = vmul.f32 %v588, %v895
        %v1084 = vmul.f32 %v589, %v899
        %v1085 = vmul.f32 %v590, %v903
        %v1086 = vmul.f32 %v591, %v907
        %v1087 = vmul.f32 %v592, %v911
        %v1088 = vmul.f32 %v593, %v915
        %v1089 = vmul.f32 %v594, %v919
        %v1090 = vmul.f32 %v595, %v923
        %v1091 = vmul.f32 %v596, %v927
        %v1092 = vmul.f32 %v597, %v931
        %v1093 = vmul.f32 %v598, %v935
        %v1094 = vmul.f32 %v599, %v939
        %v1095 = vmul.f32 %v600, %v943
        %v1096 = vmul.f32 %v601, %v947
        %v1097 = vmul.f32 %v602, %v951
        %v1098 = vmul.f32 %v603, %v955
        %v1099 = vmul.f32 %v604, %v959
        %v1100 = vmul.f32 %v605, %v963
        %v1101 = vmul.f32 %v606, %v967
        %v1102 = vmul.f32 %v607, %v971
        %v1103 = vmul.f32 %v608, %v975
        %v1104 = vmul.f32 %v609, %v979
        %v1105 = vmul.f32 %v610, %v983
        %v1106 = vmul.f32 %v611, %v987
        %v1107 = vmul.f32 %v612, %v991
        %v1108 = vmul.f32 %v613, %v995
        %v1109 = vmul.f32 %v614, %v999
        %v1110 = vmul.f32 %v615, %v1003
        %v1111 = vmul.f32 %v616, %v1007
        %v1112 = vmul.f32 %v617, %v1011
        %v1113 = vmul.f32 %v618, %v1015
        %v1114 = vmul.f32 %v619, %v1019
        %v1115 = vmul.f32 %v620, %v1023
        %v1116 = vmul.f32 %v621, %v1027
        %v1117 = vmul.f32 %v622, %v1031
        %v1118 = vmul.f32 %v623, %v1035
        %v1119 = vmul.f32 %v624, %v1039
        %vm1120 = vcmask 260096
        %v1121 = vsel %vm1120, %v1080, 0.0
        %1122 = vadd.xlane.f32.xlu0 %v1121
        %v1123 = vpop.xlane.xlu0 %1122
        %v1124 = vsel %vm1120, %v1081, 0.0
        %1125 = vadd.xlane.f32.xlu0 %v1124
        %v1126 = vpop.xlane.xlu0 %1125
        %v1127 = vsel %vm1120, %v1082, 0.0
        %1128 = vadd.xlane.f32.xlu0 %v1127
        %v1129 = vpop.xlane.xlu0 %1128
        %v1130 = vsel %vm1120, %v1083, 0.0
        %1131 = vadd.xlane.f32.xlu0 %v1130
        %v1132 = vpop.xlane.xlu0 %1131
        %v1133 = vsel %vm1120, %v1084, 0.0
        %1134 = vadd.xlane.f32.xlu0 %v1133
        %v1135 = vpop.xlane.xlu0 %1134
        %v1136 = vsel %vm1120, %v1085, 0.0
        %1137 = vadd.xlane.f32.xlu0 %v1136
        %v1138 = vpop.xlane.xlu0 %1137
        %v1139 = vsel %vm1120, %v1086, 0.0
        %1140 = vadd.xlane.f32.xlu0 %v1139
        %v1141 = vpop.xlane.xlu0 %1140
        %v1142 = vsel %vm1120, %v1087, 0.0
        %1143 = vadd.xlane.f32.xlu0 %v1142
        %v1144 = vpop.xlane.xlu0 %1143
        %v1145 = vsel %vm1120, %v1088, 0.0
        %1146 = vadd.xlane.f32.xlu0 %v1145
        %v1147 = vpop.xlane.xlu0 %1146
        %v1148 = vsel %vm1120, %v1089, 0.0
        %1149 = vadd.xlane.f32.xlu0 %v1148
        %v1150 = vpop.xlane.xlu0 %1149
        %v1151 = vsel %vm1120, %v1090, 0.0
        %1152 = vadd.xlane.f32.xlu0 %v1151
        %v1153 = vpop.xlane.xlu0 %1152
        %v1154 = vsel %vm1120, %v1091, 0.0
        %1155 = vadd.xlane.f32.xlu0 %v1154
        %v1156 = vpop.xlane.xlu0 %1155
        %v1157 = vsel %vm1120, %v1092, 0.0
        %1158 = vadd.xlane.f32.xlu0 %v1157
        %v1159 = vpop.xlane.xlu0 %1158
        %v1160 = vsel %vm1120, %v1093, 0.0
        %1161 = vadd.xlane.f32.xlu0 %v1160
        %v1162 = vpop.xlane.xlu0 %1161
        %v1163 = vsel %vm1120, %v1094, 0.0
        %1164 = vadd.xlane.f32.xlu0 %v1163
        %v1165 = vpop.xlane.xlu0 %1164
        %v1166 = vsel %vm1120, %v1095, 0.0
        %1167 = vadd.xlane.f32.xlu0 %v1166
        %v1168 = vpop.xlane.xlu0 %1167
        %v1169 = vsel %vm1120, %v1096, 0.0
        %1170 = vadd.xlane.f32.xlu0 %v1169
        %v1171 = vpop.xlane.xlu0 %1170
        %v1172 = vsel %vm1120, %v1097, 0.0
        %1173 = vadd.xlane.f32.xlu0 %v1172
        %v1174 = vpop.xlane.xlu0 %1173
        %v1175 = vsel %vm1120, %v1098, 0.0
        %1176 = vadd.xlane.f32.xlu0 %v1175
        %v1177 = vpop.xlane.xlu0 %1176
        %v1178 = vsel %vm1120, %v1099, 0.0
        %1179 = vadd.xlane.f32.xlu0 %v1178
        %v1180 = vpop.xlane.xlu0 %1179
        %v1181 = vsel %vm1120, %v1100, 0.0
        %1182 = vadd.xlane.f32.xlu0 %v1181
        %v1183 = vpop.xlane.xlu0 %1182
        %v1184 = vsel %vm1120, %v1101, 0.0
        %1185 = vadd.xlane.f32.xlu0 %v1184
        %v1186 = vpop.xlane.xlu0 %1185
        %v1187 = vsel %vm1120, %v1102, 0.0
        %1188 = vadd.xlane.f32.xlu0 %v1187
        %v1189 = vpop.xlane.xlu0 %1188
        %v1190 = vsel %vm1120, %v1103, 0.0
        %1191 = vadd.xlane.f32.xlu0 %v1190
        %v1192 = vpop.xlane.xlu0 %1191
        %v1193 = vsel %vm1120, %v1104, 0.0
        %1194 = vadd.xlane.f32.xlu0 %v1193
        %v1195 = vpop.xlane.xlu0 %1194
        %v1196 = vsel %vm1120, %v1105, 0.0
        %1197 = vadd.xlane.f32.xlu0 %v1196
        %v1198 = vpop.xlane.xlu0 %1197
        %v1199 = vsel %vm1120, %v1106, 0.0
        %1200 = vadd.xlane.f32.xlu0 %v1199
        %v1201 = vpop.xlane.xlu0 %1200
        %v1202 = vsel %vm1120, %v1107, 0.0
        %1203 = vadd.xlane.f32.xlu0 %v1202
        %v1204 = vpop.xlane.xlu0 %1203
        %v1205 = vsel %vm1120, %v1108, 0.0
        %1206 = vadd.xlane.f32.xlu0 %v1205
        %v1207 = vpop.xlane.xlu0 %1206
        %v1208 = vsel %vm1120, %v1109, 0.0
        %1209 = vadd.xlane.f32.xlu0 %v1208
        %v1210 = vpop.xlane.xlu0 %1209
        %v1211 = vsel %vm1120, %v1110, 0.0
        %1212 = vadd.xlane.f32.xlu0 %v1211
        %v1213 = vpop.xlane.xlu0 %1212
        %v1214 = vsel %vm1120, %v1111, 0.0
        %1215 = vadd.xlane.f32.xlu0 %v1214
        %v1216 = vpop.xlane.xlu0 %1215
        %v1217 = vsel %vm1120, %v1112, 0.0
        %1218 = vadd.xlane.f32.xlu0 %v1217
        %v1219 = vpop.xlane.xlu0 %1218
        %v1220 = vsel %vm1120, %v1113, 0.0
        %1221 = vadd.xlane.f32.xlu0 %v1220
        %v1222 = vpop.xlane.xlu0 %1221
        %v1223 = vsel %vm1120, %v1114, 0.0
        %1224 = vadd.xlane.f32.xlu0 %v1223
        %v1225 = vpop.xlane.xlu0 %1224
        %v1226 = vsel %vm1120, %v1115, 0.0
        %1227 = vadd.xlane.f32.xlu0 %v1226
        %v1228 = vpop.xlane.xlu0 %1227
        %v1229 = vsel %vm1120, %v1116, 0.0
        %1230 = vadd.xlane.f32.xlu0 %v1229
        %v1231 = vpop.xlane.xlu0 %1230
        %v1232 = vsel %vm1120, %v1117, 0.0
        %1233 = vadd.xlane.f32.xlu0 %v1232
        %v1234 = vpop.xlane.xlu0 %1233
        %v1235 = vsel %vm1120, %v1118, 0.0
        %1236 = vadd.xlane.f32.xlu0 %v1235
        %v1237 = vpop.xlane.xlu0 %1236
        %v1238 = vsel %vm1120, %v1119, 0.0
        %1239 = vadd.xlane.f32.xlu0 %v1238
        %v1240 = vpop.xlane.xlu0 %1239
        %v1241 = vtanh.pop %v1123
        %v1242 = vtanh.pop %v1126
        %v1243 = vtanh.pop %v1129
        %v1244 = vtanh.pop %v1132
        %v1245 = vtanh.pop %v1135
        %v1246 = vtanh.pop %v1138
        %v1247 = vtanh.pop %v1141
        %v1248 = vtanh.pop %v1144
        %v1249 = vtanh.pop %v1147
        %v1250 = vtanh.pop %v1150
        %v1251 = vtanh.pop %v1153
        %v1252 = vtanh.pop %v1156
        %v1253 = vtanh.pop %v1159
        %v1254 = vtanh.pop %v1162
        %v1255 = vtanh.pop %v1165
        %v1256 = vtanh.pop %v1168
        %v1257 = vtanh.pop %v1171
        %v1258 = vtanh.pop %v1174
        %v1259 = vtanh.pop %v1177
        %v1260 = vtanh.pop %v1180
        %v1261 = vtanh.pop %v1183
        %v1262 = vtanh.pop %v1186
        %v1263 = vtanh.pop %v1189
        %v1264 = vtanh.pop %v1192
        %v1265 = vtanh.pop %v1195
        %v1266 = vtanh.pop %v1198
        %v1267 = vtanh.pop %v1201
        %v1268 = vtanh.pop %v1204
        %v1269 = vtanh.pop %v1207
        %v1270 = vtanh.pop %v1210
        %v1271 = vtanh.pop %v1213
        %v1272 = vtanh.pop %v1216
        %v1273 = vtanh.pop %v1219
        %v1274 = vtanh.pop %v1222
        %v1275 = vtanh.pop %v1225
        %v1276 = vtanh.pop %v1228
        %v1277 = vtanh.pop %v1231
        %v1278 = vtanh.pop %v1234
        %v1279 = vtanh.pop %v1237
        %v1280 = vtanh.pop %v1240
        %v1281 = vmul.f32 %v1241, %v585
        %v1282 = vmul.f32 %v1242, %v586
        %v1283 = vmul.f32 %v1243, %v587
        %v1284 = vmul.f32 %v1244, %v588
        %v1285 = vmul.f32 %v1245, %v589
        %v1286 = vmul.f32 %v1246, %v590
        %v1287 = vmul.f32 %v1247, %v591
        %v1288 = vmul.f32 %v1248, %v592
        %v1289 = vmul.f32 %v1249, %v593
        %v1290 = vmul.f32 %v1250, %v594
        %v1291 = vmul.f32 %v1251, %v595
        %v1292 = vmul.f32 %v1252, %v596
        %v1293 = vmul.f32 %v1253, %v597
        %v1294 = vmul.f32 %v1254, %v598
        %v1295 = vmul.f32 %v1255, %v599
        %v1296 = vmul.f32 %v1256, %v600
        %v1297 = vmul.f32 %v1257, %v601
        %v1298 = vmul.f32 %v1258, %v602
        %v1299 = vmul.f32 %v1259, %v603
        %v1300 = vmul.f32 %v1260, %v604
        %v1301 = vmul.f32 %v1261, %v605
        %v1302 = vmul.f32 %v1262, %v606
        %v1303 = vmul.f32 %v1263, %v607
        %v1304 = vmul.f32 %v1264, %v608
        %v1305 = vmul.f32 %v1265, %v609
        %v1306 = vmul.f32 %v1266, %v610
        %v1307 = vmul.f32 %v1267, %v611
        %v1308 = vmul.f32 %v1268, %v612
        %v1309 = vmul.f32 %v1269, %v613
        %v1310 = vmul.f32 %v1270, %v614
        %v1311 = vmul.f32 %v1271, %v615
        %v1312 = vmul.f32 %v1272, %v616
        %v1313 = vmul.f32 %v1273, %v617
        %v1314 = vmul.f32 %v1274, %v618
        %v1315 = vmul.f32 %v1275, %v619
        %v1316 = vmul.f32 %v1276, %v620
        %v1317 = vmul.f32 %v1277, %v621
        %v1318 = vmul.f32 %v1278, %v622
        %v1319 = vmul.f32 %v1279, %v623
        %v1320 = vmul.f32 %v1280, %v624
        %v1321 = vsel %vm1120, %v1281, 0.0
        %v1322 = vrot.slane %v1321, 4
        %v1323 = vadd.f32 %v1321, %v1322
        %v1324 = vrot.slane %v1323, 2
        %v1325 = vadd.f32 %v1323, %v1324
        %v1326 = vrot.slane %v1325, 1
        %v1327 = vadd.f32 %v1325, %v1326
        %v1328 = vsel %vm1120, %v1282, 0.0
        %v1329 = vrot.slane %v1328, 4
        %v1330 = vadd.f32 %v1328, %v1329
        %v1331 = vrot.slane %v1330, 2
        %v1332 = vadd.f32 %v1330, %v1331
        %v1333 = vrot.slane %v1332, 1
        %v1334 = vadd.f32 %v1332, %v1333
        %v1335 = vsel %vm1120, %v1283, 0.0
        %v1336 = vrot.slane %v1335, 4
        %v1337 = vadd.f32 %v1335, %v1336
        %v1338 = vrot.slane %v1337, 2
        %v1339 = vadd.f32 %v1337, %v1338
        %v1340 = vrot.slane %v1339, 1
        %v1341 = vadd.f32 %v1339, %v1340
        %v1342 = vsel %vm1120, %v1284, 0.0
        %v1343 = vrot.slane %v1342, 4
        %v1344 = vadd.f32 %v1342, %v1343
        %v1345 = vrot.slane %v1344, 2
        %v1346 = vadd.f32 %v1344, %v1345
        %v1347 = vrot.slane %v1346, 1
        %v1348 = vadd.f32 %v1346, %v1347
        %v1349 = vsel %vm1120, %v1285, 0.0
        %v1350 = vrot.slane %v1349, 4
        %v1351 = vadd.f32 %v1349, %v1350
        %v1352 = vrot.slane %v1351, 2
        %v1353 = vadd.f32 %v1351, %v1352
        %v1354 = vrot.slane %v1353, 1
        %v1355 = vadd.f32 %v1353, %v1354
        %v1356 = vsel %vm1120, %v1286, 0.0
        %v1357 = vrot.slane %v1356, 4
        %v1358 = vadd.f32 %v1356, %v1357
        %v1359 = vrot.slane %v1358, 2
        %v1360 = vadd.f32 %v1358, %v1359
        %v1361 = vrot.slane %v1360, 1
        %v1362 = vadd.f32 %v1360, %v1361
        %v1363 = vsel %vm1120, %v1287, 0.0
        %v1364 = vrot.slane %v1363, 4
        %v1365 = vadd.f32 %v1363, %v1364
        %v1366 = vrot.slane %v1365, 2
        %v1367 = vadd.f32 %v1365, %v1366
        %v1368 = vrot.slane %v1367, 1
        %v1369 = vadd.f32 %v1367, %v1368
        %v1370 = vsel %vm1120, %v1288, 0.0
        %v1371 = vrot.slane %v1370, 4
        %v1372 = vadd.f32 %v1370, %v1371
        %v1373 = vrot.slane %v1372, 2
        %v1374 = vadd.f32 %v1372, %v1373
        %v1375 = vrot.slane %v1374, 1
        %v1376 = vadd.f32 %v1374, %v1375
        %v1377 = vsel %vm1120, %v1289, 0.0
        %v1378 = vrot.slane %v1377, 4
        %v1379 = vadd.f32 %v1377, %v1378
        %v1380 = vrot.slane %v1379, 2
        %v1381 = vadd.f32 %v1379, %v1380
        %v1382 = vrot.slane %v1381, 1
        %v1383 = vadd.f32 %v1381, %v1382
        %v1384 = vsel %vm1120, %v1290, 0.0
        %v1385 = vrot.slane %v1384, 4
        %v1386 = vadd.f32 %v1384, %v1385
        %v1387 = vrot.slane %v1386, 2
        %v1388 = vadd.f32 %v1386, %v1387
        %v1389 = vrot.slane %v1388, 1
        %v1390 = vadd.f32 %v1388, %v1389
        %v1391 = vsel %vm1120, %v1291, 0.0
        %v1392 = vrot.slane %v1391, 4
        %v1393 = vadd.f32 %v1391, %v1392
        %v1394 = vrot.slane %v1393, 2
        %v1395 = vadd.f32 %v1393, %v1394
        %v1396 = vrot.slane %v1395, 1
        %v1397 = vadd.f32 %v1395, %v1396
        %v1398 = vsel %vm1120, %v1292, 0.0
        %v1399 = vrot.slane %v1398, 4
        %v1400 = vadd.f32 %v1398, %v1399
        %v1401 = vrot.slane %v1400, 2
        %v1402 = vadd.f32 %v1400, %v1401
        %v1403 = vrot.slane %v1402, 1
        %v1404 = vadd.f32 %v1402, %v1403
        %v1405 = vsel %vm1120, %v1293, 0.0
        %v1406 = vrot.slane %v1405, 4
        %v1407 = vadd.f32 %v1405, %v1406
        %v1408 = vrot.slane %v1407, 2
        %v1409 = vadd.f32 %v1407, %v1408
        %v1410 = vrot.slane %v1409, 1
        %v1411 = vadd.f32 %v1409, %v1410
        %v1412 = vsel %vm1120, %v1294, 0.0
        %v1413 = vrot.slane %v1412, 4
        %v1414 = vadd.f32 %v1412, %v1413
        %v1415 = vrot.slane %v1414, 2
        %v1416 = vadd.f32 %v1414, %v1415
        %v1417 = vrot.slane %v1416, 1
        %v1418 = vadd.f32 %v1416, %v1417
        %v1419 = vsel %vm1120, %v1295, 0.0
        %v1420 = vrot.slane %v1419, 4
        %v1421 = vadd.f32 %v1419, %v1420
        %v1422 = vrot.slane %v1421, 2
        %v1423 = vadd.f32 %v1421, %v1422
        %v1424 = vrot.slane %v1423, 1
        %v1425 = vadd.f32 %v1423, %v1424
        %v1426 = vsel %vm1120, %v1296, 0.0
        %v1427 = vrot.slane %v1426, 4
        %v1428 = vadd.f32 %v1426, %v1427
        %v1429 = vrot.slane %v1428, 2
        %v1430 = vadd.f32 %v1428, %v1429
        %v1431 = vrot.slane %v1430, 1
        %v1432 = vadd.f32 %v1430, %v1431
        %v1433 = vsel %vm1120, %v1297, 0.0
        %v1434 = vrot.slane %v1433, 4
        %v1435 = vadd.f32 %v1433, %v1434
        %v1436 = vrot.slane %v1435, 2
        %v1437 = vadd.f32 %v1435, %v1436
        %v1438 = vrot.slane %v1437, 1
        %v1439 = vadd.f32 %v1437, %v1438
        %v1440 = vsel %vm1120, %v1298, 0.0
        %v1441 = vrot.slane %v1440, 4
        %v1442 = vadd.f32 %v1440, %v1441
        %v1443 = vrot.slane %v1442, 2
        %v1444 = vadd.f32 %v1442, %v1443
        %v1445 = vrot.slane %v1444, 1
        %v1446 = vadd.f32 %v1444, %v1445
        %v1447 = vsel %vm1120, %v1299, 0.0
        %v1448 = vrot.slane %v1447, 4
        %v1449 = vadd.f32 %v1447, %v1448
        %v1450 = vrot.slane %v1449, 2
        %v1451 = vadd.f32 %v1449, %v1450
        %v1452 = vrot.slane %v1451, 1
        %v1453 = vadd.f32 %v1451, %v1452
        %v1454 = vsel %vm1120, %v1300, 0.0
        %v1455 = vrot.slane %v1454, 4
        %v1456 = vadd.f32 %v1454, %v1455
        %v1457 = vrot.slane %v1456, 2
        %v1458 = vadd.f32 %v1456, %v1457
        %v1459 = vrot.slane %v1458, 1
        %v1460 = vadd.f32 %v1458, %v1459
        %v1461 = vsel %vm1120, %v1301, 0.0
        %v1462 = vrot.slane %v1461, 4
        %v1463 = vadd.f32 %v1461, %v1462
        %v1464 = vrot.slane %v1463, 2
        %v1465 = vadd.f32 %v1463, %v1464
        %v1466 = vrot.slane %v1465, 1
        %v1467 = vadd.f32 %v1465, %v1466
        %v1468 = vsel %vm1120, %v1302, 0.0
        %v1469 = vrot.slane %v1468, 4
        %v1470 = vadd.f32 %v1468, %v1469
        %v1471 = vrot.slane %v1470, 2
        %v1472 = vadd.f32 %v1470, %v1471
        %v1473 = vrot.slane %v1472, 1
        %v1474 = vadd.f32 %v1472, %v1473
        %v1475 = vsel %vm1120, %v1303, 0.0
        %v1476 = vrot.slane %v1475, 4
        %v1477 = vadd.f32 %v1475, %v1476
        %v1478 = vrot.slane %v1477, 2
        %v1479 = vadd.f32 %v1477, %v1478
        %v1480 = vrot.slane %v1479, 1
        %v1481 = vadd.f32 %v1479, %v1480
        %v1482 = vsel %vm1120, %v1304, 0.0
        %v1483 = vrot.slane %v1482, 4
        %v1484 = vadd.f32 %v1482, %v1483
        %v1485 = vrot.slane %v1484, 2
        %v1486 = vadd.f32 %v1484, %v1485
        %v1487 = vrot.slane %v1486, 1
        %v1488 = vadd.f32 %v1486, %v1487
        %v1489 = vsel %vm1120, %v1305, 0.0
        %v1490 = vrot.slane %v1489, 4
        %v1491 = vadd.f32 %v1489, %v1490
        %v1492 = vrot.slane %v1491, 2
        %v1493 = vadd.f32 %v1491, %v1492
        %v1494 = vrot.slane %v1493, 1
        %v1495 = vadd.f32 %v1493, %v1494
        %v1496 = vsel %vm1120, %v1306, 0.0
        %v1497 = vrot.slane %v1496, 4
        %v1498 = vadd.f32 %v1496, %v1497
        %v1499 = vrot.slane %v1498, 2
        %v1500 = vadd.f32 %v1498, %v1499
        %v1501 = vrot.slane %v1500, 1
        %v1502 = vadd.f32 %v1500, %v1501
        %v1503 = vsel %vm1120, %v1307, 0.0
        %v1504 = vrot.slane %v1503, 4
        %v1505 = vadd.f32 %v1503, %v1504
        %v1506 = vrot.slane %v1505, 2
        %v1507 = vadd.f32 %v1505, %v1506
        %v1508 = vrot.slane %v1507, 1
        %v1509 = vadd.f32 %v1507, %v1508
        %v1510 = vsel %vm1120, %v1308, 0.0
        %v1511 = vrot.slane %v1510, 4
        %v1512 = vadd.f32 %v1510, %v1511
        %v1513 = vrot.slane %v1512, 2
        %v1514 = vadd.f32 %v1512, %v1513
        %v1515 = vrot.slane %v1514, 1
        %v1516 = vadd.f32 %v1514, %v1515
        %v1517 = vsel %vm1120, %v1309, 0.0
        %v1518 = vrot.slane %v1517, 4
        %v1519 = vadd.f32 %v1517, %v1518
        %v1520 = vrot.slane %v1519, 2
        %v1521 = vadd.f32 %v1519, %v1520
        %v1522 = vrot.slane %v1521, 1
        %v1523 = vadd.f32 %v1521, %v1522
        %v1524 = vsel %vm1120, %v1310, 0.0
        %v1525 = vrot.slane %v1524, 4
        %v1526 = vadd.f32 %v1524, %v1525
        %v1527 = vrot.slane %v1526, 2
        %v1528 = vadd.f32 %v1526, %v1527
        %v1529 = vrot.slane %v1528, 1
        %v1530 = vadd.f32 %v1528, %v1529
        %v1531 = vsel %vm1120, %v1311, 0.0
        %v1532 = vrot.slane %v1531, 4
        %v1533 = vadd.f32 %v1531, %v1532
        %v1534 = vrot.slane %v1533, 2
        %v1535 = vadd.f32 %v1533, %v1534
        %v1536 = vrot.slane %v1535, 1
        %v1537 = vadd.f32 %v1535, %v1536
        %v1538 = vsel %vm1120, %v1312, 0.0
        %v1539 = vrot.slane %v1538, 4
        %v1540 = vadd.f32 %v1538, %v1539
        %v1541 = vrot.slane %v1540, 2
        %v1542 = vadd.f32 %v1540, %v1541
        %v1543 = vrot.slane %v1542, 1
        %v1544 = vadd.f32 %v1542, %v1543
        %v1545 = vsel %vm1120, %v1313, 0.0
        %v1546 = vrot.slane %v1545, 4
        %v1547 = vadd.f32 %v1545, %v1546
        %v1548 = vrot.slane %v1547, 2
        %v1549 = vadd.f32 %v1547, %v1548
        %v1550 = vrot.slane %v1549, 1
        %v1551 = vadd.f32 %v1549, %v1550
        %v1552 = vsel %vm1120, %v1314, 0.0
        %v1553 = vrot.slane %v1552, 4
        %v1554 = vadd.f32 %v1552, %v1553
        %v1555 = vrot.slane %v1554, 2
        %v1556 = vadd.f32 %v1554, %v1555
        %v1557 = vrot.slane %v1556, 1
        %v1558 = vadd.f32 %v1556, %v1557
        %v1559 = vsel %vm1120, %v1315, 0.0
        %v1560 = vrot.slane %v1559, 4
        %v1561 = vadd.f32 %v1559, %v1560
        %v1562 = vrot.slane %v1561, 2
        %v1563 = vadd.f32 %v1561, %v1562
        %v1564 = vrot.slane %v1563, 1
        %v1565 = vadd.f32 %v1563, %v1564
        %v1566 = vsel %vm1120, %v1316, 0.0
        %v1567 = vrot.slane %v1566, 4
        %v1568 = vadd.f32 %v1566, %v1567
        %v1569 = vrot.slane %v1568, 2
        %v1570 = vadd.f32 %v1568, %v1569
        %v1571 = vrot.slane %v1570, 1
        %v1572 = vadd.f32 %v1570, %v1571
        %v1573 = vsel %vm1120, %v1317, 0.0
        %v1574 = vrot.slane %v1573, 4
        %v1575 = vadd.f32 %v1573, %v1574
        %v1576 = vrot.slane %v1575, 2
        %v1577 = vadd.f32 %v1575, %v1576
        %v1578 = vrot.slane %v1577, 1
        %v1579 = vadd.f32 %v1577, %v1578
        %v1580 = vsel %vm1120, %v1318, 0.0
        %v1581 = vrot.slane %v1580, 4
        %v1582 = vadd.f32 %v1580, %v1581
        %v1583 = vrot.slane %v1582, 2
        %v1584 = vadd.f32 %v1582, %v1583
        %v1585 = vrot.slane %v1584, 1
        %v1586 = vadd.f32 %v1584, %v1585
        %v1587 = vsel %vm1120, %v1319, 0.0
        %v1588 = vrot.slane %v1587, 4
        %v1589 = vadd.f32 %v1587, %v1588
        %v1590 = vrot.slane %v1589, 2
        %v1591 = vadd.f32 %v1589, %v1590
        %v1592 = vrot.slane %v1591, 1
        %v1593 = vadd.f32 %v1591, %v1592
        %v1594 = vsel %vm1120, %v1320, 0.0
        %v1595 = vrot.slane %v1594, 4
        %v1596 = vadd.f32 %v1594, %v1595
        %v1597 = vrot.slane %v1596, 2
        %v1598 = vadd.f32 %v1596, %v1597
        %v1599 = vrot.slane %v1598, 1
        %v1600 = vadd.f32 %v1598, %v1599
        %vm1641 = vcmask 1041409
        %v1642 = vsel %vm1641, %v1334, %v1327
        %vm1643 = vcmask 1042434
        %v1644 = vsel %vm1643, %v1341, %v1642
        %vm1645 = vcmask 1043459
        %v1646 = vsel %vm1645, %v1348, %v1644
        %vm1647 = vcmask 1044484
        %v1648 = vsel %vm1647, %v1355, %v1646
        %vm1649 = vcmask 1045509
        %v1650 = vsel %vm1649, %v1362, %v1648
        %vm1651 = vcmask 1046534
        %v1652 = vsel %vm1651, %v1369, %v1650
        %vm1653 = vcmask 1047559
        %v1654 = vsel %vm1653, %v1376, %v1652
        %v1655 = vsel %vm1641, %v1390, %v1383
        %v1656 = vsel %vm1643, %v1397, %v1655
        %v1657 = vsel %vm1645, %v1404, %v1656
        %v1658 = vsel %vm1647, %v1411, %v1657
        %v1659 = vsel %vm1649, %v1418, %v1658
        %v1660 = vsel %vm1651, %v1425, %v1659
        %v1661 = vsel %vm1653, %v1432, %v1660
        %v1662 = vsel %vm1641, %v1446, %v1439
        %v1663 = vsel %vm1643, %v1453, %v1662
        %v1664 = vsel %vm1645, %v1460, %v1663
        %v1665 = vsel %vm1647, %v1467, %v1664
        %v1666 = vsel %vm1649, %v1474, %v1665
        %v1667 = vsel %vm1651, %v1481, %v1666
        %v1668 = vsel %vm1653, %v1488, %v1667
        %v1669 = vsel %vm1641, %v1502, %v1495
        %v1670 = vsel %vm1643, %v1509, %v1669
        %v1671 = vsel %vm1645, %v1516, %v1670
        %v1672 = vsel %vm1647, %v1523, %v1671
        %v1673 = vsel %vm1649, %v1530, %v1672
        %v1674 = vsel %vm1651, %v1537, %v1673
        %v1675 = vsel %vm1653, %v1544, %v1674
        %v1676 = vsel %vm1641, %v1558, %v1551
        %v1677 = vsel %vm1643, %v1565, %v1676
        %v1678 = vsel %vm1645, %v1572, %v1677
        %v1679 = vsel %vm1647, %v1579, %v1678
        %v1680 = vsel %vm1649, %v1586, %v1679
        %v1681 = vsel %vm1651, %v1593, %v1680
        %v1682 = vsel %vm1653, %v1600, %v1681
        %1688 = vrot.lane.b32.xlu0 %v625, 32
        %v1689 = vpop.permute.xlu0 %1688
        %1690 = vrot.lane.b32.xlu0 %v626, 32
        %v1691 = vpop.permute.xlu0 %1690
        %1692 = vrot.lane.b32.xlu0 %v627, 32
        %v1693 = vpop.permute.xlu0 %1692
        %1694 = vrot.lane.b32.xlu0 %v628, 32
        %v1695 = vpop.permute.xlu0 %1694
        %1696 = vrot.lane.b32.xlu0 %v629, 32
        %v1697 = vpop.permute.xlu0 %1696
        %vm1703 = vcmask 261120
        %v1704 = vsel %vm1703, %v1654, %v1689
        %v1705 = vsel %vm1703, %v1661, %v1691
        %v1706 = vsel %vm1703, %v1668, %v1693
        %v1707 = vsel %vm1703, %v1675, %v1695
        %v1708 = vsel %vm1703, %v1682, %v1697
        %v1709 = vld [vmem:[%s2] sm:$0xff]
        %v1710 = vld [vmem:[%s2 + $0x8] sm:$0xff]
        %v1711 = vld [vmem:[%s2 + $0x10] sm:$0xff]
        %v1712 = vld [vmem:[%s2 + $0x18] sm:$0xff]
        %v1713 = vld [vmem:[%s2 + $0x20] sm:$0xff]
        %v1714 = vld [vmem:[%s2 + $0x28] sm:$0xff]
        %v1715 = vld [vmem:[%s2 + $0x30] sm:$0xff]
        %v1716 = vld [vmem:[%s2 + $0x38] sm:$0xff]
        %vm1717 = vcmask 523264
        %v1719 = vsel %vm1717, %v1704, 0
        %v1722 = vsel %vm1717, %v1705, 0
        %v1725 = vsel %vm1717, %v1706, 0
        %v1728 = vsel %vm1717, %v1707, 0
        %v1731 = vsel %vm1717, %v1708, 0
        %1733 = vmatprep.subr.mxu0 0.0
        %1734 = vmatpush1.msra.mxu0 0.0
        %1735 = vmatprep.subr.mxu0 0.0
        %1736 = vmatpush1.msra.mxu0 0.0
        %1737 = vmatprep.subr.mxu0 0.0
        %1738 = vmatpush1.msra.mxu0 0.0
        %1739 = vmatprep.subr.mxu0 0.0
        %1740 = vmatpush1.msra.mxu0 0.0
        %1741 = vmatprep.subr.mxu0 0.0
        %1742 = vmatpush1.msra.mxu0 0.0
        %1743 = vmatprep.subr.mxu0 0.0
        %1744 = vmatpush1.msra.mxu0 0.0
        %1745 = vmatprep.subr.mxu0 0.0
        %1746 = vmatpush1.msra.mxu0 0.0
        %1747 = vmatprep.subr.mxu0 0.0
        %1748 = vmatpush1.msra.mxu0 0.0
        %1749 = vmatprep.subr.mxu0 0.0
        %1750 = vmatpush1.msra.mxu0 %v1716
        %1751 = vmatprep.subr.mxu0 0.0
        %1752 = vmatpush1.msra.mxu0 %v1715
        %1753 = vmatprep.subr.mxu0 0.0
        %1754 = vmatpush1.msra.mxu0 %v1714
        %1755 = vmatprep.subr.mxu0 0.0
        %1756 = vmatpush1.msra.mxu0 %v1713
        %1757 = vmatprep.subr.mxu0 0.0
        %1758 = vmatpush1.msra.mxu0 %v1712
        %1759 = vmatprep.subr.mxu0 0.0
        %1760 = vmatpush1.msra.mxu0 %v1711
        %1761 = vmatprep.subr.mxu0 0.0
        %1762 = vmatpush1.msra.mxu0 %v1710
        %1763 = vmatprep.subr.mxu0 0.0
        %1764 = vmatpush1.msra.mxu0 %v1709
        %1765 = vmatprep.subr.mxu0 0.0
        %1766 = vmatpush2.msra.mxu0 0.0
        %1767 = vmatprep.subr.mxu0 0.0
        %1768 = vmatpush2.msra.mxu0 0.0
        %1769 = vmatprep.subr.mxu0 0.0
        %1770 = vmatpush2.msra.mxu0 0.0
        %1771 = vmatprep.subr.mxu0 0.0
        %1772 = vmatpush2.msra.mxu0 0.0
        %1773 = vmatprep.subr.mxu0 0.0
        %1774 = vmatpush2.msra.mxu0 0.0
        %1775 = vmatprep.subr.mxu0 0.0
        %1776 = vmatpush2.msra.mxu0 0.0
        %1777 = vmatprep.subr.mxu0 0.0
        %1778 = vmatpush2.msra.mxu0 0.0
        %1779 = vmatprep.subr.mxu0 0.0
        %1780 = vmatpush2.msra.mxu0 0.0
        %1781 = vmatprep.subr.mxu0 0.0
        %1782 = vmatpush2.msra.mxu0 0.0
        %1783 = vmatprep.subr.mxu0 0.0
        %1784 = vmatpush2.msra.mxu0 0.0
        %1785 = vmatprep.subr.mxu0 0.0
        %1786 = vmatpush2.msra.mxu0 0.0
        %1787 = vmatprep.subr.mxu0 0.0
        %1788 = vmatpush2.msra.mxu0 0.0
        %1789 = vmatprep.subr.mxu0 0.0
        %1790 = vmatpush2.msra.mxu0 0.0
        %1791 = vmatprep.subr.mxu0 0.0
        %1792 = vmatpush2.msra.mxu0 0.0
        %1793 = vmatprep.subr.mxu0 0.0
        %1794 = vmatpush2.msra.mxu0 0.0
        %1795 = vmatprep.subr.mxu0 0.0
        %1796 = vmatpush2.msra.mxu0 0.0
        %1797 = vmatprep.mubr.f32.mxu0 0.0
        %1798 = vmatmul.mubr.f32.gmra.mxu0 %v1719
        %v1799 = vpop.f32.mrf.mxu0
        %v1800 = vadd.f32 0.0, %v1799
        %v1801 = vpop.f32.mrf.mxu0
        %1802 = vmatprep.mubr.f32.mxu0 0.0
        %1803 = vmatmul.mubr.f32.gmra.mxu0 %v1722
        %v1804 = vpop.f32.mrf.mxu0
        %v1805 = vadd.f32 0.0, %v1804
        %v1806 = vpop.f32.mrf.mxu0
        %1807 = vmatprep.mubr.f32.mxu0 0.0
        %1808 = vmatmul.mubr.f32.gmra.mxu0 %v1725
        %v1809 = vpop.f32.mrf.mxu0
        %v1810 = vadd.f32 0.0, %v1809
        %v1811 = vpop.f32.mrf.mxu0
        %1812 = vmatprep.mubr.f32.mxu0 0.0
        %1813 = vmatmul.mubr.f32.gmra.mxu0 %v1728
        %v1814 = vpop.f32.mrf.mxu0
        %v1815 = vadd.f32 0.0, %v1814
        %v1816 = vpop.f32.mrf.mxu0
        %1817 = vmatprep.mubr.f32.mxu0 0.0
        %1818 = vmatmul.mubr.f32.gmra.mxu0 %v1731
        %v1819 = vpop.f32.mrf.mxu0
        %v1820 = vadd.f32 0.0, %v1819
        %v1821 = vpop.f32.mrf.mxu0
        %1822 = vdwg.mxu0
        %v1828 = vcombine.high %v1800, %v1800
        %v1830 = vunpack.c.l.s4 1966171168
        %v1831 = vunpack.c.0.s8 %v1830
        %v1832 = vlaneseq
        %v1833 = vshrl.u32 %v1832, 7
        %v1834 = vsub.s32 %v1831, %v1833
        %v1835 = vrot.slane %v1800, %v1834
        %v1837 = vunpack.c.l.s4 1966171168
        %v1838 = vunpack.c.0.s8 %v1837
        %v1839 = vlaneseq
        %v1840 = vshrl.u32 %v1839, 7
        %v1841 = vsub.s32 %v1838, %v1840
        %v1842 = vrot.slane %v1828, %v1841
        %v1843 = vcombine.high %v1835, %v1835
        %v1844 = vcombine.high %v1842, %v1842
        %v1846 = vunpack.c.l.s4 1966171168
        %v1847 = vunpack.c.0.s8 %v1846
        %v1848 = vlaneseq
        %v1849 = vshrl.u32 %v1848, 7
        %v1850 = vsub.s32 %v1847, %v1849
        %v1851 = vrot.slane %v1835, %v1850
        %v1853 = vunpack.c.l.s4 1966171168
        %v1854 = vunpack.c.0.s8 %v1853
        %v1855 = vlaneseq
        %v1856 = vshrl.u32 %v1855, 7
        %v1857 = vsub.s32 %v1854, %v1856
        %v1858 = vrot.slane %v1842, %v1857
        %v1860 = vunpack.c.l.s4 1966171168
        %v1861 = vunpack.c.0.s8 %v1860
        %v1862 = vlaneseq
        %v1863 = vshrl.u32 %v1862, 7
        %v1864 = vsub.s32 %v1861, %v1863
        %v1865 = vrot.slane %v1843, %v1864
        %v1867 = vunpack.c.l.s4 1966171168
        %v1868 = vunpack.c.0.s8 %v1867
        %v1869 = vlaneseq
        %v1870 = vshrl.u32 %v1869, 7
        %v1871 = vsub.s32 %v1868, %v1870
        %v1872 = vrot.slane %v1844, %v1871
        %v1873 = vcombine.high %v1851, %v1851
        %v1874 = vcombine.high %v1858, %v1858
        %v1875 = vcombine.high %v1865, %v1865
        %v1876 = vcombine.high %v1872, %v1872
        %v1877 = vcombine.high %v1805, %v1805
        %v1879 = vunpack.c.l.s4 1966171168
        %v1880 = vunpack.c.0.s8 %v1879
        %v1881 = vlaneseq
        %v1882 = vshrl.u32 %v1881, 7
        %v1883 = vsub.s32 %v1880, %v1882
        %v1884 = vrot.slane %v1805, %v1883
        %v1886 = vunpack.c.l.s4 1966171168
        %v1887 = vunpack.c.0.s8 %v1886
        %v1888 = vlaneseq
        %v1889 = vshrl.u32 %v1888, 7
        %v1890 = vsub.s32 %v1887, %v1889
        %v1891 = vrot.slane %v1877, %v1890
        %v1892 = vcombine.high %v1884, %v1884
        %v1893 = vcombine.high %v1891, %v1891
        %v1895 = vunpack.c.l.s4 1966171168
        %v1896 = vunpack.c.0.s8 %v1895
        %v1897 = vlaneseq
        %v1898 = vshrl.u32 %v1897, 7
        %v1899 = vsub.s32 %v1896, %v1898
        %v1900 = vrot.slane %v1884, %v1899
        %v1902 = vunpack.c.l.s4 1966171168
        %v1903 = vunpack.c.0.s8 %v1902
        %v1904 = vlaneseq
        %v1905 = vshrl.u32 %v1904, 7
        %v1906 = vsub.s32 %v1903, %v1905
        %v1907 = vrot.slane %v1891, %v1906
        %v1909 = vunpack.c.l.s4 1966171168
        %v1910 = vunpack.c.0.s8 %v1909
        %v1911 = vlaneseq
        %v1912 = vshrl.u32 %v1911, 7
        %v1913 = vsub.s32 %v1910, %v1912
        %v1914 = vrot.slane %v1892, %v1913
        %v1916 = vunpack.c.l.s4 1966171168
        %v1917 = vunpack.c.0.s8 %v1916
        %v1918 = vlaneseq
        %v1919 = vshrl.u32 %v1918, 7
        %v1920 = vsub.s32 %v1917, %v1919
        %v1921 = vrot.slane %v1893, %v1920
        %v1922 = vcombine.high %v1900, %v1900
        %v1923 = vcombine.high %v1907, %v1907
        %v1924 = vcombine.high %v1914, %v1914
        %v1925 = vcombine.high %v1921, %v1921
        %v1926 = vcombine.high %v1810, %v1810
        %v1928 = vunpack.c.l.s4 1966171168
        %v1929 = vunpack.c.0.s8 %v1928
        %v1930 = vlaneseq
        %v1931 = vshrl.u32 %v1930, 7
        %v1932 = vsub.s32 %v1929, %v1931
        %v1933 = vrot.slane %v1810, %v1932
        %v1935 = vunpack.c.l.s4 1966171168
        %v1936 = vunpack.c.0.s8 %v1935
        %v1937 = vlaneseq
        %v1938 = vshrl.u32 %v1937, 7
        %v1939 = vsub.s32 %v1936, %v1938
        %v1940 = vrot.slane %v1926, %v1939
        %v1941 = vcombine.high %v1933, %v1933
        %v1942 = vcombine.high %v1940, %v1940
        %v1944 = vunpack.c.l.s4 1966171168
        %v1945 = vunpack.c.0.s8 %v1944
        %v1946 = vlaneseq
        %v1947 = vshrl.u32 %v1946, 7
        %v1948 = vsub.s32 %v1945, %v1947
        %v1949 = vrot.slane %v1933, %v1948
        %v1951 = vunpack.c.l.s4 1966171168
        %v1952 = vunpack.c.0.s8 %v1951
        %v1953 = vlaneseq
        %v1954 = vshrl.u32 %v1953, 7
        %v1955 = vsub.s32 %v1952, %v1954
        %v1956 = vrot.slane %v1940, %v1955
        %v1958 = vunpack.c.l.s4 1966171168
        %v1959 = vunpack.c.0.s8 %v1958
        %v1960 = vlaneseq
        %v1961 = vshrl.u32 %v1960, 7
        %v1962 = vsub.s32 %v1959, %v1961
        %v1963 = vrot.slane %v1941, %v1962
        %v1965 = vunpack.c.l.s4 1966171168
        %v1966 = vunpack.c.0.s8 %v1965
        %v1967 = vlaneseq
        %v1968 = vshrl.u32 %v1967, 7
        %v1969 = vsub.s32 %v1966, %v1968
        %v1970 = vrot.slane %v1942, %v1969
        %v1971 = vcombine.high %v1949, %v1949
        %v1972 = vcombine.high %v1956, %v1956
        %v1973 = vcombine.high %v1963, %v1963
        %v1974 = vcombine.high %v1970, %v1970
        %v1975 = vcombine.high %v1815, %v1815
        %v1977 = vunpack.c.l.s4 1966171168
        %v1978 = vunpack.c.0.s8 %v1977
        %v1979 = vlaneseq
        %v1980 = vshrl.u32 %v1979, 7
        %v1981 = vsub.s32 %v1978, %v1980
        %v1982 = vrot.slane %v1815, %v1981
        %v1984 = vunpack.c.l.s4 1966171168
        %v1985 = vunpack.c.0.s8 %v1984
        %v1986 = vlaneseq
        %v1987 = vshrl.u32 %v1986, 7
        %v1988 = vsub.s32 %v1985, %v1987
        %v1989 = vrot.slane %v1975, %v1988
        %v1990 = vcombine.high %v1982, %v1982
        %v1991 = vcombine.high %v1989, %v1989
        %v1993 = vunpack.c.l.s4 1966171168
        %v1994 = vunpack.c.0.s8 %v1993
        %v1995 = vlaneseq
        %v1996 = vshrl.u32 %v1995, 7
        %v1997 = vsub.s32 %v1994, %v1996
        %v1998 = vrot.slane %v1982, %v1997
        %v2000 = vunpack.c.l.s4 1966171168
        %v2001 = vunpack.c.0.s8 %v2000
        %v2002 = vlaneseq
        %v2003 = vshrl.u32 %v2002, 7
        %v2004 = vsub.s32 %v2001, %v2003
        %v2005 = vrot.slane %v1989, %v2004
        %v2007 = vunpack.c.l.s4 1966171168
        %v2008 = vunpack.c.0.s8 %v2007
        %v2009 = vlaneseq
        %v2010 = vshrl.u32 %v2009, 7
        %v2011 = vsub.s32 %v2008, %v2010
        %v2012 = vrot.slane %v1990, %v2011
        %v2014 = vunpack.c.l.s4 1966171168
        %v2015 = vunpack.c.0.s8 %v2014
        %v2016 = vlaneseq
        %v2017 = vshrl.u32 %v2016, 7
        %v2018 = vsub.s32 %v2015, %v2017
        %v2019 = vrot.slane %v1991, %v2018
        %v2020 = vcombine.high %v1998, %v1998
        %v2021 = vcombine.high %v2005, %v2005
        %v2022 = vcombine.high %v2012, %v2012
        %v2023 = vcombine.high %v2019, %v2019
        %v2024 = vcombine.high %v1820, %v1820
        %v2026 = vunpack.c.l.s4 1966171168
        %v2027 = vunpack.c.0.s8 %v2026
        %v2028 = vlaneseq
        %v2029 = vshrl.u32 %v2028, 7
        %v2030 = vsub.s32 %v2027, %v2029
        %v2031 = vrot.slane %v1820, %v2030
        %v2033 = vunpack.c.l.s4 1966171168
        %v2034 = vunpack.c.0.s8 %v2033
        %v2035 = vlaneseq
        %v2036 = vshrl.u32 %v2035, 7
        %v2037 = vsub.s32 %v2034, %v2036
        %v2038 = vrot.slane %v2024, %v2037
        %v2039 = vcombine.high %v2031, %v2031
        %v2040 = vcombine.high %v2038, %v2038
        %v2042 = vunpack.c.l.s4 1966171168
        %v2043 = vunpack.c.0.s8 %v2042
        %v2044 = vlaneseq
        %v2045 = vshrl.u32 %v2044, 7
        %v2046 = vsub.s32 %v2043, %v2045
        %v2047 = vrot.slane %v2031, %v2046
        %v2049 = vunpack.c.l.s4 1966171168
        %v2050 = vunpack.c.0.s8 %v2049
        %v2051 = vlaneseq
        %v2052 = vshrl.u32 %v2051, 7
        %v2053 = vsub.s32 %v2050, %v2052
        %v2054 = vrot.slane %v2038, %v2053
        %v2056 = vunpack.c.l.s4 1966171168
        %v2057 = vunpack.c.0.s8 %v2056
        %v2058 = vlaneseq
        %v2059 = vshrl.u32 %v2058, 7
        %v2060 = vsub.s32 %v2057, %v2059
        %v2061 = vrot.slane %v2039, %v2060
        %v2063 = vunpack.c.l.s4 1966171168
        %v2064 = vunpack.c.0.s8 %v2063
        %v2065 = vlaneseq
        %v2066 = vshrl.u32 %v2065, 7
        %v2067 = vsub.s32 %v2064, %v2066
        %v2068 = vrot.slane %v2040, %v2067
        %v2069 = vcombine.high %v2047, %v2047
        %v2070 = vcombine.high %v2054, %v2054
        %v2071 = vcombine.high %v2061, %v2061
        %v2072 = vcombine.high %v2068, %v2068
        %v2113 = vld [vmem:[%s3] sm:$0x1f]
        %v2115 = vcombine.high %v2113, %v2113
        %v2117 = vunpack.c.l.s4 1966171168
        %v2118 = vunpack.c.0.s8 %v2117
        %v2119 = vlaneseq
        %v2120 = vshrl.u32 %v2119, 7
        %v2121 = vsub.s32 %v2118, %v2120
        %v2122 = vrot.slane %v2113, %v2121
        %v2124 = vunpack.c.l.s4 1966171168
        %v2125 = vunpack.c.0.s8 %v2124
        %v2126 = vlaneseq
        %v2127 = vshrl.u32 %v2126, 7
        %v2128 = vsub.s32 %v2125, %v2127
        %v2129 = vrot.slane %v2115, %v2128
        %v2130 = vcombine.high %v2122, %v2122
        %v2132 = vunpack.c.l.s4 1966171168
        %v2133 = vunpack.c.0.s8 %v2132
        %v2134 = vlaneseq
        %v2135 = vshrl.u32 %v2134, 7
        %v2136 = vsub.s32 %v2133, %v2135
        %v2137 = vrot.slane %v2122, %v2136
        %v2139 = vunpack.c.l.s4 1966171168
        %v2140 = vunpack.c.0.s8 %v2139
        %v2141 = vlaneseq
        %v2142 = vshrl.u32 %v2141, 7
        %v2143 = vsub.s32 %v2140, %v2142
        %v2144 = vrot.slane %v2129, %v2143
        %v2146 = vunpack.c.l.s4 1966171168
        %v2147 = vunpack.c.0.s8 %v2146
        %v2148 = vlaneseq
        %v2149 = vshrl.u32 %v2148, 7
        %v2150 = vsub.s32 %v2147, %v2149
        %v2151 = vrot.slane %v2130, %v2150
        %v2152 = vcombine.high %v2137, %v2137
        %v2153 = vcombine.high %v2151, %v2151
        %v2159 = vadd.f32 %v1851, %v2137
        %v2160 = vadd.f32 %v1865, %v2151
        %v2161 = vadd.f32 %v1873, %v2152
        %v2162 = vadd.f32 %v1875, %v2153
        %v2163 = vadd.f32 %v1858, %v2144
        %v2164 = vadd.f32 %v1872, %v2137
        %v2165 = vadd.f32 %v1874, %v2151
        %v2166 = vadd.f32 %v1876, %v2152
        %v2167 = vadd.f32 %v1900, %v2153
        %v2168 = vadd.f32 %v1914, %v2144
        %v2169 = vadd.f32 %v1922, %v2137
        %v2170 = vadd.f32 %v1924, %v2151
        %v2171 = vadd.f32 %v1907, %v2152
        %v2172 = vadd.f32 %v1921, %v2153
        %v2173 = vadd.f32 %v1923, %v2144
        %v2174 = vadd.f32 %v1925, %v2137
        %v2175 = vadd.f32 %v1949, %v2151
        %v2176 = vadd.f32 %v1963, %v2152
        %v2177 = vadd.f32 %v1971, %v2153
        %v2178 = vadd.f32 %v1973, %v2144
        %v2179 = vadd.f32 %v1956, %v2137
        %v2180 = vadd.f32 %v1970, %v2151
        %v2181 = vadd.f32 %v1972, %v2152
        %v2182 = vadd.f32 %v1974, %v2153
        %v2183 = vadd.f32 %v1998, %v2144
        %v2184 = vadd.f32 %v2012, %v2137
        %v2185 = vadd.f32 %v2020, %v2151
        %v2186 = vadd.f32 %v2022, %v2152
        %v2187 = vadd.f32 %v2005, %v2153
        %v2188 = vadd.f32 %v2019, %v2144
        %v2189 = vadd.f32 %v2021, %v2137
        %v2190 = vadd.f32 %v2023, %v2151
        %v2191 = vadd.f32 %v2047, %v2152
        %v2192 = vadd.f32 %v2061, %v2153
        %v2193 = vadd.f32 %v2069, %v2144
        %v2194 = vadd.f32 %v2071, %v2137
        %v2195 = vadd.f32 %v2054, %v2151
        %v2196 = vadd.f32 %v2068, %v2152
        %v2197 = vadd.f32 %v2070, %v2153
        %v2198 = vadd.f32 %v2072, %v2144
        %v2199 = vtanh.pop %v2159
        %v2200 = vtanh.pop %v2160
        %v2201 = vtanh.pop %v2161
        %v2202 = vtanh.pop %v2162
        %v2203 = vtanh.pop %v2163
        %v2204 = vtanh.pop %v2164
        %v2205 = vtanh.pop %v2165
        %v2206 = vtanh.pop %v2166
        %v2207 = vtanh.pop %v2167
        %v2208 = vtanh.pop %v2168
        %v2209 = vtanh.pop %v2169
        %v2210 = vtanh.pop %v2170
        %v2211 = vtanh.pop %v2171
        %v2212 = vtanh.pop %v2172
        %v2213 = vtanh.pop %v2173
        %v2214 = vtanh.pop %v2174
        %v2215 = vtanh.pop %v2175
        %v2216 = vtanh.pop %v2176
        %v2217 = vtanh.pop %v2177
        %v2218 = vtanh.pop %v2178
        %v2219 = vtanh.pop %v2179
        %v2220 = vtanh.pop %v2180
        %v2221 = vtanh.pop %v2181
        %v2222 = vtanh.pop %v2182
        %v2223 = vtanh.pop %v2183
        %v2224 = vtanh.pop %v2184
        %v2225 = vtanh.pop %v2185
        %v2226 = vtanh.pop %v2186
        %v2227 = vtanh.pop %v2187
        %v2228 = vtanh.pop %v2188
        %v2229 = vtanh.pop %v2189
        %v2230 = vtanh.pop %v2190
        %v2231 = vtanh.pop %v2191
        %v2232 = vtanh.pop %v2192
        %v2233 = vtanh.pop %v2193
        %v2234 = vtanh.pop %v2194
        %v2235 = vtanh.pop %v2195
        %v2236 = vtanh.pop %v2196
        %v2237 = vtanh.pop %v2197
        %v2238 = vtanh.pop %v2198
        %v2244 = vcombine.low %v2199, %v2200
        %v2245 = vcombine.low %v2201, %v2202
        %v2247 = vunpack.c.l.s4 1966171168
        %v2248 = vunpack.c.0.s8 %v2247
        %v2249 = vlaneseq
        %v2250 = vshrl.u32 %v2249, 7
        %v2251 = vsub.s32 %v2248, %v2250
        %v2252 = vrot.slane %v2244, %v2251
        %v2254 = vunpack.c.l.s4 1966171168
        %v2255 = vunpack.c.0.s8 %v2254
        %v2256 = vlaneseq
        %v2257 = vshrl.u32 %v2256, 7
        %v2258 = vsub.s32 %v2255, %v2257
        %v2259 = vrot.slane %v2245, %v2258
        %v2261 = vunpack.c.l.s4 1966171168
        %v2262 = vunpack.c.0.s8 %v2261
        %v2263 = vlaneseq
        %v2264 = vshrl.u32 %v2263, 7
        %v2265 = vsub.s32 %v2262, %v2264
        %v2266 = vrot.slane %v2203, %v2265
        %v2267 = vcombine.low %v2252, %v2259
        %v2269 = vunpack.c.l.s4 1966171168
        %v2270 = vunpack.c.0.s8 %v2269
        %v2271 = vlaneseq
        %v2272 = vshrl.u32 %v2271, 7
        %v2273 = vsub.s32 %v2270, %v2272
        %v2274 = vrot.slane %v2267, %v2273
        %v2276 = vunpack.c.l.s4 1966171168
        %v2277 = vunpack.c.0.s8 %v2276
        %v2278 = vlaneseq
        %v2279 = vshrl.u32 %v2278, 7
        %v2280 = vsub.s32 %v2277, %v2279
        %v2281 = vrot.slane %v2266, %v2280
        %v2282 = vcombine.low %v2274, %v2281
        %2283 = vrot.lane.b32.xlu0 %v2282, 96
        %v2284 = vpop.permute.xlu0 %2283
        %v2285 = vsel %vm1703, %v2282, 0
        %v2287 = vsel %vm1703, %v2284, 0
        %2289 = vmatprep.subr.mxu0 0.0
        %2290 = vmatpush1.xpose.msra.mxu0 0.0
        %2291 = vmatprep.subr.mxu0 0.0
        %2292 = vmatpush1.xpose.msra.mxu0 0.0
        %2293 = vmatprep.subr.mxu0 0.0
        %2294 = vmatpush1.xpose.msra.mxu0 0.0
        %2295 = vmatprep.subr.mxu0 0.0
        %2296 = vmatpush1.xpose.msra.mxu0 0.0
        %2297 = vmatprep.subr.mxu0 0.0
        %2298 = vmatpush1.xpose.msra.mxu0 0.0
        %2299 = vmatprep.subr.mxu0 0.0
        %2300 = vmatpush1.xpose.msra.mxu0 0.0
        %2301 = vmatprep.subr.mxu0 0.0
        %2302 = vmatpush1.xpose.msra.mxu0 0.0
        %2303 = vmatprep.subr.mxu0 0.0
        %2304 = vmatpush1.xpose.msra.mxu0 0.0
        %2305 = vmatprep.subr.mxu0 0.0
        %2306 = vmatpush1.xpose.msra.mxu0 0.0
        %2307 = vmatprep.subr.mxu0 0.0
        %2308 = vmatpush1.xpose.msra.mxu0 0.0
        %2309 = vmatprep.subr.mxu0 0.0
        %2310 = vmatpush1.xpose.msra.mxu0 0.0
        %2311 = vmatprep.subr.mxu0 0.0
        %2312 = vmatpush1.xpose.msra.mxu0 0.0
        %2313 = vmatprep.subr.mxu0 0.0
        %2314 = vmatpush1.xpose.msra.mxu0 0.0
        %2315 = vmatprep.subr.mxu0 0.0
        %2316 = vmatpush1.xpose.msra.mxu0 0.0
        %2317 = vmatprep.subr.mxu0 0.0
        %2318 = vmatpush1.xpose.msra.mxu0 0.0
        %2319 = vmatprep.subr.mxu0 0.0
        %2320 = vmatpush1.xpose.msra.mxu0 %v2287
        %2321 = vmatprep.subr.mxu0 0.0
        %2322 = vmatpush2.xpose.msra.mxu0 0.0
        %2323 = vmatprep.subr.mxu0 0.0
        %2324 = vmatpush2.xpose.msra.mxu0 0.0
        %2325 = vmatprep.subr.mxu0 0.0
        %2326 = vmatpush2.xpose.msra.mxu0 0.0
        %2327 = vmatprep.subr.mxu0 0.0
        %2328 = vmatpush2.xpose.msra.mxu0 0.0
        %2329 = vmatprep.subr.mxu0 0.0
        %2330 = vmatpush2.xpose.msra.mxu0 0.0
        %2331 = vmatprep.subr.mxu0 0.0
        %2332 = vmatpush2.xpose.msra.mxu0 0.0
        %2333 = vmatprep.subr.mxu0 0.0
        %2334 = vmatpush2.xpose.msra.mxu0 0.0
        %2335 = vmatprep.subr.mxu0 0.0
        %2336 = vmatpush2.xpose.msra.mxu0 0.0
        %2337 = vmatprep.subr.mxu0 0.0
        %2338 = vmatpush2.xpose.msra.mxu0 0.0
        %2339 = vmatprep.subr.mxu0 0.0
        %2340 = vmatpush2.xpose.msra.mxu0 0.0
        %2341 = vmatprep.subr.mxu0 0.0
        %2342 = vmatpush2.xpose.msra.mxu0 0.0
        %2343 = vmatprep.subr.mxu0 0.0
        %2344 = vmatpush2.xpose.msra.mxu0 0.0
        %2345 = vmatprep.subr.mxu0 0.0
        %2346 = vmatpush2.xpose.msra.mxu0 0.0
        %2347 = vmatprep.subr.mxu0 0.0
        %2348 = vmatpush2.xpose.msra.mxu0 0.0
        %2349 = vmatprep.subr.mxu0 0.0
        %2350 = vmatpush2.xpose.msra.mxu0 0.0
        %2351 = vmatprep.subr.mxu0 0.0
        %2352 = vmatpush2.xpose.msra.mxu0 0.0
        %2353 = vmatprep.mubr.f32.mxu0 0.0
        %2354 = vmatmul.mubr.f32.gmra.mxu0 %v2285
        %v2355 = vpop.f32.mrf.mxu0
        %v2356 = vadd.f32 0.0, %v2355
        %v2357 = vpop.f32.mrf.mxu0
        %2358 = vdwg.mxu0
        %v2364 = vcombine.low %v2204, %v2205
        %v2365 = vcombine.low %v2206, %v2207
        %v2367 = vunpack.c.l.s4 1966171168
        %v2368 = vunpack.c.0.s8 %v2367
        %v2369 = vlaneseq
        %v2370 = vshrl.u32 %v2369, 7
        %v2371 = vsub.s32 %v2368, %v2370
        %v2372 = vrot.slane %v2364, %v2371
        %v2374 = vunpack.c.l.s4 1966171168
        %v2375 = vunpack.c.0.s8 %v2374
        %v2376 = vlaneseq
        %v2377 = vshrl.u32 %v2376, 7
        %v2378 = vsub.s32 %v2375, %v2377
        %v2379 = vrot.slane %v2365, %v2378
        %v2381 = vunpack.c.l.s4 1966171168
        %v2382 = vunpack.c.0.s8 %v2381
        %v2383 = vlaneseq
        %v2384 = vshrl.u32 %v2383, 7
        %v2385 = vsub.s32 %v2382, %v2384
        %v2386 = vrot.slane %v2208, %v2385
        %v2387 = vcombine.low %v2372, %v2379
        %v2389 = vunpack.c.l.s4 1966171168
        %v2390 = vunpack.c.0.s8 %v2389
        %v2391 = vlaneseq
        %v2392 = vshrl.u32 %v2391, 7
        %v2393 = vsub.s32 %v2390, %v2392
        %v2394 = vrot.slane %v2387, %v2393
        %v2396 = vunpack.c.l.s4 1966171168
        %v2397 = vunpack.c.0.s8 %v2396
        %v2398 = vlaneseq
        %v2399 = vshrl.u32 %v2398, 7
        %v2400 = vsub.s32 %v2397, %v2399
        %v2401 = vrot.slane %v2386, %v2400
        %v2402 = vcombine.low %v2394, %v2401
        %2403 = vrot.lane.b32.xlu0 %v2402, 96
        %v2404 = vpop.permute.xlu0 %2403
        %v2405 = vsel %vm1703, %v2402, 0
        %v2407 = vsel %vm1703, %v2404, 0
        %2409 = vmatprep.subr.mxu0 0.0
        %2410 = vmatpush1.xpose.msra.mxu0 0.0
        %2411 = vmatprep.subr.mxu0 0.0
        %2412 = vmatpush1.xpose.msra.mxu0 0.0
        %2413 = vmatprep.subr.mxu0 0.0
        %2414 = vmatpush1.xpose.msra.mxu0 0.0
        %2415 = vmatprep.subr.mxu0 0.0
        %2416 = vmatpush1.xpose.msra.mxu0 0.0
        %2417 = vmatprep.subr.mxu0 0.0
        %2418 = vmatpush1.xpose.msra.mxu0 0.0
        %2419 = vmatprep.subr.mxu0 0.0
        %2420 = vmatpush1.xpose.msra.mxu0 0.0
        %2421 = vmatprep.subr.mxu0 0.0
        %2422 = vmatpush1.xpose.msra.mxu0 0.0
        %2423 = vmatprep.subr.mxu0 0.0
        %2424 = vmatpush1.xpose.msra.mxu0 0.0
        %2425 = vmatprep.subr.mxu0 0.0
        %2426 = vmatpush1.xpose.msra.mxu0 0.0
        %2427 = vmatprep.subr.mxu0 0.0
        %2428 = vmatpush1.xpose.msra.mxu0 0.0
        %2429 = vmatprep.subr.mxu0 0.0
        %2430 = vmatpush1.xpose.msra.mxu0 0.0
        %2431 = vmatprep.subr.mxu0 0.0
        %2432 = vmatpush1.xpose.msra.mxu0 0.0
        %2433 = vmatprep.subr.mxu0 0.0
        %2434 = vmatpush1.xpose.msra.mxu0 0.0
        %2435 = vmatprep.subr.mxu0 0.0
        %2436 = vmatpush1.xpose.msra.mxu0 0.0
        %2437 = vmatprep.subr.mxu0 0.0
        %2438 = vmatpush1.xpose.msra.mxu0 0.0
        %2439 = vmatprep.subr.mxu0 0.0
        %2440 = vmatpush1.xpose.msra.mxu0 %v2407
        %2441 = vmatprep.subr.mxu0 0.0
        %2442 = vmatpush2.xpose.msra.mxu0 0.0
        %2443 = vmatprep.subr.mxu0 0.0
        %2444 = vmatpush2.xpose.msra.mxu0 0.0
        %2445 = vmatprep.subr.mxu0 0.0
        %2446 = vmatpush2.xpose.msra.mxu0 0.0
        %2447 = vmatprep.subr.mxu0 0.0
        %2448 = vmatpush2.xpose.msra.mxu0 0.0
        %2449 = vmatprep.subr.mxu0 0.0
        %2450 = vmatpush2.xpose.msra.mxu0 0.0
        %2451 = vmatprep.subr.mxu0 0.0
        %2452 = vmatpush2.xpose.msra.mxu0 0.0
        %2453 = vmatprep.subr.mxu0 0.0
        %2454 = vmatpush2.xpose.msra.mxu0 0.0
        %2455 = vmatprep.subr.mxu0 0.0
        %2456 = vmatpush2.xpose.msra.mxu0 0.0
        %2457 = vmatprep.subr.mxu0 0.0
        %2458 = vmatpush2.xpose.msra.mxu0 0.0
        %2459 = vmatprep.subr.mxu0 0.0
        %2460 = vmatpush2.xpose.msra.mxu0 0.0
        %2461 = vmatprep.subr.mxu0 0.0
        %2462 = vmatpush2.xpose.msra.mxu0 0.0
        %2463 = vmatprep.subr.mxu0 0.0
        %2464 = vmatpush2.xpose.msra.mxu0 0.0
        %2465 = vmatprep.subr.mxu0 0.0
        %2466 = vmatpush2.xpose.msra.mxu0 0.0
        %2467 = vmatprep.subr.mxu0 0.0
        %2468 = vmatpush2.xpose.msra.mxu0 0.0
        %2469 = vmatprep.subr.mxu0 0.0
        %2470 = vmatpush2.xpose.msra.mxu0 0.0
        %2471 = vmatprep.subr.mxu0 0.0
        %2472 = vmatpush2.xpose.msra.mxu0 0.0
        %2473 = vmatprep.mubr.f32.mxu0 0.0
        %2474 = vmatmul.mubr.f32.gmra.mxu0 %v2405
        %v2475 = vpop.f32.mrf.mxu0
        %v2476 = vadd.f32 0.0, %v2475
        %v2477 = vpop.f32.mrf.mxu0
        %2478 = vdwg.mxu0
        %v2484 = vcombine.low %v2209, %v2210
        %v2485 = vcombine.low %v2211, %v2212
        %v2487 = vunpack.c.l.s4 1966171168
        %v2488 = vunpack.c.0.s8 %v2487
        %v2489 = vlaneseq
        %v2490 = vshrl.u32 %v2489, 7
        %v2491 = vsub.s32 %v2488, %v2490
        %v2492 = vrot.slane %v2484, %v2491
        %v2494 = vunpack.c.l.s4 1966171168
        %v2495 = vunpack.c.0.s8 %v2494
        %v2496 = vlaneseq
        %v2497 = vshrl.u32 %v2496, 7
        %v2498 = vsub.s32 %v2495, %v2497
        %v2499 = vrot.slane %v2485, %v2498
        %v2501 = vunpack.c.l.s4 1966171168
        %v2502 = vunpack.c.0.s8 %v2501
        %v2503 = vlaneseq
        %v2504 = vshrl.u32 %v2503, 7
        %v2505 = vsub.s32 %v2502, %v2504
        %v2506 = vrot.slane %v2213, %v2505
        %v2507 = vcombine.low %v2492, %v2499
        %v2509 = vunpack.c.l.s4 1966171168
        %v2510 = vunpack.c.0.s8 %v2509
        %v2511 = vlaneseq
        %v2512 = vshrl.u32 %v2511, 7
        %v2513 = vsub.s32 %v2510, %v2512
        %v2514 = vrot.slane %v2507, %v2513
        %v2516 = vunpack.c.l.s4 1966171168
        %v2517 = vunpack.c.0.s8 %v2516
        %v2518 = vlaneseq
        %v2519 = vshrl.u32 %v2518, 7
        %v2520 = vsub.s32 %v2517, %v2519
        %v2521 = vrot.slane %v2506, %v2520
        %v2522 = vcombine.low %v2514, %v2521
        %2523 = vrot.lane.b32.xlu0 %v2522, 96
        %v2524 = vpop.permute.xlu0 %2523
        %v2525 = vsel %vm1703, %v2522, 0
        %v2527 = vsel %vm1703, %v2524, 0
        %2529 = vmatprep.subr.mxu0 0.0
        %2530 = vmatpush1.xpose.msra.mxu0 0.0
        %2531 = vmatprep.subr.mxu0 0.0
        %2532 = vmatpush1.xpose.msra.mxu0 0.0
        %2533 = vmatprep.subr.mxu0 0.0
        %2534 = vmatpush1.xpose.msra.mxu0 0.0
        %2535 = vmatprep.subr.mxu0 0.0
        %2536 = vmatpush1.xpose.msra.mxu0 0.0
        %2537 = vmatprep.subr.mxu0 0.0
        %2538 = vmatpush1.xpose.msra.mxu0 0.0
        %2539 = vmatprep.subr.mxu0 0.0
        %2540 = vmatpush1.xpose.msra.mxu0 0.0
        %2541 = vmatprep.subr.mxu0 0.0
        %2542 = vmatpush1.xpose.msra.mxu0 0.0
        %2543 = vmatprep.subr.mxu0 0.0
        %2544 = vmatpush1.xpose.msra.mxu0 0.0
        %2545 = vmatprep.subr.mxu0 0.0
        %2546 = vmatpush1.xpose.msra.mxu0 0.0
        %2547 = vmatprep.subr.mxu0 0.0
        %2548 = vmatpush1.xpose.msra.mxu0 0.0
        %2549 = vmatprep.subr.mxu0 0.0
        %2550 = vmatpush1.xpose.msra.mxu0 0.0
        %2551 = vmatprep.subr.mxu0 0.0
        %2552 = vmatpush1.xpose.msra.mxu0 0.0
        %2553 = vmatprep.subr.mxu0 0.0
        %2554 = vmatpush1.xpose.msra.mxu0 0.0
        %2555 = vmatprep.subr.mxu0 0.0
        %2556 = vmatpush1.xpose.msra.mxu0 0.0
        %2557 = vmatprep.subr.mxu0 0.0
        %2558 = vmatpush1.xpose.msra.mxu0 0.0
        %2559 = vmatprep.subr.mxu0 0.0
        %2560 = vmatpush1.xpose.msra.mxu0 %v2527
        %2561 = vmatprep.subr.mxu0 0.0
        %2562 = vmatpush2.xpose.msra.mxu0 0.0
        %2563 = vmatprep.subr.mxu0 0.0
        %2564 = vmatpush2.xpose.msra.mxu0 0.0
        %2565 = vmatprep.subr.mxu0 0.0
        %2566 = vmatpush2.xpose.msra.mxu0 0.0
        %2567 = vmatprep.subr.mxu0 0.0
        %2568 = vmatpush2.xpose.msra.mxu0 0.0
        %2569 = vmatprep.subr.mxu0 0.0
        %2570 = vmatpush2.xpose.msra.mxu0 0.0
        %2571 = vmatprep.subr.mxu0 0.0
        %2572 = vmatpush2.xpose.msra.mxu0 0.0
        %2573 = vmatprep.subr.mxu0 0.0
        %2574 = vmatpush2.xpose.msra.mxu0 0.0
        %2575 = vmatprep.subr.mxu0 0.0
        %2576 = vmatpush2.xpose.msra.mxu0 0.0
        %2577 = vmatprep.subr.mxu0 0.0
        %2578 = vmatpush2.xpose.msra.mxu0 0.0
        %2579 = vmatprep.subr.mxu0 0.0
        %2580 = vmatpush2.xpose.msra.mxu0 0.0
        %2581 = vmatprep.subr.mxu0 0.0
        %2582 = vmatpush2.xpose.msra.mxu0 0.0
        %2583 = vmatprep.subr.mxu0 0.0
        %2584 = vmatpush2.xpose.msra.mxu0 0.0
        %2585 = vmatprep.subr.mxu0 0.0
        %2586 = vmatpush2.xpose.msra.mxu0 0.0
        %2587 = vmatprep.subr.mxu0 0.0
        %2588 = vmatpush2.xpose.msra.mxu0 0.0
        %2589 = vmatprep.subr.mxu0 0.0
        %2590 = vmatpush2.xpose.msra.mxu0 0.0
        %2591 = vmatprep.subr.mxu0 0.0
        %2592 = vmatpush2.xpose.msra.mxu0 0.0
        %2593 = vmatprep.mubr.f32.mxu0 0.0
        %2594 = vmatmul.mubr.f32.gmra.mxu0 %v2525
        %v2595 = vpop.f32.mrf.mxu0
        %v2596 = vadd.f32 0.0, %v2595
        %v2597 = vpop.f32.mrf.mxu0
        %2598 = vdwg.mxu0
        %v2604 = vcombine.low %v2214, %v2215
        %v2605 = vcombine.low %v2216, %v2217
        %v2607 = vunpack.c.l.s4 1966171168
        %v2608 = vunpack.c.0.s8 %v2607
        %v2609 = vlaneseq
        %v2610 = vshrl.u32 %v2609, 7
        %v2611 = vsub.s32 %v2608, %v2610
        %v2612 = vrot.slane %v2604, %v2611
        %v2614 = vunpack.c.l.s4 1966171168
        %v2615 = vunpack.c.0.s8 %v2614
        %v2616 = vlaneseq
        %v2617 = vshrl.u32 %v2616, 7
        %v2618 = vsub.s32 %v2615, %v2617
        %v2619 = vrot.slane %v2605, %v2618
        %v2621 = vunpack.c.l.s4 1966171168
        %v2622 = vunpack.c.0.s8 %v2621
        %v2623 = vlaneseq
        %v2624 = vshrl.u32 %v2623, 7
        %v2625 = vsub.s32 %v2622, %v2624
        %v2626 = vrot.slane %v2218, %v2625
        %v2627 = vcombine.low %v2612, %v2619
        %v2629 = vunpack.c.l.s4 1966171168
        %v2630 = vunpack.c.0.s8 %v2629
        %v2631 = vlaneseq
        %v2632 = vshrl.u32 %v2631, 7
        %v2633 = vsub.s32 %v2630, %v2632
        %v2634 = vrot.slane %v2627, %v2633
        %v2636 = vunpack.c.l.s4 1966171168
        %v2637 = vunpack.c.0.s8 %v2636
        %v2638 = vlaneseq
        %v2639 = vshrl.u32 %v2638, 7
        %v2640 = vsub.s32 %v2637, %v2639
        %v2641 = vrot.slane %v2626, %v2640
        %v2642 = vcombine.low %v2634, %v2641
        %2643 = vrot.lane.b32.xlu0 %v2642, 96
        %v2644 = vpop.permute.xlu0 %2643
        %v2645 = vsel %vm1703, %v2642, 0
        %v2647 = vsel %vm1703, %v2644, 0
        %2649 = vmatprep.subr.mxu0 0.0
        %2650 = vmatpush1.xpose.msra.mxu0 0.0
        %2651 = vmatprep.subr.mxu0 0.0
        %2652 = vmatpush1.xpose.msra.mxu0 0.0
        %2653 = vmatprep.subr.mxu0 0.0
        %2654 = vmatpush1.xpose.msra.mxu0 0.0
        %2655 = vmatprep.subr.mxu0 0.0
        %2656 = vmatpush1.xpose.msra.mxu0 0.0
        %2657 = vmatprep.subr.mxu0 0.0
        %2658 = vmatpush1.xpose.msra.mxu0 0.0
        %2659 = vmatprep.subr.mxu0 0.0
        %2660 = vmatpush1.xpose.msra.mxu0 0.0
        %2661 = vmatprep.subr.mxu0 0.0
        %2662 = vmatpush1.xpose.msra.mxu0 0.0
        %2663 = vmatprep.subr.mxu0 0.0
        %2664 = vmatpush1.xpose.msra.mxu0 0.0
        %2665 = vmatprep.subr.mxu0 0.0
        %2666 = vmatpush1.xpose.msra.mxu0 0.0
        %2667 = vmatprep.subr.mxu0 0.0
        %2668 = vmatpush1.xpose.msra.mxu0 0.0
        %2669 = vmatprep.subr.mxu0 0.0
        %2670 = vmatpush1.xpose.msra.mxu0 0.0
        %2671 = vmatprep.subr.mxu0 0.0
        %2672 = vmatpush1.xpose.msra.mxu0 0.0
        %2673 = vmatprep.subr.mxu0 0.0
        %2674 = vmatpush1.xpose.msra.mxu0 0.0
        %2675 = vmatprep.subr.mxu0 0.0
        %2676 = vmatpush1.xpose.msra.mxu0 0.0
        %2677 = vmatprep.subr.mxu0 0.0
        %2678 = vmatpush1.xpose.msra.mxu0 0.0
        %2679 = vmatprep.subr.mxu0 0.0
        %2680 = vmatpush1.xpose.msra.mxu0 %v2647
        %2681 = vmatprep.subr.mxu0 0.0
        %2682 = vmatpush2.xpose.msra.mxu0 0.0
        %2683 = vmatprep.subr.mxu0 0.0
        %2684 = vmatpush2.xpose.msra.mxu0 0.0
        %2685 = vmatprep.subr.mxu0 0.0
        %2686 = vmatpush2.xpose.msra.mxu0 0.0
        %2687 = vmatprep.subr.mxu0 0.0
        %2688 = vmatpush2.xpose.msra.mxu0 0.0
        %2689 = vmatprep.subr.mxu0 0.0
        %2690 = vmatpush2.xpose.msra.mxu0 0.0
        %2691 = vmatprep.subr.mxu0 0.0
        %2692 = vmatpush2.xpose.msra.mxu0 0.0
        %2693 = vmatprep.subr.mxu0 0.0
        %2694 = vmatpush2.xpose.msra.mxu0 0.0
        %2695 = vmatprep.subr.mxu0 0.0
        %2696 = vmatpush2.xpose.msra.mxu0 0.0
        %2697 = vmatprep.subr.mxu0 0.0
        %2698 = vmatpush2.xpose.msra.mxu0 0.0
        %2699 = vmatprep.subr.mxu0 0.0
        %2700 = vmatpush2.xpose.msra.mxu0 0.0
        %2701 = vmatprep.subr.mxu0 0.0
        %2702 = vmatpush2.xpose.msra.mxu0 0.0
        %2703 = vmatprep.subr.mxu0 0.0
        %2704 = vmatpush2.xpose.msra.mxu0 0.0
        %2705 = vmatprep.subr.mxu0 0.0
        %2706 = vmatpush2.xpose.msra.mxu0 0.0
        %2707 = vmatprep.subr.mxu0 0.0
        %2708 = vmatpush2.xpose.msra.mxu0 0.0
        %2709 = vmatprep.subr.mxu0 0.0
        %2710 = vmatpush2.xpose.msra.mxu0 0.0
        %2711 = vmatprep.subr.mxu0 0.0
        %2712 = vmatpush2.xpose.msra.mxu0 0.0
        %2713 = vmatprep.mubr.f32.mxu0 0.0
        %2714 = vmatmul.mubr.f32.gmra.mxu0 %v2645
        %v2715 = vpop.f32.mrf.mxu0
        %v2716 = vadd.f32 0.0, %v2715
        %v2717 = vpop.f32.mrf.mxu0
        %2718 = vdwg.mxu0
        %v2724 = vcombine.low %v2219, %v2220
        %v2725 = vcombine.low %v2221, %v2222
        %v2727 = vunpack.c.l.s4 1966171168
        %v2728 = vunpack.c.0.s8 %v2727
        %v2729 = vlaneseq
        %v2730 = vshrl.u32 %v2729, 7
        %v2731 = vsub.s32 %v2728, %v2730
        %v2732 = vrot.slane %v2724, %v2731
        %v2734 = vunpack.c.l.s4 1966171168
        %v2735 = vunpack.c.0.s8 %v2734
        %v2736 = vlaneseq
        %v2737 = vshrl.u32 %v2736, 7
        %v2738 = vsub.s32 %v2735, %v2737
        %v2739 = vrot.slane %v2725, %v2738
        %v2741 = vunpack.c.l.s4 1966171168
        %v2742 = vunpack.c.0.s8 %v2741
        %v2743 = vlaneseq
        %v2744 = vshrl.u32 %v2743, 7
        %v2745 = vsub.s32 %v2742, %v2744
        %v2746 = vrot.slane %v2223, %v2745
        %v2747 = vcombine.low %v2732, %v2739
        %v2749 = vunpack.c.l.s4 1966171168
        %v2750 = vunpack.c.0.s8 %v2749
        %v2751 = vlaneseq
        %v2752 = vshrl.u32 %v2751, 7
        %v2753 = vsub.s32 %v2750, %v2752
        %v2754 = vrot.slane %v2747, %v2753
        %v2756 = vunpack.c.l.s4 1966171168
        %v2757 = vunpack.c.0.s8 %v2756
        %v2758 = vlaneseq
        %v2759 = vshrl.u32 %v2758, 7
        %v2760 = vsub.s32 %v2757, %v2759
        %v2761 = vrot.slane %v2746, %v2760
        %v2762 = vcombine.low %v2754, %v2761
        %2763 = vrot.lane.b32.xlu0 %v2762, 96
        %v2764 = vpop.permute.xlu0 %2763
        %v2765 = vsel %vm1703, %v2762, 0
        %v2767 = vsel %vm1703, %v2764, 0
        %2769 = vmatprep.subr.mxu0 0.0
        %2770 = vmatpush1.xpose.msra.mxu0 0.0
        %2771 = vmatprep.subr.mxu0 0.0
        %2772 = vmatpush1.xpose.msra.mxu0 0.0
        %2773 = vmatprep.subr.mxu0 0.0
        %2774 = vmatpush1.xpose.msra.mxu0 0.0
        %2775 = vmatprep.subr.mxu0 0.0
        %2776 = vmatpush1.xpose.msra.mxu0 0.0
        %2777 = vmatprep.subr.mxu0 0.0
        %2778 = vmatpush1.xpose.msra.mxu0 0.0
        %2779 = vmatprep.subr.mxu0 0.0
        %2780 = vmatpush1.xpose.msra.mxu0 0.0
        %2781 = vmatprep.subr.mxu0 0.0
        %2782 = vmatpush1.xpose.msra.mxu0 0.0
        %2783 = vmatprep.subr.mxu0 0.0
        %2784 = vmatpush1.xpose.msra.mxu0 0.0
        %2785 = vmatprep.subr.mxu0 0.0
        %2786 = vmatpush1.xpose.msra.mxu0 0.0
        %2787 = vmatprep.subr.mxu0 0.0
        %2788 = vmatpush1.xpose.msra.mxu0 0.0
        %2789 = vmatprep.subr.mxu0 0.0
        %2790 = vmatpush1.xpose.msra.mxu0 0.0
        %2791 = vmatprep.subr.mxu0 0.0
        %2792 = vmatpush1.xpose.msra.mxu0 0.0
        %2793 = vmatprep.subr.mxu0 0.0
        %2794 = vmatpush1.xpose.msra.mxu0 0.0
        %2795 = vmatprep.subr.mxu0 0.0
        %2796 = vmatpush1.xpose.msra.mxu0 0.0
        %2797 = vmatprep.subr.mxu0 0.0
        %2798 = vmatpush1.xpose.msra.mxu0 0.0
        %2799 = vmatprep.subr.mxu0 0.0
        %2800 = vmatpush1.xpose.msra.mxu0 %v2767
        %2801 = vmatprep.subr.mxu0 0.0
        %2802 = vmatpush2.xpose.msra.mxu0 0.0
        %2803 = vmatprep.subr.mxu0 0.0
        %2804 = vmatpush2.xpose.msra.mxu0 0.0
        %2805 = vmatprep.subr.mxu0 0.0
        %2806 = vmatpush2.xpose.msra.mxu0 0.0
        %2807 = vmatprep.subr.mxu0 0.0
        %2808 = vmatpush2.xpose.msra.mxu0 0.0
        %2809 = vmatprep.subr.mxu0 0.0
        %2810 = vmatpush2.xpose.msra.mxu0 0.0
        %2811 = vmatprep.subr.mxu0 0.0
        %2812 = vmatpush2.xpose.msra.mxu0 0.0
        %2813 = vmatprep.subr.mxu0 0.0
        %2814 = vmatpush2.xpose.msra.mxu0 0.0
        %2815 = vmatprep.subr.mxu0 0.0
        %2816 = vmatpush2.xpose.msra.mxu0 0.0
        %2817 = vmatprep.subr.mxu0 0.0
        %2818 = vmatpush2.xpose.msra.mxu0 0.0
        %2819 = vmatprep.subr.mxu0 0.0
        %2820 = vmatpush2.xpose.msra.mxu0 0.0
        %2821 = vmatprep.subr.mxu0 0.0
        %2822 = vmatpush2.xpose.msra.mxu0 0.0
        %2823 = vmatprep.subr.mxu0 0.0
        %2824 = vmatpush2.xpose.msra.mxu0 0.0
        %2825 = vmatprep.subr.mxu0 0.0
        %2826 = vmatpush2.xpose.msra.mxu0 0.0
        %2827 = vmatprep.subr.mxu0 0.0
        %2828 = vmatpush2.xpose.msra.mxu0 0.0
        %2829 = vmatprep.subr.mxu0 0.0
        %2830 = vmatpush2.xpose.msra.mxu0 0.0
        %2831 = vmatprep.subr.mxu0 0.0
        %2832 = vmatpush2.xpose.msra.mxu0 0.0
        %2833 = vmatprep.mubr.f32.mxu0 0.0
        %2834 = vmatmul.mubr.f32.gmra.mxu0 %v2765
        %v2835 = vpop.f32.mrf.mxu0
        %v2836 = vadd.f32 0.0, %v2835
        %v2837 = vpop.f32.mrf.mxu0
        %2838 = vdwg.mxu0
        %v2844 = vcombine.low %v2224, %v2225
        %v2845 = vcombine.low %v2226, %v2227
        %v2847 = vunpack.c.l.s4 1966171168
        %v2848 = vunpack.c.0.s8 %v2847
        %v2849 = vlaneseq
        %v2850 = vshrl.u32 %v2849, 7
        %v2851 = vsub.s32 %v2848, %v2850
        %v2852 = vrot.slane %v2844, %v2851
        %v2854 = vunpack.c.l.s4 1966171168
        %v2855 = vunpack.c.0.s8 %v2854
        %v2856 = vlaneseq
        %v2857 = vshrl.u32 %v2856, 7
        %v2858 = vsub.s32 %v2855, %v2857
        %v2859 = vrot.slane %v2845, %v2858
        %v2861 = vunpack.c.l.s4 1966171168
        %v2862 = vunpack.c.0.s8 %v2861
        %v2863 = vlaneseq
        %v2864 = vshrl.u32 %v2863, 7
        %v2865 = vsub.s32 %v2862, %v2864
        %v2866 = vrot.slane %v2228, %v2865
        %v2867 = vcombine.low %v2852, %v2859
        %v2869 = vunpack.c.l.s4 1966171168
        %v2870 = vunpack.c.0.s8 %v2869
        %v2871 = vlaneseq
        %v2872 = vshrl.u32 %v2871, 7
        %v2873 = vsub.s32 %v2870, %v2872
        %v2874 = vrot.slane %v2867, %v2873
        %v2876 = vunpack.c.l.s4 1966171168
        %v2877 = vunpack.c.0.s8 %v2876
        %v2878 = vlaneseq
        %v2879 = vshrl.u32 %v2878, 7
        %v2880 = vsub.s32 %v2877, %v2879
        %v2881 = vrot.slane %v2866, %v2880
        %v2882 = vcombine.low %v2874, %v2881
        %2883 = vrot.lane.b32.xlu0 %v2882, 96
        %v2884 = vpop.permute.xlu0 %2883
        %v2885 = vsel %vm1703, %v2882, 0
        %v2887 = vsel %vm1703, %v2884, 0
        %2889 = vmatprep.subr.mxu0 0.0
        %2890 = vmatpush1.xpose.msra.mxu0 0.0
        %2891 = vmatprep.subr.mxu0 0.0
        %2892 = vmatpush1.xpose.msra.mxu0 0.0
        %2893 = vmatprep.subr.mxu0 0.0
        %2894 = vmatpush1.xpose.msra.mxu0 0.0
        %2895 = vmatprep.subr.mxu0 0.0
        %2896 = vmatpush1.xpose.msra.mxu0 0.0
        %2897 = vmatprep.subr.mxu0 0.0
        %2898 = vmatpush1.xpose.msra.mxu0 0.0
        %2899 = vmatprep.subr.mxu0 0.0
        %2900 = vmatpush1.xpose.msra.mxu0 0.0
        %2901 = vmatprep.subr.mxu0 0.0
        %2902 = vmatpush1.xpose.msra.mxu0 0.0
        %2903 = vmatprep.subr.mxu0 0.0
        %2904 = vmatpush1.xpose.msra.mxu0 0.0
        %2905 = vmatprep.subr.mxu0 0.0
        %2906 = vmatpush1.xpose.msra.mxu0 0.0
        %2907 = vmatprep.subr.mxu0 0.0
        %2908 = vmatpush1.xpose.msra.mxu0 0.0
        %2909 = vmatprep.subr.mxu0 0.0
        %2910 = vmatpush1.xpose.msra.mxu0 0.0
        %2911 = vmatprep.subr.mxu0 0.0
        %2912 = vmatpush1.xpose.msra.mxu0 0.0
        %2913 = vmatprep.subr.mxu0 0.0
        %2914 = vmatpush1.xpose.msra.mxu0 0.0
        %2915 = vmatprep.subr.mxu0 0.0
        %2916 = vmatpush1.xpose.msra.mxu0 0.0
        %2917 = vmatprep.subr.mxu0 0.0
        %2918 = vmatpush1.xpose.msra.mxu0 0.0
        %2919 = vmatprep.subr.mxu0 0.0
        %2920 = vmatpush1.xpose.msra.mxu0 %v2887
        %2921 = vmatprep.subr.mxu0 0.0
        %2922 = vmatpush2.xpose.msra.mxu0 0.0
        %2923 = vmatprep.subr.mxu0 0.0
        %2924 = vmatpush2.xpose.msra.mxu0 0.0
        %2925 = vmatprep.subr.mxu0 0.0
        %2926 = vmatpush2.xpose.msra.mxu0 0.0
        %2927 = vmatprep.subr.mxu0 0.0
        %2928 = vmatpush2.xpose.msra.mxu0 0.0
        %2929 = vmatprep.subr.mxu0 0.0
        %2930 = vmatpush2.xpose.msra.mxu0 0.0
        %2931 = vmatprep.subr.mxu0 0.0
        %2932 = vmatpush2.xpose.msra.mxu0 0.0
        %2933 = vmatprep.subr.mxu0 0.0
        %2934 = vmatpush2.xpose.msra.mxu0 0.0
        %2935 = vmatprep.subr.mxu0 0.0
        %2936 = vmatpush2.xpose.msra.mxu0 0.0
        %2937 = vmatprep.subr.mxu0 0.0
        %2938 = vmatpush2.xpose.msra.mxu0 0.0
        %2939 = vmatprep.subr.mxu0 0.0
        %2940 = vmatpush2.xpose.msra.mxu0 0.0
        %2941 = vmatprep.subr.mxu0 0.0
        %2942 = vmatpush2.xpose.msra.mxu0 0.0
        %2943 = vmatprep.subr.mxu0 0.0
        %2944 = vmatpush2.xpose.msra.mxu0 0.0
        %2945 = vmatprep.subr.mxu0 0.0
        %2946 = vmatpush2.xpose.msra.mxu0 0.0
        %2947 = vmatprep.subr.mxu0 0.0
        %2948 = vmatpush2.xpose.msra.mxu0 0.0
        %2949 = vmatprep.subr.mxu0 0.0
        %2950 = vmatpush2.xpose.msra.mxu0 0.0
        %2951 = vmatprep.subr.mxu0 0.0
        %2952 = vmatpush2.xpose.msra.mxu0 0.0
        %2953 = vmatprep.mubr.f32.mxu0 0.0
        %2954 = vmatmul.mubr.f32.gmra.mxu0 %v2885
        %v2955 = vpop.f32.mrf.mxu0
        %v2956 = vadd.f32 0.0, %v2955
        %v2957 = vpop.f32.mrf.mxu0
        %2958 = vdwg.mxu0
        %v2964 = vcombine.low %v2229, %v2230
        %v2965 = vcombine.low %v2231, %v2232
        %v2967 = vunpack.c.l.s4 1966171168
        %v2968 = vunpack.c.0.s8 %v2967
        %v2969 = vlaneseq
        %v2970 = vshrl.u32 %v2969, 7
        %v2971 = vsub.s32 %v2968, %v2970
        %v2972 = vrot.slane %v2964, %v2971
        %v2974 = vunpack.c.l.s4 1966171168
        %v2975 = vunpack.c.0.s8 %v2974
        %v2976 = vlaneseq
        %v2977 = vshrl.u32 %v2976, 7
        %v2978 = vsub.s32 %v2975, %v2977
        %v2979 = vrot.slane %v2965, %v2978
        %v2981 = vunpack.c.l.s4 1966171168
        %v2982 = vunpack.c.0.s8 %v2981
        %v2983 = vlaneseq
        %v2984 = vshrl.u32 %v2983, 7
        %v2985 = vsub.s32 %v2982, %v2984
        %v2986 = vrot.slane %v2233, %v2985
        %v2987 = vcombine.low %v2972, %v2979
        %v2989 = vunpack.c.l.s4 1966171168
        %v2990 = vunpack.c.0.s8 %v2989
        %v2991 = vlaneseq
        %v2992 = vshrl.u32 %v2991, 7
        %v2993 = vsub.s32 %v2990, %v2992
        %v2994 = vrot.slane %v2987, %v2993
        %v2996 = vunpack.c.l.s4 1966171168
        %v2997 = vunpack.c.0.s8 %v2996
        %v2998 = vlaneseq
        %v2999 = vshrl.u32 %v2998, 7
        %v3000 = vsub.s32 %v2997, %v2999
        %v3001 = vrot.slane %v2986, %v3000
        %v3002 = vcombine.low %v2994, %v3001
        %3003 = vrot.lane.b32.xlu0 %v3002, 96
        %v3004 = vpop.permute.xlu0 %3003
        %v3005 = vsel %vm1703, %v3002, 0
        %v3007 = vsel %vm1703, %v3004, 0
        %3009 = vmatprep.subr.mxu0 0.0
        %3010 = vmatpush1.xpose.msra.mxu0 0.0
        %3011 = vmatprep.subr.mxu0 0.0
        %3012 = vmatpush1.xpose.msra.mxu0 0.0
        %3013 = vmatprep.subr.mxu0 0.0
        %3014 = vmatpush1.xpose.msra.mxu0 0.0
        %3015 = vmatprep.subr.mxu0 0.0
        %3016 = vmatpush1.xpose.msra.mxu0 0.0
        %3017 = vmatprep.subr.mxu0 0.0
        %3018 = vmatpush1.xpose.msra.mxu0 0.0
        %3019 = vmatprep.subr.mxu0 0.0
        %3020 = vmatpush1.xpose.msra.mxu0 0.0
        %3021 = vmatprep.subr.mxu0 0.0
        %3022 = vmatpush1.xpose.msra.mxu0 0.0
        %3023 = vmatprep.subr.mxu0 0.0
        %3024 = vmatpush1.xpose.msra.mxu0 0.0
        %3025 = vmatprep.subr.mxu0 0.0
        %3026 = vmatpush1.xpose.msra.mxu0 0.0
        %3027 = vmatprep.subr.mxu0 0.0
        %3028 = vmatpush1.xpose.msra.mxu0 0.0
        %3029 = vmatprep.subr.mxu0 0.0
        %3030 = vmatpush1.xpose.msra.mxu0 0.0
        %3031 = vmatprep.subr.mxu0 0.0
        %3032 = vmatpush1.xpose.msra.mxu0 0.0
        %3033 = vmatprep.subr.mxu0 0.0
        %3034 = vmatpush1.xpose.msra.mxu0 0.0
        %3035 = vmatprep.subr.mxu0 0.0
        %3036 = vmatpush1.xpose.msra.mxu0 0.0
        %3037 = vmatprep.subr.mxu0 0.0
        %3038 = vmatpush1.xpose.msra.mxu0 0.0
        %3039 = vmatprep.subr.mxu0 0.0
        %3040 = vmatpush1.xpose.msra.mxu0 %v3007
        %3041 = vmatprep.subr.mxu0 0.0
        %3042 = vmatpush2.xpose.msra.mxu0 0.0
        %3043 = vmatprep.subr.mxu0 0.0
        %3044 = vmatpush2.xpose.msra.mxu0 0.0
        %3045 = vmatprep.subr.mxu0 0.0
        %3046 = vmatpush2.xpose.msra.mxu0 0.0
        %3047 = vmatprep.subr.mxu0 0.0
        %3048 = vmatpush2.xpose.msra.mxu0 0.0
        %3049 = vmatprep.subr.mxu0 0.0
        %3050 = vmatpush2.xpose.msra.mxu0 0.0
        %3051 = vmatprep.subr.mxu0 0.0
        %3052 = vmatpush2.xpose.msra.mxu0 0.0
        %3053 = vmatprep.subr.mxu0 0.0
        %3054 = vmatpush2.xpose.msra.mxu0 0.0
        %3055 = vmatprep.subr.mxu0 0.0
        %3056 = vmatpush2.xpose.msra.mxu0 0.0
        %3057 = vmatprep.subr.mxu0 0.0
        %3058 = vmatpush2.xpose.msra.mxu0 0.0
        %3059 = vmatprep.subr.mxu0 0.0
        %3060 = vmatpush2.xpose.msra.mxu0 0.0
        %3061 = vmatprep.subr.mxu0 0.0
        %3062 = vmatpush2.xpose.msra.mxu0 0.0
        %3063 = vmatprep.subr.mxu0 0.0
        %3064 = vmatpush2.xpose.msra.mxu0 0.0
        %3065 = vmatprep.subr.mxu0 0.0
        %3066 = vmatpush2.xpose.msra.mxu0 0.0
        %3067 = vmatprep.subr.mxu0 0.0
        %3068 = vmatpush2.xpose.msra.mxu0 0.0
        %3069 = vmatprep.subr.mxu0 0.0
        %3070 = vmatpush2.xpose.msra.mxu0 0.0
        %3071 = vmatprep.subr.mxu0 0.0
        %3072 = vmatpush2.xpose.msra.mxu0 0.0
        %3073 = vmatprep.mubr.f32.mxu0 0.0
        %3074 = vmatmul.mubr.f32.gmra.mxu0 %v3005
        %v3075 = vpop.f32.mrf.mxu0
        %v3076 = vadd.f32 0.0, %v3075
        %v3077 = vpop.f32.mrf.mxu0
        %3078 = vdwg.mxu0
        %v3084 = vcombine.low %v2234, %v2235
        %v3085 = vcombine.low %v2236, %v2237
        %v3087 = vunpack.c.l.s4 1966171168
        %v3088 = vunpack.c.0.s8 %v3087
        %v3089 = vlaneseq
        %v3090 = vshrl.u32 %v3089, 7
        %v3091 = vsub.s32 %v3088, %v3090
        %v3092 = vrot.slane %v3084, %v3091
        %v3094 = vunpack.c.l.s4 1966171168
        %v3095 = vunpack.c.0.s8 %v3094
        %v3096 = vlaneseq
        %v3097 = vshrl.u32 %v3096, 7
        %v3098 = vsub.s32 %v3095, %v3097
        %v3099 = vrot.slane %v3085, %v3098
        %v3101 = vunpack.c.l.s4 1966171168
        %v3102 = vunpack.c.0.s8 %v3101
        %v3103 = vlaneseq
        %v3104 = vshrl.u32 %v3103, 7
        %v3105 = vsub.s32 %v3102, %v3104
        %v3106 = vrot.slane %v2238, %v3105
        %v3107 = vcombine.low %v3092, %v3099
        %v3109 = vunpack.c.l.s4 1966171168
        %v3110 = vunpack.c.0.s8 %v3109
        %v3111 = vlaneseq
        %v3112 = vshrl.u32 %v3111, 7
        %v3113 = vsub.s32 %v3110, %v3112
        %v3114 = vrot.slane %v3107, %v3113
        %v3116 = vunpack.c.l.s4 1966171168
        %v3117 = vunpack.c.0.s8 %v3116
        %v3118 = vlaneseq
        %v3119 = vshrl.u32 %v3118, 7
        %v3120 = vsub.s32 %v3117, %v3119
        %v3121 = vrot.slane %v3106, %v3120
        %v3122 = vcombine.low %v3114, %v3121
        %3123 = vrot.lane.b32.xlu0 %v3122, 96
        %v3124 = vpop.permute.xlu0 %3123
        %v3125 = vsel %vm1703, %v3122, 0
        %v3127 = vsel %vm1703, %v3124, 0
        %3129 = vmatprep.subr.mxu0 0.0
        %3130 = vmatpush1.xpose.msra.mxu0 0.0
        %3131 = vmatprep.subr.mxu0 0.0
        %3132 = vmatpush1.xpose.msra.mxu0 0.0
        %3133 = vmatprep.subr.mxu0 0.0
        %3134 = vmatpush1.xpose.msra.mxu0 0.0
        %3135 = vmatprep.subr.mxu0 0.0
        %3136 = vmatpush1.xpose.msra.mxu0 0.0
        %3137 = vmatprep.subr.mxu0 0.0
        %3138 = vmatpush1.xpose.msra.mxu0 0.0
        %3139 = vmatprep.subr.mxu0 0.0
        %3140 = vmatpush1.xpose.msra.mxu0 0.0
        %3141 = vmatprep.subr.mxu0 0.0
        %3142 = vmatpush1.xpose.msra.mxu0 0.0
        %3143 = vmatprep.subr.mxu0 0.0
        %3144 = vmatpush1.xpose.msra.mxu0 0.0
        %3145 = vmatprep.subr.mxu0 0.0
        %3146 = vmatpush1.xpose.msra.mxu0 0.0
        %3147 = vmatprep.subr.mxu0 0.0
        %3148 = vmatpush1.xpose.msra.mxu0 0.0
        %3149 = vmatprep.subr.mxu0 0.0
        %3150 = vmatpush1.xpose.msra.mxu0 0.0
        %3151 = vmatprep.subr.mxu0 0.0
        %3152 = vmatpush1.xpose.msra.mxu0 0.0
        %3153 = vmatprep.subr.mxu0 0.0
        %3154 = vmatpush1.xpose.msra.mxu0 0.0
        %3155 = vmatprep.subr.mxu0 0.0
        %3156 = vmatpush1.xpose.msra.mxu0 0.0
        %3157 = vmatprep.subr.mxu0 0.0
        %3158 = vmatpush1.xpose.msra.mxu0 0.0
        %3159 = vmatprep.subr.mxu0 0.0
        %3160 = vmatpush1.xpose.msra.mxu0 %v3127
        %3161 = vmatprep.subr.mxu0 0.0
        %3162 = vmatpush2.xpose.msra.mxu0 0.0
        %3163 = vmatprep.subr.mxu0 0.0
        %3164 = vmatpush2.xpose.msra.mxu0 0.0
        %3165 = vmatprep.subr.mxu0 0.0
        %3166 = vmatpush2.xpose.msra.mxu0 0.0
        %3167 = vmatprep.subr.mxu0 0.0
        %3168 = vmatpush2.xpose.msra.mxu0 0.0
        %3169 = vmatprep.subr.mxu0 0.0
        %3170 = vmatpush2.xpose.msra.mxu0 0.0
        %3171 = vmatprep.subr.mxu0 0.0
        %3172 = vmatpush2.xpose.msra.mxu0 0.0
        %3173 = vmatprep.subr.mxu0 0.0
        %3174 = vmatpush2.xpose.msra.mxu0 0.0
        %3175 = vmatprep.subr.mxu0 0.0
        %3176 = vmatpush2.xpose.msra.mxu0 0.0
        %3177 = vmatprep.subr.mxu0 0.0
        %3178 = vmatpush2.xpose.msra.mxu0 0.0
        %3179 = vmatprep.subr.mxu0 0.0
        %3180 = vmatpush2.xpose.msra.mxu0 0.0
        %3181 = vmatprep.subr.mxu0 0.0
        %3182 = vmatpush2.xpose.msra.mxu0 0.0
        %3183 = vmatprep.subr.mxu0 0.0
        %3184 = vmatpush2.xpose.msra.mxu0 0.0
        %3185 = vmatprep.subr.mxu0 0.0
        %3186 = vmatpush2.xpose.msra.mxu0 0.0
        %3187 = vmatprep.subr.mxu0 0.0
        %3188 = vmatpush2.xpose.msra.mxu0 0.0
        %3189 = vmatprep.subr.mxu0 0.0
        %3190 = vmatpush2.xpose.msra.mxu0 0.0
        %3191 = vmatprep.subr.mxu0 0.0
        %3192 = vmatpush2.xpose.msra.mxu0 0.0
        %3193 = vmatprep.mubr.f32.mxu0 0.0
        %3194 = vmatmul.mubr.f32.gmra.mxu0 %v3125
        %v3195 = vpop.f32.mrf.mxu0
        %v3196 = vadd.f32 0.0, %v3195
        %v3197 = vpop.f32.mrf.mxu0
        %3198 = vdwg.mxu0
        %vm3199 = vcmask 36864
        %v3200 = vsel %vm3199, %v2356, 0.0
        %v3201 = vsel %vm3199, %v2476, 0.0
        %v3202 = vadd.f32 %v3200, %v3201
        %v3203 = vsel %vm3199, %v2596, 0.0
        %v3204 = vadd.f32 %v3202, %v3203
        %v3205 = vsel %vm3199, %v2716, 0.0
        %v3206 = vadd.f32 %v3204, %v3205
        %v3207 = vsel %vm3199, %v2836, 0.0
        %v3208 = vadd.f32 %v3206, %v3207
        %v3209 = vsel %vm3199, %v2956, 0.0
        %v3210 = vadd.f32 %v3208, %v3209
        %v3211 = vsel %vm3199, %v3076, 0.0
        %v3212 = vadd.f32 %v3210, %v3211
        %v3213 = vsel %vm3199, %v3196, 0.0
        %v3214 = vadd.f32 %v3212, %v3213
        %v3215 = vsel %vm3199, %v2356, -inf
        %v3216 = vrot.slane %v3215, 4
        %v3217 = vmax.f32 %v3215, %v3216
        %v3218 = vrot.slane %v3217, 2
        %v3219 = vmax.f32 %v3217, %v3218
        %v3220 = vrot.slane %v3219, 1
        %v3221 = vmax.f32 %v3219, %v3220
        %v3222 = vsel %vm3199, %v2476, -inf
        %v3223 = vrot.slane %v3222, 4
        %v3224 = vmax.f32 %v3222, %v3223
        %v3225 = vrot.slane %v3224, 2
        %v3226 = vmax.f32 %v3224, %v3225
        %v3227 = vrot.slane %v3226, 1
        %v3228 = vmax.f32 %v3226, %v3227
        %v3229 = vsel %vm3199, %v2596, -inf
        %v3230 = vrot.slane %v3229, 4
        %v3231 = vmax.f32 %v3229, %v3230
        %v3232 = vrot.slane %v3231, 2
        %v3233 = vmax.f32 %v3231, %v3232
        %v3234 = vrot.slane %v3233, 1
        %v3235 = vmax.f32 %v3233, %v3234
        %v3236 = vsel %vm3199, %v2716, -inf
        %v3237 = vrot.slane %v3236, 4
        %v3238 = vmax.f32 %v3236, %v3237
        %v3239 = vrot.slane %v3238, 2
        %v3240 = vmax.f32 %v3238, %v3239
        %v3241 = vrot.slane %v3240, 1
        %v3242 = vmax.f32 %v3240, %v3241
        %v3243 = vsel %vm3199, %v2836, -inf
        %v3244 = vrot.slane %v3243, 4
        %v3245 = vmax.f32 %v3243, %v3244
        %v3246 = vrot.slane %v3245, 2
        %v3247 = vmax.f32 %v3245, %v3246
        %v3248 = vrot.slane %v3247, 1
        %v3249 = vmax.f32 %v3247, %v3248
        %v3250 = vsel %vm3199, %v2956, -inf
        %v3251 = vrot.slane %v3250, 4
        %v3252 = vmax.f32 %v3250, %v3251
        %v3253 = vrot.slane %v3252, 2
        %v3254 = vmax.f32 %v3252, %v3253
        %v3255 = vrot.slane %v3254, 1
        %v3256 = vmax.f32 %v3254, %v3255
        %v3257 = vsel %vm3199, %v3076, -inf
        %v3258 = vrot.slane %v3257, 4
        %v3259 = vmax.f32 %v3257, %v3258
        %v3260 = vrot.slane %v3259, 2
        %v3261 = vmax.f32 %v3259, %v3260
        %v3262 = vrot.slane %v3261, 1
        %v3263 = vmax.f32 %v3261, %v3262
        %v3264 = vsel %vm3199, %v3196, -inf
        %v3265 = vrot.slane %v3264, 4
        %v3266 = vmax.f32 %v3264, %v3265
        %v3267 = vrot.slane %v3266, 2
        %v3268 = vmax.f32 %v3266, %v3267
        %v3269 = vrot.slane %v3268, 1
        %v3270 = vmax.f32 %v3268, %v3269
        %v3271 = vsub.f32 %v2356, %v3221
        %v3272 = vsub.f32 %v2476, %v3228
        %v3273 = vsub.f32 %v2596, %v3235
        %v3274 = vsub.f32 %v2716, %v3242
        %v3275 = vsub.f32 %v2836, %v3249
        %v3276 = vsub.f32 %v2956, %v3256
        %v3277 = vsub.f32 %v3076, %v3263
        %v3278 = vsub.f32 %v3196, %v3270
        %v3279 = vmul.f32 %v3271, 1.442695
        %v3280 = vpow.pop %v3279
        %v3281 = vmul.f32 %v3272, 1.442695
        %v3282 = vpow.pop %v3281
        %v3283 = vmul.f32 %v3273, 1.442695
        %v3284 = vpow.pop %v3283
        %v3285 = vmul.f32 %v3274, 1.442695
        %v3286 = vpow.pop %v3285
        %v3287 = vmul.f32 %v3275, 1.442695
        %v3288 = vpow.pop %v3287
        %v3289 = vmul.f32 %v3276, 1.442695
        %v3290 = vpow.pop %v3289
        %v3291 = vmul.f32 %v3277, 1.442695
        %v3292 = vpow.pop %v3291
        %v3293 = vmul.f32 %v3278, 1.442695
        %v3294 = vpow.pop %v3293
        %v3295 = vsel %vm3199, %v3280, 0.0
        %v3296 = vrot.slane %v3295, 4
        %v3297 = vadd.f32 %v3295, %v3296
        %v3298 = vrot.slane %v3297, 2
        %v3299 = vadd.f32 %v3297, %v3298
        %v3300 = vrot.slane %v3299, 1
        %v3301 = vadd.f32 %v3299, %v3300
        %v3302 = vsel %vm3199, %v3282, 0.0
        %v3303 = vrot.slane %v3302, 4
        %v3304 = vadd.f32 %v3302, %v3303
        %v3305 = vrot.slane %v3304, 2
        %v3306 = vadd.f32 %v3304, %v3305
        %v3307 = vrot.slane %v3306, 1
        %v3308 = vadd.f32 %v3306, %v3307
        %v3309 = vsel %vm3199, %v3284, 0.0
        %v3310 = vrot.slane %v3309, 4
        %v3311 = vadd.f32 %v3309, %v3310
        %v3312 = vrot.slane %v3311, 2
        %v3313 = vadd.f32 %v3311, %v3312
        %v3314 = vrot.slane %v3313, 1
        %v3315 = vadd.f32 %v3313, %v3314
        %v3316 = vsel %vm3199, %v3286, 0.0
        %v3317 = vrot.slane %v3316, 4
        %v3318 = vadd.f32 %v3316, %v3317
        %v3319 = vrot.slane %v3318, 2
        %v3320 = vadd.f32 %v3318, %v3319
        %v3321 = vrot.slane %v3320, 1
        %v3322 = vadd.f32 %v3320, %v3321
        %v3323 = vsel %vm3199, %v3288, 0.0
        %v3324 = vrot.slane %v3323, 4
        %v3325 = vadd.f32 %v3323, %v3324
        %v3326 = vrot.slane %v3325, 2
        %v3327 = vadd.f32 %v3325, %v3326
        %v3328 = vrot.slane %v3327, 1
        %v3329 = vadd.f32 %v3327, %v3328
        %v3330 = vsel %vm3199, %v3290, 0.0
        %v3331 = vrot.slane %v3330, 4
        %v3332 = vadd.f32 %v3330, %v3331
        %v3333 = vrot.slane %v3332, 2
        %v3334 = vadd.f32 %v3332, %v3333
        %v3335 = vrot.slane %v3334, 1
        %v3336 = vadd.f32 %v3334, %v3335
        %v3337 = vsel %vm3199, %v3292, 0.0
        %v3338 = vrot.slane %v3337, 4
        %v3339 = vadd.f32 %v3337, %v3338
        %v3340 = vrot.slane %v3339, 2
        %v3341 = vadd.f32 %v3339, %v3340
        %v3342 = vrot.slane %v3341, 1
        %v3343 = vadd.f32 %v3341, %v3342
        %v3344 = vsel %vm3199, %v3294, 0.0
        %v3345 = vrot.slane %v3344, 4
        %v3346 = vadd.f32 %v3344, %v3345
        %v3347 = vrot.slane %v3346, 2
        %v3348 = vadd.f32 %v3346, %v3347
        %v3349 = vrot.slane %v3348, 1
        %v3350 = vadd.f32 %v3348, %v3349
        %v3351 = vrcp.pop %v3301
        %v3352 = vrcp.pop %v3308
        %v3353 = vrcp.pop %v3315
        %v3354 = vrcp.pop %v3322
        %v3355 = vrcp.pop %v3329
        %v3356 = vrcp.pop %v3336
        %v3357 = vrcp.pop %v3343
        %v3358 = vrcp.pop %v3350
        %v3359 = vmul.f32 %v3280, %v3351
        %v3360 = vmul.f32 %v3282, %v3352
        %v3361 = vmul.f32 %v3284, %v3353
        %v3362 = vmul.f32 %v3286, %v3354
        %v3363 = vmul.f32 %v3288, %v3355
        %v3364 = vmul.f32 %v3290, %v3356
        %v3365 = vmul.f32 %v3292, %v3357
        %v3366 = vmul.f32 %v3294, %v3358
        %3367 = vmax.xlane.f32.xlu0 %v3215
        %v3368 = vpop.xlane.xlu0 %3367
        %3369 = vmax.xlane.f32.xlu0 %v3222
        %v3370 = vpop.xlane.xlu0 %3369
        %3371 = vmax.xlane.f32.xlu0 %v3229
        %v3372 = vpop.xlane.xlu0 %3371
        %3373 = vmax.xlane.f32.xlu0 %v3236
        %v3374 = vpop.xlane.xlu0 %3373
        %3375 = vmax.xlane.f32.xlu0 %v3243
        %v3376 = vpop.xlane.xlu0 %3375
        %3377 = vmax.xlane.f32.xlu0 %v3250
        %v3378 = vpop.xlane.xlu0 %3377
        %3379 = vmax.xlane.f32.xlu0 %v3257
        %v3380 = vpop.xlane.xlu0 %3379
        %3381 = vmax.xlane.f32.xlu0 %v3264
        %v3382 = vpop.xlane.xlu0 %3381
        %v3383 = vsub.f32 %v2356, %v3368
        %v3384 = vsub.f32 %v2476, %v3370
        %v3385 = vsub.f32 %v2596, %v3372
        %v3386 = vsub.f32 %v2716, %v3374
        %v3387 = vsub.f32 %v2836, %v3376
        %v3388 = vsub.f32 %v2956, %v3378
        %v3389 = vsub.f32 %v3076, %v3380
        %v3390 = vsub.f32 %v3196, %v3382
        %v3391 = vmul.f32 %v3383, 1.442695
        %v3392 = vpow.pop %v3391
        %v3393 = vmul.f32 %v3384, 1.442695
        %v3394 = vpow.pop %v3393
        %v3395 = vmul.f32 %v3385, 1.442695
        %v3396 = vpow.pop %v3395
        %v3397 = vmul.f32 %v3386, 1.442695
        %v3398 = vpow.pop %v3397
        %v3399 = vmul.f32 %v3387, 1.442695
        %v3400 = vpow.pop %v3399
        %v3401 = vmul.f32 %v3388, 1.442695
        %v3402 = vpow.pop %v3401
        %v3403 = vmul.f32 %v3389, 1.442695
        %v3404 = vpow.pop %v3403
        %v3405 = vmul.f32 %v3390, 1.442695
        %v3406 = vpow.pop %v3405
        %v3407 = vsel %vm3199, %v3392, 0.0
        %3408 = vadd.xlane.f32.xlu0 %v3407
        %v3409 = vpop.xlane.xlu0 %3408
        %v3410 = vsel %vm3199, %v3394, 0.0
        %3411 = vadd.xlane.f32.xlu0 %v3410
        %v3412 = vpop.xlane.xlu0 %3411
        %v3413 = vsel %vm3199, %v3396, 0.0
        %3414 = vadd.xlane.f32.xlu0 %v3413
        %v3415 = vpop.xlane.xlu0 %3414
        %v3416 = vsel %vm3199, %v3398, 0.0
        %3417 = vadd.xlane.f32.xlu0 %v3416
        %v3418 = vpop.xlane.xlu0 %3417
        %v3419 = vsel %vm3199, %v3400, 0.0
        %3420 = vadd.xlane.f32.xlu0 %v3419
        %v3421 = vpop.xlane.xlu0 %3420
        %v3422 = vsel %vm3199, %v3402, 0.0
        %3423 = vadd.xlane.f32.xlu0 %v3422
        %v3424 = vpop.xlane.xlu0 %3423
        %v3425 = vsel %vm3199, %v3404, 0.0
        %3426 = vadd.xlane.f32.xlu0 %v3425
        %v3427 = vpop.xlane.xlu0 %3426
        %v3428 = vsel %vm3199, %v3406, 0.0
        %3429 = vadd.xlane.f32.xlu0 %v3428
        %v3430 = vpop.xlane.xlu0 %3429
        %v3431 = vrcp.pop %v3409
        %v3432 = vrcp.pop %v3412
        %v3433 = vrcp.pop %v3415
        %v3434 = vrcp.pop %v3418
        %v3435 = vrcp.pop %v3421
        %v3436 = vrcp.pop %v3424
        %v3437 = vrcp.pop %v3427
        %v3438 = vrcp.pop %v3430
        %v3439 = vmul.f32 %v3392, %v3431
        %v3440 = vmul.f32 %v3394, %v3432
        %v3441 = vmul.f32 %v3396, %v3433
        %v3442 = vmul.f32 %v3398, %v3434
        %v3443 = vmul.f32 %v3400, %v3435
        %v3444 = vmul.f32 %v3402, %v3436
        %v3445 = vmul.f32 %v3404, %v3437
        %v3446 = vmul.f32 %v3406, %v3438
        %3447 = vxpose.xlu0.b32.start [1/16] %v3359, 128
        %3448 = vxpose.xlu0.b32.cont [2/16] 0.0, 128
        %3449 = vxpose.xlu0.b32.cont [3/16] 0.0, 128
        %3450 = vxpose.xlu0.b32.cont [4/16] 0.0, 128
        %3451 = vxpose.xlu0.b32.cont [5/16] 0.0, 128
        %3452 = vxpose.xlu0.b32.cont [6/16] 0.0, 128
        %3453 = vxpose.xlu0.b32.cont [7/16] 0.0, 128
        %3454 = vxpose.xlu0.b32.cont [8/16] 0.0, 128
        %3455 = vxpose.xlu0.b32.cont [9/16] 0.0, 128
        %3456 = vxpose.xlu0.b32.cont [10/16] 0.0, 128
        %3457 = vxpose.xlu0.b32.cont [11/16] 0.0, 128
        %3458 = vxpose.xlu0.b32.cont [12/16] 0.0, 128
        %3459 = vxpose.xlu0.b32.cont [13/16] 0.0, 128
        %3460 = vxpose.xlu0.b32.cont [14/16] 0.0, 128
        %3461 = vxpose.xlu0.b32.cont [15/16] 0.0, 128
        %3462 = vxpose.xlu0.b32.end [16/16] 0.0, 128
        %v3463 = vpop.trf.xlu0
        %v3464 = vpop.trf.xlu0
        %v3465 = vpop.trf.xlu0
        %v3466 = vpop.trf.xlu0
        %v3467 = vpop.trf.xlu0
        %v3468 = vpop.trf.xlu0
        %v3469 = vpop.trf.xlu0
        %v3470 = vpop.trf.xlu0
        %v3471 = vpop.trf.xlu0
        %v3472 = vpop.trf.xlu0
        %v3473 = vpop.trf.xlu0
        %v3474 = vpop.trf.xlu0
        %v3475 = vpop.trf.xlu0
        %v3476 = vpop.trf.xlu0
        %v3477 = vpop.trf.xlu0
        %v3478 = vpop.trf.xlu0
        %vm3479 = vcmask 39936
        %v3481 = vsel %vm3479, %v3463, 0
        %vm3483 = vcmask 1044480
        %v3484 = vsel %vm3483, %v2282, 0
        %3486 = vmatprep.subr.mxu0 0.0
        %3487 = vmatpush1.msra.mxu0 0.0
        %3488 = vmatprep.subr.mxu0 0.0
        %3489 = vmatpush1.msra.mxu0 0.0
        %3490 = vmatprep.subr.mxu0 0.0
        %3491 = vmatpush1.msra.mxu0 0.0
        %3492 = vmatprep.subr.mxu0 0.0
        %3493 = vmatpush1.msra.mxu0 0.0
        %3494 = vmatprep.subr.mxu0 0.0
        %3495 = vmatpush1.msra.mxu0 0.0
        %3496 = vmatprep.subr.mxu0 0.0
        %3497 = vmatpush1.msra.mxu0 0.0
        %3498 = vmatprep.subr.mxu0 0.0
        %3499 = vmatpush1.msra.mxu0 0.0
        %3500 = vmatprep.subr.mxu0 0.0
        %3501 = vmatpush1.msra.mxu0 0.0
        %3502 = vmatprep.subr.mxu0 0.0
        %3503 = vmatpush1.msra.mxu0 0.0
        %3504 = vmatprep.subr.mxu0 0.0
        %3505 = vmatpush1.msra.mxu0 0.0
        %3506 = vmatprep.subr.mxu0 0.0
        %3507 = vmatpush1.msra.mxu0 0.0
        %3508 = vmatprep.subr.mxu0 0.0
        %3509 = vmatpush1.msra.mxu0 0.0
        %3510 = vmatprep.subr.mxu0 0.0
        %3511 = vmatpush1.msra.mxu0 0.0
        %3512 = vmatprep.subr.mxu0 0.0
        %3513 = vmatpush1.msra.mxu0 0.0
        %3514 = vmatprep.subr.mxu0 0.0
        %3515 = vmatpush1.msra.mxu0 0.0
        %3516 = vmatprep.subr.mxu0 0.0
        %3517 = vmatpush1.msra.mxu0 %v3484
        %3518 = vmatprep.subr.mxu0 0.0
        %3519 = vmatpush2.msra.mxu0 0.0
        %3520 = vmatprep.subr.mxu0 0.0
        %3521 = vmatpush2.msra.mxu0 0.0
        %3522 = vmatprep.subr.mxu0 0.0
        %3523 = vmatpush2.msra.mxu0 0.0
        %3524 = vmatprep.subr.mxu0 0.0
        %3525 = vmatpush2.msra.mxu0 0.0
        %3526 = vmatprep.subr.mxu0 0.0
        %3527 = vmatpush2.msra.mxu0 0.0
        %3528 = vmatprep.subr.mxu0 0.0
        %3529 = vmatpush2.msra.mxu0 0.0
        %3530 = vmatprep.subr.mxu0 0.0
        %3531 = vmatpush2.msra.mxu0 0.0
        %3532 = vmatprep.subr.mxu0 0.0
        %3533 = vmatpush2.msra.mxu0 0.0
        %3534 = vmatprep.subr.mxu0 0.0
        %3535 = vmatpush2.msra.mxu0 0.0
        %3536 = vmatprep.subr.mxu0 0.0
        %3537 = vmatpush2.msra.mxu0 0.0
        %3538 = vmatprep.subr.mxu0 0.0
        %3539 = vmatpush2.msra.mxu0 0.0
        %3540 = vmatprep.subr.mxu0 0.0
        %3541 = vmatpush2.msra.mxu0 0.0
        %3542 = vmatprep.subr.mxu0 0.0
        %3543 = vmatpush2.msra.mxu0 0.0
        %3544 = vmatprep.subr.mxu0 0.0
        %3545 = vmatpush2.msra.mxu0 0.0
        %3546 = vmatprep.subr.mxu0 0.0
        %3547 = vmatpush2.msra.mxu0 0.0
        %3548 = vmatprep.subr.mxu0 0.0
        %3549 = vmatpush2.msra.mxu0 0.0
        %3550 = vmatprep.mubr.f32.mxu0 0.0
        %3551 = vmatmul.mubr.f32.gmra.mxu0 %v3481
        %v3552 = vpop.f32.mrf.mxu0
        %v3553 = vadd.f32 0.0, %v3552
        %v3554 = vpop.f32.mrf.mxu0
        %3555 = vdwg.mxu0
        %3556 = vxpose.xlu0.b32.start [1/16] %v3360, 128
        %3557 = vxpose.xlu0.b32.cont [2/16] 0.0, 128
        %3558 = vxpose.xlu0.b32.cont [3/16] 0.0, 128
        %3559 = vxpose.xlu0.b32.cont [4/16] 0.0, 128
        %3560 = vxpose.xlu0.b32.cont [5/16] 0.0, 128
        %3561 = vxpose.xlu0.b32.cont [6/16] 0.0, 128
        %3562 = vxpose.xlu0.b32.cont [7/16] 0.0, 128
        %3563 = vxpose.xlu0.b32.cont [8/16] 0.0, 128
        %3564 = vxpose.xlu0.b32.cont [9/16] 0.0, 128
        %3565 = vxpose.xlu0.b32.cont [10/16] 0.0, 128
        %3566 = vxpose.xlu0.b32.cont [11/16] 0.0, 128
        %3567 = vxpose.xlu0.b32.cont [12/16] 0.0, 128
        %3568 = vxpose.xlu0.b32.cont [13/16] 0.0, 128
        %3569 = vxpose.xlu0.b32.cont [14/16] 0.0, 128
        %3570 = vxpose.xlu0.b32.cont [15/16] 0.0, 128
        %3571 = vxpose.xlu0.b32.end [16/16] 0.0, 128
        %v3572 = vpop.trf.xlu0
        %v3573 = vpop.trf.xlu0
        %v3574 = vpop.trf.xlu0
        %v3575 = vpop.trf.xlu0
        %v3576 = vpop.trf.xlu0
        %v3577 = vpop.trf.xlu0
        %v3578 = vpop.trf.xlu0
        %v3579 = vpop.trf.xlu0
        %v3580 = vpop.trf.xlu0
        %v3581 = vpop.trf.xlu0
        %v3582 = vpop.trf.xlu0
        %v3583 = vpop.trf.xlu0
        %v3584 = vpop.trf.xlu0
        %v3585 = vpop.trf.xlu0
        %v3586 = vpop.trf.xlu0
        %v3587 = vpop.trf.xlu0
        %v3589 = vsel %vm3479, %v3572, 0
        %v3591 = vsel %vm3483, %v2402, 0
        %3593 = vmatprep.subr.mxu0 0.0
        %3594 = vmatpush1.msra.mxu0 0.0
        %3595 = vmatprep.subr.mxu0 0.0
        %3596 = vmatpush1.msra.mxu0 0.0
        %3597 = vmatprep.subr.mxu0 0.0
        %3598 = vmatpush1.msra.mxu0 0.0
        %3599 = vmatprep.subr.mxu0 0.0
        %3600 = vmatpush1.msra.mxu0 0.0
        %3601 = vmatprep.subr.mxu0 0.0
        %3602 = vmatpush1.msra.mxu0 0.0
        %3603 = vmatprep.subr.mxu0 0.0
        %3604 = vmatpush1.msra.mxu0 0.0
        %3605 = vmatprep.subr.mxu0 0.0
        %3606 = vmatpush1.msra.mxu0 0.0
        %3607 = vmatprep.subr.mxu0 0.0
        %3608 = vmatpush1.msra.mxu0 0.0
        %3609 = vmatprep.subr.mxu0 0.0
        %3610 = vmatpush1.msra.mxu0 0.0
        %3611 = vmatprep.subr.mxu0 0.0
        %3612 = vmatpush1.msra.mxu0 0.0
        %3613 = vmatprep.subr.mxu0 0.0
        %3614 = vmatpush1.msra.mxu0 0.0
        %3615 = vmatprep.subr.mxu0 0.0
        %3616 = vmatpush1.msra.mxu0 0.0
        %3617 = vmatprep.subr.mxu0 0.0
        %3618 = vmatpush1.msra.mxu0 0.0
        %3619 = vmatprep.subr.mxu0 0.0
        %3620 = vmatpush1.msra.mxu0 0.0
        %3621 = vmatprep.subr.mxu0 0.0
        %3622 = vmatpush1.msra.mxu0 0.0
        %3623 = vmatprep.subr.mxu0 0.0
        %3624 = vmatpush1.msra.mxu0 %v3591
        %3625 = vmatprep.subr.mxu0 0.0
        %3626 = vmatpush2.msra.mxu0 0.0
        %3627 = vmatprep.subr.mxu0 0.0
        %3628 = vmatpush2.msra.mxu0 0.0
        %3629 = vmatprep.subr.mxu0 0.0
        %3630 = vmatpush2.msra.mxu0 0.0
        %3631 = vmatprep.subr.mxu0 0.0
        %3632 = vmatpush2.msra.mxu0 0.0
        %3633 = vmatprep.subr.mxu0 0.0
        %3634 = vmatpush2.msra.mxu0 0.0
        %3635 = vmatprep.subr.mxu0 0.0
        %3636 = vmatpush2.msra.mxu0 0.0
        %3637 = vmatprep.subr.mxu0 0.0
        %3638 = vmatpush2.msra.mxu0 0.0
        %3639 = vmatprep.subr.mxu0 0.0
        %3640 = vmatpush2.msra.mxu0 0.0
        %3641 = vmatprep.subr.mxu0 0.0
        %3642 = vmatpush2.msra.mxu0 0.0
        %3643 = vmatprep.subr.mxu0 0.0
        %3644 = vmatpush2.msra.mxu0 0.0
        %3645 = vmatprep.subr.mxu0 0.0
        %3646 = vmatpush2.msra.mxu0 0.0
        %3647 = vmatprep.subr.mxu0 0.0
        %3648 = vmatpush2.msra.mxu0 0.0
        %3649 = vmatprep.subr.mxu0 0.0
        %3650 = vmatpush2.msra.mxu0 0.0
        %3651 = vmatprep.subr.mxu0 0.0
        %3652 = vmatpush2.msra.mxu0 0.0
        %3653 = vmatprep.subr.mxu0 0.0
        %3654 = vmatpush2.msra.mxu0 0.0
        %3655 = vmatprep.subr.mxu0 0.0
        %3656 = vmatpush2.msra.mxu0 0.0
        %3657 = vmatprep.mubr.f32.mxu0 0.0
        %3658 = vmatmul.mubr.f32.gmra.mxu0 %v3589
        %v3659 = vpop.f32.mrf.mxu0
        %v3660 = vadd.f32 0.0, %v3659
        %v3661 = vpop.f32.mrf.mxu0
        %3662 = vdwg.mxu0
        %3663 = vxpose.xlu0.b32.start [1/16] %v3361, 128
        %3664 = vxpose.xlu0.b32.cont [2/16] 0.0, 128
        %3665 = vxpose.xlu0.b32.cont [3/16] 0.0, 128
        %3666 = vxpose.xlu0.b32.cont [4/16] 0.0, 128
        %3667 = vxpose.xlu0.b32.cont [5/16] 0.0, 128
        %3668 = vxpose.xlu0.b32.cont [6/16] 0.0, 128
        %3669 = vxpose.xlu0.b32.cont [7/16] 0.0, 128
        %3670 = vxpose.xlu0.b32.cont [8/16] 0.0, 128
        %3671 = vxpose.xlu0.b32.cont [9/16] 0.0, 128
        %3672 = vxpose.xlu0.b32.cont [10/16] 0.0, 128
        %3673 = vxpose.xlu0.b32.cont [11/16] 0.0, 128
        %3674 = vxpose.xlu0.b32.cont [12/16] 0.0, 128
        %3675 = vxpose.xlu0.b32.cont [13/16] 0.0, 128
        %3676 = vxpose.xlu0.b32.cont [14/16] 0.0, 128
        %3677 = vxpose.xlu0.b32.cont [15/16] 0.0, 128
        %3678 = vxpose.xlu0.b32.end [16/16] 0.0, 128
        %v3679 = vpop.trf.xlu0
        %v3680 = vpop.trf.xlu0
        %v3681 = vpop.trf.xlu0
        %v3682 = vpop.trf.xlu0
        %v3683 = vpop.trf.xlu0
        %v3684 = vpop.trf.xlu0
        %v3685 = vpop.trf.xlu0
        %v3686 = vpop.trf.xlu0
        %v3687 = vpop.trf.xlu0
        %v3688 = vpop.trf.xlu0
        %v3689 = vpop.trf.xlu0
        %v3690 = vpop.trf.xlu0
        %v3691 = vpop.trf.xlu0
        %v3692 = vpop.trf.xlu0
        %v3693 = vpop.trf.xlu0
        %v3694 = vpop.trf.xlu0
        %v3696 = vsel %vm3479, %v3679, 0
        %v3698 = vsel %vm3483, %v2522, 0
        %3700 = vmatprep.subr.mxu0 0.0
        %3701 = vmatpush1.msra.mxu0 0.0
        %3702 = vmatprep.subr.mxu0 0.0
        %3703 = vmatpush1.msra.mxu0 0.0
        %3704 = vmatprep.subr.mxu0 0.0
        %3705 = vmatpush1.msra.mxu0 0.0
        %3706 = vmatprep.subr.mxu0 0.0
        %3707 = vmatpush1.msra.mxu0 0.0
        %3708 = vmatprep.subr.mxu0 0.0
        %3709 = vmatpush1.msra.mxu0 0.0
        %3710 = vmatprep.subr.mxu0 0.0
        %3711 = vmatpush1.msra.mxu0 0.0
        %3712 = vmatprep.subr.mxu0 0.0
        %3713 = vmatpush1.msra.mxu0 0.0
        %3714 = vmatprep.subr.mxu0 0.0
        %3715 = vmatpush1.msra.mxu0 0.0
        %3716 = vmatprep.subr.mxu0 0.0
        %3717 = vmatpush1.msra.mxu0 0.0
        %3718 = vmatprep.subr.mxu0 0.0
        %3719 = vmatpush1.msra.mxu0 0.0
        %3720 = vmatprep.subr.mxu0 0.0
        %3721 = vmatpush1.msra.mxu0 0.0
        %3722 = vmatprep.subr.mxu0 0.0
        %3723 = vmatpush1.msra.mxu0 0.0
        %3724 = vmatprep.subr.mxu0 0.0
        %3725 = vmatpush1.msra.mxu0 0.0
        %3726 = vmatprep.subr.mxu0 0.0
        %3727 = vmatpush1.msra.mxu0 0.0
        %3728 = vmatprep.subr.mxu0 0.0
        %3729 = vmatpush1.msra.mxu0 0.0
        %3730 = vmatprep.subr.mxu0 0.0
        %3731 = vmatpush1.msra.mxu0 %v3698
        %3732 = vmatprep.subr.mxu0 0.0
        %3733 = vmatpush2.msra.mxu0 0.0
        %3734 = vmatprep.subr.mxu0 0.0
        %3735 = vmatpush2.msra.mxu0 0.0
        %3736 = vmatprep.subr.mxu0 0.0
        %3737 = vmatpush2.msra.mxu0 0.0
        %3738 = vmatprep.subr.mxu0 0.0
        %3739 = vmatpush2.msra.mxu0 0.0
        %3740 = vmatprep.subr.mxu0 0.0
        %3741 = vmatpush2.msra.mxu0 0.0
        %3742 = vmatprep.subr.mxu0 0.0
        %3743 = vmatpush2.msra.mxu0 0.0
        %3744 = vmatprep.subr.mxu0 0.0
        %3745 = vmatpush2.msra.mxu0 0.0
        %3746 = vmatprep.subr.mxu0 0.0
        %3747 = vmatpush2.msra.mxu0 0.0
        %3748 = vmatprep.subr.mxu0 0.0
        %3749 = vmatpush2.msra.mxu0 0.0
        %3750 = vmatprep.subr.mxu0 0.0
        %3751 = vmatpush2.msra.mxu0 0.0
        %3752 = vmatprep.subr.mxu0 0.0
        %3753 = vmatpush2.msra.mxu0 0.0
        %3754 = vmatprep.subr.mxu0 0.0
        %3755 = vmatpush2.msra.mxu0 0.0
        %3756 = vmatprep.subr.mxu0 0.0
        %3757 = vmatpush2.msra.mxu0 0.0
        %3758 = vmatprep.subr.mxu0 0.0
        %3759 = vmatpush2.msra.mxu0 0.0
        %3760 = vmatprep.subr.mxu0 0.0
        %3761 = vmatpush2.msra.mxu0 0.0
        %3762 = vmatprep.subr.mxu0 0.0
        %3763 = vmatpush2.msra.mxu0 0.0
        %3764 = vmatprep.mubr.f32.mxu0 0.0
        %3765 = vmatmul.mubr.f32.gmra.mxu0 %v3696
        %v3766 = vpop.f32.mrf.mxu0
        %v3767 = vadd.f32 0.0, %v3766
        %v3768 = vpop.f32.mrf.mxu0
        %3769 = vdwg.mxu0
        %3770 = vxpose.xlu0.b32.start [1/16] %v3362, 128
        %3771 = vxpose.xlu0.b32.cont [2/16] 0.0, 128
        %3772 = vxpose.xlu0.b32.cont [3/16] 0.0, 128
        %3773 = vxpose.xlu0.b32.cont [4/16] 0.0, 128
        %3774 = vxpose.xlu0.b32.cont [5/16] 0.0, 128
        %3775 = vxpose.xlu0.b32.cont [6/16] 0.0, 128
        %3776 = vxpose.xlu0.b32.cont [7/16] 0.0, 128
        %3777 = vxpose.xlu0.b32.cont [8/16] 0.0, 128
        %3778 = vxpose.xlu0.b32.cont [9/16] 0.0, 128
        %3779 = vxpose.xlu0.b32.cont [10/16] 0.0, 128
        %3780 = vxpose.xlu0.b32.cont [11/16] 0.0, 128
        %3781 = vxpose.xlu0.b32.cont [12/16] 0.0, 128
        %3782 = vxpose.xlu0.b32.cont [13/16] 0.0, 128
        %3783 = vxpose.xlu0.b32.cont [14/16] 0.0, 128
        %3784 = vxpose.xlu0.b32.cont [15/16] 0.0, 128
        %3785 = vxpose.xlu0.b32.end [16/16] 0.0, 128
        %v3786 = vpop.trf.xlu0
        %v3787 = vpop.trf.xlu0
        %v3788 = vpop.trf.xlu0
        %v3789 = vpop.trf.xlu0
        %v3790 = vpop.trf.xlu0
        %v3791 = vpop.trf.xlu0
        %v3792 = vpop.trf.xlu0
        %v3793 = vpop.trf.xlu0
        %v3794 = vpop.trf.xlu0
        %v3795 = vpop.trf.xlu0
        %v3796 = vpop.trf.xlu0
        %v3797 = vpop.trf.xlu0
        %v3798 = vpop.trf.xlu0
        %v3799 = vpop.trf.xlu0
        %v3800 = vpop.trf.xlu0
        %v3801 = vpop.trf.xlu0
        %v3803 = vsel %vm3479, %v3786, 0
        %v3805 = vsel %vm3483, %v2642, 0
        %3807 = vmatprep.subr.mxu0 0.0
        %3808 = vmatpush1.msra.mxu0 0.0
        %3809 = vmatprep.subr.mxu0 0.0
        %3810 = vmatpush1.msra.mxu0 0.0
        %3811 = vmatprep.subr.mxu0 0.0
        %3812 = vmatpush1.msra.mxu0 0.0
        %3813 = vmatprep.subr.mxu0 0.0
        %3814 = vmatpush1.msra.mxu0 0.0
        %3815 = vmatprep.subr.mxu0 0.0
        %3816 = vmatpush1.msra.mxu0 0.0
        %3817 = vmatprep.subr.mxu0 0.0
        %3818 = vmatpush1.msra.mxu0 0.0
        %3819 = vmatprep.subr.mxu0 0.0
        %3820 = vmatpush1.msra.mxu0 0.0
        %3821 = vmatprep.subr.mxu0 0.0
        %3822 = vmatpush1.msra.mxu0 0.0
        %3823 = vmatprep.subr.mxu0 0.0
        %3824 = vmatpush1.msra.mxu0 0.0
        %3825 = vmatprep.subr.mxu0 0.0
        %3826 = vmatpush1.msra.mxu0 0.0
        %3827 = vmatprep.subr.mxu0 0.0
        %3828 = vmatpush1.msra.mxu0 0.0
        %3829 = vmatprep.subr.mxu0 0.0
        %3830 = vmatpush1.msra.mxu0 0.0
        %3831 = vmatprep.subr.mxu0 0.0
        %3832 = vmatpush1.msra.mxu0 0.0
        %3833 = vmatprep.subr.mxu0 0.0
        %3834 = vmatpush1.msra.mxu0 0.0
        %3835 = vmatprep.subr.mxu0 0.0
        %3836 = vmatpush1.msra.mxu0 0.0
        %3837 = vmatprep.subr.mxu0 0.0
        %3838 = vmatpush1.msra.mxu0 %v3805
        %3839 = vmatprep.subr.mxu0 0.0
        %3840 = vmatpush2.msra.mxu0 0.0
        %3841 = vmatprep.subr.mxu0 0.0
        %3842 = vmatpush2.msra.mxu0 0.0
        %3843 = vmatprep.subr.mxu0 0.0
        %3844 = vmatpush2.msra.mxu0 0.0
        %3845 = vmatprep.subr.mxu0 0.0
        %3846 = vmatpush2.msra.mxu0 0.0
        %3847 = vmatprep.subr.mxu0 0.0
        %3848 = vmatpush2.msra.mxu0 0.0
        %3849 = vmatprep.subr.mxu0 0.0
        %3850 = vmatpush2.msra.mxu0 0.0
        %3851 = vmatprep.subr.mxu0 0.0
        %3852 = vmatpush2.msra.mxu0 0.0
        %3853 = vmatprep.subr.mxu0 0.0
        %3854 = vmatpush2.msra.mxu0 0.0
        %3855 = vmatprep.subr.mxu0 0.0
        %3856 = vmatpush2.msra.mxu0 0.0
        %3857 = vmatprep.subr.mxu0 0.0
        %3858 = vmatpush2.msra.mxu0 0.0
        %3859 = vmatprep.subr.mxu0 0.0
        %3860 = vmatpush2.msra.mxu0 0.0
        %3861 = vmatprep.subr.mxu0 0.0
        %3862 = vmatpush2.msra.mxu0 0.0
        %3863 = vmatprep.subr.mxu0 0.0
        %3864 = vmatpush2.msra.mxu0 0.0
        %3865 = vmatprep.subr.mxu0 0.0
        %3866 = vmatpush2.msra.mxu0 0.0
        %3867 = vmatprep.subr.mxu0 0.0
        %3868 = vmatpush2.msra.mxu0 0.0
        %3869 = vmatprep.subr.mxu0 0.0
        %3870 = vmatpush2.msra.mxu0 0.0
        %3871 = vmatprep.mubr.f32.mxu0 0.0
        %3872 = vmatmul.mubr.f32.gmra.mxu0 %v3803
        %v3873 = vpop.f32.mrf.mxu0
        %v3874 = vadd.f32 0.0, %v3873
        %v3875 = vpop.f32.mrf.mxu0
        %3876 = vdwg.mxu0
        %3877 = vxpose.xlu0.b32.start [1/16] %v3363, 128
        %3878 = vxpose.xlu0.b32.cont [2/16] 0.0, 128
        %3879 = vxpose.xlu0.b32.cont [3/16] 0.0, 128
        %3880 = vxpose.xlu0.b32.cont [4/16] 0.0, 128
        %3881 = vxpose.xlu0.b32.cont [5/16] 0.0, 128
        %3882 = vxpose.xlu0.b32.cont [6/16] 0.0, 128
        %3883 = vxpose.xlu0.b32.cont [7/16] 0.0, 128
        %3884 = vxpose.xlu0.b32.cont [8/16] 0.0, 128
        %3885 = vxpose.xlu0.b32.cont [9/16] 0.0, 128
        %3886 = vxpose.xlu0.b32.cont [10/16] 0.0, 128
        %3887 = vxpose.xlu0.b32.cont [11/16] 0.0, 128
        %3888 = vxpose.xlu0.b32.cont [12/16] 0.0, 128
        %3889 = vxpose.xlu0.b32.cont [13/16] 0.0, 128
        %3890 = vxpose.xlu0.b32.cont [14/16] 0.0, 128
        %3891 = vxpose.xlu0.b32.cont [15/16] 0.0, 128
        %3892 = vxpose.xlu0.b32.end [16/16] 0.0, 128
        %v3893 = vpop.trf.xlu0
        %v3894 = vpop.trf.xlu0
        %v3895 = vpop.trf.xlu0
        %v3896 = vpop.trf.xlu0
        %v3897 = vpop.trf.xlu0
        %v3898 = vpop.trf.xlu0
        %v3899 = vpop.trf.xlu0
        %v3900 = vpop.trf.xlu0
        %v3901 = vpop.trf.xlu0
        %v3902 = vpop.trf.xlu0
        %v3903 = vpop.trf.xlu0
        %v3904 = vpop.trf.xlu0
        %v3905 = vpop.trf.xlu0
        %v3906 = vpop.trf.xlu0
        %v3907 = vpop.trf.xlu0
        %v3908 = vpop.trf.xlu0
        %v3910 = vsel %vm3479, %v3893, 0
        %v3912 = vsel %vm3483, %v2762, 0
        %3914 = vmatprep.subr.mxu0 0.0
        %3915 = vmatpush1.msra.mxu0 0.0
        %3916 = vmatprep.subr.mxu0 0.0
        %3917 = vmatpush1.msra.mxu0 0.0
        %3918 = vmatprep.subr.mxu0 0.0
        %3919 = vmatpush1.msra.mxu0 0.0
        %3920 = vmatprep.subr.mxu0 0.0
        %3921 = vmatpush1.msra.mxu0 0.0
        %3922 = vmatprep.subr.mxu0 0.0
        %3923 = vmatpush1.msra.mxu0 0.0
        %3924 = vmatprep.subr.mxu0 0.0
        %3925 = vmatpush1.msra.mxu0 0.0
        %3926 = vmatprep.subr.mxu0 0.0
        %3927 = vmatpush1.msra.mxu0 0.0
        %3928 = vmatprep.subr.mxu0 0.0
        %3929 = vmatpush1.msra.mxu0 0.0
        %3930 = vmatprep.subr.mxu0 0.0
        %3931 = vmatpush1.msra.mxu0 0.0
        %3932 = vmatprep.subr.mxu0 0.0
        %3933 = vmatpush1.msra.mxu0 0.0
        %3934 = vmatprep.subr.mxu0 0.0
        %3935 = vmatpush1.msra.mxu0 0.0
        %3936 = vmatprep.subr.mxu0 0.0
        %3937 = vmatpush1.msra.mxu0 0.0
        %3938 = vmatprep.subr.mxu0 0.0
        %3939 = vmatpush1.msra.mxu0 0.0
        %3940 = vmatprep.subr.mxu0 0.0
        %3941 = vmatpush1.msra.mxu0 0.0
        %3942 = vmatprep.subr.mxu0 0.0
        %3943 = vmatpush1.msra.mxu0 0.0
        %3944 = vmatprep.subr.mxu0 0.0
        %3945 = vmatpush1.msra.mxu0 %v3912
        %3946 = vmatprep.subr.mxu0 0.0
        %3947 = vmatpush2.msra.mxu0 0.0
        %3948 = vmatprep.subr.mxu0 0.0
        %3949 = vmatpush2.msra.mxu0 0.0
        %3950 = vmatprep.subr.mxu0 0.0
        %3951 = vmatpush2.msra.mxu0 0.0
        %3952 = vmatprep.subr.mxu0 0.0
        %3953 = vmatpush2.msra.mxu0 0.0
        %3954 = vmatprep.subr.mxu0 0.0
        %3955 = vmatpush2.msra.mxu0 0.0
        %3956 = vmatprep.subr.mxu0 0.0
        %3957 = vmatpush2.msra.mxu0 0.0
        %3958 = vmatprep.subr.mxu0 0.0
        %3959 = vmatpush2.msra.mxu0 0.0
        %3960 = vmatprep.subr.mxu0 0.0
        %3961 = vmatpush2.msra.mxu0 0.0
        %3962 = vmatprep.subr.mxu0 0.0
        %3963 = vmatpush2.msra.mxu0 0.0
        %3964 = vmatprep.subr.mxu0 0.0
        %3965 = vmatpush2.msra.mxu0 0.0
        %3966 = vmatprep.subr.mxu0 0.0
        %3967 = vmatpush2.msra.mxu0 0.0
        %3968 = vmatprep.subr.mxu0 0.0
        %3969 = vmatpush2.msra.mxu0 0.0
        %3970 = vmatprep.subr.mxu0 0.0
        %3971 = vmatpush2.msra.mxu0 0.0
        %3972 = vmatprep.subr.mxu0 0.0
        %3973 = vmatpush2.msra.mxu0 0.0
        %3974 = vmatprep.subr.mxu0 0.0
        %3975 = vmatpush2.msra.mxu0 0.0
        %3976 = vmatprep.subr.mxu0 0.0
        %3977 = vmatpush2.msra.mxu0 0.0
        %3978 = vmatprep.mubr.f32.mxu0 0.0
        %3979 = vmatmul.mubr.f32.gmra.mxu0 %v3910
        %v3980 = vpop.f32.mrf.mxu0
        %v3981 = vadd.f32 0.0, %v3980
        %v3982 = vpop.f32.mrf.mxu0
        %3983 = vdwg.mxu0
        %3984 = vxpose.xlu0.b32.start [1/16] %v3364, 128
        %3985 = vxpose.xlu0.b32.cont [2/16] 0.0, 128
        %3986 = vxpose.xlu0.b32.cont [3/16] 0.0, 128
        %3987 = vxpose.xlu0.b32.cont [4/16] 0.0, 128
        %3988 = vxpose.xlu0.b32.cont [5/16] 0.0, 128
        %3989 = vxpose.xlu0.b32.cont [6/16] 0.0, 128
        %3990 = vxpose.xlu0.b32.cont [7/16] 0.0, 128
        %3991 = vxpose.xlu0.b32.cont [8/16] 0.0, 128
        %3992 = vxpose.xlu0.b32.cont [9/16] 0.0, 128
        %3993 = vxpose.xlu0.b32.cont [10/16] 0.0, 128
        %3994 = vxpose.xlu0.b32.cont [11/16] 0.0, 128
        %3995 = vxpose.xlu0.b32.cont [12/16] 0.0, 128
        %3996 = vxpose.xlu0.b32.cont [13/16] 0.0, 128
        %3997 = vxpose.xlu0.b32.cont [14/16] 0.0, 128
        %3998 = vxpose.xlu0.b32.cont [15/16] 0.0, 128
        %3999 = vxpose.xlu0.b32.end [16/16] 0.0, 128
        %v4000 = vpop.trf.xlu0
        %v4001 = vpop.trf.xlu0
        %v4002 = vpop.trf.xlu0
        %v4003 = vpop.trf.xlu0
        %v4004 = vpop.trf.xlu0
        %v4005 = vpop.trf.xlu0
        %v4006 = vpop.trf.xlu0
        %v4007 = vpop.trf.xlu0
        %v4008 = vpop.trf.xlu0
        %v4009 = vpop.trf.xlu0
        %v4010 = vpop.trf.xlu0
        %v4011 = vpop.trf.xlu0
        %v4012 = vpop.trf.xlu0
        %v4013 = vpop.trf.xlu0
        %v4014 = vpop.trf.xlu0
        %v4015 = vpop.trf.xlu0
        %v4017 = vsel %vm3479, %v4000, 0
        %v4019 = vsel %vm3483, %v2882, 0
        %4021 = vmatprep.subr.mxu0 0.0
        %4022 = vmatpush1.msra.mxu0 0.0
        %4023 = vmatprep.subr.mxu0 0.0
        %4024 = vmatpush1.msra.mxu0 0.0
        %4025 = vmatprep.subr.mxu0 0.0
        %4026 = vmatpush1.msra.mxu0 0.0
        %4027 = vmatprep.subr.mxu0 0.0
        %4028 = vmatpush1.msra.mxu0 0.0
        %4029 = vmatprep.subr.mxu0 0.0
        %4030 = vmatpush1.msra.mxu0 0.0
        %4031 = vmatprep.subr.mxu0 0.0
        %4032 = vmatpush1.msra.mxu0 0.0
        %4033 = vmatprep.subr.mxu0 0.0
        %4034 = vmatpush1.msra.mxu0 0.0
        %4035 = vmatprep.subr.mxu0 0.0
        %4036 = vmatpush1.msra.mxu0 0.0
        %4037 = vmatprep.subr.mxu0 0.0
        %4038 = vmatpush1.msra.mxu0 0.0
        %4039 = vmatprep.subr.mxu0 0.0
        %4040 = vmatpush1.msra.mxu0 0.0
        %4041 = vmatprep.subr.mxu0 0.0
        %4042 = vmatpush1.msra.mxu0 0.0
        %4043 = vmatprep.subr.mxu0 0.0
        %4044 = vmatpush1.msra.mxu0 0.0
        %4045 = vmatprep.subr.mxu0 0.0
        %4046 = vmatpush1.msra.mxu0 0.0
        %4047 = vmatprep.subr.mxu0 0.0
        %4048 = vmatpush1.msra.mxu0 0.0
        %4049 = vmatprep.subr.mxu0 0.0
        %4050 = vmatpush1.msra.mxu0 0.0
        %4051 = vmatprep.subr.mxu0 0.0
        %4052 = vmatpush1.msra.mxu0 %v4019
        %4053 = vmatprep.subr.mxu0 0.0
        %4054 = vmatpush2.msra.mxu0 0.0
        %4055 = vmatprep.subr.mxu0 0.0
        %4056 = vmatpush2.msra.mxu0 0.0
        %4057 = vmatprep.subr.mxu0 0.0
        %4058 = vmatpush2.msra.mxu0 0.0
        %4059 = vmatprep.subr.mxu0 0.0
        %4060 = vmatpush2.msra.mxu0 0.0
        %4061 = vmatprep.subr.mxu0 0.0
        %4062 = vmatpush2.msra.mxu0 0.0
        %4063 = vmatprep.subr.mxu0 0.0
        %4064 = vmatpush2.msra.mxu0 0.0
        %4065 = vmatprep.subr.mxu0 0.0
        %4066 = vmatpush2.msra.mxu0 0.0
        %4067 = vmatprep.subr.mxu0 0.0
        %4068 = vmatpush2.msra.mxu0 0.0
        %4069 = vmatprep.subr.mxu0 0.0
        %4070 = vmatpush2.msra.mxu0 0.0
        %4071 = vmatprep.subr.mxu0 0.0
        %4072 = vmatpush2.msra.mxu0 0.0
        %4073 = vmatprep.subr.mxu0 0.0
        %4074 = vmatpush2.msra.mxu0 0.0
        %4075 = vmatprep.subr.mxu0 0.0
        %4076 = vmatpush2.msra.mxu0 0.0
        %4077 = vmatprep.subr.mxu0 0.0
        %4078 = vmatpush2.msra.mxu0 0.0
        %4079 = vmatprep.subr.mxu0 0.0
        %4080 = vmatpush2.msra.mxu0 0.0
        %4081 = vmatprep.subr.mxu0 0.0
        %4082 = vmatpush2.msra.mxu0 0.0
        %4083 = vmatprep.subr.mxu0 0.0
        %4084 = vmatpush2.msra.mxu0 0.0
        %4085 = vmatprep.mubr.f32.mxu0 0.0
        %4086 = vmatmul.mubr.f32.gmra.mxu0 %v4017
        %v4087 = vpop.f32.mrf.mxu0
        %v4088 = vadd.f32 0.0, %v4087
        %v4089 = vpop.f32.mrf.mxu0
        %4090 = vdwg.mxu0
        %4091 = vxpose.xlu0.b32.start [1/16] %v3365, 128
        %4092 = vxpose.xlu0.b32.cont [2/16] 0.0, 128
        %4093 = vxpose.xlu0.b32.cont [3/16] 0.0, 128
        %4094 = vxpose.xlu0.b32.cont [4/16] 0.0, 128
        %4095 = vxpose.xlu0.b32.cont [5/16] 0.0, 128
        %4096 = vxpose.xlu0.b32.cont [6/16] 0.0, 128
        %4097 = vxpose.xlu0.b32.cont [7/16] 0.0, 128
        %4098 = vxpose.xlu0.b32.cont [8/16] 0.0, 128
        %4099 = vxpose.xlu0.b32.cont [9/16] 0.0, 128
        %4100 = vxpose.xlu0.b32.cont [10/16] 0.0, 128
        %4101 = vxpose.xlu0.b32.cont [11/16] 0.0, 128
        %4102 = vxpose.xlu0.b32.cont [12/16] 0.0, 128
        %4103 = vxpose.xlu0.b32.cont [13/16] 0.0, 128
        %4104 = vxpose.xlu0.b32.cont [14/16] 0.0, 128
        %4105 = vxpose.xlu0.b32.cont [15/16] 0.0, 128
        %4106 = vxpose.xlu0.b32.end [16/16] 0.0, 128
        %v4107 = vpop.trf.xlu0
        %v4108 = vpop.trf.xlu0
        %v4109 = vpop.trf.xlu0
        %v4110 = vpop.trf.xlu0
        %v4111 = vpop.trf.xlu0
        %v4112 = vpop.trf.xlu0
        %v4113 = vpop.trf.xlu0
        %v4114 = vpop.trf.xlu0
        %v4115 = vpop.trf.xlu0
        %v4116 = vpop.trf.xlu0
        %v4117 = vpop.trf.xlu0
        %v4118 = vpop.trf.xlu0
        %v4119 = vpop.trf.xlu0
        %v4120 = vpop.trf.xlu0
        %v4121 = vpop.trf.xlu0
        %v4122 = vpop.trf.xlu0
        %v4124 = vsel %vm3479, %v4107, 0
        %v4126 = vsel %vm3483, %v3002, 0
        %4128 = vmatprep.subr.mxu0 0.0
        %4129 = vmatpush1.msra.mxu0 0.0
        %4130 = vmatprep.subr.mxu0 0.0
        %4131 = vmatpush1.msra.mxu0 0.0
        %4132 = vmatprep.subr.mxu0 0.0
        %4133 = vmatpush1.msra.mxu0 0.0
        %4134 = vmatprep.subr.mxu0 0.0
        %4135 = vmatpush1.msra.mxu0 0.0
        %4136 = vmatprep.subr.mxu0 0.0
        %4137 = vmatpush1.msra.mxu0 0.0
        %4138 = vmatprep.subr.mxu0 0.0
        %4139 = vmatpush1.msra.mxu0 0.0
        %4140 = vmatprep.subr.mxu0 0.0
        %4141 = vmatpush1.msra.mxu0 0.0
        %4142 = vmatprep.subr.mxu0 0.0
        %4143 = vmatpush1.msra.mxu0 0.0
        %4144 = vmatprep.subr.mxu0 0.0
        %4145 = vmatpush1.msra.mxu0 0.0
        %4146 = vmatprep.subr.mxu0 0.0
        %4147 = vmatpush1.msra.mxu0 0.0
        %4148 = vmatprep.subr.mxu0 0.0
        %4149 = vmatpush1.msra.mxu0 0.0
        %4150 = vmatprep.subr.mxu0 0.0
        %4151 = vmatpush1.msra.mxu0 0.0
        %4152 = vmatprep.subr.mxu0 0.0
        %4153 = vmatpush1.msra.mxu0 0.0
        %4154 = vmatprep.subr.mxu0 0.0
        %4155 = vmatpush1.msra.mxu0 0.0
        %4156 = vmatprep.subr.mxu0 0.0
        %4157 = vmatpush1.msra.mxu0 0.0
        %4158 = vmatprep.subr.mxu0 0.0
        %4159 = vmatpush1.msra.mxu0 %v4126
        %4160 = vmatprep.subr.mxu0 0.0
        %4161 = vmatpush2.msra.mxu0 0.0
        %4162 = vmatprep.subr.mxu0 0.0
        %4163 = vmatpush2.msra.mxu0 0.0
        %4164 = vmatprep.subr.mxu0 0.0
        %4165 = vmatpush2.msra.mxu0 0.0
        %4166 = vmatprep.subr.mxu0 0.0
        %4167 = vmatpush2.msra.mxu0 0.0
        %4168 = vmatprep.subr.mxu0 0.0
        %4169 = vmatpush2.msra.mxu0 0.0
        %4170 = vmatprep.subr.mxu0 0.0
        %4171 = vmatpush2.msra.mxu0 0.0
        %4172 = vmatprep.subr.mxu0 0.0
        %4173 = vmatpush2.msra.mxu0 0.0
        %4174 = vmatprep.subr.mxu0 0.0
        %4175 = vmatpush2.msra.mxu0 0.0
        %4176 = vmatprep.subr.mxu0 0.0
        %4177 = vmatpush2.msra.mxu0 0.0
        %4178 = vmatprep.subr.mxu0 0.0
        %4179 = vmatpush2.msra.mxu0 0.0
        %4180 = vmatprep.subr.mxu0 0.0
        %4181 = vmatpush2.msra.mxu0 0.0
        %4182 = vmatprep.subr.mxu0 0.0
        %4183 = vmatpush2.msra.mxu0 0.0
        %4184 = vmatprep.subr.mxu0 0.0
        %4185 = vmatpush2.msra.mxu0 0.0
        %4186 = vmatprep.subr.mxu0 0.0
        %4187 = vmatpush2.msra.mxu0 0.0
        %4188 = vmatprep.subr.mxu0 0.0
        %4189 = vmatpush2.msra.mxu0 0.0
        %4190 = vmatprep.subr.mxu0 0.0
        %4191 = vmatpush2.msra.mxu0 0.0
        %4192 = vmatprep.mubr.f32.mxu0 0.0
        %4193 = vmatmul.mubr.f32.gmra.mxu0 %v4124
        %v4194 = vpop.f32.mrf.mxu0
        %v4195 = vadd.f32 0.0, %v4194
        %v4196 = vpop.f32.mrf.mxu0
        %4197 = vdwg.mxu0
        %4198 = vxpose.xlu0.b32.start [1/16] %v3366, 128
        %4199 = vxpose.xlu0.b32.cont [2/16] 0.0, 128
        %4200 = vxpose.xlu0.b32.cont [3/16] 0.0, 128
        %4201 = vxpose.xlu0.b32.cont [4/16] 0.0, 128
        %4202 = vxpose.xlu0.b32.cont [5/16] 0.0, 128
        %4203 = vxpose.xlu0.b32.cont [6/16] 0.0, 128
        %4204 = vxpose.xlu0.b32.cont [7/16] 0.0, 128
        %4205 = vxpose.xlu0.b32.cont [8/16] 0.0, 128
        %4206 = vxpose.xlu0.b32.cont [9/16] 0.0, 128
        %4207 = vxpose.xlu0.b32.cont [10/16] 0.0, 128
        %4208 = vxpose.xlu0.b32.cont [11/16] 0.0, 128
        %4209 = vxpose.xlu0.b32.cont [12/16] 0.0, 128
        %4210 = vxpose.xlu0.b32.cont [13/16] 0.0, 128
        %4211 = vxpose.xlu0.b32.cont [14/16] 0.0, 128
        %4212 = vxpose.xlu0.b32.cont [15/16] 0.0, 128
        %4213 = vxpose.xlu0.b32.end [16/16] 0.0, 128
        %v4214 = vpop.trf.xlu0
        %v4215 = vpop.trf.xlu0
        %v4216 = vpop.trf.xlu0
        %v4217 = vpop.trf.xlu0
        %v4218 = vpop.trf.xlu0
        %v4219 = vpop.trf.xlu0
        %v4220 = vpop.trf.xlu0
        %v4221 = vpop.trf.xlu0
        %v4222 = vpop.trf.xlu0
        %v4223 = vpop.trf.xlu0
        %v4224 = vpop.trf.xlu0
        %v4225 = vpop.trf.xlu0
        %v4226 = vpop.trf.xlu0
        %v4227 = vpop.trf.xlu0
        %v4228 = vpop.trf.xlu0
        %v4229 = vpop.trf.xlu0
        %v4231 = vsel %vm3479, %v4214, 0
        %v4233 = vsel %vm3483, %v3122, 0
        %4235 = vmatprep.subr.mxu0 0.0
        %4236 = vmatpush1.msra.mxu0 0.0
        %4237 = vmatprep.subr.mxu0 0.0
        %4238 = vmatpush1.msra.mxu0 0.0
        %4239 = vmatprep.subr.mxu0 0.0
        %4240 = vmatpush1.msra.mxu0 0.0
        %4241 = vmatprep.subr.mxu0 0.0
        %4242 = vmatpush1.msra.mxu0 0.0
        %4243 = vmatprep.subr.mxu0 0.0
        %4244 = vmatpush1.msra.mxu0 0.0
        %4245 = vmatprep.subr.mxu0 0.0
        %4246 = vmatpush1.msra.mxu0 0.0
        %4247 = vmatprep.subr.mxu0 0.0
        %4248 = vmatpush1.msra.mxu0 0.0
        %4249 = vmatprep.subr.mxu0 0.0
        %4250 = vmatpush1.msra.mxu0 0.0
        %4251 = vmatprep.subr.mxu0 0.0
        %4252 = vmatpush1.msra.mxu0 0.0
        %4253 = vmatprep.subr.mxu0 0.0
        %4254 = vmatpush1.msra.mxu0 0.0
        %4255 = vmatprep.subr.mxu0 0.0
        %4256 = vmatpush1.msra.mxu0 0.0
        %4257 = vmatprep.subr.mxu0 0.0
        %4258 = vmatpush1.msra.mxu0 0.0
        %4259 = vmatprep.subr.mxu0 0.0
        %4260 = vmatpush1.msra.mxu0 0.0
        %4261 = vmatprep.subr.mxu0 0.0
        %4262 = vmatpush1.msra.mxu0 0.0
        %4263 = vmatprep.subr.mxu0 0.0
        %4264 = vmatpush1.msra.mxu0 0.0
        %4265 = vmatprep.subr.mxu0 0.0
        %4266 = vmatpush1.msra.mxu0 %v4233
        %4267 = vmatprep.subr.mxu0 0.0
        %4268 = vmatpush2.msra.mxu0 0.0
        %4269 = vmatprep.subr.mxu0 0.0
        %4270 = vmatpush2.msra.mxu0 0.0
        %4271 = vmatprep.subr.mxu0 0.0
        %4272 = vmatpush2.msra.mxu0 0.0
        %4273 = vmatprep.subr.mxu0 0.0
        %4274 = vmatpush2.msra.mxu0 0.0
        %4275 = vmatprep.subr.mxu0 0.0
        %4276 = vmatpush2.msra.mxu0 0.0
        %4277 = vmatprep.subr.mxu0 0.0
        %4278 = vmatpush2.msra.mxu0 0.0
        %4279 = vmatprep.subr.mxu0 0.0
        %4280 = vmatpush2.msra.mxu0 0.0
        %4281 = vmatprep.subr.mxu0 0.0
        %4282 = vmatpush2.msra.mxu0 0.0
        %4283 = vmatprep.subr.mxu0 0.0
        %4284 = vmatpush2.msra.mxu0 0.0
        %4285 = vmatprep.subr.mxu0 0.0
        %4286 = vmatpush2.msra.mxu0 0.0
        %4287 = vmatprep.subr.mxu0 0.0
        %4288 = vmatpush2.msra.mxu0 0.0
        %4289 = vmatprep.subr.mxu0 0.0
        %4290 = vmatpush2.msra.mxu0 0.0
        %4291 = vmatprep.subr.mxu0 0.0
        %4292 = vmatpush2.msra.mxu0 0.0
        %4293 = vmatprep.subr.mxu0 0.0
        %4294 = vmatpush2.msra.mxu0 0.0
        %4295 = vmatprep.subr.mxu0 0.0
        %4296 = vmatpush2.msra.mxu0 0.0
        %4297 = vmatprep.subr.mxu0 0.0
        %4298 = vmatpush2.msra.mxu0 0.0
        %4299 = vmatprep.mubr.f32.mxu0 0.0
        %4300 = vmatmul.mubr.f32.gmra.mxu0 %v4231
        %v4301 = vpop.f32.mrf.mxu0
        %v4302 = vadd.f32 0.0, %v4301
        %v4303 = vpop.f32.mrf.mxu0
        %4304 = vdwg.mxu0
        %v4306 = vsel %vm3479, %v3439, 0
        %v4308 = vsel %vm3483, %v2284, 0
        %4310 = vmatprep.subr.mxu0 0.0
        %4311 = vmatpush1.msra.mxu0 0.0
        %4312 = vmatprep.subr.mxu0 0.0
        %4313 = vmatpush1.msra.mxu0 0.0
        %4314 = vmatprep.subr.mxu0 0.0
        %4315 = vmatpush1.msra.mxu0 0.0
        %4316 = vmatprep.subr.mxu0 0.0
        %4317 = vmatpush1.msra.mxu0 0.0
        %4318 = vmatprep.subr.mxu0 0.0
        %4319 = vmatpush1.msra.mxu0 0.0
        %4320 = vmatprep.subr.mxu0 0.0
        %4321 = vmatpush1.msra.mxu0 0.0
        %4322 = vmatprep.subr.mxu0 0.0
        %4323 = vmatpush1.msra.mxu0 0.0
        %4324 = vmatprep.subr.mxu0 0.0
        %4325 = vmatpush1.msra.mxu0 0.0
        %4326 = vmatprep.subr.mxu0 0.0
        %4327 = vmatpush1.msra.mxu0 0.0
        %4328 = vmatprep.subr.mxu0 0.0
        %4329 = vmatpush1.msra.mxu0 0.0
        %4330 = vmatprep.subr.mxu0 0.0
        %4331 = vmatpush1.msra.mxu0 0.0
        %4332 = vmatprep.subr.mxu0 0.0
        %4333 = vmatpush1.msra.mxu0 0.0
        %4334 = vmatprep.subr.mxu0 0.0
        %4335 = vmatpush1.msra.mxu0 0.0
        %4336 = vmatprep.subr.mxu0 0.0
        %4337 = vmatpush1.msra.mxu0 0.0
        %4338 = vmatprep.subr.mxu0 0.0
        %4339 = vmatpush1.msra.mxu0 0.0
        %4340 = vmatprep.subr.mxu0 0.0
        %4341 = vmatpush1.msra.mxu0 %v4308
        %4342 = vmatprep.subr.mxu0 0.0
        %4343 = vmatpush2.msra.mxu0 0.0
        %4344 = vmatprep.subr.mxu0 0.0
        %4345 = vmatpush2.msra.mxu0 0.0
        %4346 = vmatprep.subr.mxu0 0.0
        %4347 = vmatpush2.msra.mxu0 0.0
        %4348 = vmatprep.subr.mxu0 0.0
        %4349 = vmatpush2.msra.mxu0 0.0
        %4350 = vmatprep.subr.mxu0 0.0
        %4351 = vmatpush2.msra.mxu0 0.0
        %4352 = vmatprep.subr.mxu0 0.0
        %4353 = vmatpush2.msra.mxu0 0.0
        %4354 = vmatprep.subr.mxu0 0.0
        %4355 = vmatpush2.msra.mxu0 0.0
        %4356 = vmatprep.subr.mxu0 0.0
        %4357 = vmatpush2.msra.mxu0 0.0
        %4358 = vmatprep.subr.mxu0 0.0
        %4359 = vmatpush2.msra.mxu0 0.0
        %4360 = vmatprep.subr.mxu0 0.0
        %4361 = vmatpush2.msra.mxu0 0.0
        %4362 = vmatprep.subr.mxu0 0.0
        %4363 = vmatpush2.msra.mxu0 0.0
        %4364 = vmatprep.subr.mxu0 0.0
        %4365 = vmatpush2.msra.mxu0 0.0
        %4366 = vmatprep.subr.mxu0 0.0
        %4367 = vmatpush2.msra.mxu0 0.0
        %4368 = vmatprep.subr.mxu0 0.0
        %4369 = vmatpush2.msra.mxu0 0.0
        %4370 = vmatprep.subr.mxu0 0.0
        %4371 = vmatpush2.msra.mxu0 0.0
        %4372 = vmatprep.subr.mxu0 0.0
        %4373 = vmatpush2.msra.mxu0 0.0
        %4374 = vmatprep.mubr.f32.mxu0 0.0
        %4375 = vmatmul.mubr.f32.gmra.mxu0 %v4306
        %v4376 = vpop.f32.mrf.mxu0
        %v4377 = vadd.f32 0.0, %v4376
        %v4378 = vpop.f32.mrf.mxu0
        %4379 = vdwg.mxu0
        %v4381 = vsel %vm3479, %v3440, 0
        %v4383 = vsel %vm3483, %v2404, 0
        %4385 = vmatprep.subr.mxu0 0.0
        %4386 = vmatpush1.msra.mxu0 0.0
        %4387 = vmatprep.subr.mxu0 0.0
        %4388 = vmatpush1.msra.mxu0 0.0
        %4389 = vmatprep.subr.mxu0 0.0
        %4390 = vmatpush1.msra.mxu0 0.0
        %4391 = vmatprep.subr.mxu0 0.0
        %4392 = vmatpush1.msra.mxu0 0.0
        %4393 = vmatprep.subr.mxu0 0.0
        %4394 = vmatpush1.msra.mxu0 0.0
        %4395 = vmatprep.subr.mxu0 0.0
        %4396 = vmatpush1.msra.mxu0 0.0
        %4397 = vmatprep.subr.mxu0 0.0
        %4398 = vmatpush1.msra.mxu0 0.0
        %4399 = vmatprep.subr.mxu0 0.0
        %4400 = vmatpush1.msra.mxu0 0.0
        %4401 = vmatprep.subr.mxu0 0.0
        %4402 = vmatpush1.msra.mxu0 0.0
        %4403 = vmatprep.subr.mxu0 0.0
        %4404 = vmatpush1.msra.mxu0 0.0
        %4405 = vmatprep.subr.mxu0 0.0
        %4406 = vmatpush1.msra.mxu0 0.0
        %4407 = vmatprep.subr.mxu0 0.0
        %4408 = vmatpush1.msra.mxu0 0.0
        %4409 = vmatprep.subr.mxu0 0.0
        %4410 = vmatpush1.msra.mxu0 0.0
        %4411 = vmatprep.subr.mxu0 0.0
        %4412 = vmatpush1.msra.mxu0 0.0
        %4413 = vmatprep.subr.mxu0 0.0
        %4414 = vmatpush1.msra.mxu0 0.0
        %4415 = vmatprep.subr.mxu0 0.0
        %4416 = vmatpush1.msra.mxu0 %v4383
        %4417 = vmatprep.subr.mxu0 0.0
        %4418 = vmatpush2.msra.mxu0 0.0
        %4419 = vmatprep.subr.mxu0 0.0
        %4420 = vmatpush2.msra.mxu0 0.0
        %4421 = vmatprep.subr.mxu0 0.0
        %4422 = vmatpush2.msra.mxu0 0.0
        %4423 = vmatprep.subr.mxu0 0.0
        %4424 = vmatpush2.msra.mxu0 0.0
        %4425 = vmatprep.subr.mxu0 0.0
        %4426 = vmatpush2.msra.mxu0 0.0
        %4427 = vmatprep.subr.mxu0 0.0
        %4428 = vmatpush2.msra.mxu0 0.0
        %4429 = vmatprep.subr.mxu0 0.0
        %4430 = vmatpush2.msra.mxu0 0.0
        %4431 = vmatprep.subr.mxu0 0.0
        %4432 = vmatpush2.msra.mxu0 0.0
        %4433 = vmatprep.subr.mxu0 0.0
        %4434 = vmatpush2.msra.mxu0 0.0
        %4435 = vmatprep.subr.mxu0 0.0
        %4436 = vmatpush2.msra.mxu0 0.0
        %4437 = vmatprep.subr.mxu0 0.0
        %4438 = vmatpush2.msra.mxu0 0.0
        %4439 = vmatprep.subr.mxu0 0.0
        %4440 = vmatpush2.msra.mxu0 0.0
        %4441 = vmatprep.subr.mxu0 0.0
        %4442 = vmatpush2.msra.mxu0 0.0
        %4443 = vmatprep.subr.mxu0 0.0
        %4444 = vmatpush2.msra.mxu0 0.0
        %4445 = vmatprep.subr.mxu0 0.0
        %4446 = vmatpush2.msra.mxu0 0.0
        %4447 = vmatprep.subr.mxu0 0.0
        %4448 = vmatpush2.msra.mxu0 0.0
        %4449 = vmatprep.mubr.f32.mxu0 0.0
        %4450 = vmatmul.mubr.f32.gmra.mxu0 %v4381
        %v4451 = vpop.f32.mrf.mxu0
        %v4452 = vadd.f32 0.0, %v4451
        %v4453 = vpop.f32.mrf.mxu0
        %4454 = vdwg.mxu0
        %v4456 = vsel %vm3479, %v3441, 0
        %v4458 = vsel %vm3483, %v2524, 0
        %4460 = vmatprep.subr.mxu0 0.0
        %4461 = vmatpush1.msra.mxu0 0.0
        %4462 = vmatprep.subr.mxu0 0.0
        %4463 = vmatpush1.msra.mxu0 0.0
        %4464 = vmatprep.subr.mxu0 0.0
        %4465 = vmatpush1.msra.mxu0 0.0
        %4466 = vmatprep.subr.mxu0 0.0
        %4467 = vmatpush1.msra.mxu0 0.0
        %4468 = vmatprep.subr.mxu0 0.0
        %4469 = vmatpush1.msra.mxu0 0.0
        %4470 = vmatprep.subr.mxu0 0.0
        %4471 = vmatpush1.msra.mxu0 0.0
        %4472 = vmatprep.subr.mxu0 0.0
        %4473 = vmatpush1.msra.mxu0 0.0
        %4474 = vmatprep.subr.mxu0 0.0
        %4475 = vmatpush1.msra.mxu0 0.0
        %4476 = vmatprep.subr.mxu0 0.0
        %4477 = vmatpush1.msra.mxu0 0.0
        %4478 = vmatprep.subr.mxu0 0.0
        %4479 = vmatpush1.msra.mxu0 0.0
        %4480 = vmatprep.subr.mxu0 0.0
        %4481 = vmatpush1.msra.mxu0 0.0
        %4482 = vmatprep.subr.mxu0 0.0
        %4483 = vmatpush1.msra.mxu0 0.0
        %4484 = vmatprep.subr.mxu0 0.0
        %4485 = vmatpush1.msra.mxu0 0.0
        %4486 = vmatprep.subr.mxu0 0.0
        %4487 = vmatpush1.msra.mxu0 0.0
        %4488 = vmatprep.subr.mxu0 0.0
        %4489 = vmatpush1.msra.mxu0 0.0
        %4490 = vmatprep.subr.mxu0 0.0
        %4491 = vmatpush1.msra.mxu0 %v4458
        %4492 = vmatprep.subr.mxu0 0.0
        %4493 = vmatpush2.msra.mxu0 0.0
        %4494 = vmatprep.subr.mxu0 0.0
        %4495 = vmatpush2.msra.mxu0 0.0
        %4496 = vmatprep.subr.mxu0 0.0
        %4497 = vmatpush2.msra.mxu0 0.0
        %4498 = vmatprep.subr.mxu0 0.0
        %4499 = vmatpush2.msra.mxu0 0.0
        %4500 = vmatprep.subr.mxu0 0.0
        %4501 = vmatpush2.msra.mxu0 0.0
        %4502 = vmatprep.subr.mxu0 0.0
        %4503 = vmatpush2.msra.mxu0 0.0
        %4504 = vmatprep.subr.mxu0 0.0
        %4505 = vmatpush2.msra.mxu0 0.0
        %4506 = vmatprep.subr.mxu0 0.0
        %4507 = vmatpush2.msra.mxu0 0.0
        %4508 = vmatprep.subr.mxu0 0.0
        %4509 = vmatpush2.msra.mxu0 0.0
        %4510 = vmatprep.subr.mxu0 0.0
        %4511 = vmatpush2.msra.mxu0 0.0
        %4512 = vmatprep.subr.mxu0 0.0
        %4513 = vmatpush2.msra.mxu0 0.0
        %4514 = vmatprep.subr.mxu0 0.0
        %4515 = vmatpush2.msra.mxu0 0.0
        %4516 = vmatprep.subr.mxu0 0.0
        %4517 = vmatpush2.msra.mxu0 0.0
        %4518 = vmatprep.subr.mxu0 0.0
        %4519 = vmatpush2.msra.mxu0 0.0
        %4520 = vmatprep.subr.mxu0 0.0
        %4521 = vmatpush2.msra.mxu0 0.0
        %4522 = vmatprep.subr.mxu0 0.0
        %4523 = vmatpush2.msra.mxu0 0.0
        %4524 = vmatprep.mubr.f32.mxu0 0.0
        %4525 = vmatmul.mubr.f32.gmra.mxu0 %v4456
        %v4526 = vpop.f32.mrf.mxu0
        %v4527 = vadd.f32 0.0, %v4526
        %v4528 = vpop.f32.mrf.mxu0
        %4529 = vdwg.mxu0
        %v4531 = vsel %vm3479, %v3442, 0
        %v4533 = vsel %vm3483, %v2644, 0
        %4535 = vmatprep.subr.mxu0 0.0
        %4536 = vmatpush1.msra.mxu0 0.0
        %4537 = vmatprep.subr.mxu0 0.0
        %4538 = vmatpush1.msra.mxu0 0.0
        %4539 = vmatprep.subr.mxu0 0.0
        %4540 = vmatpush1.msra.mxu0 0.0
        %4541 = vmatprep.subr.mxu0 0.0
        %4542 = vmatpush1.msra.mxu0 0.0
        %4543 = vmatprep.subr.mxu0 0.0
        %4544 = vmatpush1.msra.mxu0 0.0
        %4545 = vmatprep.subr.mxu0 0.0
        %4546 = vmatpush1.msra.mxu0 0.0
        %4547 = vmatprep.subr.mxu0 0.0
        %4548 = vmatpush1.msra.mxu0 0.0
        %4549 = vmatprep.subr.mxu0 0.0
        %4550 = vmatpush1.msra.mxu0 0.0
        %4551 = vmatprep.subr.mxu0 0.0
        %4552 = vmatpush1.msra.mxu0 0.0
        %4553 = vmatprep.subr.mxu0 0.0
        %4554 = vmatpush1.msra.mxu0 0.0
        %4555 = vmatprep.subr.mxu0 0.0
        %4556 = vmatpush1.msra.mxu0 0.0
        %4557 = vmatprep.subr.mxu0 0.0
        %4558 = vmatpush1.msra.mxu0 0.0
        %4559 = vmatprep.subr.mxu0 0.0
        %4560 = vmatpush1.msra.mxu0 0.0
        %4561 = vmatprep.subr.mxu0 0.0
        %4562 = vmatpush1.msra.mxu0 0.0
        %4563 = vmatprep.subr.mxu0 0.0
        %4564 = vmatpush1.msra.mxu0 0.0
        %4565 = vmatprep.subr.mxu0 0.0
        %4566 = vmatpush1.msra.mxu0 %v4533
        %4567 = vmatprep.subr.mxu0 0.0
        %4568 = vmatpush2.msra.mxu0 0.0
        %4569 = vmatprep.subr.mxu0 0.0
        %4570 = vmatpush2.msra.mxu0 0.0
        %4571 = vmatprep.subr.mxu0 0.0
        %4572 = vmatpush2.msra.mxu0 0.0
        %4573 = vmatprep.subr.mxu0 0.0
        %4574 = vmatpush2.msra.mxu0 0.0
        %4575 = vmatprep.subr.mxu0 0.0
        %4576 = vmatpush2.msra.mxu0 0.0
        %4577 = vmatprep.subr.mxu0 0.0
        %4578 = vmatpush2.msra.mxu0 0.0
        %4579 = vmatprep.subr.mxu0 0.0
        %4580 = vmatpush2.msra.mxu0 0.0
        %4581 = vmatprep.subr.mxu0 0.0
        %4582 = vmatpush2.msra.mxu0 0.0
        %4583 = vmatprep.subr.mxu0 0.0
        %4584 = vmatpush2.msra.mxu0 0.0
        %4585 = vmatprep.subr.mxu0 0.0
        %4586 = vmatpush2.msra.mxu0 0.0
        %4587 = vmatprep.subr.mxu0 0.0
        %4588 = vmatpush2.msra.mxu0 0.0
        %4589 = vmatprep.subr.mxu0 0.0
        %4590 = vmatpush2.msra.mxu0 0.0
        %4591 = vmatprep.subr.mxu0 0.0
        %4592 = vmatpush2.msra.mxu0 0.0
        %4593 = vmatprep.subr.mxu0 0.0
        %4594 = vmatpush2.msra.mxu0 0.0
        %4595 = vmatprep.subr.mxu0 0.0
        %4596 = vmatpush2.msra.mxu0 0.0
        %4597 = vmatprep.subr.mxu0 0.0
        %4598 = vmatpush2.msra.mxu0 0.0
        %4599 = vmatprep.mubr.f32.mxu0 0.0
        %4600 = vmatmul.mubr.f32.gmra.mxu0 %v4531
        %v4601 = vpop.f32.mrf.mxu0
        %v4602 = vadd.f32 0.0, %v4601
        %v4603 = vpop.f32.mrf.mxu0
        %4604 = vdwg.mxu0
        %v4606 = vsel %vm3479, %v3443, 0
        %v4608 = vsel %vm3483, %v2764, 0
        %4610 = vmatprep.subr.mxu0 0.0
        %4611 = vmatpush1.msra.mxu0 0.0
        %4612 = vmatprep.subr.mxu0 0.0
        %4613 = vmatpush1.msra.mxu0 0.0
        %4614 = vmatprep.subr.mxu0 0.0
        %4615 = vmatpush1.msra.mxu0 0.0
        %4616 = vmatprep.subr.mxu0 0.0
        %4617 = vmatpush1.msra.mxu0 0.0
        %4618 = vmatprep.subr.mxu0 0.0
        %4619 = vmatpush1.msra.mxu0 0.0
        %4620 = vmatprep.subr.mxu0 0.0
        %4621 = vmatpush1.msra.mxu0 0.0
        %4622 = vmatprep.subr.mxu0 0.0
        %4623 = vmatpush1.msra.mxu0 0.0
        %4624 = vmatprep.subr.mxu0 0.0
        %4625 = vmatpush1.msra.mxu0 0.0
        %4626 = vmatprep.subr.mxu0 0.0
        %4627 = vmatpush1.msra.mxu0 0.0
        %4628 = vmatprep.subr.mxu0 0.0
        %4629 = vmatpush1.msra.mxu0 0.0
        %4630 = vmatprep.subr.mxu0 0.0
        %4631 = vmatpush1.msra.mxu0 0.0
        %4632 = vmatprep.subr.mxu0 0.0
        %4633 = vmatpush1.msra.mxu0 0.0
        %4634 = vmatprep.subr.mxu0 0.0
        %4635 = vmatpush1.msra.mxu0 0.0
        %4636 = vmatprep.subr.mxu0 0.0
        %4637 = vmatpush1.msra.mxu0 0.0
        %4638 = vmatprep.subr.mxu0 0.0
        %4639 = vmatpush1.msra.mxu0 0.0
        %4640 = vmatprep.subr.mxu0 0.0
        %4641 = vmatpush1.msra.mxu0 %v4608
        %4642 = vmatprep.subr.mxu0 0.0
        %4643 = vmatpush2.msra.mxu0 0.0
        %4644 = vmatprep.subr.mxu0 0.0
        %4645 = vmatpush2.msra.mxu0 0.0
        %4646 = vmatprep.subr.mxu0 0.0
        %4647 = vmatpush2.msra.mxu0 0.0
        %4648 = vmatprep.subr.mxu0 0.0
        %4649 = vmatpush2.msra.mxu0 0.0
        %4650 = vmatprep.subr.mxu0 0.0
        %4651 = vmatpush2.msra.mxu0 0.0
        %4652 = vmatprep.subr.mxu0 0.0
        %4653 = vmatpush2.msra.mxu0 0.0
        %4654 = vmatprep.subr.mxu0 0.0
        %4655 = vmatpush2.msra.mxu0 0.0
        %4656 = vmatprep.subr.mxu0 0.0
        %4657 = vmatpush2.msra.mxu0 0.0
        %4658 = vmatprep.subr.mxu0 0.0
        %4659 = vmatpush2.msra.mxu0 0.0
        %4660 = vmatprep.subr.mxu0 0.0
        %4661 = vmatpush2.msra.mxu0 0.0
        %4662 = vmatprep.subr.mxu0 0.0
        %4663 = vmatpush2.msra.mxu0 0.0
        %4664 = vmatprep.subr.mxu0 0.0
        %4665 = vmatpush2.msra.mxu0 0.0
        %4666 = vmatprep.subr.mxu0 0.0
        %4667 = vmatpush2.msra.mxu0 0.0
        %4668 = vmatprep.subr.mxu0 0.0
        %4669 = vmatpush2.msra.mxu0 0.0
        %4670 = vmatprep.subr.mxu0 0.0
        %4671 = vmatpush2.msra.mxu0 0.0
        %4672 = vmatprep.subr.mxu0 0.0
        %4673 = vmatpush2.msra.mxu0 0.0
        %4674 = vmatprep.mubr.f32.mxu0 0.0
        %4675 = vmatmul.mubr.f32.gmra.mxu0 %v4606
        %v4676 = vpop.f32.mrf.mxu0
        %v4677 = vadd.f32 0.0, %v4676
        %v4678 = vpop.f32.mrf.mxu0
        %4679 = vdwg.mxu0
        %v4681 = vsel %vm3479, %v3444, 0
        %v4683 = vsel %vm3483, %v2884, 0
        %4685 = vmatprep.subr.mxu0 0.0
        %4686 = vmatpush1.msra.mxu0 0.0
        %4687 = vmatprep.subr.mxu0 0.0
        %4688 = vmatpush1.msra.mxu0 0.0
        %4689 = vmatprep.subr.mxu0 0.0
        %4690 = vmatpush1.msra.mxu0 0.0
        %4691 = vmatprep.subr.mxu0 0.0
        %4692 = vmatpush1.msra.mxu0 0.0
        %4693 = vmatprep.subr.mxu0 0.0
        %4694 = vmatpush1.msra.mxu0 0.0
        %4695 = vmatprep.subr.mxu0 0.0
        %4696 = vmatpush1.msra.mxu0 0.0
        %4697 = vmatprep.subr.mxu0 0.0
        %4698 = vmatpush1.msra.mxu0 0.0
        %4699 = vmatprep.subr.mxu0 0.0
        %4700 = vmatpush1.msra.mxu0 0.0
        %4701 = vmatprep.subr.mxu0 0.0
        %4702 = vmatpush1.msra.mxu0 0.0
        %4703 = vmatprep.subr.mxu0 0.0
        %4704 = vmatpush1.msra.mxu0 0.0
        %4705 = vmatprep.subr.mxu0 0.0
        %4706 = vmatpush1.msra.mxu0 0.0
        %4707 = vmatprep.subr.mxu0 0.0
        %4708 = vmatpush1.msra.mxu0 0.0
        %4709 = vmatprep.subr.mxu0 0.0
        %4710 = vmatpush1.msra.mxu0 0.0
        %4711 = vmatprep.subr.mxu0 0.0
        %4712 = vmatpush1.msra.mxu0 0.0
        %4713 = vmatprep.subr.mxu0 0.0
        %4714 = vmatpush1.msra.mxu0 0.0
        %4715 = vmatprep.subr.mxu0 0.0
        %4716 = vmatpush1.msra.mxu0 %v4683
        %4717 = vmatprep.subr.mxu0 0.0
        %4718 = vmatpush2.msra.mxu0 0.0
        %4719 = vmatprep.subr.mxu0 0.0
        %4720 = vmatpush2.msra.mxu0 0.0
        %4721 = vmatprep.subr.mxu0 0.0
        %4722 = vmatpush2.msra.mxu0 0.0
        %4723 = vmatprep.subr.mxu0 0.0
        %4724 = vmatpush2.msra.mxu0 0.0
        %4725 = vmatprep.subr.mxu0 0.0
        %4726 = vmatpush2.msra.mxu0 0.0
        %4727 = vmatprep.subr.mxu0 0.0
        %4728 = vmatpush2.msra.mxu0 0.0
        %4729 = vmatprep.subr.mxu0 0.0
        %4730 = vmatpush2.msra.mxu0 0.0
        %4731 = vmatprep.subr.mxu0 0.0
        %4732 = vmatpush2.msra.mxu0 0.0
        %4733 = vmatprep.subr.mxu0 0.0
        %4734 = vmatpush2.msra.mxu0 0.0
        %4735 = vmatprep.subr.mxu0 0.0
        %4736 = vmatpush2.msra.mxu0 0.0
        %4737 = vmatprep.subr.mxu0 0.0
        %4738 = vmatpush2.msra.mxu0 0.0
        %4739 = vmatprep.subr.mxu0 0.0
        %4740 = vmatpush2.msra.mxu0 0.0
        %4741 = vmatprep.subr.mxu0 0.0
        %4742 = vmatpush2.msra.mxu0 0.0
        %4743 = vmatprep.subr.mxu0 0.0
        %4744 = vmatpush2.msra.mxu0 0.0
        %4745 = vmatprep.subr.mxu0 0.0
        %4746 = vmatpush2.msra.mxu0 0.0
        %4747 = vmatprep.subr.mxu0 0.0
        %4748 = vmatpush2.msra.mxu0 0.0
        %4749 = vmatprep.mubr.f32.mxu0 0.0
        %4750 = vmatmul.mubr.f32.gmra.mxu0 %v4681
        %v4751 = vpop.f32.mrf.mxu0
        %v4752 = vadd.f32 0.0, %v4751
        %v4753 = vpop.f32.mrf.mxu0
        %4754 = vdwg.mxu0
        %v4756 = vsel %vm3479, %v3445, 0
        %v4758 = vsel %vm3483, %v3004, 0
        %4760 = vmatprep.subr.mxu0 0.0
        %4761 = vmatpush1.msra.mxu0 0.0
        %4762 = vmatprep.subr.mxu0 0.0
        %4763 = vmatpush1.msra.mxu0 0.0
        %4764 = vmatprep.subr.mxu0 0.0
        %4765 = vmatpush1.msra.mxu0 0.0
        %4766 = vmatprep.subr.mxu0 0.0
        %4767 = vmatpush1.msra.mxu0 0.0
        %4768 = vmatprep.subr.mxu0 0.0
        %4769 = vmatpush1.msra.mxu0 0.0
        %4770 = vmatprep.subr.mxu0 0.0
        %4771 = vmatpush1.msra.mxu0 0.0
        %4772 = vmatprep.subr.mxu0 0.0
        %4773 = vmatpush1.msra.mxu0 0.0
        %4774 = vmatprep.subr.mxu0 0.0
        %4775 = vmatpush1.msra.mxu0 0.0
        %4776 = vmatprep.subr.mxu0 0.0
        %4777 = vmatpush1.msra.mxu0 0.0
        %4778 = vmatprep.subr.mxu0 0.0
        %4779 = vmatpush1.msra.mxu0 0.0
        %4780 = vmatprep.subr.mxu0 0.0
        %4781 = vmatpush1.msra.mxu0 0.0
        %4782 = vmatprep.subr.mxu0 0.0
        %4783 = vmatpush1.msra.mxu0 0.0
        %4784 = vmatprep.subr.mxu0 0.0
        %4785 = vmatpush1.msra.mxu0 0.0
        %4786 = vmatprep.subr.mxu0 0.0
        %4787 = vmatpush1.msra.mxu0 0.0
        %4788 = vmatprep.subr.mxu0 0.0
        %4789 = vmatpush1.msra.mxu0 0.0
        %4790 = vmatprep.subr.mxu0 0.0
        %4791 = vmatpush1.msra.mxu0 %v4758
        %4792 = vmatprep.subr.mxu0 0.0
        %4793 = vmatpush2.msra.mxu0 0.0
        %4794 = vmatprep.subr.mxu0 0.0
        %4795 = vmatpush2.msra.mxu0 0.0
        %4796 = vmatprep.subr.mxu0 0.0
        %4797 = vmatpush2.msra.mxu0 0.0
        %4798 = vmatprep.subr.mxu0 0.0
        %4799 = vmatpush2.msra.mxu0 0.0
        %4800 = vmatprep.subr.mxu0 0.0
        %4801 = vmatpush2.msra.mxu0 0.0
        %4802 = vmatprep.subr.mxu0 0.0
        %4803 = vmatpush2.msra.mxu0 0.0
        %4804 = vmatprep.subr.mxu0 0.0
        %4805 = vmatpush2.msra.mxu0 0.0
        %4806 = vmatprep.subr.mxu0 0.0
        %4807 = vmatpush2.msra.mxu0 0.0
        %4808 = vmatprep.subr.mxu0 0.0
        %4809 = vmatpush2.msra.mxu0 0.0
        %4810 = vmatprep.subr.mxu0 0.0
        %4811 = vmatpush2.msra.mxu0 0.0
        %4812 = vmatprep.subr.mxu0 0.0
        %4813 = vmatpush2.msra.mxu0 0.0
        %4814 = vmatprep.subr.mxu0 0.0
        %4815 = vmatpush2.msra.mxu0 0.0
        %4816 = vmatprep.subr.mxu0 0.0
        %4817 = vmatpush2.msra.mxu0 0.0
        %4818 = vmatprep.subr.mxu0 0.0
        %4819 = vmatpush2.msra.mxu0 0.0
        %4820 = vmatprep.subr.mxu0 0.0
        %4821 = vmatpush2.msra.mxu0 0.0
        %4822 = vmatprep.subr.mxu0 0.0
        %4823 = vmatpush2.msra.mxu0 0.0
        %4824 = vmatprep.mubr.f32.mxu0 0.0
        %4825 = vmatmul.mubr.f32.gmra.mxu0 %v4756
        %v4826 = vpop.f32.mrf.mxu0
        %v4827 = vadd.f32 0.0, %v4826
        %v4828 = vpop.f32.mrf.mxu0
        %4829 = vdwg.mxu0
        %v4831 = vsel %vm3479, %v3446, 0
        %v4833 = vsel %vm3483, %v3124, 0
        %4835 = vmatprep.subr.mxu0 0.0
        %4836 = vmatpush1.msra.mxu0 0.0
        %4837 = vmatprep.subr.mxu0 0.0
        %4838 = vmatpush1.msra.mxu0 0.0
        %4839 = vmatprep.subr.mxu0 0.0
        %4840 = vmatpush1.msra.mxu0 0.0
        %4841 = vmatprep.subr.mxu0 0.0
        %4842 = vmatpush1.msra.mxu0 0.0
        %4843 = vmatprep.subr.mxu0 0.0
        %4844 = vmatpush1.msra.mxu0 0.0
        %4845 = vmatprep.subr.mxu0 0.0
        %4846 = vmatpush1.msra.mxu0 0.0
        %4847 = vmatprep.subr.mxu0 0.0
        %4848 = vmatpush1.msra.mxu0 0.0
        %4849 = vmatprep.subr.mxu0 0.0
        %4850 = vmatpush1.msra.mxu0 0.0
        %4851 = vmatprep.subr.mxu0 0.0
        %4852 = vmatpush1.msra.mxu0 0.0
        %4853 = vmatprep.subr.mxu0 0.0
        %4854 = vmatpush1.msra.mxu0 0.0
        %4855 = vmatprep.subr.mxu0 0.0
        %4856 = vmatpush1.msra.mxu0 0.0
        %4857 = vmatprep.subr.mxu0 0.0
        %4858 = vmatpush1.msra.mxu0 0.0
        %4859 = vmatprep.subr.mxu0 0.0
        %4860 = vmatpush1.msra.mxu0 0.0
        %4861 = vmatprep.subr.mxu0 0.0
        %4862 = vmatpush1.msra.mxu0 0.0
        %4863 = vmatprep.subr.mxu0 0.0
        %4864 = vmatpush1.msra.mxu0 0.0
        %4865 = vmatprep.subr.mxu0 0.0
        %4866 = vmatpush1.msra.mxu0 %v4833
        %4867 = vmatprep.subr.mxu0 0.0
        %4868 = vmatpush2.msra.mxu0 0.0
        %4869 = vmatprep.subr.mxu0 0.0
        %4870 = vmatpush2.msra.mxu0 0.0
        %4871 = vmatprep.subr.mxu0 0.0
        %4872 = vmatpush2.msra.mxu0 0.0
        %4873 = vmatprep.subr.mxu0 0.0
        %4874 = vmatpush2.msra.mxu0 0.0
        %4875 = vmatprep.subr.mxu0 0.0
        %4876 = vmatpush2.msra.mxu0 0.0
        %4877 = vmatprep.subr.mxu0 0.0
        %4878 = vmatpush2.msra.mxu0 0.0
        %4879 = vmatprep.subr.mxu0 0.0
        %4880 = vmatpush2.msra.mxu0 0.0
        %4881 = vmatprep.subr.mxu0 0.0
        %4882 = vmatpush2.msra.mxu0 0.0
        %4883 = vmatprep.subr.mxu0 0.0
        %4884 = vmatpush2.msra.mxu0 0.0
        %4885 = vmatprep.subr.mxu0 0.0
        %4886 = vmatpush2.msra.mxu0 0.0
        %4887 = vmatprep.subr.mxu0 0.0
        %4888 = vmatpush2.msra.mxu0 0.0
        %4889 = vmatprep.subr.mxu0 0.0
        %4890 = vmatpush2.msra.mxu0 0.0
        %4891 = vmatprep.subr.mxu0 0.0
        %4892 = vmatpush2.msra.mxu0 0.0
        %4893 = vmatprep.subr.mxu0 0.0
        %4894 = vmatpush2.msra.mxu0 0.0
        %4895 = vmatprep.subr.mxu0 0.0
        %4896 = vmatpush2.msra.mxu0 0.0
        %4897 = vmatprep.subr.mxu0 0.0
        %4898 = vmatpush2.msra.mxu0 0.0
        %4899 = vmatprep.mubr.f32.mxu0 0.0
        %4900 = vmatmul.mubr.f32.gmra.mxu0 %v4831
        %v4901 = vpop.f32.mrf.mxu0
        %v4902 = vadd.f32 0.0, %v4901
        %v4903 = vpop.f32.mrf.mxu0
        %4904 = vdwg.mxu0
        %vm4905 = vcmask 258048
        %v4906 = vsel %vm4905, %v3553, 0.0
        %v4907 = vrot.slane %v4906, 4
        %v4908 = vadd.f32 %v4906, %v4907
        %v4909 = vrot.slane %v4908, 2
        %v4910 = vadd.f32 %v4908, %v4909
        %v4911 = vrot.slane %v4910, 1
        %v4912 = vadd.f32 %v4910, %v4911
        %v4913 = vsel %vm4905, %v3660, 0.0
        %v4914 = vrot.slane %v4913, 4
        %v4915 = vadd.f32 %v4913, %v4914
        %v4916 = vrot.slane %v4915, 2
        %v4917 = vadd.f32 %v4915, %v4916
        %v4918 = vrot.slane %v4917, 1
        %v4919 = vadd.f32 %v4917, %v4918
        %v4920 = vsel %vm4905, %v3767, 0.0
        %v4921 = vrot.slane %v4920, 4
        %v4922 = vadd.f32 %v4920, %v4921
        %v4923 = vrot.slane %v4922, 2
        %v4924 = vadd.f32 %v4922, %v4923
        %v4925 = vrot.slane %v4924, 1
        %v4926 = vadd.f32 %v4924, %v4925
        %v4927 = vsel %vm4905, %v3874, 0.0
        %v4928 = vrot.slane %v4927, 4
        %v4929 = vadd.f32 %v4927, %v4928
        %v4930 = vrot.slane %v4929, 2
        %v4931 = vadd.f32 %v4929, %v4930
        %v4932 = vrot.slane %v4931, 1
        %v4933 = vadd.f32 %v4931, %v4932
        %v4934 = vsel %vm4905, %v3981, 0.0
        %v4935 = vrot.slane %v4934, 4
        %v4936 = vadd.f32 %v4934, %v4935
        %v4937 = vrot.slane %v4936, 2
        %v4938 = vadd.f32 %v4936, %v4937
        %v4939 = vrot.slane %v4938, 1
        %v4940 = vadd.f32 %v4938, %v4939
        %v4941 = vsel %vm4905, %v4088, 0.0
        %v4942 = vrot.slane %v4941, 4
        %v4943 = vadd.f32 %v4941, %v4942
        %v4944 = vrot.slane %v4943, 2
        %v4945 = vadd.f32 %v4943, %v4944
        %v4946 = vrot.slane %v4945, 1
        %v4947 = vadd.f32 %v4945, %v4946
        %v4948 = vsel %vm4905, %v4195, 0.0
        %v4949 = vrot.slane %v4948, 4
        %v4950 = vadd.f32 %v4948, %v4949
        %v4951 = vrot.slane %v4950, 2
        %v4952 = vadd.f32 %v4950, %v4951
        %v4953 = vrot.slane %v4952, 1
        %v4954 = vadd.f32 %v4952, %v4953
        %v4955 = vsel %vm4905, %v4302, 0.0
        %v4956 = vrot.slane %v4955, 4
        %v4957 = vadd.f32 %v4955, %v4956
        %v4958 = vrot.slane %v4957, 2
        %v4959 = vadd.f32 %v4957, %v4958
        %v4960 = vrot.slane %v4959, 1
        %v4961 = vadd.f32 %v4959, %v4960
        %v4962 = vsel %vm4905, %v4377, 0.0
        %v4963 = vrot.slane %v4962, 4
        %v4964 = vadd.f32 %v4962, %v4963
        %v4965 = vrot.slane %v4964, 2
        %v4966 = vadd.f32 %v4964, %v4965
        %v4967 = vrot.slane %v4966, 1
        %v4968 = vadd.f32 %v4966, %v4967
        %v4969 = vsel %vm4905, %v4452, 0.0
        %v4970 = vrot.slane %v4969, 4
        %v4971 = vadd.f32 %v4969, %v4970
        %v4972 = vrot.slane %v4971, 2
        %v4973 = vadd.f32 %v4971, %v4972
        %v4974 = vrot.slane %v4973, 1
        %v4975 = vadd.f32 %v4973, %v4974
        %v4976 = vsel %vm4905, %v4527, 0.0
        %v4977 = vrot.slane %v4976, 4
        %v4978 = vadd.f32 %v4976, %v4977
        %v4979 = vrot.slane %v4978, 2
        %v4980 = vadd.f32 %v4978, %v4979
        %v4981 = vrot.slane %v4980, 1
        %v4982 = vadd.f32 %v4980, %v4981
        %v4983 = vsel %vm4905, %v4602, 0.0
        %v4984 = vrot.slane %v4983, 4
        %v4985 = vadd.f32 %v4983, %v4984
        %v4986 = vrot.slane %v4985, 2
        %v4987 = vadd.f32 %v4985, %v4986
        %v4988 = vrot.slane %v4987, 1
        %v4989 = vadd.f32 %v4987, %v4988
        %v4990 = vsel %vm4905, %v4677, 0.0
        %v4991 = vrot.slane %v4990, 4
        %v4992 = vadd.f32 %v4990, %v4991
        %v4993 = vrot.slane %v4992, 2
        %v4994 = vadd.f32 %v4992, %v4993
        %v4995 = vrot.slane %v4994, 1
        %v4996 = vadd.f32 %v4994, %v4995
        %v4997 = vsel %vm4905, %v4752, 0.0
        %v4998 = vrot.slane %v4997, 4
        %v4999 = vadd.f32 %v4997, %v4998
        %v5000 = vrot.slane %v4999, 2
        %v5001 = vadd.f32 %v4999, %v5000
        %v5002 = vrot.slane %v5001, 1
        %v5003 = vadd.f32 %v5001, %v5002
        %v5004 = vsel %vm4905, %v4827, 0.0
        %v5005 = vrot.slane %v5004, 4
        %v5006 = vadd.f32 %v5004, %v5005
        %v5007 = vrot.slane %v5006, 2
        %v5008 = vadd.f32 %v5006, %v5007
        %v5009 = vrot.slane %v5008, 1
        %v5010 = vadd.f32 %v5008, %v5009
        %v5011 = vsel %vm4905, %v4902, 0.0
        %v5012 = vrot.slane %v5011, 4
        %v5013 = vadd.f32 %v5011, %v5012
        %v5014 = vrot.slane %v5013, 2
        %v5015 = vadd.f32 %v5013, %v5014
        %v5016 = vrot.slane %v5015, 1
        %v5017 = vadd.f32 %v5015, %v5016
        %v5026 = vsel %vm4905, %v2282, 0.0
        %v5027 = vrot.slane %v5026, 4
        %v5028 = vadd.f32 %v5026, %v5027
        %v5029 = vrot.slane %v5028, 2
        %v5030 = vadd.f32 %v5028, %v5029
        %v5031 = vrot.slane %v5030, 1
        %v5032 = vadd.f32 %v5030, %v5031
        %v5033 = vsel %vm4905, %v2402, 0.0
        %v5034 = vrot.slane %v5033, 4
        %v5035 = vadd.f32 %v5033, %v5034
        %v5036 = vrot.slane %v5035, 2
        %v5037 = vadd.f32 %v5035, %v5036
        %v5038 = vrot.slane %v5037, 1
        %v5039 = vadd.f32 %v5037, %v5038
        %v5040 = vsel %vm4905, %v2522, 0.0
        %v5041 = vrot.slane %v5040, 4
        %v5042 = vadd.f32 %v5040, %v5041
        %v5043 = vrot.slane %v5042, 2
        %v5044 = vadd.f32 %v5042, %v5043
        %v5045 = vrot.slane %v5044, 1
        %v5046 = vadd.f32 %v5044, %v5045
        %v5047 = vsel %vm4905, %v2642, 0.0
        %v5048 = vrot.slane %v5047, 4
        %v5049 = vadd.f32 %v5047, %v5048
        %v5050 = vrot.slane %v5049, 2
        %v5051 = vadd.f32 %v5049, %v5050
        %v5052 = vrot.slane %v5051, 1
        %v5053 = vadd.f32 %v5051, %v5052
        %v5054 = vsel %vm4905, %v2762, 0.0
        %v5055 = vrot.slane %v5054, 4
        %v5056 = vadd.f32 %v5054, %v5055
        %v5057 = vrot.slane %v5056, 2
        %v5058 = vadd.f32 %v5056, %v5057
        %v5059 = vrot.slane %v5058, 1
        %v5060 = vadd.f32 %v5058, %v5059
        %v5061 = vsel %vm4905, %v2882, 0.0
        %v5062 = vrot.slane %v5061, 4
        %v5063 = vadd.f32 %v5061, %v5062
        %v5064 = vrot.slane %v5063, 2
        %v5065 = vadd.f32 %v5063, %v5064
        %v5066 = vrot.slane %v5065, 1
        %v5067 = vadd.f32 %v5065, %v5066
        %v5068 = vsel %vm4905, %v3002, 0.0
        %v5069 = vrot.slane %v5068, 4
        %v5070 = vadd.f32 %v5068, %v5069
        %v5071 = vrot.slane %v5070, 2
        %v5072 = vadd.f32 %v5070, %v5071
        %v5073 = vrot.slane %v5072, 1
        %v5074 = vadd.f32 %v5072, %v5073
        %v5075 = vsel %vm4905, %v3122, 0.0
        %v5076 = vrot.slane %v5075, 4
        %v5077 = vadd.f32 %v5075, %v5076
        %v5078 = vrot.slane %v5077, 2
        %v5079 = vadd.f32 %v5077, %v5078
        %v5080 = vrot.slane %v5079, 1
        %v5081 = vadd.f32 %v5079, %v5080
        %vm5082 = vcmask 520448
        %v5083 = vsel %vm5082, %v2282, 0.0
        %v5084 = vrot.slane %v5083, 4
        %v5085 = vadd.f32 %v5083, %v5084
        %v5086 = vrot.slane %v5085, 2
        %v5087 = vadd.f32 %v5085, %v5086
        %v5088 = vrot.slane %v5087, 1
        %v5089 = vadd.f32 %v5087, %v5088
        %v5090 = vsel %vm5082, %v2402, 0.0
        %v5091 = vrot.slane %v5090, 4
        %v5092 = vadd.f32 %v5090, %v5091
        %v5093 = vrot.slane %v5092, 2
        %v5094 = vadd.f32 %v5092, %v5093
        %v5095 = vrot.slane %v5094, 1
        %v5096 = vadd.f32 %v5094, %v5095
        %v5097 = vsel %vm5082, %v2522, 0.0
        %v5098 = vrot.slane %v5097, 4
        %v5099 = vadd.f32 %v5097, %v5098
        %v5100 = vrot.slane %v5099, 2
        %v5101 = vadd.f32 %v5099, %v5100
        %v5102 = vrot.slane %v5101, 1
        %v5103 = vadd.f32 %v5101, %v5102
        %v5104 = vsel %vm5082, %v2642, 0.0
        %v5105 = vrot.slane %v5104, 4
        %v5106 = vadd.f32 %v5104, %v5105
        %v5107 = vrot.slane %v5106, 2
        %v5108 = vadd.f32 %v5106, %v5107
        %v5109 = vrot.slane %v5108, 1
        %v5110 = vadd.f32 %v5108, %v5109
        %v5111 = vsel %vm5082, %v2762, 0.0
        %v5112 = vrot.slane %v5111, 4
        %v5113 = vadd.f32 %v5111, %v5112
        %v5114 = vrot.slane %v5113, 2
        %v5115 = vadd.f32 %v5113, %v5114
        %v5116 = vrot.slane %v5115, 1
        %v5117 = vadd.f32 %v5115, %v5116
        %v5118 = vsel %vm5082, %v2882, 0.0
        %v5119 = vrot.slane %v5118, 4
        %v5120 = vadd.f32 %v5118, %v5119
        %v5121 = vrot.slane %v5120, 2
        %v5122 = vadd.f32 %v5120, %v5121
        %v5123 = vrot.slane %v5122, 1
        %v5124 = vadd.f32 %v5122, %v5123
        %v5125 = vsel %vm5082, %v3002, 0.0
        %v5126 = vrot.slane %v5125, 4
        %v5127 = vadd.f32 %v5125, %v5126
        %v5128 = vrot.slane %v5127, 2
        %v5129 = vadd.f32 %v5127, %v5128
        %v5130 = vrot.slane %v5129, 1
        %v5131 = vadd.f32 %v5129, %v5130
        %v5132 = vsel %vm5082, %v3122, 0.0
        %v5133 = vrot.slane %v5132, 4
        %v5134 = vadd.f32 %v5132, %v5133
        %v5135 = vrot.slane %v5134, 2
        %v5136 = vadd.f32 %v5134, %v5135
        %v5137 = vrot.slane %v5136, 1
        %v5138 = vadd.f32 %v5136, %v5137
        %v5147 = vsel %vm1641, %v4919, %v4912
        %v5148 = vsel %vm1643, %v4926, %v5147
        %v5149 = vsel %vm1645, %v4933, %v5148
        %v5150 = vsel %vm1647, %v4940, %v5149
        %v5151 = vsel %vm1649, %v4947, %v5150
        %v5152 = vsel %vm1651, %v4954, %v5151
        %v5153 = vsel %vm1653, %v4961, %v5152
        %v5163 = vsel %vm1641, %v4975, %v4968
        %v5164 = vsel %vm1643, %v4982, %v5163
        %v5165 = vsel %vm1645, %v4989, %v5164
        %v5166 = vsel %vm1647, %v4996, %v5165
        %v5167 = vsel %vm1649, %v5003, %v5166
        %v5168 = vsel %vm1651, %v5010, %v5167
        %v5169 = vsel %vm1653, %v5017, %v5168
        %5170 = vrot.lane.b32.xlu0 %v5169, 32
        %v5171 = vpop.permute.xlu0 %5170
        %v5181 = vsel %vm1641, %v5039, %v5032
        %v5182 = vsel %vm1643, %v5046, %v5181
        %v5183 = vsel %vm1645, %v5053, %v5182
        %v5184 = vsel %vm1647, %v5060, %v5183
        %v5185 = vsel %vm1649, %v5067, %v5184
        %v5186 = vsel %vm1651, %v5074, %v5185
        %v5187 = vsel %vm1653, %v5081, %v5186
        %5188 = vrot.lane.b32.xlu0 %v5187, 64
        %v5189 = vpop.permute.xlu0 %5188
        %v5199 = vsel %vm1641, %v5096, %v5089
        %v5200 = vsel %vm1643, %v5103, %v5199
        %v5201 = vsel %vm1645, %v5110, %v5200
        %v5202 = vsel %vm1647, %v5117, %v5201
        %v5203 = vsel %vm1649, %v5124, %v5202
        %v5204 = vsel %vm1651, %v5131, %v5203
        %v5205 = vsel %vm1653, %v5138, %v5204
        %5206 = vrot.lane.b32.xlu0 %v5205, 64
        %v5207 = vpop.permute.xlu0 %5206
        %v5209 = vsel %vm1703, %v5153, %v5171
        %v5210 = vsel %vm1717, %v5209, %v5189
        %vm5211 = vcmask 785408
        %v5212 = vsel %vm5211, %v5210, %v5207
        %v5213 = vld [vmem:[%s4] sm:$0xff]
        %v5214 = vld [vmem:[%s4 + $0x8] sm:$0xff]
        %v5215 = vld [vmem:[%s4 + $0x10] sm:$0xff]
        %v5216 = vld [vmem:[%s4 + $0x18] sm:$0xff]
        %v5217 = vld [vmem:[%s4 + $0x20] sm:$0xff]
        %v5218 = vld [vmem:[%s4 + $0x28] sm:$0xff]
        %v5219 = vld [vmem:[%s4 + $0x30] sm:$0xff]
        %v5220 = vld [vmem:[%s4 + $0x38] sm:$0xff]
        %v5221 = vld [vmem:[%s4 + $0x40] sm:$0xff]
        %v5222 = vld [vmem:[%s4 + $0x48] sm:$0xff]
        %v5223 = vld [vmem:[%s4 + $0x50] sm:$0xff]
        %v5224 = vld [vmem:[%s4 + $0x58] sm:$0xff]
        %v5225 = vld [vmem:[%s4 + $0x60] sm:$0xff]
        %v5226 = vld [vmem:[%s4 + $0x68] sm:$0xff]
        %v5227 = vld [vmem:[%s4 + $0x70] sm:$0xff]
        %v5228 = vld [vmem:[%s4 + $0x78] sm:$0xff]
        %v5229 = vld [vmem:[%s5] sm:$0x1]
        %v5231 = vlaneseq
        %v5232 = vshrl.u32 %v5231, 7
        %v5233 = vsub.s32 0, %v5232
        %v5234 = vrot.slane %v5229, %v5233
        %5236 = vmatprep.subr.mxu0 0.0
        %5237 = vmatpush1.msra.mxu0 %v5228
        %5238 = vmatprep.subr.mxu0 0.0
        %5239 = vmatpush1.msra.mxu0 %v5227
        %5240 = vmatprep.subr.mxu0 0.0
        %5241 = vmatpush1.msra.mxu0 %v5226
        %5242 = vmatprep.subr.mxu0 0.0
        %5243 = vmatpush1.msra.mxu0 %v5225
        %5244 = vmatprep.subr.mxu0 0.0
        %5245 = vmatpush1.msra.mxu0 %v5224
        %5246 = vmatprep.subr.mxu0 0.0
        %5247 = vmatpush1.msra.mxu0 %v5223
        %5248 = vmatprep.subr.mxu0 0.0
        %5249 = vmatpush1.msra.mxu0 %v5222
        %5250 = vmatprep.subr.mxu0 0.0
        %5251 = vmatpush1.msra.mxu0 %v5221
        %5252 = vmatprep.subr.mxu0 0.0
        %5253 = vmatpush1.msra.mxu0 %v5220
        %5254 = vmatprep.subr.mxu0 0.0
        %5255 = vmatpush1.msra.mxu0 %v5219
        %5256 = vmatprep.subr.mxu0 0.0
        %5257 = vmatpush1.msra.mxu0 %v5218
        %5258 = vmatprep.subr.mxu0 0.0
        %5259 = vmatpush1.msra.mxu0 %v5217
        %5260 = vmatprep.subr.mxu0 0.0
        %5261 = vmatpush1.msra.mxu0 %v5216
        %5262 = vmatprep.subr.mxu0 0.0
        %5263 = vmatpush1.msra.mxu0 %v5215
        %5264 = vmatprep.subr.mxu0 0.0
        %5265 = vmatpush1.msra.mxu0 %v5214
        %5266 = vmatprep.subr.mxu0 0.0
        %5267 = vmatpush1.msra.mxu0 %v5213
        %5268 = vmatprep.subr.mxu0 0.0
        %5269 = vmatpush2.msra.mxu0 0.0
        %5270 = vmatprep.subr.mxu0 0.0
        %5271 = vmatpush2.msra.mxu0 0.0
        %5272 = vmatprep.subr.mxu0 0.0
        %5273 = vmatpush2.msra.mxu0 0.0
        %5274 = vmatprep.subr.mxu0 0.0
        %5275 = vmatpush2.msra.mxu0 0.0
        %5276 = vmatprep.subr.mxu0 0.0
        %5277 = vmatpush2.msra.mxu0 0.0
        %5278 = vmatprep.subr.mxu0 0.0
        %5279 = vmatpush2.msra.mxu0 0.0
        %5280 = vmatprep.subr.mxu0 0.0
        %5281 = vmatpush2.msra.mxu0 0.0
        %5282 = vmatprep.subr.mxu0 0.0
        %5283 = vmatpush2.msra.mxu0 0.0
        %5284 = vmatprep.subr.mxu0 0.0
        %5285 = vmatpush2.msra.mxu0 0.0
        %5286 = vmatprep.subr.mxu0 0.0
        %5287 = vmatpush2.msra.mxu0 0.0
        %5288 = vmatprep.subr.mxu0 0.0
        %5289 = vmatpush2.msra.mxu0 0.0
        %5290 = vmatprep.subr.mxu0 0.0
        %5291 = vmatpush2.msra.mxu0 0.0
        %5292 = vmatprep.subr.mxu0 0.0
        %5293 = vmatpush2.msra.mxu0 0.0
        %5294 = vmatprep.subr.mxu0 0.0
        %5295 = vmatpush2.msra.mxu0 0.0
        %5296 = vmatprep.subr.mxu0 0.0
        %5297 = vmatpush2.msra.mxu0 0.0
        %5298 = vmatprep.subr.mxu0 0.0
        %5299 = vmatpush2.msra.mxu0 0.0
        %5300 = vmatprep.mubr.f32.mxu0 0.0
        %5301 = vmatmul.mubr.f32.gmra.mxu0 %v5212
        %v5302 = vpop.f32.mrf.mxu0
        %v5303 = vadd.f32 %v5234, %v5302
        %v5304 = vpop.f32.mrf.mxu0
        %5305 = vdwg.mxu0
        %v5306 = vsel %vm5211, %v5303, 0.0
        %v5307 = vrot.slane %v5306, 4
        %v5308 = vadd.f32 %v5306, %v5307
        %v5309 = vrot.slane %v5308, 2
        %v5310 = vadd.f32 %v5308, %v5309
        %v5311 = vrot.slane %v5310, 1
        %v5312 = vadd.f32 %v5310, %v5311
        %v5313 = vrcp.pop 8.0
        %v5314 = vmul.f32 %v5312, %v5313
        %v5315 = vsub.f32 %v5303, %v5314
        %v5316 = vmul.f32 %v5315, %v5315
        %v5317 = vsel %vm5211, %v5316, 0.0
        %v5318 = vrot.slane %v5317, 4
        %v5319 = vadd.f32 %v5317, %v5318
        %v5320 = vrot.slane %v5319, 2
        %v5321 = vadd.f32 %v5319, %v5320
        %v5322 = vrot.slane %v5321, 1
        %v5323 = vadd.f32 %v5321, %v5322
        %v5324 = vmul.f32 %v5323, %v5313
        %v5325 = vadd.f32 %v5324, 1e-05
        %v5326 = vrsqrt.pop %v5325
        %v5327 = vmul.f32 %v5315, %v5326
        %v5328 = vld [vmem:[%s6] sm:$0x1]
        %v5330 = vlaneseq
        %v5331 = vshrl.u32 %v5330, 7
        %v5332 = vsub.s32 0, %v5331
        %v5333 = vrot.slane %v5328, %v5332
        %v5335 = vmul.f32 %v5327, %v5333
        %v5336 = vld [vmem:[%s7] sm:$0x1]
        %v5338 = vlaneseq
        %v5339 = vshrl.u32 %v5338, 7
        %v5340 = vsub.s32 0, %v5339
        %v5341 = vrot.slane %v5336, %v5340
        %v5343 = vadd.f32 %v5335, %v5341
        %v5344 = vmax.f32 %v5343, 0.0
        %v5345 = vld [vmem:[%s8] sm:$0xff]
        %v5346 = vld [vmem:[%s8 + $0x8] sm:$0xff]
        %v5347 = vld [vmem:[%s8 + $0x10] sm:$0xff]
        %v5348 = vld [vmem:[%s8 + $0x18] sm:$0xff]
        %v5349 = vld [vmem:[%s8 + $0x20] sm:$0xff]
        %v5350 = vld [vmem:[%s8 + $0x28] sm:$0xff]
        %v5351 = vld [vmem:[%s8 + $0x30] sm:$0xff]
        %v5352 = vld [vmem:[%s8 + $0x38] sm:$0xff]
        %v5353 = vld [vmem:[%s8 + $0x40] sm:$0xff]
        %v5354 = vld [vmem:[%s8 + $0x48] sm:$0xff]
        %v5355 = vld [vmem:[%s8 + $0x50] sm:$0xff]
        %v5356 = vld [vmem:[%s8 + $0x58] sm:$0xff]
        %v5357 = vld [vmem:[%s9] sm:$0x1]
        %v5359 = vlaneseq
        %v5360 = vshrl.u32 %v5359, 7
        %v5361 = vsub.s32 0, %v5360
        %v5362 = vrot.slane %v5357, %v5361
        %v5365 = vsel %vm5211, %v5344, 0
        %5367 = vmatprep.subr.mxu0 0.0
        %5368 = vmatpush1.msra.mxu0 0.0
        %5369 = vmatprep.subr.mxu0 0.0
        %5370 = vmatpush1.msra.mxu0 0.0
        %5371 = vmatprep.subr.mxu0 0.0
        %5372 = vmatpush1.msra.mxu0 0.0
        %5373 = vmatprep.subr.mxu0 0.0
        %5374 = vmatpush1.msra.mxu0 0.0
        %5375 = vmatprep.subr.mxu0 0.0
        %5376 = vmatpush1.msra.mxu0 %v5356
        %5377 = vmatprep.subr.mxu0 0.0
        %5378 = vmatpush1.msra.mxu0 %v5355
        %5379 = vmatprep.subr.mxu0 0.0
        %5380 = vmatpush1.msra.mxu0 %v5354
        %5381 = vmatprep.subr.mxu0 0.0
        %5382 = vmatpush1.msra.mxu0 %v5353
        %5383 = vmatprep.subr.mxu0 0.0
        %5384 = vmatpush1.msra.mxu0 %v5352
        %5385 = vmatprep.subr.mxu0 0.0
        %5386 = vmatpush1.msra.mxu0 %v5351
        %5387 = vmatprep.subr.mxu0 0.0
        %5388 = vmatpush1.msra.mxu0 %v5350
        %5389 = vmatprep.subr.mxu0 0.0
        %5390 = vmatpush1.msra.mxu0 %v5349
        %5391 = vmatprep.subr.mxu0 0.0
        %5392 = vmatpush1.msra.mxu0 %v5348
        %5393 = vmatprep.subr.mxu0 0.0
        %5394 = vmatpush1.msra.mxu0 %v5347
        %5395 = vmatprep.subr.mxu0 0.0
        %5396 = vmatpush1.msra.mxu0 %v5346
        %5397 = vmatprep.subr.mxu0 0.0
        %5398 = vmatpush1.msra.mxu0 %v5345
        %5399 = vmatprep.subr.mxu0 0.0
        %5400 = vmatpush2.msra.mxu0 0.0
        %5401 = vmatprep.subr.mxu0 0.0
        %5402 = vmatpush2.msra.mxu0 0.0
        %5403 = vmatprep.subr.mxu0 0.0
        %5404 = vmatpush2.msra.mxu0 0.0
        %5405 = vmatprep.subr.mxu0 0.0
        %5406 = vmatpush2.msra.mxu0 0.0
        %5407 = vmatprep.subr.mxu0 0.0
        %5408 = vmatpush2.msra.mxu0 0.0
        %5409 = vmatprep.subr.mxu0 0.0
        %5410 = vmatpush2.msra.mxu0 0.0
        %5411 = vmatprep.subr.mxu0 0.0
        %5412 = vmatpush2.msra.mxu0 0.0
        %5413 = vmatprep.subr.mxu0 0.0
        %5414 = vmatpush2.msra.mxu0 0.0
        %5415 = vmatprep.subr.mxu0 0.0
        %5416 = vmatpush2.msra.mxu0 0.0
        %5417 = vmatprep.subr.mxu0 0.0
        %5418 = vmatpush2.msra.mxu0 0.0
        %5419 = vmatprep.subr.mxu0 0.0
        %5420 = vmatpush2.msra.mxu0 0.0
        %5421 = vmatprep.subr.mxu0 0.0
        %5422 = vmatpush2.msra.mxu0 0.0
        %5423 = vmatprep.subr.mxu0 0.0
        %5424 = vmatpush2.msra.mxu0 0.0
        %5425 = vmatprep.subr.mxu0 0.0
        %5426 = vmatpush2.msra.mxu0 0.0
        %5427 = vmatprep.subr.mxu0 0.0
        %5428 = vmatpush2.msra.mxu0 0.0
        %5429 = vmatprep.subr.mxu0 0.0
        %5430 = vmatpush2.msra.mxu0 0.0
        %5431 = vmatprep.mubr.f32.mxu0 0.0
        %5432 = vmatmul.mubr.f32.gmra.mxu0 %v5365
        %v5433 = vpop.f32.mrf.mxu0
        %v5434 = vadd.f32 %v5362, %v5433
        %v5435 = vpop.f32.mrf.mxu0
        %5436 = vdwg.mxu0
        %v5437 = vmax.f32 %v5434, 0.0
        %v5438 = vld [vmem:[%s10] sm:$0xff]
        %v5439 = vld [vmem:[%s10 + $0x8] sm:$0xff]
        %v5440 = vld [vmem:[%s10 + $0x10] sm:$0xf]
        %v5441 = vld [vmem:[%s11] sm:$0x1]
        %v5443 = vlaneseq
        %v5444 = vshrl.u32 %v5443, 7
        %v5445 = vsub.s32 0, %v5444
        %v5446 = vrot.slane %v5441, %v5445
        %vm5448 = vcmask 162816
        %v5450 = vsel %vm5448, %v5437, 0
        %vm5452 = vcmask 1043456
        %v5454 = vsel %vm5452, %v5440, 0
        %5456 = vmatprep.subr.mxu0 0.0
        %5457 = vmatpush1.msra.mxu0 0.0
        %5458 = vmatprep.subr.mxu0 0.0
        %5459 = vmatpush1.msra.mxu0 0.0
        %5460 = vmatprep.subr.mxu0 0.0
        %5461 = vmatpush1.msra.mxu0 0.0
        %5462 = vmatprep.subr.mxu0 0.0
        %5463 = vmatpush1.msra.mxu0 0.0
        %5464 = vmatprep.subr.mxu0 0.0
        %5465 = vmatpush1.msra.mxu0 0.0
        %5466 = vmatprep.subr.mxu0 0.0
        %5467 = vmatpush1.msra.mxu0 0.0
        %5468 = vmatprep.subr.mxu0 0.0
        %5469 = vmatpush1.msra.mxu0 0.0
        %5470 = vmatprep.subr.mxu0 0.0
        %5471 = vmatpush1.msra.mxu0 0.0
        %5472 = vmatprep.subr.mxu0 0.0
        %5473 = vmatpush1.msra.mxu0 0.0
        %5474 = vmatprep.subr.mxu0 0.0
        %5475 = vmatpush1.msra.mxu0 0.0
        %5476 = vmatprep.subr.mxu0 0.0
        %5477 = vmatpush1.msra.mxu0 0.0
        %5478 = vmatprep.subr.mxu0 0.0
        %5479 = vmatpush1.msra.mxu0 0.0
        %5480 = vmatprep.subr.mxu0 0.0
        %5481 = vmatpush1.msra.mxu0 0.0
        %5482 = vmatprep.subr.mxu0 0.0
        %5483 = vmatpush1.msra.mxu0 %v5454
        %5484 = vmatprep.subr.mxu0 0.0
        %5485 = vmatpush1.msra.mxu0 %v5439
        %5486 = vmatprep.subr.mxu0 0.0
        %5487 = vmatpush1.msra.mxu0 %v5438
        %5488 = vmatprep.subr.mxu0 0.0
        %5489 = vmatpush2.msra.mxu0 0.0
        %5490 = vmatprep.subr.mxu0 0.0
        %5491 = vmatpush2.msra.mxu0 0.0
        %5492 = vmatprep.subr.mxu0 0.0
        %5493 = vmatpush2.msra.mxu0 0.0
        %5494 = vmatprep.subr.mxu0 0.0
        %5495 = vmatpush2.msra.mxu0 0.0
        %5496 = vmatprep.subr.mxu0 0.0
        %5497 = vmatpush2.msra.mxu0 0.0
        %5498 = vmatprep.subr.mxu0 0.0
        %5499 = vmatpush2.msra.mxu0 0.0
        %5500 = vmatprep.subr.mxu0 0.0
        %5501 = vmatpush2.msra.mxu0 0.0
        %5502 = vmatprep.subr.mxu0 0.0
        %5503 = vmatpush2.msra.mxu0 0.0
        %5504 = vmatprep.subr.mxu0 0.0
        %5505 = vmatpush2.msra.mxu0 0.0
        %5506 = vmatprep.subr.mxu0 0.0
        %5507 = vmatpush2.msra.mxu0 0.0
        %5508 = vmatprep.subr.mxu0 0.0
        %5509 = vmatpush2.msra.mxu0 0.0
        %5510 = vmatprep.subr.mxu0 0.0
        %5511 = vmatpush2.msra.mxu0 0.0
        %5512 = vmatprep.subr.mxu0 0.0
        %5513 = vmatpush2.msra.mxu0 0.0
        %5514 = vmatprep.subr.mxu0 0.0
        %5515 = vmatpush2.msra.mxu0 0.0
        %5516 = vmatprep.subr.mxu0 0.0
        %5517 = vmatpush2.msra.mxu0 0.0
        %5518 = vmatprep.subr.mxu0 0.0
        %5519 = vmatpush2.msra.mxu0 0.0
        %5520 = vmatprep.mubr.f32.mxu0 0.0
        %5521 = vmatmul.mubr.f32.gmra.mxu0 %v5450
        %v5522 = vpop.f32.mrf.mxu0
        %v5523 = vadd.f32 %v5446, %v5522
        %v5524 = vpop.f32.mrf.mxu0
        %5525 = vdwg.mxu0
        %5526 = vst [vmem:[%s580] sm:$0xff] 0.0
        %vm5527 = vcmask 15360
        %5528 = vst.msk [vmem:[%s580] sm:$0xff] %vm5527, %v5523
        %5530 = vrot.lane.b32.xlu0 %v3214, 8
        %v5531 = vpop.permute.xlu0 %5530
        %vm5533 = vcmask 102464
        %5534 = vst.msk [vmem:[%s580] sm:$0x1f] %vm5533, %v5531
      $region100: #{kaam_forward.3} parent=95 // pred_fallthru
        _
      %p5535 = scmp.eq.s32.totalorder %s30, 1
      // Predicated region
      $region101: #{kaam_forward.3} parent=95 // pred_check
        %p5536 = pneg %p5535
      $region102: #{kaam_forward.3} parent=95 // pred_check_branch
        %5538 = sbr.rel (%p5536) target = $region104
      $region103: #{kaam_forward.3} parent=95 // pred_region
        %v5539 = vld [vmem:[%s12] sm:$0xff]
        %v5540 = vld [vmem:[%s12 + $0x8] sm:$0xff]
        %v5541 = vld [vmem:[%s12 + $0x10] sm:$0xff]
        %v5542 = vld [vmem:[%s12 + $0x18] sm:$0xff]
        %v5543 = vld [vmem:[%s12 + $0x20] sm:$0xff]
        %v5544 = vld [vmem:[%s12 + $0x28] sm:$0xff]
        %v5545 = vld [vmem:[%s12 + $0x30] sm:$0xff]
        %v5546 = vld [vmem:[%s12 + $0x38] sm:$0xff]
        %5555 = vrot.lane.b32.xlu0 %v5539, 32
        %v5556 = vpop.permute.xlu0 %5555
        %5557 = vrot.lane.b32.xlu0 %v5540, 32
        %v5558 = vpop.permute.xlu0 %5557
        %5559 = vrot.lane.b32.xlu0 %v5541, 32
        %v5560 = vpop.permute.xlu0 %5559
        %5561 = vrot.lane.b32.xlu0 %v5542, 32
        %v5562 = vpop.permute.xlu0 %5561
        %5563 = vrot.lane.b32.xlu0 %v5543, 32
        %v5564 = vpop.permute.xlu0 %5563
        %5565 = vrot.lane.b32.xlu0 %v5544, 32
        %v5566 = vpop.permute.xlu0 %5565
        %5567 = vrot.lane.b32.xlu0 %v5545, 32
        %v5568 = vpop.permute.xlu0 %5567
        %5569 = vrot.lane.b32.xlu0 %v5546, 32
        %v5570 = vpop.permute.xlu0 %5569
        %5579 = vrot.lane.b32.xlu0 %v5539, 64
        %v5580 = vpop.permute.xlu0 %5579
        %5581 = vrot.lane.b32.xlu0 %v5540, 64
        %v5582 = vpop.permute.xlu0 %5581
        %5583 = vrot.lane.b32.xlu0 %v5541, 64
        %v5584 = vpop.permute.xlu0 %5583
        %5585 = vrot.lane.b32.xlu0 %v5542, 64
        %v5586 = vpop.permute.xlu0 %5585
        %5587 = vrot.lane.b32.xlu0 %v5543, 64
        %v5588 = vpop.permute.xlu0 %5587
        %5589 = vrot.lane.b32.xlu0 %v5544, 64
        %v5590 = vpop.permute.xlu0 %5589
        %5591 = vrot.lane.b32.xlu0 %v5545, 64
        %v5592 = vpop.permute.xlu0 %5591
        %5593 = vrot.lane.b32.xlu0 %v5546, 64
        %v5594 = vpop.permute.xlu0 %5593
        %5603 = vrot.lane.b32.xlu0 %v5539, 96
        %v5604 = vpop.permute.xlu0 %5603
        %5605 = vrot.lane.b32.xlu0 %v5540, 96
        %v5606 = vpop.permute.xlu0 %5605
        %5607 = vrot.lane.b32.xlu0 %v5541, 96
        %v5608 = vpop.permute.xlu0 %5607
        %5609 = vrot.lane.b32.xlu0 %v5542, 96
        %v5610 = vpop.permute.xlu0 %5609
        %5611 = vrot.lane.b32.xlu0 %v5543, 96
        %v5612 = vpop.permute.xlu0 %5611
        %5613 = vrot.lane.b32.xlu0 %v5544, 96
        %v5614 = vpop.permute.xlu0 %5613
        %5615 = vrot.lane.b32.xlu0 %v5545, 96
        %v5616 = vpop.permute.xlu0 %5615
        %5617 = vrot.lane.b32.xlu0 %v5546, 96
        %v5618 = vpop.permute.xlu0 %5617
        %vm5627 = vcmask 261120
        %v5628 = vsel %vm5627, %v5539, %v5556
        %v5629 = vsel %vm5627, %v5540, %v5558
        %v5630 = vsel %vm5627, %v5541, %v5560
        %v5631 = vsel %vm5627, %v5542, %v5562
        %v5632 = vsel %vm5627, %v5543, %v5564
        %v5633 = vsel %vm5627, %v5544, %v5566
        %v5634 = vsel %vm5627, %v5545, %v5568
        %v5635 = vsel %vm5627, %v5546, %v5570
        %vm5636 = vcmask 523264
        %v5637 = vsel %vm5636, %v5628, %v5580
        %v5638 = vsel %vm5636, %v5629, %v5582
        %v5639 = vsel %vm5636, %v5630, %v5584
        %v5640 = vsel %vm5636, %v5631, %v5586
        %v5641 = vsel %vm5636, %v5632, %v5588
        %v5642 = vsel %vm5636, %v5633, %v5590
        %v5643 = vsel %vm5636, %v5634, %v5592
        %v5644 = vsel %vm5636, %v5635, %v5594
        %vm5645 = vcmask 785408
        %v5646 = vsel %vm5645, %v5637, %v5604
        %v5647 = vsel %vm5645, %v5638, %v5606
        %v5648 = vsel %vm5645, %v5639, %v5608
        %v5649 = vsel %vm5645, %v5640, %v5610
        %v5650 = vsel %vm5645, %v5641, %v5612
        %v5651 = vsel %vm5645, %v5642, %v5614
        %v5652 = vsel %vm5645, %v5643, %v5616
        %v5653 = vsel %vm5645, %v5644, %v5618
        %v5654 = vld [vmem:[%s13] sm:$0xff]
        %v5655 = vld [vmem:[%s13 + $0x8] sm:$0xff]
        %v5656 = vld [vmem:[%s13 + $0x10] sm:$0xff]
        %v5657 = vld [vmem:[%s13 + $0x18] sm:$0xff]
        %v5658 = vld [vmem:[%s13 + $0x20] sm:$0xff]
        %v5659 = vld [vmem:[%s13 + $0x28] sm:$0xff]
        %v5660 = vld [vmem:[%s13 + $0x30] sm:$0xff]
        %v5661 = vld [vmem:[%s13 + $0x38] sm:$0xff]
        %v5662 = vld [vmem:[%s14] sm:$0xff]
        %v5663 = vld [vmem:[%s14 + $0x8] sm:$0xff]
        %v5664 = vld [vmem:[%s14 + $0x10] sm:$0xff]
        %v5665 = vld [vmem:[%s14 + $0x18] sm:$0xff]
        %v5666 = vld [vmem:[%s14 + $0x20] sm:$0xff]
        %v5667 = vld [vmem:[%s14 + $0x28] sm:$0xff]
        %v5668 = vld [vmem:[%s14 + $0x30] sm:$0xff]
        %v5669 = vld [vmem:[%s14 + $0x38] sm:$0xff]
        %v5670 = vld [vmem:[%s15] sm:$0x1]
        %v5671 = vld [vmem:[%s16] sm:$0x1]
        %v5672 = vld [vmem:[%s17] sm:$0xff]
        %v5673 = vld [vmem:[%s17 + $0x8] sm:$0xff]
        %v5674 = vld [vmem:[%s17 + $0x10] sm:$0xff]
        %v5675 = vld [vmem:[%s17 + $0x18] sm:$0xff]
        %v5676 = vld [vmem:[%s17 + $0x20] sm:$0xff]
        %v5677 = vld [vmem:[%s17 + $0x28] sm:$0xff]
        %v5678 = vld [vmem:[%s17 + $0x30] sm:$0xff]
        %v5679 = vld [vmem:[%s17 + $0x38] sm:$0xff]
        %v5680 = vld [vmem:[%s17 + $0x40] sm:$0xff]
        %v5681 = vld [vmem:[%s17 + $0x48] sm:$0xff]
        %v5682 = vld [vmem:[%s17 + $0x50] sm:$0xff]
        %v5683 = vld [vmem:[%s17 + $0x58] sm:$0xff]
        %v5684 = vld [vmem:[%s17 + $0x60] sm:$0xff]
        %v5685 = vld [vmem:[%s17 + $0x68] sm:$0xff]
        %v5686 = vld [vmem:[%s17 + $0x70] sm:$0xff]
        %v5687 = vld [vmem:[%s17 + $0x78] sm:$0xff]
        %v5688 = vld [vmem:[%s18] sm:$0xf]
        %v5690 = vlaneseq
        %v5691 = vshrl.u32 %v5690, 7
        %v5692 = vsub.s32 0, %v5691
        %v5693 = vrot.slane %v5671, %v5692
        %v5695 = vmul.f32 %v5693, %v5646
        %v5696 = vmul.f32 %v5693, %v5647
        %v5697 = vmul.f32 %v5693, %v5648
        %v5698 = vmul.f32 %v5693, %v5649
        %v5699 = vmul.f32 %v5693, %v5650
        %v5700 = vmul.f32 %v5693, %v5651
        %v5701 = vmul.f32 %v5693, %v5652
        %v5702 = vmul.f32 %v5693, %v5653
        %5703 = vmatprep.subr.mxu0 0.0
        %5704 = vmatpush1.msra.mxu0 %v5687
        %5705 = vmatprep.subr.mxu0 0.0
        %5706 = vmatpush1.msra.mxu0 %v5686
        %5707 = vmatprep.subr.mxu0 0.0
        %5708 = vmatpush1.msra.mxu0 %v5685
        %5709 = vmatprep.subr.mxu0 0.0
        %5710 = vmatpush1.msra.mxu0 %v5684
        %5711 = vmatprep.subr.mxu0 0.0
        %5712 = vmatpush1.msra.mxu0 %v5683
        %5713 = vmatprep.subr.mxu0 0.0
        %5714 = vmatpush1.msra.mxu0 %v5682
        %5715 = vmatprep.subr.mxu0 0.0
        %5716 = vmatpush1.msra.mxu0 %v5681
        %5717 = vmatprep.subr.mxu0 0.0
        %5718 = vmatpush1.msra.mxu0 %v5680
        %5719 = vmatprep.subr.mxu0 0.0
        %5720 = vmatpush1.msra.mxu0 %v5679
        %5721 = vmatprep.subr.mxu0 0.0
        %5722 = vmatpush1.msra.mxu0 %v5678
        %5723 = vmatprep.subr.mxu0 0.0
        %5724 = vmatpush1.msra.mxu0 %v5677
        %5725 = vmatprep.subr.mxu0 0.0
        %5726 = vmatpush1.msra.mxu0 %v5676
        %5727 = vmatprep.subr.mxu0 0.0
        %5728 = vmatpush1.msra.mxu0 %v5675
        %5729 = vmatprep.subr.mxu0 0.0
        %5730 = vmatpush1.msra.mxu0 %v5674
        %5731 = vmatprep.subr.mxu0 0.0
        %5732 = vmatpush1.msra.mxu0 %v5673
        %5733 = vmatprep.subr.mxu0 0.0
        %5734 = vmatpush1.msra.mxu0 %v5672
        %5735 = vmatprep.subr.mxu0 0.0
        %5736 = vmatpush2.msra.mxu0 0.0
        %5737 = vmatprep.subr.mxu0 0.0
        %5738 = vmatpush2.msra.mxu0 0.0
        %5739 = vmatprep.subr.mxu0 0.0
        %5740 = vmatpush2.msra.mxu0 0.0
        %5741 = vmatprep.subr.mxu0 0.0
        %5742 = vmatpush2.msra.mxu0 0.0
        %5743 = vmatprep.subr.mxu0 0.0
        %5744 = vmatpush2.msra.mxu0 0.0
        %5745 = vmatprep.subr.mxu0 0.0
        %5746 = vmatpush2.msra.mxu0 0.0
        %5747 = vmatprep.subr.mxu0 0.0
        %5748 = vmatpush2.msra.mxu0 0.0
        %5749 = vmatprep.subr.mxu0 0.0
        %5750 = vmatpush2.msra.mxu0 0.0
        %5751 = vmatprep.subr.mxu0 0.0
        %5752 = vmatpush2.msra.mxu0 0.0
        %5753 = vmatprep.subr.mxu0 0.0
        %5754 = vmatpush2.msra.mxu0 0.0
        %5755 = vmatprep.subr.mxu0 0.0
        %5756 = vmatpush2.msra.mxu0 0.0
        %5757 = vmatprep.subr.mxu0 0.0
        %5758 = vmatpush2.msra.mxu0 0.0
        %5759 = vmatprep.subr.mxu0 0.0
        %5760 = vmatpush2.msra.mxu0 0.0
        %5761 = vmatprep.subr.mxu0 0.0
        %5762 = vmatpush2.msra.mxu0 0.0
        %5763 = vmatprep.subr.mxu0 0.0
        %5764 = vmatpush2.msra.mxu0 0.0
        %5765 = vmatprep.subr.mxu0 0.0
        %5766 = vmatpush2.msra.mxu0 0.0
        %5767 = vmatprep.mubr.f32.mxu0 0.0
        %5768 = vmatmul.mubr.f32.gmra.mxu0 %v5695
        %v5769 = vpop.f32.mrf.mxu0
        %v5770 = vadd.f32 0.0, %v5769
        %v5771 = vpop.f32.mrf.mxu0
        %5772 = vmatprep.mubr.f32.mxu0 0.0
        %5773 = vmatmul.mubr.f32.gmra.mxu0 %v5696
        %v5774 = vpop.f32.mrf.mxu0
        %v5775 = vadd.f32 0.0, %v5774
        %v5776 = vpop.f32.mrf.mxu0
        %5777 = vmatprep.mubr.f32.mxu0 0.0
        %5778 = vmatmul.mubr.f32.gmra.mxu0 %v5697
        %v5779 = vpop.f32.mrf.mxu0
        %v5780 = vadd.f32 0.0, %v5779
        %v5781 = vpop.f32.mrf.mxu0
        %5782 = vmatprep.mubr.f32.mxu0 0.0
        %5783 = vmatmul.mubr.f32.gmra.mxu0 %v5698
        %v5784 = vpop.f32.mrf.mxu0
        %v5785 = vadd.f32 0.0, %v5784
        %v5786 = vpop.f32.mrf.mxu0
        %5787 = vmatprep.mubr.f32.mxu0 0.0
        %5788 = vmatmul.mubr.f32.gmra.mxu0 %v5699
        %v5789 = vpop.f32.mrf.mxu0
        %v5790 = vadd.f32 0.0, %v5789
        %v5791 = vpop.f32.mrf.mxu0
        %5792 = vmatprep.mubr.f32.mxu0 0.0
        %5793 = vmatmul.mubr.f32.gmra.mxu0 %v5700
        %v5794 = vpop.f32.mrf.mxu0
        %v5795 = vadd.f32 0.0, %v5794
        %v5796 = vpop.f32.mrf.mxu0
        %5797 = vmatprep.mubr.f32.mxu0 0.0
        %5798 = vmatmul.mubr.f32.gmra.mxu0 %v5701
        %v5799 = vpop.f32.mrf.mxu0
        %v5800 = vadd.f32 0.0, %v5799
        %v5801 = vpop.f32.mrf.mxu0
        %5802 = vmatprep.mubr.f32.mxu0 0.0
        %5803 = vmatmul.mubr.f32.gmra.mxu0 %v5702
        %v5804 = vpop.f32.mrf.mxu0
        %v5805 = vadd.f32 0.0, %v5804
        %v5806 = vpop.f32.mrf.mxu0
        %5807 = vdwg.mxu0
        %vm5808 = vcmask 31744
        %v5810 = vsel %vm5808, %v5770, 0
        %v5813 = vsel %vm5808, %v5775, 0
        %v5816 = vsel %vm5808, %v5780, 0
        %v5819 = vsel %vm5808, %v5785, 0
        %v5822 = vsel %vm5808, %v5790, 0
        %v5825 = vsel %vm5808, %v5795, 0
        %v5828 = vsel %vm5808, %v5800, 0
        %v5831 = vsel %vm5808, %v5805, 0
        %vm5833 = vcmask 1043456
        %v5835 = vsel %vm5833, %v5688, 0
        %5837 = vmatprep.subr.mxu0 0.0
        %5838 = vmatpush1.msra.mxu0 0.0
        %5839 = vmatprep.subr.mxu0 0.0
        %5840 = vmatpush1.msra.mxu0 0.0
        %5841 = vmatprep.subr.mxu0 0.0
        %5842 = vmatpush1.msra.mxu0 0.0
        %5843 = vmatprep.subr.mxu0 0.0
        %5844 = vmatpush1.msra.mxu0 0.0
        %5845 = vmatprep.subr.mxu0 0.0
        %5846 = vmatpush1.msra.mxu0 0.0
        %5847 = vmatprep.subr.mxu0 0.0
        %5848 = vmatpush1.msra.mxu0 0.0
        %5849 = vmatprep.subr.mxu0 0.0
        %5850 = vmatpush1.msra.mxu0 0.0
        %5851 = vmatprep.subr.mxu0 0.0
        %5852 = vmatpush1.msra.mxu0 0.0
        %5853 = vmatprep.subr.mxu0 0.0
        %5854 = vmatpush1.msra.mxu0 0.0
        %5855 = vmatprep.subr.mxu0 0.0
        %5856 = vmatpush1.msra.mxu0 0.0
        %5857 = vmatprep.subr.mxu0 0.0
        %5858 = vmatpush1.msra.mxu0 0.0
        %5859 = vmatprep.subr.mxu0 0.0
        %5860 = vmatpush1.msra.mxu0 0.0
        %5861 = vmatprep.subr.mxu0 0.0
        %5862 = vmatpush1.msra.mxu0 0.0
        %5863 = vmatprep.subr.mxu0 0.0
        %5864 = vmatpush1.msra.mxu0 0.0
        %5865 = vmatprep.subr.mxu0 0.0
        %5866 = vmatpush1.msra.mxu0 0.0
        %5867 = vmatprep.subr.mxu0 0.0
        %5868 = vmatpush1.msra.mxu0 %v5835
        %5869 = vmatprep.subr.mxu0 0.0
        %5870 = vmatpush2.msra.mxu0 0.0
        %5871 = vmatprep.subr.mxu0 0.0
        %5872 = vmatpush2.msra.mxu0 0.0
        %5873 = vmatprep.subr.mxu0 0.0
        %5874 = vmatpush2.msra.mxu0 0.0
        %5875 = vmatprep.subr.mxu0 0.0
        %5876 = vmatpush2.msra.mxu0 0.0
        %5877 = vmatprep.subr.mxu0 0.0
        %5878 = vmatpush2.msra.mxu0 0.0
        %5879 = vmatprep.subr.mxu0 0.0
        %5880 = vmatpush2.msra.mxu0 0.0
        %5881 = vmatprep.subr.mxu0 0.0
        %5882 = vmatpush2.msra.mxu0 0.0
        %5883 = vmatprep.subr.mxu0 0.0
        %5884 = vmatpush2.msra.mxu0 0.0
        %5885 = vmatprep.subr.mxu0 0.0
        %5886 = vmatpush2.msra.mxu0 0.0
        %5887 = vmatprep.subr.mxu0 0.0
        %5888 = vmatpush2.msra.mxu0 0.0
        %5889 = vmatprep.subr.mxu0 0.0
        %5890 = vmatpush2.msra.mxu0 0.0
        %5891 = vmatprep.subr.mxu0 0.0
        %5892 = vmatpush2.msra.mxu0 0.0
        %5893 = vmatprep.subr.mxu0 0.0
        %5894 = vmatpush2.msra.mxu0 0.0
        %5895 = vmatprep.subr.mxu0 0.0
        %5896 = vmatpush2.msra.mxu0 0.0
        %5897 = vmatprep.subr.mxu0 0.0
        %5898 = vmatpush2.msra.mxu0 0.0
        %5899 = vmatprep.subr.mxu0 0.0
        %5900 = vmatpush2.msra.mxu0 0.0
        %5901 = vmatprep.mubr.f32.mxu0 0.0
        %5902 = vmatmul.mubr.f32.gmra.mxu0 %v5810
        %v5903 = vpop.f32.mrf.mxu0
        %v5904 = vadd.f32 0.0, %v5903
        %v5905 = vpop.f32.mrf.mxu0
        %5906 = vmatprep.mubr.f32.mxu0 0.0
        %5907 = vmatmul.mubr.f32.gmra.mxu0 %v5813
        %v5908 = vpop.f32.mrf.mxu0
        %v5909 = vadd.f32 0.0, %v5908
        %v5910 = vpop.f32.mrf.mxu0
        %5911 = vmatprep.mubr.f32.mxu0 0.0
        %5912 = vmatmul.mubr.f32.gmra.mxu0 %v5816
        %v5913 = vpop.f32.mrf.mxu0
        %v5914 = vadd.f32 0.0, %v5913
        %v5915 = vpop.f32.mrf.mxu0
        %5916 = vmatprep.mubr.f32.mxu0 0.0
        %5917 = vmatmul.mubr.f32.gmra.mxu0 %v5819
        %v5918 = vpop.f32.mrf.mxu0
        %v5919 = vadd.f32 0.0, %v5918
        %v5920 = vpop.f32.mrf.mxu0
        %5921 = vmatprep.mubr.f32.mxu0 0.0
        %5922 = vmatmul.mubr.f32.gmra.mxu0 %v5822
        %v5923 = vpop.f32.mrf.mxu0
        %v5924 = vadd.f32 0.0, %v5923
        %v5925 = vpop.f32.mrf.mxu0
        %5926 = vmatprep.mubr.f32.mxu0 0.0
        %5927 = vmatmul.mubr.f32.gmra.mxu0 %v5825
        %v5928 = vpop.f32.mrf.mxu0
        %v5929 = vadd.f32 0.0, %v5928
        %v5930 = vpop.f32.mrf.mxu0
        %5931 = vmatprep.mubr.f32.mxu0 0.0
        %5932 = vmatmul.mubr.f32.gmra.mxu0 %v5828
        %v5933 = vpop.f32.mrf.mxu0
        %v5934 = vadd.f32 0.0, %v5933
        %v5935 = vpop.f32.mrf.mxu0
        %5936 = vmatprep.mubr.f32.mxu0 0.0
        %5937 = vmatmul.mubr.f32.gmra.mxu0 %v5831
        %v5938 = vpop.f32.mrf.mxu0
        %v5939 = vadd.f32 0.0, %v5938
        %v5940 = vpop.f32.mrf.mxu0
        %5941 = vdwg.mxu0
        %v5942 = vmul.f32 %v5693, %v5904
        %v5943 = vmul.f32 %v5693, %v5909
        %v5944 = vmul.f32 %v5693, %v5914
        %v5945 = vmul.f32 %v5693, %v5919
        %v5946 = vmul.f32 %v5693, %v5924
        %v5947 = vmul.f32 %v5693, %v5929
        %v5948 = vmul.f32 %v5693, %v5934
        %v5949 = vmul.f32 %v5693, %v5939
        %v5950 = vmul.f32 %v5693, %v5654
        %v5951 = vmul.f32 %v5693, %v5655
        %v5952 = vmul.f32 %v5693, %v5656
        %v5953 = vmul.f32 %v5693, %v5657
        %v5954 = vmul.f32 %v5693, %v5658
        %v5955 = vmul.f32 %v5693, %v5659
        %v5956 = vmul.f32 %v5693, %v5660
        %v5957 = vmul.f32 %v5693, %v5661
        %5958 = vmatprep.subr.mxu0 0.0
        %5959 = vmatpush1.msra.mxu0 %v5687
        %5960 = vmatprep.subr.mxu0 0.0
        %5961 = vmatpush1.msra.mxu0 %v5686
        %5962 = vmatprep.subr.mxu0 0.0
        %5963 = vmatpush1.msra.mxu0 %v5685
        %5964 = vmatprep.subr.mxu0 0.0
        %5965 = vmatpush1.msra.mxu0 %v5684
        %5966 = vmatprep.subr.mxu0 0.0
        %5967 = vmatpush1.msra.mxu0 %v5683
        %5968 = vmatprep.subr.mxu0 0.0
        %5969 = vmatpush1.msra.mxu0 %v5682
        %5970 = vmatprep.subr.mxu0 0.0
        %5971 = vmatpush1.msra.mxu0 %v5681
        %5972 = vmatprep.subr.mxu0 0.0
        %5973 = vmatpush1.msra.mxu0 %v5680
        %5974 = vmatprep.subr.mxu0 0.0
        %5975 = vmatpush1.msra.mxu0 %v5679
        %5976 = vmatprep.subr.mxu0 0.0
        %5977 = vmatpush1.msra.mxu0 %v5678
        %5978 = vmatprep.subr.mxu0 0.0
        %5979 = vmatpush1.msra.mxu0 %v5677
        %5980 = vmatprep.subr.mxu0 0.0
        %5981 = vmatpush1.msra.mxu0 %v5676
        %5982 = vmatprep.subr.mxu0 0.0
        %5983 = vmatpush1.msra.mxu0 %v5675
        %5984 = vmatprep.subr.mxu0 0.0
        %5985 = vmatpush1.msra.mxu0 %v5674
        %5986 = vmatprep.subr.mxu0 0.0
        %5987 = vmatpush1.msra.mxu0 %v5673
        %5988 = vmatprep.subr.mxu0 0.0
        %5989 = vmatpush1.msra.mxu0 %v5672
        %5990 = vmatprep.subr.mxu0 0.0
        %5991 = vmatpush2.msra.mxu0 0.0
        %5992 = vmatprep.subr.mxu0 0.0
        %5993 = vmatpush2.msra.mxu0 0.0
        %5994 = vmatprep.subr.mxu0 0.0
        %5995 = vmatpush2.msra.mxu0 0.0
        %5996 = vmatprep.subr.mxu0 0.0
        %5997 = vmatpush2.msra.mxu0 0.0
        %5998 = vmatprep.subr.mxu0 0.0
        %5999 = vmatpush2.msra.mxu0 0.0
        %6000 = vmatprep.subr.mxu0 0.0
        %6001 = vmatpush2.msra.mxu0 0.0
        %6002 = vmatprep.subr.mxu0 0.0
        %6003 = vmatpush2.msra.mxu0 0.0
        %6004 = vmatprep.subr.mxu0 0.0
        %6005 = vmatpush2.msra.mxu0 0.0
        %6006 = vmatprep.subr.mxu0 0.0
        %6007 = vmatpush2.msra.mxu0 0.0
        %6008 = vmatprep.subr.mxu0 0.0
        %6009 = vmatpush2.msra.mxu0 0.0
        %6010 = vmatprep.subr.mxu0 0.0
        %6011 = vmatpush2.msra.mxu0 0.0
        %6012 = vmatprep.subr.mxu0 0.0
        %6013 = vmatpush2.msra.mxu0 0.0
        %6014 = vmatprep.subr.mxu0 0.0
        %6015 = vmatpush2.msra.mxu0 0.0
        %6016 = vmatprep.subr.mxu0 0.0
        %6017 = vmatpush2.msra.mxu0 0.0
        %6018 = vmatprep.subr.mxu0 0.0
        %6019 = vmatpush2.msra.mxu0 0.0
        %6020 = vmatprep.subr.mxu0 0.0
        %6021 = vmatpush2.msra.mxu0 0.0
        %6022 = vmatprep.mubr.f32.mxu0 0.0
        %6023 = vmatmul.mubr.f32.gmra.mxu0 %v5950
        %v6024 = vpop.f32.mrf.mxu0
        %v6025 = vadd.f32 0.0, %v6024
        %v6026 = vpop.f32.mrf.mxu0
        %6027 = vmatprep.mubr.f32.mxu0 0.0
        %6028 = vmatmul.mubr.f32.gmra.mxu0 %v5951
        %v6029 = vpop.f32.mrf.mxu0
        %v6030 = vadd.f32 0.0, %v6029
        %v6031 = vpop.f32.mrf.mxu0
        %6032 = vmatprep.mubr.f32.mxu0 0.0
        %6033 = vmatmul.mubr.f32.gmra.mxu0 %v5952
        %v6034 = vpop.f32.mrf.mxu0
        %v6035 = vadd.f32 0.0, %v6034
        %v6036 = vpop.f32.mrf.mxu0
        %6037 = vmatprep.mubr.f32.mxu0 0.0
        %6038 = vmatmul.mubr.f32.gmra.mxu0 %v5953
        %v6039 = vpop.f32.mrf.mxu0
        %v6040 = vadd.f32 0.0, %v6039
        %v6041 = vpop.f32.mrf.mxu0
        %6042 = vmatprep.mubr.f32.mxu0 0.0
        %6043 = vmatmul.mubr.f32.gmra.mxu0 %v5954
        %v6044 = vpop.f32.mrf.mxu0
        %v6045 = vadd.f32 0.0, %v6044
        %v6046 = vpop.f32.mrf.mxu0
        %6047 = vmatprep.mubr.f32.mxu0 0.0
        %6048 = vmatmul.mubr.f32.gmra.mxu0 %v5955
        %v6049 = vpop.f32.mrf.mxu0
        %v6050 = vadd.f32 0.0, %v6049
        %v6051 = vpop.f32.mrf.mxu0
        %6052 = vmatprep.mubr.f32.mxu0 0.0
        %6053 = vmatmul.mubr.f32.gmra.mxu0 %v5956
        %v6054 = vpop.f32.mrf.mxu0
        %v6055 = vadd.f32 0.0, %v6054
        %v6056 = vpop.f32.mrf.mxu0
        %6057 = vmatprep.mubr.f32.mxu0 0.0
        %6058 = vmatmul.mubr.f32.gmra.mxu0 %v5957
        %v6059 = vpop.f32.mrf.mxu0
        %v6060 = vadd.f32 0.0, %v6059
        %v6061 = vpop.f32.mrf.mxu0
        %6062 = vdwg.mxu0
        %v6064 = vsel %vm5808, %v6025, 0
        %v6067 = vsel %vm5808, %v6030, 0
        %v6070 = vsel %vm5808, %v6035, 0
        %v6073 = vsel %vm5808, %v6040, 0
        %v6076 = vsel %vm5808, %v6045, 0
        %v6079 = vsel %vm5808, %v6050, 0
        %v6082 = vsel %vm5808, %v6055, 0
        %v6085 = vsel %vm5808, %v6060, 0
        %6087 = vmatprep.subr.mxu0 0.0
        %6088 = vmatpush1.msra.mxu0 0.0
        %6089 = vmatprep.subr.mxu0 0.0
        %6090 = vmatpush1.msra.mxu0 0.0
        %6091 = vmatprep.subr.mxu0 0.0
        %6092 = vmatpush1.msra.mxu0 0.0
        %6093 = vmatprep.subr.mxu0 0.0
        %6094 = vmatpush1.msra.mxu0 0.0
        %6095 = vmatprep.subr.mxu0 0.0
        %6096 = vmatpush1.msra.mxu0 0.0
        %6097 = vmatprep.subr.mxu0 0.0
        %6098 = vmatpush1.msra.mxu0 0.0
        %6099 = vmatprep.subr.mxu0 0.0
        %6100 = vmatpush1.msra.mxu0 0.0
        %6101 = vmatprep.subr.mxu0 0.0
        %6102 = vmatpush1.msra.mxu0 0.0
        %6103 = vmatprep.subr.mxu0 0.0
        %6104 = vmatpush1.msra.mxu0 0.0
        %6105 = vmatprep.subr.mxu0 0.0
        %6106 = vmatpush1.msra.mxu0 0.0
        %6107 = vmatprep.subr.mxu0 0.0
        %6108 = vmatpush1.msra.mxu0 0.0
        %6109 = vmatprep.subr.mxu0 0.0
        %6110 = vmatpush1.msra.mxu0 0.0
        %6111 = vmatprep.subr.mxu0 0.0
        %6112 = vmatpush1.msra.mxu0 0.0
        %6113 = vmatprep.subr.mxu0 0.0
        %6114 = vmatpush1.msra.mxu0 0.0
        %6115 = vmatprep.subr.mxu0 0.0
        %6116 = vmatpush1.msra.mxu0 0.0
        %6117 = vmatprep.subr.mxu0 0.0
        %6118 = vmatpush1.msra.mxu0 %v5835
        %6119 = vmatprep.subr.mxu0 0.0
        %6120 = vmatpush2.msra.mxu0 0.0
        %6121 = vmatprep.subr.mxu0 0.0
        %6122 = vmatpush2.msra.mxu0 0.0
        %6123 = vmatprep.subr.mxu0 0.0
        %6124 = vmatpush2.msra.mxu0 0.0
        %6125 = vmatprep.subr.mxu0 0.0
        %6126 = vmatpush2.msra.mxu0 0.0
        %6127 = vmatprep.subr.mxu0 0.0
        %6128 = vmatpush2.msra.mxu0 0.0
        %6129 = vmatprep.subr.mxu0 0.0
        %6130 = vmatpush2.msra.mxu0 0.0
        %6131 = vmatprep.subr.mxu0 0.0
        %6132 = vmatpush2.msra.mxu0 0.0
        %6133 = vmatprep.subr.mxu0 0.0
        %6134 = vmatpush2.msra.mxu0 0.0
        %6135 = vmatprep.subr.mxu0 0.0
        %6136 = vmatpush2.msra.mxu0 0.0
        %6137 = vmatprep.subr.mxu0 0.0
        %6138 = vmatpush2.msra.mxu0 0.0
        %6139 = vmatprep.subr.mxu0 0.0
        %6140 = vmatpush2.msra.mxu0 0.0
        %6141 = vmatprep.subr.mxu0 0.0
        %6142 = vmatpush2.msra.mxu0 0.0
        %6143 = vmatprep.subr.mxu0 0.0
        %6144 = vmatpush2.msra.mxu0 0.0
        %6145 = vmatprep.subr.mxu0 0.0
        %6146 = vmatpush2.msra.mxu0 0.0
        %6147 = vmatprep.subr.mxu0 0.0
        %6148 = vmatpush2.msra.mxu0 0.0
        %6149 = vmatprep.subr.mxu0 0.0
        %6150 = vmatpush2.msra.mxu0 0.0
        %6151 = vmatprep.mubr.f32.mxu0 0.0
        %6152 = vmatmul.mubr.f32.gmra.mxu0 %v6064
        %v6153 = vpop.f32.mrf.mxu0
        %v6154 = vadd.f32 0.0, %v6153
        %v6155 = vpop.f32.mrf.mxu0
        %6156 = vmatprep.mubr.f32.mxu0 0.0
        %6157 = vmatmul.mubr.f32.gmra.mxu0 %v6067
        %v6158 = vpop.f32.mrf.mxu0
        %v6159 = vadd.f32 0.0, %v6158
        %v6160 = vpop.f32.mrf.mxu0
        %6161 = vmatprep.mubr.f32.mxu0 0.0
        %6162 = vmatmul.mubr.f32.gmra.mxu0 %v6070
        %v6163 = vpop.f32.mrf.mxu0
        %v6164 = vadd.f32 0.0, %v6163
        %v6165 = vpop.f32.mrf.mxu0
        %6166 = vmatprep.mubr.f32.mxu0 0.0
        %6167 = vmatmul.mubr.f32.gmra.mxu0 %v6073
        %v6168 = vpop.f32.mrf.mxu0
        %v6169 = vadd.f32 0.0, %v6168
        %v6170 = vpop.f32.mrf.mxu0
        %6171 = vmatprep.mubr.f32.mxu0 0.0
        %6172 = vmatmul.mubr.f32.gmra.mxu0 %v6076
        %v6173 = vpop.f32.mrf.mxu0
        %v6174 = vadd.f32 0.0, %v6173
        %v6175 = vpop.f32.mrf.mxu0
        %6176 = vmatprep.mubr.f32.mxu0 0.0
        %6177 = vmatmul.mubr.f32.gmra.mxu0 %v6079
        %v6178 = vpop.f32.mrf.mxu0
        %v6179 = vadd.f32 0.0, %v6178
        %v6180 = vpop.f32.mrf.mxu0
        %6181 = vmatprep.mubr.f32.mxu0 0.0
        %6182 = vmatmul.mubr.f32.gmra.mxu0 %v6082
        %v6183 = vpop.f32.mrf.mxu0
        %v6184 = vadd.f32 0.0, %v6183
        %v6185 = vpop.f32.mrf.mxu0
        %6186 = vmatprep.mubr.f32.mxu0 0.0
        %6187 = vmatmul.mubr.f32.gmra.mxu0 %v6085
        %v6188 = vpop.f32.mrf.mxu0
        %v6189 = vadd.f32 0.0, %v6188
        %v6190 = vpop.f32.mrf.mxu0
        %6191 = vdwg.mxu0
        %v6192 = vmul.f32 %v5693, %v6154
        %v6193 = vmul.f32 %v5693, %v6159
        %v6194 = vmul.f32 %v5693, %v6164
        %v6195 = vmul.f32 %v5693, %v6169
        %v6196 = vmul.f32 %v5693, %v6174
        %v6197 = vmul.f32 %v5693, %v6179
        %v6198 = vmul.f32 %v5693, %v6184
        %v6199 = vmul.f32 %v5693, %v6189
        %v6200 = vmul.f32 %v5693, %v5662
        %v6201 = vmul.f32 %v5693, %v5663
        %v6202 = vmul.f32 %v5693, %v5664
        %v6203 = vmul.f32 %v5693, %v5665
        %v6204 = vmul.f32 %v5693, %v5666
        %v6205 = vmul.f32 %v5693, %v5667
        %v6206 = vmul.f32 %v5693, %v5668
        %v6207 = vmul.f32 %v5693, %v5669
        %6208 = vmatprep.subr.mxu0 0.0
        %6209 = vmatpush1.msra.mxu0 %v5687
        %6210 = vmatprep.subr.mxu0 0.0
        %6211 = vmatpush1.msra.mxu0 %v5686
        %6212 = vmatprep.subr.mxu0 0.0
        %6213 = vmatpush1.msra.mxu0 %v5685
        %6214 = vmatprep.subr.mxu0 0.0
        %6215 = vmatpush1.msra.mxu0 %v5684
        %6216 = vmatprep.subr.mxu0 0.0
        %6217 = vmatpush1.msra.mxu0 %v5683
        %6218 = vmatprep.subr.mxu0 0.0
        %6219 = vmatpush1.msra.mxu0 %v5682
        %6220 = vmatprep.subr.mxu0 0.0
        %6221 = vmatpush1.msra.mxu0 %v5681
        %6222 = vmatprep.subr.mxu0 0.0
        %6223 = vmatpush1.msra.mxu0 %v5680
        %6224 = vmatprep.subr.mxu0 0.0
        %6225 = vmatpush1.msra.mxu0 %v5679
        %6226 = vmatprep.subr.mxu0 0.0
        %6227 = vmatpush1.msra.mxu0 %v5678
        %6228 = vmatprep.subr.mxu0 0.0
        %6229 = vmatpush1.msra.mxu0 %v5677
        %6230 = vmatprep.subr.mxu0 0.0
        %6231 = vmatpush1.msra.mxu0 %v5676
        %6232 = vmatprep.subr.mxu0 0.0
        %6233 = vmatpush1.msra.mxu0 %v5675
        %6234 = vmatprep.subr.mxu0 0.0
        %6235 = vmatpush1.msra.mxu0 %v5674
        %6236 = vmatprep.subr.mxu0 0.0
        %6237 = vmatpush1.msra.mxu0 %v5673
        %6238 = vmatprep.subr.mxu0 0.0
        %6239 = vmatpush1.msra.mxu0 %v5672
        %6240 = vmatprep.subr.mxu0 0.0
        %6241 = vmatpush2.msra.mxu0 0.0
        %6242 = vmatprep.subr.mxu0 0.0
        %6243 = vmatpush2.msra.mxu0 0.0
        %6244 = vmatprep.subr.mxu0 0.0
        %6245 = vmatpush2.msra.mxu0 0.0
        %6246 = vmatprep.subr.mxu0 0.0
        %6247 = vmatpush2.msra.mxu0 0.0
        %6248 = vmatprep.subr.mxu0 0.0
        %6249 = vmatpush2.msra.mxu0 0.0
        %6250 = vmatprep.subr.mxu0 0.0
        %6251 = vmatpush2.msra.mxu0 0.0
        %6252 = vmatprep.subr.mxu0 0.0
        %6253 = vmatpush2.msra.mxu0 0.0
        %6254 = vmatprep.subr.mxu0 0.0
        %6255 = vmatpush2.msra.mxu0 0.0
        %6256 = vmatprep.subr.mxu0 0.0
        %6257 = vmatpush2.msra.mxu0 0.0
        %6258 = vmatprep.subr.mxu0 0.0
        %6259 = vmatpush2.msra.mxu0 0.0
        %6260 = vmatprep.subr.mxu0 0.0
        %6261 = vmatpush2.msra.mxu0 0.0
        %6262 = vmatprep.subr.mxu0 0.0
        %6263 = vmatpush2.msra.mxu0 0.0
        %6264 = vmatprep.subr.mxu0 0.0
        %6265 = vmatpush2.msra.mxu0 0.0
        %6266 = vmatprep.subr.mxu0 0.0
        %6267 = vmatpush2.msra.mxu0 0.0
        %6268 = vmatprep.subr.mxu0 0.0
        %6269 = vmatpush2.msra.mxu0 0.0
        %6270 = vmatprep.subr.mxu0 0.0
        %6271 = vmatpush2.msra.mxu0 0.0
        %6272 = vmatprep.mubr.f32.mxu0 0.0
        %6273 = vmatmul.mubr.f32.gmra.mxu0 %v6200
        %v6274 = vpop.f32.mrf.mxu0
        %v6275 = vadd.f32 0.0, %v6274
        %v6276 = vpop.f32.mrf.mxu0
        %6277 = vmatprep.mubr.f32.mxu0 0.0
        %6278 = vmatmul.mubr.f32.gmra.mxu0 %v6201
        %v6279 = vpop.f32.mrf.mxu0
        %v6280 = vadd.f32 0.0, %v6279
        %v6281 = vpop.f32.mrf.mxu0
        %6282 = vmatprep.mubr.f32.mxu0 0.0
        %6283 = vmatmul.mubr.f32.gmra.mxu0 %v6202
        %v6284 = vpop.f32.mrf.mxu0
        %v6285 = vadd.f32 0.0, %v6284
        %v6286 = vpop.f32.mrf.mxu0
        %6287 = vmatprep.mubr.f32.mxu0 0.0
        %6288 = vmatmul.mubr.f32.gmra.mxu0 %v6203
        %v6289 = vpop.f32.mrf.mxu0
        %v6290 = vadd.f32 0.0, %v6289
        %v6291 = vpop.f32.mrf.mxu0
        %6292 = vmatprep.mubr.f32.mxu0 0.0
        %6293 = vmatmul.mubr.f32.gmra.mxu0 %v6204
        %v6294 = vpop.f32.mrf.mxu0
        %v6295 = vadd.f32 0.0, %v6294
        %v6296 = vpop.f32.mrf.mxu0
        %6297 = vmatprep.mubr.f32.mxu0 0.0
        %6298 = vmatmul.mubr.f32.gmra.mxu0 %v6205
        %v6299 = vpop.f32.mrf.mxu0
        %v6300 = vadd.f32 0.0, %v6299
        %v6301 = vpop.f32.mrf.mxu0
        %6302 = vmatprep.mubr.f32.mxu0 0.0
        %6303 = vmatmul.mubr.f32.gmra.mxu0 %v6206
        %v6304 = vpop.f32.mrf.mxu0
        %v6305 = vadd.f32 0.0, %v6304
        %v6306 = vpop.f32.mrf.mxu0
        %6307 = vmatprep.mubr.f32.mxu0 0.0
        %6308 = vmatmul.mubr.f32.gmra.mxu0 %v6207
        %v6309 = vpop.f32.mrf.mxu0
        %v6310 = vadd.f32 0.0, %v6309
        %v6311 = vpop.f32.mrf.mxu0
        %6312 = vdwg.mxu0
        %v6314 = vsel %vm5808, %v6275, 0
        %v6317 = vsel %vm5808, %v6280, 0
        %v6320 = vsel %vm5808, %v6285, 0
        %v6323 = vsel %vm5808, %v6290, 0
        %v6326 = vsel %vm5808, %v6295, 0
        %v6329 = vsel %vm5808, %v6300, 0
        %v6332 = vsel %vm5808, %v6305, 0
        %v6335 = vsel %vm5808, %v6310, 0
        %6337 = vmatprep.subr.mxu0 0.0
        %6338 = vmatpush1.msra.mxu0 0.0
        %6339 = vmatprep.subr.mxu0 0.0
        %6340 = vmatpush1.msra.mxu0 0.0
        %6341 = vmatprep.subr.mxu0 0.0
        %6342 = vmatpush1.msra.mxu0 0.0
        %6343 = vmatprep.subr.mxu0 0.0
        %6344 = vmatpush1.msra.mxu0 0.0
        %6345 = vmatprep.subr.mxu0 0.0
        %6346 = vmatpush1.msra.mxu0 0.0
        %6347 = vmatprep.subr.mxu0 0.0
        %6348 = vmatpush1.msra.mxu0 0.0
        %6349 = vmatprep.subr.mxu0 0.0
        %6350 = vmatpush1.msra.mxu0 0.0
        %6351 = vmatprep.subr.mxu0 0.0
        %6352 = vmatpush1.msra.mxu0 0.0
        %6353 = vmatprep.subr.mxu0 0.0
        %6354 = vmatpush1.msra.mxu0 0.0
        %6355 = vmatprep.subr.mxu0 0.0
        %6356 = vmatpush1.msra.mxu0 0.0
        %6357 = vmatprep.subr.mxu0 0.0
        %6358 = vmatpush1.msra.mxu0 0.0
        %6359 = vmatprep.subr.mxu0 0.0
        %6360 = vmatpush1.msra.mxu0 0.0
        %6361 = vmatprep.subr.mxu0 0.0
        %6362 = vmatpush1.msra.mxu0 0.0
        %6363 = vmatprep.subr.mxu0 0.0
        %6364 = vmatpush1.msra.mxu0 0.0
        %6365 = vmatprep.subr.mxu0 0.0
        %6366 = vmatpush1.msra.mxu0 0.0
        %6367 = vmatprep.subr.mxu0 0.0
        %6368 = vmatpush1.msra.mxu0 %v5835
        %6369 = vmatprep.subr.mxu0 0.0
        %6370 = vmatpush2.msra.mxu0 0.0
        %6371 = vmatprep.subr.mxu0 0.0
        %6372 = vmatpush2.msra.mxu0 0.0
        %6373 = vmatprep.subr.mxu0 0.0
        %6374 = vmatpush2.msra.mxu0 0.0
        %6375 = vmatprep.subr.mxu0 0.0
        %6376 = vmatpush2.msra.mxu0 0.0
        %6377 = vmatprep.subr.mxu0 0.0
        %6378 = vmatpush2.msra.mxu0 0.0
        %6379 = vmatprep.subr.mxu0 0.0
        %6380 = vmatpush2.msra.mxu0 0.0
        %6381 = vmatprep.subr.mxu0 0.0
        %6382 = vmatpush2.msra.mxu0 0.0
        %6383 = vmatprep.subr.mxu0 0.0
        %6384 = vmatpush2.msra.mxu0 0.0
        %6385 = vmatprep.subr.mxu0 0.0
        %6386 = vmatpush2.msra.mxu0 0.0
        %6387 = vmatprep.subr.mxu0 0.0
        %6388 = vmatpush2.msra.mxu0 0.0
        %6389 = vmatprep.subr.mxu0 0.0
        %6390 = vmatpush2.msra.mxu0 0.0
        %6391 = vmatprep.subr.mxu0 0.0
        %6392 = vmatpush2.msra.mxu0 0.0
        %6393 = vmatprep.subr.mxu0 0.0
        %6394 = vmatpush2.msra.mxu0 0.0
        %6395 = vmatprep.subr.mxu0 0.0
        %6396 = vmatpush2.msra.mxu0 0.0
        %6397 = vmatprep.subr.mxu0 0.0
        %6398 = vmatpush2.msra.mxu0 0.0
        %6399 = vmatprep.subr.mxu0 0.0
        %6400 = vmatpush2.msra.mxu0 0.0
        %6401 = vmatprep.mubr.f32.mxu0 0.0
        %6402 = vmatmul.mubr.f32.gmra.mxu0 %v6314
        %v6403 = vpop.f32.mrf.mxu0
        %v6404 = vadd.f32 0.0, %v6403
        %v6405 = vpop.f32.mrf.mxu0
        %6406 = vmatprep.mubr.f32.mxu0 0.0
        %6407 = vmatmul.mubr.f32.gmra.mxu0 %v6317
        %v6408 = vpop.f32.mrf.mxu0
        %v6409 = vadd.f32 0.0, %v6408
        %v6410 = vpop.f32.mrf.mxu0
        %6411 = vmatprep.mubr.f32.mxu0 0.0
        %6412 = vmatmul.mubr.f32.gmra.mxu0 %v6320
        %v6413 = vpop.f32.mrf.mxu0
        %v6414 = vadd.f32 0.0, %v6413
        %v6415 = vpop.f32.mrf.mxu0
        %6416 = vmatprep.mubr.f32.mxu0 0.0
        %6417 = vmatmul.mubr.f32.gmra.mxu0 %v6323
        %v6418 = vpop.f32.mrf.mxu0
        %v6419 = vadd.f32 0.0, %v6418
        %v6420 = vpop.f32.mrf.mxu0
        %6421 = vmatprep.mubr.f32.mxu0 0.0
        %6422 = vmatmul.mubr.f32.gmra.mxu0 %v6326
        %v6423 = vpop.f32.mrf.mxu0
        %v6424 = vadd.f32 0.0, %v6423
        %v6425 = vpop.f32.mrf.mxu0
        %6426 = vmatprep.mubr.f32.mxu0 0.0
        %6427 = vmatmul.mubr.f32.gmra.mxu0 %v6329
        %v6428 = vpop.f32.mrf.mxu0
        %v6429 = vadd.f32 0.0, %v6428
        %v6430 = vpop.f32.mrf.mxu0
        %6431 = vmatprep.mubr.f32.mxu0 0.0
        %6432 = vmatmul.mubr.f32.gmra.mxu0 %v6332
        %v6433 = vpop.f32.mrf.mxu0
        %v6434 = vadd.f32 0.0, %v6433
        %v6435 = vpop.f32.mrf.mxu0
        %6436 = vmatprep.mubr.f32.mxu0 0.0
        %6437 = vmatmul.mubr.f32.gmra.mxu0 %v6335
        %v6438 = vpop.f32.mrf.mxu0
        %v6439 = vadd.f32 0.0, %v6438
        %v6440 = vpop.f32.mrf.mxu0
        %6441 = vdwg.mxu0
        %v6442 = vmul.f32 %v5693, %v6404
        %v6443 = vmul.f32 %v5693, %v6409
        %v6444 = vmul.f32 %v5693, %v6414
        %v6445 = vmul.f32 %v5693, %v6419
        %v6446 = vmul.f32 %v5693, %v6424
        %v6447 = vmul.f32 %v5693, %v6429
        %v6448 = vmul.f32 %v5693, %v6434
        %v6449 = vmul.f32 %v5693, %v6439
        %v6451 = vlaneseq
        %v6452 = vshrl.u32 %v6451, 7
        %v6453 = vsub.s32 0, %v6452
        %v6454 = vrot.slane %v5670, %v6453
        %v6456 = vadd.f32 %v5942, %v6454
        %v6457 = vadd.f32 %v5943, %v6454
        %v6458 = vadd.f32 %v5944, %v6454
        %v6459 = vadd.f32 %v5945, %v6454
        %v6460 = vadd.f32 %v5946, %v6454
        %v6461 = vadd.f32 %v5947, %v6454
        %v6462 = vadd.f32 %v5948, %v6454
        %v6463 = vadd.f32 %v5949, %v6454
        %v6464 = vsub.f32 %v6456, %v6192
        %v6465 = vsub.f32 %v6457, %v6193
        %v6466 = vsub.f32 %v6458, %v6194
        %v6467 = vsub.f32 %v6459, %v6195
        %v6468 = vsub.f32 %v6460, %v6196
        %v6469 = vsub.f32 %v6461, %v6197
        %v6470 = vsub.f32 %v6462, %v6198
        %v6471 = vsub.f32 %v6463, %v6199
        %v6472 = vsub.f32 %v6456, %v6442
        %v6473 = vsub.f32 %v6457, %v6443
        %v6474 = vsub.f32 %v6458, %v6444
        %v6475 = vsub.f32 %v6459, %v6445
        %v6476 = vsub.f32 %v6460, %v6446
        %v6477 = vsub.f32 %v6461, %v6447
        %v6478 = vsub.f32 %v6462, %v6448
        %v6479 = vsub.f32 %v6463, %v6449
        %v6480 = vmul.f32 %v6464, %v6464
        %v6481 = vmul.f32 %v6465, %v6465
        %v6482 = vmul.f32 %v6466, %v6466
        %v6483 = vmul.f32 %v6467, %v6467
        %v6484 = vmul.f32 %v6468, %v6468
        %v6485 = vmul.f32 %v6469, %v6469
        %v6486 = vmul.f32 %v6470, %v6470
        %v6487 = vmul.f32 %v6471, %v6471
        %6488 = vmatprep.subr.mxu0 0.0
        %6489 = vmatpush1.msra.mxu0 %v5687
        %6490 = vmatprep.subr.mxu0 0.0
        %6491 = vmatpush1.msra.mxu0 %v5686
        %6492 = vmatprep.subr.mxu0 0.0
        %6493 = vmatpush1.msra.mxu0 %v5685
        %6494 = vmatprep.subr.mxu0 0.0
        %6495 = vmatpush1.msra.mxu0 %v5684
        %6496 = vmatprep.subr.mxu0 0.0
        %6497 = vmatpush1.msra.mxu0 %v5683
        %6498 = vmatprep.subr.mxu0 0.0
        %6499 = vmatpush1.msra.mxu0 %v5682
        %6500 = vmatprep.subr.mxu0 0.0
        %6501 = vmatpush1.msra.mxu0 %v5681
        %6502 = vmatprep.subr.mxu0 0.0
        %6503 = vmatpush1.msra.mxu0 %v5680
        %6504 = vmatprep.subr.mxu0 0.0
        %6505 = vmatpush1.msra.mxu0 %v5679
        %6506 = vmatprep.subr.mxu0 0.0
        %6507 = vmatpush1.msra.mxu0 %v5678
        %6508 = vmatprep.subr.mxu0 0.0
        %6509 = vmatpush1.msra.mxu0 %v5677
        %6510 = vmatprep.subr.mxu0 0.0
        %6511 = vmatpush1.msra.mxu0 %v5676
        %6512 = vmatprep.subr.mxu0 0.0
        %6513 = vmatpush1.msra.mxu0 %v5675
        %6514 = vmatprep.subr.mxu0 0.0
        %6515 = vmatpush1.msra.mxu0 %v5674
        %6516 = vmatprep.subr.mxu0 0.0
        %6517 = vmatpush1.msra.mxu0 %v5673
        %6518 = vmatprep.subr.mxu0 0.0
        %6519 = vmatpush1.msra.mxu0 %v5672
        %6520 = vmatprep.subr.mxu0 0.0
        %6521 = vmatpush2.msra.mxu0 0.0
        %6522 = vmatprep.subr.mxu0 0.0
        %6523 = vmatpush2.msra.mxu0 0.0
        %6524 = vmatprep.subr.mxu0 0.0
        %6525 = vmatpush2.msra.mxu0 0.0
        %6526 = vmatprep.subr.mxu0 0.0
        %6527 = vmatpush2.msra.mxu0 0.0
        %6528 = vmatprep.subr.mxu0 0.0
        %6529 = vmatpush2.msra.mxu0 0.0
        %6530 = vmatprep.subr.mxu0 0.0
        %6531 = vmatpush2.msra.mxu0 0.0
        %6532 = vmatprep.subr.mxu0 0.0
        %6533 = vmatpush2.msra.mxu0 0.0
        %6534 = vmatprep.subr.mxu0 0.0
        %6535 = vmatpush2.msra.mxu0 0.0
        %6536 = vmatprep.subr.mxu0 0.0
        %6537 = vmatpush2.msra.mxu0 0.0
        %6538 = vmatprep.subr.mxu0 0.0
        %6539 = vmatpush2.msra.mxu0 0.0
        %6540 = vmatprep.subr.mxu0 0.0
        %6541 = vmatpush2.msra.mxu0 0.0
        %6542 = vmatprep.subr.mxu0 0.0
        %6543 = vmatpush2.msra.mxu0 0.0
        %6544 = vmatprep.subr.mxu0 0.0
        %6545 = vmatpush2.msra.mxu0 0.0
        %6546 = vmatprep.subr.mxu0 0.0
        %6547 = vmatpush2.msra.mxu0 0.0
        %6548 = vmatprep.subr.mxu0 0.0
        %6549 = vmatpush2.msra.mxu0 0.0
        %6550 = vmatprep.subr.mxu0 0.0
        %6551 = vmatpush2.msra.mxu0 0.0
        %6552 = vmatprep.mubr.f32.mxu0 0.0
        %6553 = vmatmul.mubr.f32.gmra.mxu0 %v6480
        %v6554 = vpop.f32.mrf.mxu0
        %v6555 = vadd.f32 0.0, %v6554
        %v6556 = vpop.f32.mrf.mxu0
        %6557 = vmatprep.mubr.f32.mxu0 0.0
        %6558 = vmatmul.mubr.f32.gmra.mxu0 %v6481
        %v6559 = vpop.f32.mrf.mxu0
        %v6560 = vadd.f32 0.0, %v6559
        %v6561 = vpop.f32.mrf.mxu0
        %6562 = vmatprep.mubr.f32.mxu0 0.0
        %6563 = vmatmul.mubr.f32.gmra.mxu0 %v6482
        %v6564 = vpop.f32.mrf.mxu0
        %v6565 = vadd.f32 0.0, %v6564
        %v6566 = vpop.f32.mrf.mxu0
        %6567 = vmatprep.mubr.f32.mxu0 0.0
        %6568 = vmatmul.mubr.f32.gmra.mxu0 %v6483
        %v6569 = vpop.f32.mrf.mxu0
        %v6570 = vadd.f32 0.0, %v6569
        %v6571 = vpop.f32.mrf.mxu0
        %6572 = vmatprep.mubr.f32.mxu0 0.0
        %6573 = vmatmul.mubr.f32.gmra.mxu0 %v6484
        %v6574 = vpop.f32.mrf.mxu0
        %v6575 = vadd.f32 0.0, %v6574
        %v6576 = vpop.f32.mrf.mxu0
        %6577 = vmatprep.mubr.f32.mxu0 0.0
        %6578 = vmatmul.mubr.f32.gmra.mxu0 %v6485
        %v6579 = vpop.f32.mrf.mxu0
        %v6580 = vadd.f32 0.0, %v6579
        %v6581 = vpop.f32.mrf.mxu0
        %6582 = vmatprep.mubr.f32.mxu0 0.0
        %6583 = vmatmul.mubr.f32.gmra.mxu0 %v6486
        %v6584 = vpop.f32.mrf.mxu0
        %v6585 = vadd.f32 0.0, %v6584
        %v6586 = vpop.f32.mrf.mxu0
        %6587 = vmatprep.mubr.f32.mxu0 0.0
        %6588 = vmatmul.mubr.f32.gmra.mxu0 %v6487
        %v6589 = vpop.f32.mrf.mxu0
        %v6590 = vadd.f32 0.0, %v6589
        %v6591 = vpop.f32.mrf.mxu0
        %6592 = vdwg.mxu0
        %v6593 = vmul.f32 %v6555, 0.03125
        %v6594 = vmul.f32 %v6560, 0.03125
        %v6595 = vmul.f32 %v6565, 0.03125
        %v6596 = vmul.f32 %v6570, 0.03125
        %v6597 = vmul.f32 %v6575, 0.03125
        %v6598 = vmul.f32 %v6580, 0.03125
        %v6599 = vmul.f32 %v6585, 0.03125
        %v6600 = vmul.f32 %v6590, 0.03125
        %v6601 = vmul.f32 %v6472, %v6472
        %v6602 = vmul.f32 %v6473, %v6473
        %v6603 = vmul.f32 %v6474, %v6474
        %v6604 = vmul.f32 %v6475, %v6475
        %v6605 = vmul.f32 %v6476, %v6476
        %v6606 = vmul.f32 %v6477, %v6477
        %v6607 = vmul.f32 %v6478, %v6478
        %v6608 = vmul.f32 %v6479, %v6479
        %6609 = vmatprep.subr.mxu0 0.0
        %6610 = vmatpush1.msra.mxu0 %v5687
        %6611 = vmatprep.subr.mxu0 0.0
        %6612 = vmatpush1.msra.mxu0 %v5686
        %6613 = vmatprep.subr.mxu0 0.0
        %6614 = vmatpush1.msra.mxu0 %v5685
        %6615 = vmatprep.subr.mxu0 0.0
        %6616 = vmatpush1.msra.mxu0 %v5684
        %6617 = vmatprep.subr.mxu0 0.0
        %6618 = vmatpush1.msra.mxu0 %v5683
        %6619 = vmatprep.subr.mxu0 0.0
        %6620 = vmatpush1.msra.mxu0 %v5682
        %6621 = vmatprep.subr.mxu0 0.0
        %6622 = vmatpush1.msra.mxu0 %v5681
        %6623 = vmatprep.subr.mxu0 0.0
        %6624 = vmatpush1.msra.mxu0 %v5680
        %6625 = vmatprep.subr.mxu0 0.0
        %6626 = vmatpush1.msra.mxu0 %v5679
        %6627 = vmatprep.subr.mxu0 0.0
        %6628 = vmatpush1.msra.mxu0 %v5678
        %6629 = vmatprep.subr.mxu0 0.0
        %6630 = vmatpush1.msra.mxu0 %v5677
        %6631 = vmatprep.subr.mxu0 0.0
        %6632 = vmatpush1.msra.mxu0 %v5676
        %6633 = vmatprep.subr.mxu0 0.0
        %6634 = vmatpush1.msra.mxu0 %v5675
        %6635 = vmatprep.subr.mxu0 0.0
        %6636 = vmatpush1.msra.mxu0 %v5674
        %6637 = vmatprep.subr.mxu0 0.0
        %6638 = vmatpush1.msra.mxu0 %v5673
        %6639 = vmatprep.subr.mxu0 0.0
        %6640 = vmatpush1.msra.mxu0 %v5672
        %6641 = vmatprep.subr.mxu0 0.0
        %6642 = vmatpush2.msra.mxu0 0.0
        %6643 = vmatprep.subr.mxu0 0.0
        %6644 = vmatpush2.msra.mxu0 0.0
        %6645 = vmatprep.subr.mxu0 0.0
        %6646 = vmatpush2.msra.mxu0 0.0
        %6647 = vmatprep.subr.mxu0 0.0
        %6648 = vmatpush2.msra.mxu0 0.0
        %6649 = vmatprep.subr.mxu0 0.0
        %6650 = vmatpush2.msra.mxu0 0.0
        %6651 = vmatprep.subr.mxu0 0.0
        %6652 = vmatpush2.msra.mxu0 0.0
        %6653 = vmatprep.subr.mxu0 0.0
        %6654 = vmatpush2.msra.mxu0 0.0
        %6655 = vmatprep.subr.mxu0 0.0
        %6656 = vmatpush2.msra.mxu0 0.0
        %6657 = vmatprep.subr.mxu0 0.0
        %6658 = vmatpush2.msra.mxu0 0.0
        %6659 = vmatprep.subr.mxu0 0.0
        %6660 = vmatpush2.msra.mxu0 0.0
        %6661 = vmatprep.subr.mxu0 0.0
        %6662 = vmatpush2.msra.mxu0 0.0
        %6663 = vmatprep.subr.mxu0 0.0
        %6664 = vmatpush2.msra.mxu0 0.0
        %6665 = vmatprep.subr.mxu0 0.0
        %6666 = vmatpush2.msra.mxu0 0.0
        %6667 = vmatprep.subr.mxu0 0.0
        %6668 = vmatpush2.msra.mxu0 0.0
        %6669 = vmatprep.subr.mxu0 0.0
        %6670 = vmatpush2.msra.mxu0 0.0
        %6671 = vmatprep.subr.mxu0 0.0
        %6672 = vmatpush2.msra.mxu0 0.0
        %6673 = vmatprep.mubr.f32.mxu0 0.0
        %6674 = vmatmul.mubr.f32.gmra.mxu0 %v6601
        %v6675 = vpop.f32.mrf.mxu0
        %v6676 = vadd.f32 0.0, %v6675
        %v6677 = vpop.f32.mrf.mxu0
        %6678 = vmatprep.mubr.f32.mxu0 0.0
        %6679 = vmatmul.mubr.f32.gmra.mxu0 %v6602
        %v6680 = vpop.f32.mrf.mxu0
        %v6681 = vadd.f32 0.0, %v6680
        %v6682 = vpop.f32.mrf.mxu0
        %6683 = vmatprep.mubr.f32.mxu0 0.0
        %6684 = vmatmul.mubr.f32.gmra.mxu0 %v6603
        %v6685 = vpop.f32.mrf.mxu0
        %v6686 = vadd.f32 0.0, %v6685
        %v6687 = vpop.f32.mrf.mxu0
        %6688 = vmatprep.mubr.f32.mxu0 0.0
        %6689 = vmatmul.mubr.f32.gmra.mxu0 %v6604
        %v6690 = vpop.f32.mrf.mxu0
        %v6691 = vadd.f32 0.0, %v6690
        %v6692 = vpop.f32.mrf.mxu0
        %6693 = vmatprep.mubr.f32.mxu0 0.0
        %6694 = vmatmul.mubr.f32.gmra.mxu0 %v6605
        %v6695 = vpop.f32.mrf.mxu0
        %v6696 = vadd.f32 0.0, %v6695
        %v6697 = vpop.f32.mrf.mxu0
        %6698 = vmatprep.mubr.f32.mxu0 0.0
        %6699 = vmatmul.mubr.f32.gmra.mxu0 %v6606
        %v6700 = vpop.f32.mrf.mxu0
        %v6701 = vadd.f32 0.0, %v6700
        %v6702 = vpop.f32.mrf.mxu0
        %6703 = vmatprep.mubr.f32.mxu0 0.0
        %6704 = vmatmul.mubr.f32.gmra.mxu0 %v6607
        %v6705 = vpop.f32.mrf.mxu0
        %v6706 = vadd.f32 0.0, %v6705
        %v6707 = vpop.f32.mrf.mxu0
        %6708 = vmatprep.mubr.f32.mxu0 0.0
        %6709 = vmatmul.mubr.f32.gmra.mxu0 %v6608
        %v6710 = vpop.f32.mrf.mxu0
        %v6711 = vadd.f32 0.0, %v6710
        %v6712 = vpop.f32.mrf.mxu0
        %6713 = vdwg.mxu0
        %v6714 = vmul.f32 %v6676, 0.03125
        %v6715 = vmul.f32 %v6681, 0.03125
        %v6716 = vmul.f32 %v6686, 0.03125
        %v6717 = vmul.f32 %v6691, 0.03125
        %v6718 = vmul.f32 %v6696, 0.03125
        %v6719 = vmul.f32 %v6701, 0.03125
        %v6720 = vmul.f32 %v6706, 0.03125
        %v6721 = vmul.f32 %v6711, 0.03125
        %v6722 = vrsqrt.pop %v6593
        %v6723 = vmul.f32 %v6593, %v6722
        %vm6724 = vcmp.eq.f32.partialorder %v6593, inf
        %v6725 = vsel %vm6724, %v6593, %v6723
        %vm6726 = vcmp.eq.f32.partialorder %v6593, 0.0
        %v6727 = vand.u32 %v6593, 2147483648
        %v6728 = vsel %vm6726, %v6727, %v6725
        %v6729 = vrsqrt.pop %v6594
        %v6730 = vmul.f32 %v6594, %v6729
        %vm6731 = vcmp.eq.f32.partialorder %v6594, inf
        %v6732 = vsel %vm6731, %v6594, %v6730
        %vm6733 = vcmp.eq.f32.partialorder %v6594, 0.0
        %v6734 = vand.u32 %v6594, 2147483648
        %v6735 = vsel %vm6733, %v6734, %v6732
        %v6736 = vrsqrt.pop %v6595
        %v6737 = vmul.f32 %v6595, %v6736
        %vm6738 = vcmp.eq.f32.partialorder %v6595, inf
        %v6739 = vsel %vm6738, %v6595, %v6737
        %vm6740 = vcmp.eq.f32.partialorder %v6595, 0.0
        %v6741 = vand.u32 %v6595, 2147483648
        %v6742 = vsel %vm6740, %v6741, %v6739
        %v6743 = vrsqrt.pop %v6596
        %v6744 = vmul.f32 %v6596, %v6743
        %vm6745 = vcmp.eq.f32.partialorder %v6596, inf
        %v6746 = vsel %vm6745, %v6596, %v6744
        %vm6747 = vcmp.eq.f32.partialorder %v6596, 0.0
        %v6748 = vand.u32 %v6596, 2147483648
        %v6749 = vsel %vm6747, %v6748, %v6746
        %v6750 = vrsqrt.pop %v6597
        %v6751 = vmul.f32 %v6597, %v6750
        %vm6752 = vcmp.eq.f32.partialorder %v6597, inf
        %v6753 = vsel %vm6752, %v6597, %v6751
        %vm6754 = vcmp.eq.f32.partialorder %v6597, 0.0
        %v6755 = vand.u32 %v6597, 2147483648
        %v6756 = vsel %vm6754, %v6755, %v6753
        %v6757 = vrsqrt.pop %v6598
        %v6758 = vmul.f32 %v6598, %v6757
        %vm6759 = vcmp.eq.f32.partialorder %v6598, inf
        %v6760 = vsel %vm6759, %v6598, %v6758
        %vm6761 = vcmp.eq.f32.partialorder %v6598, 0.0
        %v6762 = vand.u32 %v6598, 2147483648
        %v6763 = vsel %vm6761, %v6762, %v6760
        %v6764 = vrsqrt.pop %v6599
        %v6765 = vmul.f32 %v6599, %v6764
        %vm6766 = vcmp.eq.f32.partialorder %v6599, inf
        %v6767 = vsel %vm6766, %v6599, %v6765
        %vm6768 = vcmp.eq.f32.partialorder %v6599, 0.0
        %v6769 = vand.u32 %v6599, 2147483648
        %v6770 = vsel %vm6768, %v6769, %v6767
        %v6771 = vrsqrt.pop %v6600
        %v6772 = vmul.f32 %v6600, %v6771
        %vm6773 = vcmp.eq.f32.partialorder %v6600, inf
        %v6774 = vsel %vm6773, %v6600, %v6772
        %vm6775 = vcmp.eq.f32.partialorder %v6600, 0.0
        %v6776 = vand.u32 %v6600, 2147483648
        %v6777 = vsel %vm6775, %v6776, %v6774
        %v6778 = vrsqrt.pop %v6714
        %v6779 = vmul.f32 %v6714, %v6778
        %vm6780 = vcmp.eq.f32.partialorder %v6714, inf
        %v6781 = vsel %vm6780, %v6714, %v6779
        %vm6782 = vcmp.eq.f32.partialorder %v6714, 0.0
        %v6783 = vand.u32 %v6714, 2147483648
        %v6784 = vsel %vm6782, %v6783, %v6781
        %v6785 = vrsqrt.pop %v6715
        %v6786 = vmul.f32 %v6715, %v6785
        %vm6787 = vcmp.eq.f32.partialorder %v6715, inf
        %v6788 = vsel %vm6787, %v6715, %v6786
        %vm6789 = vcmp.eq.f32.partialorder %v6715, 0.0
        %v6790 = vand.u32 %v6715, 2147483648
        %v6791 = vsel %vm6789, %v6790, %v6788
        %v6792 = vrsqrt.pop %v6716
        %v6793 = vmul.f32 %v6716, %v6792
        %vm6794 = vcmp.eq.f32.partialorder %v6716, inf
        %v6795 = vsel %vm6794, %v6716, %v6793
        %vm6796 = vcmp.eq.f32.partialorder %v6716, 0.0
        %v6797 = vand.u32 %v6716, 2147483648
        %v6798 = vsel %vm6796, %v6797, %v6795
        %v6799 = vrsqrt.pop %v6717
        %v6800 = vmul.f32 %v6717, %v6799
        %vm6801 = vcmp.eq.f32.partialorder %v6717, inf
        %v6802 = vsel %vm6801, %v6717, %v6800
        %vm6803 = vcmp.eq.f32.partialorder %v6717, 0.0
        %v6804 = vand.u32 %v6717, 2147483648
        %v6805 = vsel %vm6803, %v6804, %v6802
        %v6806 = vrsqrt.pop %v6718
        %v6807 = vmul.f32 %v6718, %v6806
        %vm6808 = vcmp.eq.f32.partialorder %v6718, inf
        %v6809 = vsel %vm6808, %v6718, %v6807
        %vm6810 = vcmp.eq.f32.partialorder %v6718, 0.0
        %v6811 = vand.u32 %v6718, 2147483648
        %v6812 = vsel %vm6810, %v6811, %v6809
        %v6813 = vrsqrt.pop %v6719
        %v6814 = vmul.f32 %v6719, %v6813
        %vm6815 = vcmp.eq.f32.partialorder %v6719, inf
        %v6816 = vsel %vm6815, %v6719, %v6814
        %vm6817 = vcmp.eq.f32.partialorder %v6719, 0.0
        %v6818 = vand.u32 %v6719, 2147483648
        %v6819 = vsel %vm6817, %v6818, %v6816
        %v6820 = vrsqrt.pop %v6720
        %v6821 = vmul.f32 %v6720, %v6820
        %vm6822 = vcmp.eq.f32.partialorder %v6720, inf
        %v6823 = vsel %vm6822, %v6720, %v6821
        %vm6824 = vcmp.eq.f32.partialorder %v6720, 0.0
        %v6825 = vand.u32 %v6720, 2147483648
        %v6826 = vsel %vm6824, %v6825, %v6823
        %v6827 = vrsqrt.pop %v6721
        %v6828 = vmul.f32 %v6721, %v6827
        %vm6829 = vcmp.eq.f32.partialorder %v6721, inf
        %v6830 = vsel %vm6829, %v6721, %v6828
        %vm6831 = vcmp.eq.f32.partialorder %v6721, 0.0
        %v6832 = vand.u32 %v6721, 2147483648
        %v6833 = vsel %vm6831, %v6832, %v6830
        %v6834 = vsub.f32 %v6728, %v6784
        %v6835 = vsub.f32 %v6735, %v6791
        %v6836 = vsub.f32 %v6742, %v6798
        %v6837 = vsub.f32 %v6749, %v6805
        %v6838 = vsub.f32 %v6756, %v6812
        %v6839 = vsub.f32 %v6763, %v6819
        %v6840 = vsub.f32 %v6770, %v6826
        %v6841 = vsub.f32 %v6777, %v6833
        %v6842 = vsel %vm5808, %v6834, 0.0
        %v6843 = vsel %vm5808, %v6835, 0.0
        %v6844 = vadd.f32 %v6842, %v6843
        %v6845 = vsel %vm5808, %v6836, 0.0
        %v6846 = vadd.f32 %v6844, %v6845
        %v6847 = vsel %vm5808, %v6837, 0.0
        %v6848 = vadd.f32 %v6846, %v6847
        %v6849 = vsel %vm5808, %v6838, 0.0
        %v6850 = vadd.f32 %v6848, %v6849
        %v6851 = vsel %vm5808, %v6839, 0.0
        %v6852 = vadd.f32 %v6850, %v6851
        %v6853 = vsel %vm5808, %v6840, 0.0
        %v6854 = vadd.f32 %v6852, %v6853
        %v6855 = vsel %vm5808, %v6841, 0.0
        %v6856 = vadd.f32 %v6854, %v6855
        %6857 = vadd.xlane.f32.xlu0 %v6856
        %v6858 = vpop.xlane.xlu0 %6857
        %v6859 = vrot.slane %v6858, 4
        %v6860 = vadd.f32 %v6858, %v6859
        %v6861 = vrot.slane %v6860, 2
        %v6862 = vadd.f32 %v6860, %v6861
        %v6863 = vrot.slane %v6862, 1
        %v6864 = vadd.f32 %v6862, %v6863
        %s6865 = vtos %v6864
        %v6866 = vstv %s6865
        %v6867 = vrcp.pop 256.0
        %v6868 = vmul.f32 %v6866, %v6867
        %6869 = vst [vmem:[%s580] sm:$0xff] 0.0
        %vm6870 = vcmask 0
        %6871 = vst.msk [vmem:[%s580] sm:$0x1] %vm6870, %v6868
      $region104: #{kaam_forward.3} parent=95 // pred_fallthru
        _
      %p6872 = scmp.lt.s32.totalorder %s30, 1
      %s6873 = scalar_select %p6872, %s30, 1
      %s6874 = smul.addr %s6873, 8
      %s6875 = scalar_lea.vmem %s19, %s6874
      // Predicated region
      $region105: #{kaam_forward.3} parent=95 // pred_check
        %p6876 = pneg %p447
      $region106: #{kaam_forward.3} parent=95 // pred_check_branch
        %6878 = sbr.rel (%p6876) target = $region108
      $region107: #{kaam_forward.3} parent=95 // pred_region
        _
      $region108: #{kaam_forward.3} parent=95 // pred_fallthru
        _
    $region96: #{kaam_forward.3} parent=5 // pred_fallthru
      _
    %p6879 = scmp.le.s32.totalorder 2, %s25
    // Predicated region
    $region109: #{kaam_forward.3} parent=5 // pred_check
      %p6880 = pneg %p6879
    $region110: #{kaam_forward.3} parent=5 // pred_check_branch
      %6882 = sbr.rel (%p6880) target = $region112
    $region111: #{kaam_forward.3} parent=5 // pred_region
      %s6883 = ssub.s32 %s25, 2
      // Predicated region
      $region113: #{kaam_forward.3} parent=111 // pred_check
        %p6884 = pneg %p453
      $region114: #{kaam_forward.3} parent=111 // pred_check_branch
        %6886 = sbr.rel (%p6884) target = $region116
      $region115: #{kaam_forward.3} parent=111 // pred_region
        %p6887 = scmp.lt.s32.totalorder %s31, 1
        %s6888 = scalar_select %p6887, %s31, 1
        %s6889 = smul.addr %s6888, 8
        %s6890 = scalar_lea.vmem %s19, %s6889
      $region116: #{kaam_forward.3} parent=111 // pred_fallthru
        _
    $region112: #{kaam_forward.3} parent=5 // pred_fallthru
      _
  $region6: #{kaam_forward.3} parent=0 // loop_footer
    %s29 = sadd.s32 1, %s25
  $region7: #{kaam_forward.3} parent=0 // loop_footer_branch
    %24 = sbr.rel target = $region3
  $region8: #{kaam_forward.3} parent=0 // loop_exit
    _

</llo_original>
